<compile_context>
chip_gen: v6e
topology: v6e:2x2x1
jax: 0.10.0
libtpu: 0.0.40
codegen_flags: <defaults>
</compile_context>

<pallas_src>
import numpy as np

import jax
import jax.numpy as jnp
from jax import lax
from jax.experimental import pallas as pl
from jax.experimental.pallas import tpu as pltpu


# ----------------------------------------------------------------------------
# Fused Pallas kernel
# ----------------------------------------------------------------------------
def fused_cnn_kernel(x_ref, g1_ref, s1_ref, b1_ref, g2_ref, s2_ref, b2_ref,
                     wfc_ref, bfc_ref, out_ref):
    """Processes BLOCK_B images end-to-end, entirely in VMEM.

    x_ref  : (BB, 4, 9, 32) f32  zero-padded 36x32 input, rows split by (row % 4):
                                 x_ref[b, p, t, x] = xpad[b, 4*t + p, x]
    g1_ref : (256, 512) bf16     banded conv1 matrix; rows = (kh, x) -> kh*32 + x
                                 (rows 160..255 zero = K padding),
                                 cols = (w parity, pooled col j, co) -> half*256 + j*16 + co
    s1/b1  : (1, 512) f32        folded conv-bias+BN1 scale/bias (zero on pad lanes)
    g2_ref : (1280, 512) bf16    banded conv2 matrix; rows = (kh, j, ci) -> kh*256 + j*16 + ci,
                                 cols = (w2 parity, jo, co) -> half*256 + jo*32 + co
    s2/b2  : (1, 512) f32        folded conv-bias+BN2 scale/bias (zero on pad lanes)
    wfc_ref: (1792, 128) bf16    FC weight in the kernel's (i2, jo, co) flatten order,
                                 padded to 128 output lanes (cols 10..127 zero)
    bfc_ref: (1, 128) f32
    out_ref: (BB, 128) f32       logits in lanes 0..9, zeros elsewhere
    """
    f32 = jnp.float32
    bf16 = jnp.bfloat16
    BB = x_ref.shape[0]
    n = BB * 8

    xm = x_ref[...]                                            # (BB, 4, 9, 32)
    g1 = g1_ref[...]                                           # (256, 512) bf16
    s1 = s1_ref[...]
    b1 = b1_ref[...]
    kpad = jnp.zeros((BB, 8, 96), f32)                         # K pad 160 -> 256

    # ---- layer 1: conv rows h = 4q + r; one lane-aligned GEMM per row parity ----
    def conv1_parity(r):
        slabs = []
        for kh in range(5):
            src, off = (r + kh) % 4, (r + kh) // 4
            slabs.append(xm[:, src, off:off + 8, :])           # (BB, 8, 32)
        lhs = jnp.concatenate(slabs + [kpad], axis=-1)         # (BB, 8, 256)
        y = jnp.dot(lhs.reshape(n, 256).astype(bf16), g1,
                    preferred_element_type=f32)                # (n, 512)
        return jnp.maximum(y * s1 + b1, 0.0)                   # BN + ReLU

    y10 = conv1_parity(0)
    y11 = conv1_parity(1)
    y12 = conv1_parity(2)
    y13 = conv1_parity(3)

    # 2x2 max-pool: conv rows 4q/4q+1 -> even pooled row 2q, conv rows 4q+2/4q+3
    # -> odd pooled row 2q+1; lane halves hold even / odd output columns.
    o1e = jnp.maximum(jnp.maximum(y10[:, 0:256], y10[:, 256:512]),
                      jnp.maximum(y11[:, 0:256], y11[:, 256:512])).reshape(BB, 8, 256)
    o1o = jnp.maximum(jnp.maximum(y12[:, 0:256], y12[:, 256:512]),
                      jnp.maximum(y13[:, 0:256], y13[:, 256:512])).reshape(BB, 8, 256)
    # rows 0..6 are the valid pooled rows; row 7 is garbage but only ever feeds
    # layer-2 output rows that are themselves dropped (see shifted views below).

    # ---- layer 2: split-K (one dot per row tap), no r2 materialization ----------
    zr1 = jnp.zeros((BB, 1, 256), f32)
    zr2 = jnp.zeros((BB, 2, 256), f32)
    # delta = -1 view: row q2 holds pooled row q2-1 (zero for q2 = 0)
    e_m1 = jnp.concatenate([zr1, o1e[:, 0:7, :]], axis=1).reshape(n, 256).astype(bf16)
    o_m1 = jnp.concatenate([zr1, o1o[:, 0:7, :]], axis=1).reshape(n, 256).astype(bf16)
    # delta = 0 view: the pooled output itself (row 7 garbage feeds dropped rows only)
    e_0 = o1e.reshape(n, 256).astype(bf16)
    o_0 = o1o.reshape(n, 256).astype(bf16)
    # delta = +1 view: row q2 holds pooled row q2+1 (zero for q2 >= 6)
    e_p1 = jnp.concatenate([o1e[:, 1:7, :], zr2], axis=1).reshape(n, 256).astype(bf16)
    o_p1 = jnp.concatenate([o1o[:, 1:7, :], zr2], axis=1).reshape(n, 256).astype(bf16)

    taps_e = (e_m1, o_m1, e_0, o_0, e_p1)    # taps for even conv2 rows (kh = 0..4)
    taps_o = (o_m1, e_0, o_0, e_p1, o_p1)    # taps for odd  conv2 rows (kh = 0..4)

    y2e = None
    y2o = None
    for kh in range(5):
        g2k = g2_ref[kh * 256:(kh + 1) * 256, :]               # (256, 512) bf16
        de = jnp.dot(taps_e[kh], g2k, preferred_element_type=f32)
        do = jnp.dot(taps_o[kh], g2k, preferred_element_type=f32)
        y2e = de if y2e is None else y2e + de
        y2o = do if y2o is None else y2o + do

    s2 = s2_ref[...]
    b2 = b2_ref[...]
    y2e = jnp.maximum(y2e * s2 + b2, 0.0)
    y2o = jnp.maximum(y2o * s2 + b2, 0.0)
    o2 = jnp.maximum(jnp.maximum(y2e[:, 0:256], y2e[:, 256:512]),
                     jnp.maximum(y2o[:, 0:256], y2o[:, 256:512])).reshape(BB, 8, 256)

    # ---- fc (PyTorch flatten order folded into the wfc permutation) ------------
    flat = jnp.concatenate([o2[:, ii, :] for ii in range(7)], axis=-1)   # (BB, 1792)
    out = jnp.dot(flat.astype(bf16), wfc_ref[...],
                  preferred_element_type=f32) + bfc_ref[...]             # (BB, 128)
    out_ref[...] = out.astype(out_ref.dtype)


# ----------------------------------------------------------------------------
# One-time host-side weight packing (functions of the weights only)
# ----------------------------------------------------------------------------
def _build_g1(w1):
    """conv1 weight (16,1,5,5) OIHW -> banded GEMM matrix (256, 512) bf16."""
    w1 = np.asarray(w1, np.float32)
    g1 = np.zeros((256, 512), np.float32)                  # rows 160..255 stay zero
    for kh in range(5):
        for kw in range(5):
            for half in range(2):              # even / odd output column
                for j in range(14):            # pooled output column
                    x = 2 * j + half + kw      # padded input column
                    g1[kh * 32 + x,
                       half * 256 + j * 16: half * 256 + j * 16 + 16] = w1[:, 0, kh, kw]
    return jnp.asarray(g1, dtype=jnp.bfloat16)


def _build_g2(w2):
    """conv2 weight (32,16,5,5) OIHW -> banded GEMM matrix (1280, 512) bf16."""
    w2 = np.asarray(w2, np.float32)
    g2 = np.zeros((5 * 256, 2 * 256), np.float32)
    for kh in range(5):
        for kw in range(5):
            for half in range(2):
                for jo in range(7):            # pooled layer-2 output column
                    j = 2 * jo + half + kw - 2  # layer-1 pooled column
                    if 0 <= j < 14:
                        g2[kh * 256 + j * 16: kh * 256 + j * 16 + 16,
                           half * 256 + jo * 32: half * 256 + jo * 32 + 32] = \
                            w2[:, :, kh, kw].T
    return jnp.asarray(g2, dtype=jnp.bfloat16)


def _build_wfc(wfc):
    """fc weight (10, 1568) with PyTorch flatten index c*49 + h*7 + w
       -> (1792, 128) bf16 in the kernel's (i2, jo, co) lane order
       (pad rows and cols 10..127 zero)."""
    wfc = np.asarray(wfc, np.float32)
    wk = np.zeros((7 * 256, 128), np.float32)
    for ii in range(7):
        for jo in range(7):
            cols = np.arange(32) * 49 + ii * 7 + jo
            wk[ii * 256 + jo * 32: ii * 256 + jo * 32 + 32, 0:10] = wfc[:, cols].T
    return jnp.asarray(wk, dtype=jnp.bfloat16)


def _fold_bn_tiled(gamma, beta, mean, var, conv_bias, reps, eps=1e-5):
    """Fold conv bias + eval-mode BN into a per-lane scale/bias tiled to the
    512-wide GEMM column layout; padding lane blocks get scale = bias = 0 so
    they are exactly zero after the ReLU."""
    scale = np.asarray(gamma, np.float32) / np.sqrt(np.asarray(var, np.float32) + eps)
    bias = (np.asarray(conv_bias, np.float32) - np.asarray(mean, np.float32)) * scale \
        + np.asarray(beta, np.float32)
    c = scale.shape[0]
    pad = 256 - reps * c
    half_s = np.concatenate([np.tile(scale, reps), np.zeros((pad,), np.float32)])
    half_b = np.concatenate([np.tile(bias, reps), np.zeros((pad,), np.float32)])
    s = np.concatenate([half_s, half_s]).reshape(1, 512).astype(np.float32)
    b = np.concatenate([half_b, half_b]).reshape(1, 512).astype(np.float32)
    return jnp.asarray(s), jnp.asarray(b)


def prepare_params(raw):
    """Pack PyTorch-shaped parameters into the kernel operand layout (done once)."""
    s1, b1 = _fold_bn_tiled(raw["bn1_gamma"], raw["bn1_beta"], raw["bn1_mean"],
                            raw["bn1_var"], raw["b1"], reps=14)
    s2, b2 = _fold_bn_tiled(raw["bn2_gamma"], raw["bn2_beta"], raw["bn2_mean"],
                            raw["bn2_var"], raw["b2"], reps=7)
    bfc = np.zeros((1, 128), np.float32)
    bfc[0, :10] = np.asarray(raw["bfc"], np.float32)
    return {
        "g1": _build_g1(raw["w1"]), "s1": s1, "b1": b1,
        "g2": _build_g2(raw["w2"]), "s2": s2, "b2": b2,
        "wfc": _build_wfc(raw["wfc"]),
        "bfc": jnp.asarray(bfc),
    }


# ----------------------------------------------------------------------------
# Forward pass
# ----------------------------------------------------------------------------
@jax.jit
def forward(packed, x_nchw):
    """CNNFashion_Mnist forward.  x_nchw: (B, 1, 28, 28) -> logits (B, 10)."""
    B = x_nchw.shape[0]
    # 8..32 images per grid step (multiple of 8), keeping >= 2 grid steps when the
    # batch allows so both v7x TensorCores get work.
    block_b = min(32, max(8, ((-(-B // 2)) + 7) // 8 * 8))
    bp = (-(-B // block_b)) * block_b

    # Layout plumbing only: zero-pad to 36x32 (conv padding=2 plus spare rows)
    # and split rows by (row mod 4) so the in-kernel im2col uses only
    # contiguous slices.
    x = x_nchw.reshape(B, 28, 28).astype(jnp.float32)
    xp = jnp.pad(x, ((0, 0), (2, 6), (2, 2)))                    # (B, 36, 32)
    xm = xp.reshape(B, 9, 4, 32).transpose(0, 2, 1, 3)           # (B, 4, 9, 32)
    if bp != B:
        xm = jnp.pad(xm, ((0, bp - B), (0, 0), (0, 0), (0, 0)))

    const = lambda i: (0, 0)
    out = pl.pallas_call(
        fused_cnn_kernel,
        out_shape=jax.ShapeDtypeStruct((bp, 128), jnp.float32),
        grid=(bp // block_b,),
        in_specs=[
            pl.BlockSpec((block_b, 4, 9, 32), lambda i: (i, 0, 0, 0)),
            pl.BlockSpec((256, 512), const),
            pl.BlockSpec((1, 512), const),
            pl.BlockSpec((1, 512), const),
            pl.BlockSpec((1280, 512), const),
            pl.BlockSpec((1, 512), const),
            pl.BlockSpec((1, 512), const),
            pl.BlockSpec((1792, 128), const),
            pl.BlockSpec((1, 128), const),
        ],
        out_specs=pl.BlockSpec((block_b, 128), lambda i: (i, 0)),
        compiler_params=pltpu.CompilerParams(
            dimension_semantics=("parallel",),
            vmem_limit_bytes=48 * 1024 * 1024),
    )(xm, packed["g1"], packed["s1"], packed["b1"],
      packed["g2"], packed["s2"], packed["b2"],
      packed["wfc"], packed["bfc"])
    return out[:B, :10]


# ----------------------------------------------------------------------------
# Parameters (deterministic, synthetic — matches nn.Module shapes)
# ----------------------------------------------------------------------------
def init_params(key):
    ks = jax.random.split(key, 14)
    return {
        # layer1: Conv2d(1, 16, 5, padding=2) + BatchNorm2d(16)
        "w1": jax.random.normal(ks[0], (16, 1, 5, 5), jnp.float32) * 0.1,
        "b1": jax.random.normal(ks[1], (16,), jnp.float32) * 0.05,
        "bn1_gamma": 1.0 + 0.1 * jax.random.normal(ks[2], (16,), jnp.float32),
        "bn1_beta": 0.1 * jax.random.normal(ks[3], (16,), jnp.float32),
        "bn1_mean": 0.05 * jax.random.normal(ks[4], (16,), jnp.float32),
        "bn1_var": jax.random.uniform(ks[5], (16,), jnp.float32, 0.5, 1.5),
        # layer2: Conv2d(16, 32, 5, padding=2) + BatchNorm2d(32)
        "w2": jax.random.normal(ks[6], (32, 16, 5, 5), jnp.float32) * 0.05,
        "b2": jax.random.normal(ks[7], (32,), jnp.float32) * 0.05,
        "bn2_gamma": 1.0 + 0.1 * jax.random.normal(ks[8], (32,), jnp.float32),
        "bn2_beta": 0.1 * jax.random.normal(ks[9], (32,), jnp.float32),
        "bn2_mean": 0.05 * jax.random.normal(ks[10], (32,), jnp.float32),
        "bn2_var": jax.random.uniform(ks[11], (32,), jnp.float32, 0.5, 1.5),
        # fc: Linear(7*7*32, 10)
        "wfc": jax.random.normal(ks[12], (10, 7 * 7 * 32), jnp.float32) * 0.02,
        "bfc": jax.random.normal(ks[13], (10,), jnp.float32) * 0.02,
    }


# Pure-JAX reference (sanity check only; not the kernel path).
def forward_reference(params, x_nchw, eps=1e-5):
    x = jnp.transpose(x_nchw, (0, 2, 3, 1)).astype(jnp.float32)

    def layer(x, w, b, g, bet, m, v):
        y = lax.conv_general_dilated(
            x, jnp.transpose(w, (2, 3, 1, 0)), (1, 1), "SAME",
            dimension_numbers=("NHWC", "HWIO", "NHWC"))
        y = y + b.reshape(1, 1, 1, -1)
        y = (y - m) / jnp.sqrt(v + eps) * g + bet
        y = jnp.maximum(y, 0.0)
        B, H, W, C = y.shape
        return y.reshape(B, H // 2, 2, W // 2, 2, C).max(axis=(2, 4))

    o1 = layer(x, params["w1"], params["b1"], params["bn1_gamma"],
               params["bn1_beta"], params["bn1_mean"], params["bn1_var"])
    o2 = layer(o1, params["w2"], params["b2"], params["bn2_gamma"],
               params["bn2_beta"], params["bn2_mean"], params["bn2_var"])
    flat = jnp.transpose(o2, (0, 3, 1, 2)).reshape(x.shape[0], -1)
    return flat @ params["wfc"].T + params["bfc"]


if __name__ == "__main__":
    key = jax.random.PRNGKey(0)
    kp, kx = jax.random.split(key)
    raw = init_params(kp)
    packed = prepare_params(raw)

    # Fashion-MNIST-shaped input (the module requires 1x28x28); small batch so the
    # wrapper picks BLOCK_B = 8 -> grid of 2 steps.
    x = jax.random.normal(kx, (16, 1, 28, 28), jnp.float32)

    out = jax.block_until_ready(forward(packed, x))
    assert out.shape == (16, 10) and out.dtype == jnp.float32

    ref = jax.block_until_ready(forward_reference(raw, x))
    max_err = float(jnp.max(jnp.abs(out - ref)))
    assert jnp.allclose(out, ref, rtol=3e-2, atol=3e-2), \
        f"mismatch vs reference (max |err| = {max_err})"

    print("KERNEL_OK")
</pallas_src>

<mosaic_0001>
module attributes {stable_mosaic.version = 11 : i64} {
  func.func @fused_cnn_kernel(%arg0: i32, %arg1: memref<8x4x9x32xf32, #tpu.memory_space<vmem>>, %arg2: memref<256x512xbf16, #tpu.memory_space<vmem>>, %arg3: memref<1x512xf32, #tpu.memory_space<vmem>>, %arg4: memref<1x512xf32, #tpu.memory_space<vmem>>, %arg5: memref<1280x512xbf16, #tpu.memory_space<vmem>>, %arg6: memref<1x512xf32, #tpu.memory_space<vmem>>, %arg7: memref<1x512xf32, #tpu.memory_space<vmem>>, %arg8: memref<1792x128xbf16, #tpu.memory_space<vmem>>, %arg9: memref<1x128xf32, #tpu.memory_space<vmem>>, %arg10: memref<8x128xf32, #tpu.memory_space<vmem>>) attributes {dimension_semantics = [#tpu.dimension_semantics<parallel>], iteration_bounds = array<i64: 2>, scalar_prefetch = 0 : i64, scratch_operands = 0 : i64, tpu.core_type = #tpu.core_type<tc>, window_params = [{transform_indices = @transform_0, window_bounds = array<i64: 8, 4, 9, 32>}, {pipeline_mode = #tpu.pipeline_mode<synchronous>, transform_indices = @transform_1, window_bounds = array<i64: 256, 512>}, {pipeline_mode = #tpu.pipeline_mode<synchronous>, transform_indices = @transform_2, window_bounds = array<i64: 1, 512>}, {pipeline_mode = #tpu.pipeline_mode<synchronous>, transform_indices = @transform_3, window_bounds = array<i64: 1, 512>}, {pipeline_mode = #tpu.pipeline_mode<synchronous>, transform_indices = @transform_4, window_bounds = array<i64: 1280, 512>}, {pipeline_mode = #tpu.pipeline_mode<synchronous>, transform_indices = @transform_5, window_bounds = array<i64: 1, 512>}, {pipeline_mode = #tpu.pipeline_mode<synchronous>, transform_indices = @transform_6, window_bounds = array<i64: 1, 512>}, {pipeline_mode = #tpu.pipeline_mode<synchronous>, transform_indices = @transform_7, window_bounds = array<i64: 1792, 128>}, {pipeline_mode = #tpu.pipeline_mode<synchronous>, transform_indices = @transform_8, window_bounds = array<i64: 1, 128>}, {transform_indices = @transform_9, window_bounds = array<i64: 8, 128>}]} {
    %c0 = arith.constant 0 : index
    %c0_0 = arith.constant 0 : index
    %c0_1 = arith.constant 0 : index
    %c0_2 = arith.constant 0 : index
    %0 = vector.load %arg1[%c0, %c0_0, %c0_1, %c0_2] : memref<8x4x9x32xf32, #tpu.memory_space<vmem>>, vector<8x4x9x32xf32>
    %c0_3 = arith.constant 0 : index
    %c0_4 = arith.constant 0 : index
    %1 = vector.load %arg2[%c0_3, %c0_4] : memref<256x512xbf16, #tpu.memory_space<vmem>>, vector<256x512xbf16>
    %c0_5 = arith.constant 0 : index
    %c0_6 = arith.constant 0 : index
    %2 = vector.load %arg3[%c0_5, %c0_6] : memref<1x512xf32, #tpu.memory_space<vmem>>, vector<1x512xf32>
    %c0_7 = arith.constant 0 : index
    %c0_8 = arith.constant 0 : index
    %3 = vector.load %arg4[%c0_7, %c0_8] : memref<1x512xf32, #tpu.memory_space<vmem>>, vector<1x512xf32>
    %cst = arith.constant 0.000000e+00 : f32
    %4 = vector.broadcast %cst : f32 to vector<8x8x96xf32>
    %5 = vector.extract_strided_slice %0 {offsets = [0, 0, 0, 0], sizes = [8, 1, 8, 32], strides = [1, 1, 1, 1]} : vector<8x4x9x32xf32> to vector<8x1x8x32xf32>
    %6 = vector.shape_cast %5 : vector<8x1x8x32xf32> to vector<8x8x32xf32>
    %7 = vector.extract_strided_slice %0 {offsets = [0, 1, 0, 0], sizes = [8, 1, 8, 32], strides = [1, 1, 1, 1]} : vector<8x4x9x32xf32> to vector<8x1x8x32xf32>
    %8 = vector.shape_cast %7 : vector<8x1x8x32xf32> to vector<8x8x32xf32>
    %9 = vector.extract_strided_slice %0 {offsets = [0, 2, 0, 0], sizes = [8, 1, 8, 32], strides = [1, 1, 1, 1]} : vector<8x4x9x32xf32> to vector<8x1x8x32xf32>
    %10 = vector.shape_cast %9 : vector<8x1x8x32xf32> to vector<8x8x32xf32>
    %11 = vector.extract_strided_slice %0 {offsets = [0, 3, 0, 0], sizes = [8, 1, 8, 32], strides = [1, 1, 1, 1]} : vector<8x4x9x32xf32> to vector<8x1x8x32xf32>
    %12 = vector.shape_cast %11 : vector<8x1x8x32xf32> to vector<8x8x32xf32>
    %13 = vector.extract_strided_slice %0 {offsets = [0, 0, 1, 0], sizes = [8, 1, 8, 32], strides = [1, 1, 1, 1]} : vector<8x4x9x32xf32> to vector<8x1x8x32xf32>
    %14 = vector.shape_cast %13 : vector<8x1x8x32xf32> to vector<8x8x32xf32>
    %15 = tpu.concatenate %6, %8, %10, %12, %14, %4 in 2 : vector<8x8x32xf32>, vector<8x8x32xf32>, vector<8x8x32xf32>, vector<8x8x32xf32>, vector<8x8x32xf32>, vector<8x8x96xf32> -> vector<8x8x256xf32>
    %16 = vector.shape_cast %15 : vector<8x8x256xf32> to vector<64x256xf32>
    %17 = arith.truncf %16 : vector<64x256xf32> to vector<64x256xbf16>
    %cst_9 = arith.constant dense<0.000000e+00> : vector<64x512xf32>
    %18 = tpu.matmul %17, %1, %cst_9 {dimension_numbers = #tpu.dot_dimension_numbers<[1], [0], [0], [1], [0, 0, 1, 1], [], []>} : vector<64x256xbf16>, vector<256x512xbf16>, vector<64x512xf32> -> vector<64x512xf32>
    %19 = vector.broadcast %2 : vector<1x512xf32> to vector<64x512xf32>
    %20 = arith.mulf %18, %19 : vector<64x512xf32>
    %21 = vector.broadcast %3 : vector<1x512xf32> to vector<64x512xf32>
    %22 = arith.addf %20, %21 : vector<64x512xf32>
    %cst_10 = arith.constant 0.000000e+00 : f32
    %23 = vector.broadcast %cst_10 : f32 to vector<64x512xf32>
    %24 = arith.maximumf %22, %23 : vector<64x512xf32>
    %25 = vector.extract_strided_slice %0 {offsets = [0, 1, 0, 0], sizes = [8, 1, 8, 32], strides = [1, 1, 1, 1]} : vector<8x4x9x32xf32> to vector<8x1x8x32xf32>
    %26 = vector.shape_cast %25 : vector<8x1x8x32xf32> to vector<8x8x32xf32>
    %27 = vector.extract_strided_slice %0 {offsets = [0, 2, 0, 0], sizes = [8, 1, 8, 32], strides = [1, 1, 1, 1]} : vector<8x4x9x32xf32> to vector<8x1x8x32xf32>
    %28 = vector.shape_cast %27 : vector<8x1x8x32xf32> to vector<8x8x32xf32>
    %29 = vector.extract_strided_slice %0 {offsets = [0, 3, 0, 0], sizes = [8, 1, 8, 32], strides = [1, 1, 1, 1]} : vector<8x4x9x32xf32> to vector<8x1x8x32xf32>
    %30 = vector.shape_cast %29 : vector<8x1x8x32xf32> to vector<8x8x32xf32>
    %31 = vector.extract_strided_slice %0 {offsets = [0, 0, 1, 0], sizes = [8, 1, 8, 32], strides = [1, 1, 1, 1]} : vector<8x4x9x32xf32> to vector<8x1x8x32xf32>
    %32 = vector.shape_cast %31 : vector<8x1x8x32xf32> to vector<8x8x32xf32>
    %33 = vector.extract_strided_slice %0 {offsets = [0, 1, 1, 0], sizes = [8, 1, 8, 32], strides = [1, 1, 1, 1]} : vector<8x4x9x32xf32> to vector<8x1x8x32xf32>
    %34 = vector.shape_cast %33 : vector<8x1x8x32xf32> to vector<8x8x32xf32>
    %35 = tpu.concatenate %26, %28, %30, %32, %34, %4 in 2 : vector<8x8x32xf32>, vector<8x8x32xf32>, vector<8x8x32xf32>, vector<8x8x32xf32>, vector<8x8x32xf32>, vector<8x8x96xf32> -> vector<8x8x256xf32>
    %36 = vector.shape_cast %35 : vector<8x8x256xf32> to vector<64x256xf32>
    %37 = arith.truncf %36 : vector<64x256xf32> to vector<64x256xbf16>
    %cst_11 = arith.constant dense<0.000000e+00> : vector<64x512xf32>
    %38 = tpu.matmul %37, %1, %cst_11 {dimension_numbers = #tpu.dot_dimension_numbers<[1], [0], [0], [1], [0, 0, 1, 1], [], []>} : vector<64x256xbf16>, vector<256x512xbf16>, vector<64x512xf32> -> vector<64x512xf32>
    %39 = vector.broadcast %2 : vector<1x512xf32> to vector<64x512xf32>
    %40 = arith.mulf %38, %39 : vector<64x512xf32>
    %41 = vector.broadcast %3 : vector<1x512xf32> to vector<64x512xf32>
    %42 = arith.addf %40, %41 : vector<64x512xf32>
    %cst_12 = arith.constant 0.000000e+00 : f32
    %43 = vector.broadcast %cst_12 : f32 to vector<64x512xf32>
    %44 = arith.maximumf %42, %43 : vector<64x512xf32>
    %45 = vector.extract_strided_slice %0 {offsets = [0, 2, 0, 0], sizes = [8, 1, 8, 32], strides = [1, 1, 1, 1]} : vector<8x4x9x32xf32> to vector<8x1x8x32xf32>
    %46 = vector.shape_cast %45 : vector<8x1x8x32xf32> to vector<8x8x32xf32>
    %47 = vector.extract_strided_slice %0 {offsets = [0, 3, 0, 0], sizes = [8, 1, 8, 32], strides = [1, 1, 1, 1]} : vector<8x4x9x32xf32> to vector<8x1x8x32xf32>
    %48 = vector.shape_cast %47 : vector<8x1x8x32xf32> to vector<8x8x32xf32>
    %49 = vector.extract_strided_slice %0 {offsets = [0, 0, 1, 0], sizes = [8, 1, 8, 32], strides = [1, 1, 1, 1]} : vector<8x4x9x32xf32> to vector<8x1x8x32xf32>
    %50 = vector.shape_cast %49 : vector<8x1x8x32xf32> to vector<8x8x32xf32>
    %51 = vector.extract_strided_slice %0 {offsets = [0, 1, 1, 0], sizes = [8, 1, 8, 32], strides = [1, 1, 1, 1]} : vector<8x4x9x32xf32> to vector<8x1x8x32xf32>
    %52 = vector.shape_cast %51 : vector<8x1x8x32xf32> to vector<8x8x32xf32>
    %53 = vector.extract_strided_slice %0 {offsets = [0, 2, 1, 0], sizes = [8, 1, 8, 32], strides = [1, 1, 1, 1]} : vector<8x4x9x32xf32> to vector<8x1x8x32xf32>
    %54 = vector.shape_cast %53 : vector<8x1x8x32xf32> to vector<8x8x32xf32>
    %55 = tpu.concatenate %46, %48, %50, %52, %54, %4 in 2 : vector<8x8x32xf32>, vector<8x8x32xf32>, vector<8x8x32xf32>, vector<8x8x32xf32>, vector<8x8x32xf32>, vector<8x8x96xf32> -> vector<8x8x256xf32>
    %56 = vector.shape_cast %55 : vector<8x8x256xf32> to vector<64x256xf32>
    %57 = arith.truncf %56 : vector<64x256xf32> to vector<64x256xbf16>
    %cst_13 = arith.constant dense<0.000000e+00> : vector<64x512xf32>
    %58 = tpu.matmul %57, %1, %cst_13 {dimension_numbers = #tpu.dot_dimension_numbers<[1], [0], [0], [1], [0, 0, 1, 1], [], []>} : vector<64x256xbf16>, vector<256x512xbf16>, vector<64x512xf32> -> vector<64x512xf32>
    %59 = vector.broadcast %2 : vector<1x512xf32> to vector<64x512xf32>
    %60 = arith.mulf %58, %59 : vector<64x512xf32>
    %61 = vector.broadcast %3 : vector<1x512xf32> to vector<64x512xf32>
    %62 = arith.addf %60, %61 : vector<64x512xf32>
    %cst_14 = arith.constant 0.000000e+00 : f32
    %63 = vector.broadcast %cst_14 : f32 to vector<64x512xf32>
    %64 = arith.maximumf %62, %63 : vector<64x512xf32>
    %65 = vector.extract_strided_slice %0 {offsets = [0, 3, 0, 0], sizes = [8, 1, 8, 32], strides = [1, 1, 1, 1]} : vector<8x4x9x32xf32> to vector<8x1x8x32xf32>
    %66 = vector.shape_cast %65 : vector<8x1x8x32xf32> to vector<8x8x32xf32>
    %67 = vector.extract_strided_slice %0 {offsets = [0, 0, 1, 0], sizes = [8, 1, 8, 32], strides = [1, 1, 1, 1]} : vector<8x4x9x32xf32> to vector<8x1x8x32xf32>
    %68 = vector.shape_cast %67 : vector<8x1x8x32xf32> to vector<8x8x32xf32>
    %69 = vector.extract_strided_slice %0 {offsets = [0, 1, 1, 0], sizes = [8, 1, 8, 32], strides = [1, 1, 1, 1]} : vector<8x4x9x32xf32> to vector<8x1x8x32xf32>
    %70 = vector.shape_cast %69 : vector<8x1x8x32xf32> to vector<8x8x32xf32>
    %71 = vector.extract_strided_slice %0 {offsets = [0, 2, 1, 0], sizes = [8, 1, 8, 32], strides = [1, 1, 1, 1]} : vector<8x4x9x32xf32> to vector<8x1x8x32xf32>
    %72 = vector.shape_cast %71 : vector<8x1x8x32xf32> to vector<8x8x32xf32>
    %73 = vector.extract_strided_slice %0 {offsets = [0, 3, 1, 0], sizes = [8, 1, 8, 32], strides = [1, 1, 1, 1]} : vector<8x4x9x32xf32> to vector<8x1x8x32xf32>
    %74 = vector.shape_cast %73 : vector<8x1x8x32xf32> to vector<8x8x32xf32>
    %75 = tpu.concatenate %66, %68, %70, %72, %74, %4 in 2 : vector<8x8x32xf32>, vector<8x8x32xf32>, vector<8x8x32xf32>, vector<8x8x32xf32>, vector<8x8x32xf32>, vector<8x8x96xf32> -> vector<8x8x256xf32>
    %76 = vector.shape_cast %75 : vector<8x8x256xf32> to vector<64x256xf32>
    %77 = arith.truncf %76 : vector<64x256xf32> to vector<64x256xbf16>
    %cst_15 = arith.constant dense<0.000000e+00> : vector<64x512xf32>
    %78 = tpu.matmul %77, %1, %cst_15 {dimension_numbers = #tpu.dot_dimension_numbers<[1], [0], [0], [1], [0, 0, 1, 1], [], []>} : vector<64x256xbf16>, vector<256x512xbf16>, vector<64x512xf32> -> vector<64x512xf32>
    %79 = vector.broadcast %2 : vector<1x512xf32> to vector<64x512xf32>
    %80 = arith.mulf %78, %79 : vector<64x512xf32>
    %81 = vector.broadcast %3 : vector<1x512xf32> to vector<64x512xf32>
    %82 = arith.addf %80, %81 : vector<64x512xf32>
    %cst_16 = arith.constant 0.000000e+00 : f32
    %83 = vector.broadcast %cst_16 : f32 to vector<64x512xf32>
    %84 = arith.maximumf %82, %83 : vector<64x512xf32>
    %85 = vector.extract_strided_slice %24 {offsets = [0, 0], sizes = [64, 256], strides = [1, 1]} : vector<64x512xf32> to vector<64x256xf32>
    %86 = vector.extract_strided_slice %24 {offsets = [0, 256], sizes = [64, 256], strides = [1, 1]} : vector<64x512xf32> to vector<64x256xf32>
    %87 = arith.maximumf %85, %86 : vector<64x256xf32>
    %88 = vector.extract_strided_slice %44 {offsets = [0, 0], sizes = [64, 256], strides = [1, 1]} : vector<64x512xf32> to vector<64x256xf32>
    %89 = vector.extract_strided_slice %44 {offsets = [0, 256], sizes = [64, 256], strides = [1, 1]} : vector<64x512xf32> to vector<64x256xf32>
    %90 = arith.maximumf %88, %89 : vector<64x256xf32>
    %91 = arith.maximumf %87, %90 : vector<64x256xf32>
    %92 = vector.shape_cast %91 : vector<64x256xf32> to vector<8x8x256xf32>
    %93 = vector.extract_strided_slice %64 {offsets = [0, 0], sizes = [64, 256], strides = [1, 1]} : vector<64x512xf32> to vector<64x256xf32>
    %94 = vector.extract_strided_slice %64 {offsets = [0, 256], sizes = [64, 256], strides = [1, 1]} : vector<64x512xf32> to vector<64x256xf32>
    %95 = arith.maximumf %93, %94 : vector<64x256xf32>
    %96 = vector.extract_strided_slice %84 {offsets = [0, 0], sizes = [64, 256], strides = [1, 1]} : vector<64x512xf32> to vector<64x256xf32>
    %97 = vector.extract_strided_slice %84 {offsets = [0, 256], sizes = [64, 256], strides = [1, 1]} : vector<64x512xf32> to vector<64x256xf32>
    %98 = arith.maximumf %96, %97 : vector<64x256xf32>
    %99 = arith.maximumf %95, %98 : vector<64x256xf32>
    %100 = vector.shape_cast %99 : vector<64x256xf32> to vector<8x8x256xf32>
    %cst_17 = arith.constant 0.000000e+00 : f32
    %101 = vector.broadcast %cst_17 : f32 to vector<8x1x256xf32>
    %cst_18 = arith.constant 0.000000e+00 : f32
    %102 = vector.broadcast %cst_18 : f32 to vector<8x2x256xf32>
    %103 = vector.extract_strided_slice %92 {offsets = [0, 0, 0], sizes = [8, 7, 256], strides = [1, 1, 1]} : vector<8x8x256xf32> to vector<8x7x256xf32>
    %104 = tpu.concatenate %101, %103 in 1 : vector<8x1x256xf32>, vector<8x7x256xf32> -> vector<8x8x256xf32>
    %105 = vector.shape_cast %104 : vector<8x8x256xf32> to vector<64x256xf32>
    %106 = arith.truncf %105 : vector<64x256xf32> to vector<64x256xbf16>
    %107 = vector.extract_strided_slice %100 {offsets = [0, 0, 0], sizes = [8, 7, 256], strides = [1, 1, 1]} : vector<8x8x256xf32> to vector<8x7x256xf32>
    %108 = tpu.concatenate %101, %107 in 1 : vector<8x1x256xf32>, vector<8x7x256xf32> -> vector<8x8x256xf32>
    %109 = vector.shape_cast %108 : vector<8x8x256xf32> to vector<64x256xf32>
    %110 = arith.truncf %109 : vector<64x256xf32> to vector<64x256xbf16>
    %111 = vector.shape_cast %92 : vector<8x8x256xf32> to vector<64x256xf32>
    %112 = arith.truncf %111 : vector<64x256xf32> to vector<64x256xbf16>
    %113 = vector.shape_cast %100 : vector<8x8x256xf32> to vector<64x256xf32>
    %114 = arith.truncf %113 : vector<64x256xf32> to vector<64x256xbf16>
    %115 = vector.extract_strided_slice %92 {offsets = [0, 1, 0], sizes = [8, 6, 256], strides = [1, 1, 1]} : vector<8x8x256xf32> to vector<8x6x256xf32>
    %116 = tpu.concatenate %115, %102 in 1 : vector<8x6x256xf32>, vector<8x2x256xf32> -> vector<8x8x256xf32>
    %117 = vector.shape_cast %116 : vector<8x8x256xf32> to vector<64x256xf32>
    %118 = arith.truncf %117 : vector<64x256xf32> to vector<64x256xbf16>
    %119 = vector.extract_strided_slice %100 {offsets = [0, 1, 0], sizes = [8, 6, 256], strides = [1, 1, 1]} : vector<8x8x256xf32> to vector<8x6x256xf32>
    %120 = tpu.concatenate %119, %102 in 1 : vector<8x6x256xf32>, vector<8x2x256xf32> -> vector<8x8x256xf32>
    %121 = vector.shape_cast %120 : vector<8x8x256xf32> to vector<64x256xf32>
    %122 = arith.truncf %121 : vector<64x256xf32> to vector<64x256xbf16>
    %c0_19 = arith.constant 0 : index
    %c0_20 = arith.constant 0 : index
    %123 = vector.load %arg5[%c0_19, %c0_20] : memref<1280x512xbf16, #tpu.memory_space<vmem>>, vector<256x512xbf16>
    %cst_21 = arith.constant dense<0.000000e+00> : vector<64x512xf32>
    %124 = tpu.matmul %106, %123, %cst_21 {dimension_numbers = #tpu.dot_dimension_numbers<[1], [0], [0], [1], [0, 0, 1, 1], [], []>} : vector<64x256xbf16>, vector<256x512xbf16>, vector<64x512xf32> -> vector<64x512xf32>
    %cst_22 = arith.constant dense<0.000000e+00> : vector<64x512xf32>
    %125 = tpu.matmul %110, %123, %cst_22 {dimension_numbers = #tpu.dot_dimension_numbers<[1], [0], [0], [1], [0, 0, 1, 1], [], []>} : vector<64x256xbf16>, vector<256x512xbf16>, vector<64x512xf32> -> vector<64x512xf32>
    %c256 = arith.constant 256 : index
    %c0_23 = arith.constant 0 : index
    %126 = vector.load %arg5[%c256, %c0_23] : memref<1280x512xbf16, #tpu.memory_space<vmem>>, vector<256x512xbf16>
    %cst_24 = arith.constant dense<0.000000e+00> : vector<64x512xf32>
    %127 = tpu.matmul %110, %126, %cst_24 {dimension_numbers = #tpu.dot_dimension_numbers<[1], [0], [0], [1], [0, 0, 1, 1], [], []>} : vector<64x256xbf16>, vector<256x512xbf16>, vector<64x512xf32> -> vector<64x512xf32>
    %cst_25 = arith.constant dense<0.000000e+00> : vector<64x512xf32>
    %128 = tpu.matmul %112, %126, %cst_25 {dimension_numbers = #tpu.dot_dimension_numbers<[1], [0], [0], [1], [0, 0, 1, 1], [], []>} : vector<64x256xbf16>, vector<256x512xbf16>, vector<64x512xf32> -> vector<64x512xf32>
    %129 = arith.addf %124, %127 : vector<64x512xf32>
    %130 = arith.addf %125, %128 : vector<64x512xf32>
    %c512 = arith.constant 512 : index
    %c0_26 = arith.constant 0 : index
    %131 = vector.load %arg5[%c512, %c0_26] : memref<1280x512xbf16, #tpu.memory_space<vmem>>, vector<256x512xbf16>
    %cst_27 = arith.constant dense<0.000000e+00> : vector<64x512xf32>
    %132 = tpu.matmul %112, %131, %cst_27 {dimension_numbers = #tpu.dot_dimension_numbers<[1], [0], [0], [1], [0, 0, 1, 1], [], []>} : vector<64x256xbf16>, vector<256x512xbf16>, vector<64x512xf32> -> vector<64x512xf32>
    %cst_28 = arith.constant dense<0.000000e+00> : vector<64x512xf32>
    %133 = tpu.matmul %114, %131, %cst_28 {dimension_numbers = #tpu.dot_dimension_numbers<[1], [0], [0], [1], [0, 0, 1, 1], [], []>} : vector<64x256xbf16>, vector<256x512xbf16>, vector<64x512xf32> -> vector<64x512xf32>
    %134 = arith.addf %129, %132 : vector<64x512xf32>
    %135 = arith.addf %130, %133 : vector<64x512xf32>
    %c768 = arith.constant 768 : index
    %c0_29 = arith.constant 0 : index
    %136 = vector.load %arg5[%c768, %c0_29] : memref<1280x512xbf16, #tpu.memory_space<vmem>>, vector<256x512xbf16>
    %cst_30 = arith.constant dense<0.000000e+00> : vector<64x512xf32>
    %137 = tpu.matmul %114, %136, %cst_30 {dimension_numbers = #tpu.dot_dimension_numbers<[1], [0], [0], [1], [0, 0, 1, 1], [], []>} : vector<64x256xbf16>, vector<256x512xbf16>, vector<64x512xf32> -> vector<64x512xf32>
    %cst_31 = arith.constant dense<0.000000e+00> : vector<64x512xf32>
    %138 = tpu.matmul %118, %136, %cst_31 {dimension_numbers = #tpu.dot_dimension_numbers<[1], [0], [0], [1], [0, 0, 1, 1], [], []>} : vector<64x256xbf16>, vector<256x512xbf16>, vector<64x512xf32> -> vector<64x512xf32>
    %139 = arith.addf %134, %137 : vector<64x512xf32>
    %140 = arith.addf %135, %138 : vector<64x512xf32>
    %c1024 = arith.constant 1024 : index
    %c0_32 = arith.constant 0 : index
    %141 = vector.load %arg5[%c1024, %c0_32] : memref<1280x512xbf16, #tpu.memory_space<vmem>>, vector<256x512xbf16>
    %cst_33 = arith.constant dense<0.000000e+00> : vector<64x512xf32>
    %142 = tpu.matmul %118, %141, %cst_33 {dimension_numbers = #tpu.dot_dimension_numbers<[1], [0], [0], [1], [0, 0, 1, 1], [], []>} : vector<64x256xbf16>, vector<256x512xbf16>, vector<64x512xf32> -> vector<64x512xf32>
    %cst_34 = arith.constant dense<0.000000e+00> : vector<64x512xf32>
    %143 = tpu.matmul %122, %141, %cst_34 {dimension_numbers = #tpu.dot_dimension_numbers<[1], [0], [0], [1], [0, 0, 1, 1], [], []>} : vector<64x256xbf16>, vector<256x512xbf16>, vector<64x512xf32> -> vector<64x512xf32>
    %144 = arith.addf %139, %142 : vector<64x512xf32>
    %145 = arith.addf %140, %143 : vector<64x512xf32>
    %c0_35 = arith.constant 0 : index
    %c0_36 = arith.constant 0 : index
    %146 = vector.load %arg6[%c0_35, %c0_36] : memref<1x512xf32, #tpu.memory_space<vmem>>, vector<1x512xf32>
    %c0_37 = arith.constant 0 : index
    %c0_38 = arith.constant 0 : index
    %147 = vector.load %arg7[%c0_37, %c0_38] : memref<1x512xf32, #tpu.memory_space<vmem>>, vector<1x512xf32>
    %148 = vector.broadcast %146 : vector<1x512xf32> to vector<64x512xf32>
    %149 = arith.mulf %144, %148 : vector<64x512xf32>
    %150 = vector.broadcast %147 : vector<1x512xf32> to vector<64x512xf32>
    %151 = arith.addf %149, %150 : vector<64x512xf32>
    %cst_39 = arith.constant 0.000000e+00 : f32
    %152 = vector.broadcast %cst_39 : f32 to vector<64x512xf32>
    %153 = arith.maximumf %151, %152 : vector<64x512xf32>
    %154 = vector.broadcast %146 : vector<1x512xf32> to vector<64x512xf32>
    %155 = arith.mulf %145, %154 : vector<64x512xf32>
    %156 = vector.broadcast %147 : vector<1x512xf32> to vector<64x512xf32>
    %157 = arith.addf %155, %156 : vector<64x512xf32>
    %cst_40 = arith.constant 0.000000e+00 : f32
    %158 = vector.broadcast %cst_40 : f32 to vector<64x512xf32>
    %159 = arith.maximumf %157, %158 : vector<64x512xf32>
    %160 = vector.extract_strided_slice %153 {offsets = [0, 0], sizes = [64, 256], strides = [1, 1]} : vector<64x512xf32> to vector<64x256xf32>
    %161 = vector.extract_strided_slice %153 {offsets = [0, 256], sizes = [64, 256], strides = [1, 1]} : vector<64x512xf32> to vector<64x256xf32>
    %162 = arith.maximumf %160, %161 : vector<64x256xf32>
    %163 = vector.extract_strided_slice %159 {offsets = [0, 0], sizes = [64, 256], strides = [1, 1]} : vector<64x512xf32> to vector<64x256xf32>
    %164 = vector.extract_strided_slice %159 {offsets = [0, 256], sizes = [64, 256], strides = [1, 1]} : vector<64x512xf32> to vector<64x256xf32>
    %165 = arith.maximumf %163, %164 : vector<64x256xf32>
    %166 = arith.maximumf %162, %165 : vector<64x256xf32>
    %167 = vector.shape_cast %166 : vector<64x256xf32> to vector<8x8x256xf32>
    %168 = vector.extract_strided_slice %167 {offsets = [0, 0, 0], sizes = [8, 1, 256], strides = [1, 1, 1]} : vector<8x8x256xf32> to vector<8x1x256xf32>
    %169 = vector.shape_cast %168 : vector<8x1x256xf32> to vector<8x256xf32>
    %170 = vector.extract_strided_slice %167 {offsets = [0, 1, 0], sizes = [8, 1, 256], strides = [1, 1, 1]} : vector<8x8x256xf32> to vector<8x1x256xf32>
    %171 = vector.shape_cast %170 : vector<8x1x256xf32> to vector<8x256xf32>
    %172 = vector.extract_strided_slice %167 {offsets = [0, 2, 0], sizes = [8, 1, 256], strides = [1, 1, 1]} : vector<8x8x256xf32> to vector<8x1x256xf32>
    %173 = vector.shape_cast %172 : vector<8x1x256xf32> to vector<8x256xf32>
    %174 = vector.extract_strided_slice %167 {offsets = [0, 3, 0], sizes = [8, 1, 256], strides = [1, 1, 1]} : vector<8x8x256xf32> to vector<8x1x256xf32>
    %175 = vector.shape_cast %174 : vector<8x1x256xf32> to vector<8x256xf32>
    %176 = vector.extract_strided_slice %167 {offsets = [0, 4, 0], sizes = [8, 1, 256], strides = [1, 1, 1]} : vector<8x8x256xf32> to vector<8x1x256xf32>
    %177 = vector.shape_cast %176 : vector<8x1x256xf32> to vector<8x256xf32>
    %178 = vector.extract_strided_slice %167 {offsets = [0, 5, 0], sizes = [8, 1, 256], strides = [1, 1, 1]} : vector<8x8x256xf32> to vector<8x1x256xf32>
    %179 = vector.shape_cast %178 : vector<8x1x256xf32> to vector<8x256xf32>
    %180 = vector.extract_strided_slice %167 {offsets = [0, 6, 0], sizes = [8, 1, 256], strides = [1, 1, 1]} : vector<8x8x256xf32> to vector<8x1x256xf32>
    %181 = vector.shape_cast %180 : vector<8x1x256xf32> to vector<8x256xf32>
    %182 = tpu.concatenate %169, %171, %173, %175, %177, %179, %181 in 1 : vector<8x256xf32>, vector<8x256xf32>, vector<8x256xf32>, vector<8x256xf32>, vector<8x256xf32>, vector<8x256xf32>, vector<8x256xf32> -> vector<8x1792xf32>
    %183 = arith.truncf %182 : vector<8x1792xf32> to vector<8x1792xbf16>
    %c0_41 = arith.constant 0 : index
    %c0_42 = arith.constant 0 : index
    %184 = vector.load %arg8[%c0_41, %c0_42] : memref<1792x128xbf16, #tpu.memory_space<vmem>>, vector<1792x128xbf16>
    %cst_43 = arith.constant dense<0.000000e+00> : vector<8x128xf32>
    %185 = tpu.matmul %183, %184, %cst_43 {dimension_numbers = #tpu.dot_dimension_numbers<[1], [0], [0], [1], [0, 0, 1, 1], [], []>} : vector<8x1792xbf16>, vector<1792x128xbf16>, vector<8x128xf32> -> vector<8x128xf32>
    %c0_44 = arith.constant 0 : index
    %c0_45 = arith.constant 0 : index
    %186 = vector.load %arg9[%c0_44, %c0_45] : memref<1x128xf32, #tpu.memory_space<vmem>>, vector<1x128xf32>
    %187 = vector.broadcast %186 : vector<1x128xf32> to vector<8x128xf32>
    %188 = arith.addf %185, %187 : vector<8x128xf32>
    %c0_46 = arith.constant 0 : index
    %c0_47 = arith.constant 0 : index
    %189 = vector.load %arg10[%c0_46, %c0_47] : memref<8x128xf32, #tpu.memory_space<vmem>>, vector<8x128xf32>
    tpu.vector_store %arg10[%c0_46, %c0_47], %188 {strides = array<i32>} : memref<8x128xf32, #tpu.memory_space<vmem>>, vector<8x128xf32>,
    return
  }
  func.func @transform_0(%arg0: i32) -> (i32, i32, i32, i32) {
    %c0_i32 = arith.constant 0 : i32
    %c0_i32_0 = arith.constant 0 : i32
    %c0_i32_1 = arith.constant 0 : i32
    %c0_i32_2 = arith.constant 0 : i32
    return %arg0, %c0_i32, %c0_i32_0, %c0_i32_1 : i32, i32, i32, i32
  }
  func.func @transform_1(%arg0: i32) -> (i32, i32) {
    %c0_i32 = arith.constant 0 : i32
    %c0_i32_0 = arith.constant 0 : i32
    %c0_i32_1 = arith.constant 0 : i32
    return %c0_i32, %c0_i32_0 : i32, i32
  }
  func.func @transform_2(%arg0: i32) -> (i32, i32) {
    %c0_i32 = arith.constant 0 : i32
    %c0_i32_0 = arith.constant 0 : i32
    %c0_i32_1 = arith.constant 0 : i32
    return %c0_i32, %c0_i32_0 : i32, i32
  }
  func.func @transform_3(%arg0: i32) -> (i32, i32) {
    %c0_i32 = arith.constant 0 : i32
    %c0_i32_0 = arith.constant 0 : i32
    %c0_i32_1 = arith.constant 0 : i32
    return %c0_i32, %c0_i32_0 : i32, i32
  }
  func.func @transform_4(%arg0: i32) -> (i32, i32) {
    %c0_i32 = arith.constant 0 : i32
    %c0_i32_0 = arith.constant 0 : i32
    %c0_i32_1 = arith.constant 0 : i32
    return %c0_i32, %c0_i32_0 : i32, i32
  }
  func.func @transform_5(%arg0: i32) -> (i32, i32) {
    %c0_i32 = arith.constant 0 : i32
    %c0_i32_0 = arith.constant 0 : i32
    %c0_i32_1 = arith.constant 0 : i32
    return %c0_i32, %c0_i32_0 : i32, i32
  }
  func.func @transform_6(%arg0: i32) -> (i32, i32) {
    %c0_i32 = arith.constant 0 : i32
    %c0_i32_0 = arith.constant 0 : i32
    %c0_i32_1 = arith.constant 0 : i32
    return %c0_i32, %c0_i32_0 : i32, i32
  }
  func.func @transform_7(%arg0: i32) -> (i32, i32) {
    %c0_i32 = arith.constant 0 : i32
    %c0_i32_0 = arith.constant 0 : i32
    %c0_i32_1 = arith.constant 0 : i32
    return %c0_i32, %c0_i32_0 : i32, i32
  }
  func.func @transform_8(%arg0: i32) -> (i32, i32) {
    %c0_i32 = arith.constant 0 : i32
    %c0_i32_0 = arith.constant 0 : i32
    %c0_i32_1 = arith.constant 0 : i32
    return %c0_i32, %c0_i32_0 : i32, i32
  }
  func.func @transform_9(%arg0: i32) -> (i32, i32) {
    %c0_i32 = arith.constant 0 : i32
    %c0_i32_0 = arith.constant 0 : i32
    return %arg0, %c0_i32 : i32, i32
  }
}

</mosaic_0001>

<llo_original>
// kernel: forward.1
$region0: #{forward.1}
  #allocation0 [shape = 'u32[]', space=smem, size = 0x4, offset = 0x4, fixed_abs, tag = 'smem constant byte address 0x4 - core index']
  #allocation1 [shape = 'u32[144,128]{1,0:T(1,128)}', space=vmem, size = 0x12000, scoped, tag = 'internal scratch']
  %s0 = inlined_call_operand.vmem [shape: f32[16,4,9,32], index: 0, kind: input, shape index: {}]
  %s1 = inlined_call_operand.hbm [shape: bf16[256,512], index: 1, kind: input, shape index: {}]
  %s2 = inlined_call_operand.vmem [shape: f32[1,512], index: 2, kind: input, shape index: {}]
  %s3 = inlined_call_operand.vmem [shape: f32[1,512], index: 3, kind: input, shape index: {}]
  %s4 = inlined_call_operand.vmem [shape: bf16[1280,512], index: 4, kind: input, shape index: {}]
  %s5 = inlined_call_operand.vmem [shape: f32[1,512], index: 5, kind: input, shape index: {}]
  %s6 = inlined_call_operand.vmem [shape: f32[1,512], index: 6, kind: input, shape index: {}]
  %s7 = inlined_call_operand.vmem [shape: bf16[1792,128], index: 7, kind: input, shape index: {}]
  %s8 = inlined_call_operand.vmem [shape: f32[1,128], index: 8, kind: input, shape index: {}]
  %s9 = inlined_call_operand.hbm [shape: f32[16,128], index: 9, kind: output, shape index: {}]
  %s10 = sld [smem:[#allocation0]]
  $region73: #{forward.1} parent=0
    _
  %s12 = ssub.s32 1, %s10
  %s13 = scalar_select 0, %s12, %s10
  $region1: #{forward.1} parent=0
    #allocation2 [shape = 'u8[262144]{0}', space=vmem, size = 0x40000, scoped, tag = 'input window, operand 1, single buffered']
    #allocation3 [shape = 's32[2]{0}', space=sflag, size = 0x8, scoped, tag = 'scoped memory for forward.1']
    #allocation4 [shape = 's32[2]{0}', space=sflag, size = 0x8, scoped, tag = 'scoped memory for forward.1']
    #allocation5 [shape = 'u8[8192]{0}', space=vmem, size = 0x2000, scoped, tag = 'output window, operand 0']
    %14 = vsyncpa [#allocation3], 0
    %15 = vsyncpa [#allocation4], 0
    %s16 = scalar_lea.sflag [#allocation4], 1
    %17 = vsyncpa %s16, 0
    loop: start=0, step=1, limit=4
    $region2: #{forward.1} parent=1 // loop_pre_header
      _
    $region3: #{forward.1} parent=1 // loop_header
      %s19 = sphi 0, %s23
      %p20 = scmp.ge.s32.totalorder %s19, 4
      %s29 = sphi 0, %s31
      %s32 = sphi 0, %s29
      %s33 = sphi 0, %s32
      %s49 = sphi 0, %s33
      %s53 = sphi 0, %s53
      %s55 = sphi 0, %s53
      %s56 = sphi 0, %s55
      %s70 = sphi 0, %s56
      %s74 = sphi 0, %s74
      %s76 = sphi 0, %s74
      %s77 = sphi 0, %s76
      %s91 = sphi 0, %s77
      %s95 = sphi 0, %s95
      %s97 = sphi 0, %s95
      %s98 = sphi 0, %s97
      %s112 = sphi 0, %s98
      %s116 = sphi 0, %s116
      %s118 = sphi 0, %s116
      %s119 = sphi 0, %s118
      %s133 = sphi 0, %s119
      %s137 = sphi 0, %s137
      %s139 = sphi 0, %s137
      %s140 = sphi 0, %s139
      %s154 = sphi 0, %s140
      %s158 = sphi 0, %s158
      %s160 = sphi 0, %s158
      %s161 = sphi 0, %s160
      %s175 = sphi 0, %s161
      %s179 = sphi 0, %s179
      %s181 = sphi 0, %s179
      %s182 = sphi 0, %s181
      %s196 = sphi 0, %s182
      %s200 = sphi 0, %s200
      %s202 = sphi 0, %s200
      %s203 = sphi 0, %s202
      %s217 = sphi 0, %s203
      %s223 = sphi 0, %s225
      %s226 = sphi 0, %s223
      %s227 = sphi 0, %s226
      %s243 = sphi 0, %s227
    $region4: #{forward.1} parent=1 // loop_header_branch
      %22 = sbr.rel (%p20) target = $region8
    $region5: #{forward.1} parent=1 // loop_body
      %s24 = ssub.s32 %s19, 1
      %s25 = ssub.s32 %s19, 2
      %s26 = sadd.s32 %s19, 1
      %s27 = ssub.s32 %s19, %s26
      %p28 = scmp.eq.s32.totalorder %s27, 0
      %s30 = sadd.s32 %s29, 1
      %s31 = scalar_select %p28, %s29, %s30
      %p34 = pneg %p28
      %p35 = scmp.eq.s32.totalorder %s19, 1
      %p36 = por %p34, %p35
      %p37 = scmp.ne.s32.totalorder %s29, %s32
      %p38 = scmp.eq.s32.totalorder %s19, 0
      %p39 = por %p37, %p38
      %p40 = scmp.ne.s32.totalorder %s29, %s32
      %p41 = scmp.eq.s32.totalorder %s24, 1
      %p42 = por %p40, %p41
      %p43 = scmp.ne.s32.totalorder %s32, %s33
      %p44 = scmp.eq.s32.totalorder %s24, 0
      %p45 = por %p43, %p44
      %p46 = scmp.ne.s32.totalorder %s32, %s33
      %p47 = scmp.eq.s32.totalorder %s25, 1
      %p48 = por %p46, %p47
      %p50 = scmp.ne.s32.totalorder %s33, %s49
      %p51 = scmp.eq.s32.totalorder %s25, 0
      %p52 = por %p50, %p51
      %s54 = sadd.s32 %s53, 1
      %p57 = scmp.eq.s32.totalorder %s19, 1
      %p58 = scmp.ne.s32.totalorder %s53, %s55
      %p59 = scmp.eq.s32.totalorder %s19, 0
      %p60 = por %p58, %p59
      %p61 = scmp.ne.s32.totalorder %s53, %s55
      %p62 = scmp.eq.s32.totalorder %s24, 1
      %p63 = por %p61, %p62
      %p64 = scmp.ne.s32.totalorder %s55, %s56
      %p65 = scmp.eq.s32.totalorder %s24, 0
      %p66 = por %p64, %p65
      %p67 = scmp.ne.s32.totalorder %s55, %s56
      %p68 = scmp.eq.s32.totalorder %s25, 1
      %p69 = por %p67, %p68
      %p71 = scmp.ne.s32.totalorder %s56, %s70
      %p72 = scmp.eq.s32.totalorder %s25, 0
      %p73 = por %p71, %p72
      %s75 = sadd.s32 %s74, 1
      %p78 = scmp.eq.s32.totalorder %s19, 1
      %p79 = scmp.ne.s32.totalorder %s74, %s76
      %p80 = scmp.eq.s32.totalorder %s19, 0
      %p81 = por %p79, %p80
      %p82 = scmp.ne.s32.totalorder %s74, %s76
      %p83 = scmp.eq.s32.totalorder %s24, 1
      %p84 = por %p82, %p83
      %p85 = scmp.ne.s32.totalorder %s76, %s77
      %p86 = scmp.eq.s32.totalorder %s24, 0
      %p87 = por %p85, %p86
      %p88 = scmp.ne.s32.totalorder %s76, %s77
      %p89 = scmp.eq.s32.totalorder %s25, 1
      %p90 = por %p88, %p89
      %p92 = scmp.ne.s32.totalorder %s77, %s91
      %p93 = scmp.eq.s32.totalorder %s25, 0
      %p94 = por %p92, %p93
      %s96 = sadd.s32 %s95, 1
      %p99 = scmp.eq.s32.totalorder %s19, 1
      %p100 = scmp.ne.s32.totalorder %s95, %s97
      %p101 = scmp.eq.s32.totalorder %s19, 0
      %p102 = por %p100, %p101
      %p103 = scmp.ne.s32.totalorder %s95, %s97
      %p104 = scmp.eq.s32.totalorder %s24, 1
      %p105 = por %p103, %p104
      %p106 = scmp.ne.s32.totalorder %s97, %s98
      %p107 = scmp.eq.s32.totalorder %s24, 0
      %p108 = por %p106, %p107
      %p109 = scmp.ne.s32.totalorder %s97, %s98
      %p110 = scmp.eq.s32.totalorder %s25, 1
      %p111 = por %p109, %p110
      %p113 = scmp.ne.s32.totalorder %s98, %s112
      %p114 = scmp.eq.s32.totalorder %s25, 0
      %p115 = por %p113, %p114
      %s117 = sadd.s32 %s116, 1
      %p120 = scmp.eq.s32.totalorder %s19, 1
      %p121 = scmp.ne.s32.totalorder %s116, %s118
      %p122 = scmp.eq.s32.totalorder %s19, 0
      %p123 = por %p121, %p122
      %p124 = scmp.ne.s32.totalorder %s116, %s118
      %p125 = scmp.eq.s32.totalorder %s24, 1
      %p126 = por %p124, %p125
      %p127 = scmp.ne.s32.totalorder %s118, %s119
      %p128 = scmp.eq.s32.totalorder %s24, 0
      %p129 = por %p127, %p128
      %p130 = scmp.ne.s32.totalorder %s118, %s119
      %p131 = scmp.eq.s32.totalorder %s25, 1
      %p132 = por %p130, %p131
      %p134 = scmp.ne.s32.totalorder %s119, %s133
      %p135 = scmp.eq.s32.totalorder %s25, 0
      %p136 = por %p134, %p135
      %s138 = sadd.s32 %s137, 1
      %p141 = scmp.eq.s32.totalorder %s19, 1
      %p142 = scmp.ne.s32.totalorder %s137, %s139
      %p143 = scmp.eq.s32.totalorder %s19, 0
      %p144 = por %p142, %p143
      %p145 = scmp.ne.s32.totalorder %s137, %s139
      %p146 = scmp.eq.s32.totalorder %s24, 1
      %p147 = por %p145, %p146
      %p148 = scmp.ne.s32.totalorder %s139, %s140
      %p149 = scmp.eq.s32.totalorder %s24, 0
      %p150 = por %p148, %p149
      %p151 = scmp.ne.s32.totalorder %s139, %s140
      %p152 = scmp.eq.s32.totalorder %s25, 1
      %p153 = por %p151, %p152
      %p155 = scmp.ne.s32.totalorder %s140, %s154
      %p156 = scmp.eq.s32.totalorder %s25, 0
      %p157 = por %p155, %p156
      %s159 = sadd.s32 %s158, 1
      %p162 = scmp.eq.s32.totalorder %s19, 1
      %p163 = scmp.ne.s32.totalorder %s158, %s160
      %p164 = scmp.eq.s32.totalorder %s19, 0
      %p165 = por %p163, %p164
      %p166 = scmp.ne.s32.totalorder %s158, %s160
      %p167 = scmp.eq.s32.totalorder %s24, 1
      %p168 = por %p166, %p167
      %p169 = scmp.ne.s32.totalorder %s160, %s161
      %p170 = scmp.eq.s32.totalorder %s24, 0
      %p171 = por %p169, %p170
      %p172 = scmp.ne.s32.totalorder %s160, %s161
      %p173 = scmp.eq.s32.totalorder %s25, 1
      %p174 = por %p172, %p173
      %p176 = scmp.ne.s32.totalorder %s161, %s175
      %p177 = scmp.eq.s32.totalorder %s25, 0
      %p178 = por %p176, %p177
      %s180 = sadd.s32 %s179, 1
      %p183 = scmp.eq.s32.totalorder %s19, 1
      %p184 = scmp.ne.s32.totalorder %s179, %s181
      %p185 = scmp.eq.s32.totalorder %s19, 0
      %p186 = por %p184, %p185
      %p187 = scmp.ne.s32.totalorder %s179, %s181
      %p188 = scmp.eq.s32.totalorder %s24, 1
      %p189 = por %p187, %p188
      %p190 = scmp.ne.s32.totalorder %s181, %s182
      %p191 = scmp.eq.s32.totalorder %s24, 0
      %p192 = por %p190, %p191
      %p193 = scmp.ne.s32.totalorder %s181, %s182
      %p194 = scmp.eq.s32.totalorder %s25, 1
      %p195 = por %p193, %p194
      %p197 = scmp.ne.s32.totalorder %s182, %s196
      %p198 = scmp.eq.s32.totalorder %s25, 0
      %p199 = por %p197, %p198
      %s201 = sadd.s32 %s200, 1
      %p204 = scmp.eq.s32.totalorder %s19, 1
      %p205 = scmp.ne.s32.totalorder %s200, %s202
      %p206 = scmp.eq.s32.totalorder %s19, 0
      %p207 = por %p205, %p206
      %p208 = scmp.ne.s32.totalorder %s200, %s202
      %p209 = scmp.eq.s32.totalorder %s24, 1
      %p210 = por %p208, %p209
      %p211 = scmp.ne.s32.totalorder %s202, %s203
      %p212 = scmp.eq.s32.totalorder %s24, 0
      %p213 = por %p211, %p212
      %p214 = scmp.ne.s32.totalorder %s202, %s203
      %p215 = scmp.eq.s32.totalorder %s25, 1
      %p216 = por %p214, %p215
      %p218 = scmp.ne.s32.totalorder %s203, %s217
      %p219 = scmp.eq.s32.totalorder %s25, 0
      %p220 = por %p218, %p219
      %s221 = ssub.s32 %s19, %s26
      %p222 = scmp.eq.s32.totalorder %s221, 0
      %s224 = sadd.s32 %s223, 1
      %s225 = scalar_select %p222, %s223, %s224
      %p228 = pneg %p222
      %p229 = scmp.eq.s32.totalorder %s19, 1
      %p230 = por %p228, %p229
      %p231 = scmp.ne.s32.totalorder %s223, %s226
      %p232 = scmp.eq.s32.totalorder %s19, 0
      %p233 = por %p231, %p232
      %p234 = scmp.ne.s32.totalorder %s223, %s226
      %p235 = scmp.eq.s32.totalorder %s24, 1
      %p236 = por %p234, %p235
      %p237 = scmp.ne.s32.totalorder %s226, %s227
      %p238 = scmp.eq.s32.totalorder %s24, 0
      %p239 = por %p237, %p238
      %p240 = scmp.ne.s32.totalorder %s226, %s227
      %p241 = scmp.eq.s32.totalorder %s25, 1
      %p242 = por %p240, %p241
      %p244 = scmp.ne.s32.totalorder %s227, %s243
      %p245 = scmp.eq.s32.totalorder %s25, 0
      %p246 = por %p244, %p245
      %p247 = scmp.le.s32.totalorder 1, %s19
      %p248 = scmp.lt.s32.totalorder %s19, 3
      %p249 = pnand %p247, %p248
      %p250 = pneg %p249
      // Predicated region
      $region9: #{forward.1} parent=5 // pred_check
        _
      $region10: #{forward.1} parent=5 // pred_check_branch
        %252 = sbr.rel (%p249) target = $region12
      $region11: #{forward.1} parent=5 // pred_region
        %s253 = ssub.s32 %s19, 1
        // Predicated region
        $region13: #{forward.1} parent=11 // pred_check
          %p254 = pneg %p66
        $region14: #{forward.1} parent=11 // pred_check_branch
          %256 = sbr.rel (%p254) target = $region16
        $region15: #{forward.1} parent=11 // pred_region
          %s258 = ssub.s32 8192, 8192
          %259 = vsyncadd [#allocation3], %s258
          %s260 = sshll.u32 [#allocation2], 4
          %s261 = int_to_ptr.vmem [resolvable:$true] %s260
          %266 = dma.hbm_to_vmem [thread:$0]  %s1, 8192, %s261, [#allocation3], 256, 256, 16
        $region16: #{forward.1} parent=11 // pred_fallthru
          _
        // Predicated region
        $region17: #{forward.1} parent=11 // pred_check
          %p267 = pneg %p87
        $region18: #{forward.1} parent=11 // pred_check_branch
          %269 = sbr.rel (%p267) target = $region20
        $region19: #{forward.1} parent=11 // pred_region
          _
        $region20: #{forward.1} parent=11 // pred_fallthru
          _
        // Predicated region
        $region21: #{forward.1} parent=11 // pred_check
          %p270 = pneg %p108
        $region22: #{forward.1} parent=11 // pred_check_branch
          %272 = sbr.rel (%p270) target = $region24
        $region23: #{forward.1} parent=11 // pred_region
          _
        $region24: #{forward.1} parent=11 // pred_fallthru
          _
        // Predicated region
        $region25: #{forward.1} parent=11 // pred_check
          %p273 = pneg %p129
        $region26: #{forward.1} parent=11 // pred_check_branch
          %275 = sbr.rel (%p273) target = $region28
        $region27: #{forward.1} parent=11 // pred_region
          _
        $region28: #{forward.1} parent=11 // pred_fallthru
          _
        // Predicated region
        $region29: #{forward.1} parent=11 // pred_check
          %p276 = pneg %p150
        $region30: #{forward.1} parent=11 // pred_check_branch
          %278 = sbr.rel (%p276) target = $region32
        $region31: #{forward.1} parent=11 // pred_region
          _
        $region32: #{forward.1} parent=11 // pred_fallthru
          _
        // Predicated region
        $region33: #{forward.1} parent=11 // pred_check
          %p279 = pneg %p171
        $region34: #{forward.1} parent=11 // pred_check_branch
          %281 = sbr.rel (%p279) target = $region36
        $region35: #{forward.1} parent=11 // pred_region
          _
        $region36: #{forward.1} parent=11 // pred_fallthru
          _
        // Predicated region
        $region37: #{forward.1} parent=11 // pred_check
          %p282 = pneg %p192
        $region38: #{forward.1} parent=11 // pred_check_branch
          %284 = sbr.rel (%p282) target = $region40
        $region39: #{forward.1} parent=11 // pred_region
          _
        $region40: #{forward.1} parent=11 // pred_fallthru
          _
        // Predicated region
        $region41: #{forward.1} parent=11 // pred_check
          %p285 = pneg %p213
        $region42: #{forward.1} parent=11 // pred_check_branch
          %287 = sbr.rel (%p285) target = $region44
        $region43: #{forward.1} parent=11 // pred_region
          _
        $region44: #{forward.1} parent=11 // pred_fallthru
          _
      $region12: #{forward.1} parent=5 // pred_fallthru
        _
      %p288 = scmp.lt.s32.totalorder %s19, 2
      // Predicated region
      $region45: #{forward.1} parent=5 // pred_check
        %p289 = pneg %p288
      $region46: #{forward.1} parent=5 // pred_check_branch
        %291 = sbr.rel (%p289) target = $region48
      $region47: #{forward.1} parent=5 // pred_region
        // Predicated region
        $region49: #{forward.1} parent=47 // pred_check
          %p292 = pneg %p39
        $region50: #{forward.1} parent=47 // pred_check_branch
          %294 = sbr.rel (%p292) target = $region52
        $region51: #{forward.1} parent=47 // pred_region
          %s295 = smul.u32 8, %s19
          %p296 = scmp.lt.s32.totalorder %s295, 15
          %s297 = scalar_select %p296, %s295, 15
          %s298 = smul.addr %s297, 8
          %s299 = smul.addr %s298, 8
          %s300 = scalar_lea.vmem %s0, %s299
          %s301 = smul.u32 8, %s19
        $region52: #{forward.1} parent=47 // pred_fallthru
          _
      $region48: #{forward.1} parent=5 // pred_fallthru
        _
      %p302 = scmp.le.s32.totalorder 1, %s19
      %p303 = scmp.lt.s32.totalorder %s19, 3
      %p304 = pnand %p302, %p303
      %p305 = pneg %p304
      // Predicated region
      $region53: #{forward.1} parent=5 // pred_check
        _
      $region54: #{forward.1} parent=5 // pred_check_branch
        %307 = sbr.rel (%p304) target = $region56
      $region55: #{forward.1} parent=5 // pred_region
        %s308 = ssub.s32 %s19, 1
        // Predicated region
        $region57: #{forward.1} parent=55 // pred_check
          %p309 = pneg %p66
        $region58: #{forward.1} parent=55 // pred_check_branch
          %311 = sbr.rel (%p309) target = $region60
        $region59: #{forward.1} parent=55 // pred_region
          %312 = dma.done [#allocation3], 8192
        $region60: #{forward.1} parent=55 // pred_fallthru
          _
        %s313 = smul.u32 8, %s24
        %p314 = scmp.lt.s32.totalorder %s313, 15
        %s315 = scalar_select %p314, %s313, 15
        %s316 = smul.addr %s315, 8
        %s317 = smul.addr %s316, 8
        %s318 = scalar_lea.vmem %s0, %s317
        %p319 = pneg %p45
        %p320 = pneg %p42
        %p321 = pneg %p66
        %p322 = pneg %p63
        %p323 = pneg %p87
        %p324 = pneg %p84
        %p325 = pneg %p108
        %p326 = pneg %p105
        %p327 = pneg %p129
        %p328 = pneg %p126
        %p329 = pneg %p150
        %p330 = pneg %p147
        %p331 = pneg %p171
        %p332 = pneg %p168
        %p333 = pneg %p192
        %p334 = pneg %p189
        %p335 = pneg %p213
        %p336 = pneg %p210
        %p337 = pneg %p239
        %p338 = pneg %p236
        %s339 = sand.u32 %s226, 1
        %s340 = scalar_lea.sflag [#allocation4], %s339
        %s341 = sand.u32 %s226, 1
        %s342 = smul.addr %s341, 8
        %s343 = scalar_lea.vmem [#allocation5], %s342
        %s344 = smul.u32 8, %s24
        %p345 = scmp.lt.s32.totalorder %s344, 15
        %s346 = scalar_select %p345, %s344, 15
        %s347 = smul.addr %s346, 8
        %s348 = smul.addr %s347, 8
        %s349 = scalar_lea.vmem %s0, %s348
        %s350 = smul.u32 8, %s24
        %v352 = vld [vmem:[%s349] sm:$0xff]
        %v353 = vld [vmem:[%s349 + $0x8] sm:$0x1]
        %v354 = vld [vmem:[%s349 + $0x10] sm:$0xff]
        %v355 = vld [vmem:[%s349 + $0x18] sm:$0x1]
        %v356 = vld [vmem:[%s349 + $0x20] sm:$0xff]
        %v357 = vld [vmem:[%s349 + $0x28] sm:$0x1]
        %v358 = vld [vmem:[%s349 + $0x30] sm:$0xff]
        %v359 = vld [vmem:[%s349 + $0x38] sm:$0x1]
        %v360 = vld [vmem:[%s349 + $0x40] sm:$0xff]
        %v361 = vld [vmem:[%s349 + $0x48] sm:$0x1]
        %v362 = vld [vmem:[%s349 + $0x50] sm:$0xff]
        %v363 = vld [vmem:[%s349 + $0x58] sm:$0x1]
        %v364 = vld [vmem:[%s349 + $0x60] sm:$0xff]
        %v365 = vld [vmem:[%s349 + $0x68] sm:$0x1]
        %v366 = vld [vmem:[%s349 + $0x70] sm:$0xff]
        %v367 = vld [vmem:[%s349 + $0x78] sm:$0x1]
        %v368 = vld [vmem:[%s349 + $0x80] sm:$0xff]
        %v369 = vld [vmem:[%s349 + $0x88] sm:$0x1]
        %v370 = vld [vmem:[%s349 + $0x90] sm:$0xff]
        %v371 = vld [vmem:[%s349 + $0x98] sm:$0x1]
        %v372 = vld [vmem:[%s349 + $0xa0] sm:$0xff]
        %v373 = vld [vmem:[%s349 + $0xa8] sm:$0x1]
        %v374 = vld [vmem:[%s349 + $0xb0] sm:$0xff]
        %v375 = vld [vmem:[%s349 + $0xb8] sm:$0x1]
        %v376 = vld [vmem:[%s349 + $0xc0] sm:$0xff]
        %v377 = vld [vmem:[%s349 + $0xc8] sm:$0x1]
        %v378 = vld [vmem:[%s349 + $0xd0] sm:$0xff]
        %v379 = vld [vmem:[%s349 + $0xd8] sm:$0x1]
        %v380 = vld [vmem:[%s349 + $0xe0] sm:$0xff]
        %v381 = vld [vmem:[%s349 + $0xe8] sm:$0x1]
        %v382 = vld [vmem:[%s349 + $0xf0] sm:$0xff]
        %v383 = vld [vmem:[%s349 + $0xf8] sm:$0x1]
        %v384 = vld [vmem:[%s349 + $0x100] sm:$0xff]
        %v385 = vld [vmem:[%s349 + $0x108] sm:$0x1]
        %v386 = vld [vmem:[%s349 + $0x110] sm:$0xff]
        %v387 = vld [vmem:[%s349 + $0x118] sm:$0x1]
        %v388 = vld [vmem:[%s349 + $0x120] sm:$0xff]
        %v389 = vld [vmem:[%s349 + $0x128] sm:$0x1]
        %v390 = vld [vmem:[%s349 + $0x130] sm:$0xff]
        %v391 = vld [vmem:[%s349 + $0x138] sm:$0x1]
        %v392 = vld [vmem:[%s349 + $0x140] sm:$0xff]
        %v393 = vld [vmem:[%s349 + $0x148] sm:$0x1]
        %v394 = vld [vmem:[%s349 + $0x150] sm:$0xff]
        %v395 = vld [vmem:[%s349 + $0x158] sm:$0x1]
        %v396 = vld [vmem:[%s349 + $0x160] sm:$0xff]
        %v397 = vld [vmem:[%s349 + $0x168] sm:$0x1]
        %v398 = vld [vmem:[%s349 + $0x170] sm:$0xff]
        %v399 = vld [vmem:[%s349 + $0x178] sm:$0x1]
        %v400 = vld [vmem:[%s349 + $0x180] sm:$0xff]
        %v401 = vld [vmem:[%s349 + $0x188] sm:$0x1]
        %v402 = vld [vmem:[%s349 + $0x190] sm:$0xff]
        %v403 = vld [vmem:[%s349 + $0x198] sm:$0x1]
        %v404 = vld [vmem:[%s349 + $0x1a0] sm:$0xff]
        %v405 = vld [vmem:[%s349 + $0x1a8] sm:$0x1]
        %v406 = vld [vmem:[%s349 + $0x1b0] sm:$0xff]
        %v407 = vld [vmem:[%s349 + $0x1b8] sm:$0x1]
        %v408 = vld [vmem:[%s349 + $0x1c0] sm:$0xff]
        %v409 = vld [vmem:[%s349 + $0x1c8] sm:$0x1]
        %v410 = vld [vmem:[%s349 + $0x1d0] sm:$0xff]
        %v411 = vld [vmem:[%s349 + $0x1d8] sm:$0x1]
        %v412 = vld [vmem:[%s349 + $0x1e0] sm:$0xff]
        %v413 = vld [vmem:[%s349 + $0x1e8] sm:$0x1]
        %v414 = vld [vmem:[%s349 + $0x1f0] sm:$0xff]
        %v415 = vld [vmem:[%s349 + $0x1f8] sm:$0x1]
        %v416 = vld [vmem:[#allocation2] sm:$0xff]
        %v417 = vld [vmem:[#allocation2 + $0x8] sm:$0xff]
        %v418 = vld [vmem:[#allocation2 + $0x10] sm:$0xff]
        %v419 = vld [vmem:[#allocation2 + $0x18] sm:$0xff]
        %v420 = vld [vmem:[#allocation2 + $0x20] sm:$0xff]
        %v421 = vld [vmem:[#allocation2 + $0x28] sm:$0xff]
        %v422 = vld [vmem:[#allocation2 + $0x30] sm:$0xff]
        %v423 = vld [vmem:[#allocation2 + $0x38] sm:$0xff]
        %v424 = vld [vmem:[#allocation2 + $0x40] sm:$0xff]
        %v425 = vld [vmem:[#allocation2 + $0x48] sm:$0xff]
        %v426 = vld [vmem:[#allocation2 + $0x50] sm:$0xff]
        %v427 = vld [vmem:[#allocation2 + $0x58] sm:$0xff]
        %v428 = vld [vmem:[#allocation2 + $0x60] sm:$0xff]
        %v429 = vld [vmem:[#allocation2 + $0x68] sm:$0xff]
        %v430 = vld [vmem:[#allocation2 + $0x70] sm:$0xff]
        %v431 = vld [vmem:[#allocation2 + $0x78] sm:$0xff]
        %v432 = vld [vmem:[#allocation2 + $0x80] sm:$0xff]
        %v433 = vld [vmem:[#allocation2 + $0x88] sm:$0xff]
        %v434 = vld [vmem:[#allocation2 + $0x90] sm:$0xff]
        %v435 = vld [vmem:[#allocation2 + $0x98] sm:$0xff]
        %v436 = vld [vmem:[#allocation2 + $0xa0] sm:$0xff]
        %v437 = vld [vmem:[#allocation2 + $0xa8] sm:$0xff]
        %v438 = vld [vmem:[#allocation2 + $0xb0] sm:$0xff]
        %v439 = vld [vmem:[#allocation2 + $0xb8] sm:$0xff]
        %v440 = vld [vmem:[#allocation2 + $0xc0] sm:$0xff]
        %v441 = vld [vmem:[#allocation2 + $0xc8] sm:$0xff]
        %v442 = vld [vmem:[#allocation2 + $0xd0] sm:$0xff]
        %v443 = vld [vmem:[#allocation2 + $0xd8] sm:$0xff]
        %v444 = vld [vmem:[#allocation2 + $0xe0] sm:$0xff]
        %v445 = vld [vmem:[#allocation2 + $0xe8] sm:$0xff]
        %v446 = vld [vmem:[#allocation2 + $0xf0] sm:$0xff]
        %v447 = vld [vmem:[#allocation2 + $0xf8] sm:$0xff]
        %v448 = vld [vmem:[#allocation2 + $0x100] sm:$0xff]
        %v449 = vld [vmem:[#allocation2 + $0x108] sm:$0xff]
        %v450 = vld [vmem:[#allocation2 + $0x110] sm:$0xff]
        %v451 = vld [vmem:[#allocation2 + $0x118] sm:$0xff]
        %v452 = vld [vmem:[#allocation2 + $0x120] sm:$0xff]
        %v453 = vld [vmem:[#allocation2 + $0x128] sm:$0xff]
        %v454 = vld [vmem:[#allocation2 + $0x130] sm:$0xff]
        %v455 = vld [vmem:[#allocation2 + $0x138] sm:$0xff]
        %v456 = vld [vmem:[#allocation2 + $0x140] sm:$0xff]
        %v457 = vld [vmem:[#allocation2 + $0x148] sm:$0xff]
        %v458 = vld [vmem:[#allocation2 + $0x150] sm:$0xff]
        %v459 = vld [vmem:[#allocation2 + $0x158] sm:$0xff]
        %v460 = vld [vmem:[#allocation2 + $0x160] sm:$0xff]
        %v461 = vld [vmem:[#allocation2 + $0x168] sm:$0xff]
        %v462 = vld [vmem:[#allocation2 + $0x170] sm:$0xff]
        %v463 = vld [vmem:[#allocation2 + $0x178] sm:$0xff]
        %v464 = vld [vmem:[#allocation2 + $0x180] sm:$0xff]
        %v465 = vld [vmem:[#allocation2 + $0x188] sm:$0xff]
        %v466 = vld [vmem:[#allocation2 + $0x190] sm:$0xff]
        %v467 = vld [vmem:[#allocation2 + $0x198] sm:$0xff]
        %v468 = vld [vmem:[#allocation2 + $0x1a0] sm:$0xff]
        %v469 = vld [vmem:[#allocation2 + $0x1a8] sm:$0xff]
        %v470 = vld [vmem:[#allocation2 + $0x1b0] sm:$0xff]
        %v471 = vld [vmem:[#allocation2 + $0x1b8] sm:$0xff]
        %v472 = vld [vmem:[#allocation2 + $0x1c0] sm:$0xff]
        %v473 = vld [vmem:[#allocation2 + $0x1c8] sm:$0xff]
        %v474 = vld [vmem:[#allocation2 + $0x1d0] sm:$0xff]
        %v475 = vld [vmem:[#allocation2 + $0x1d8] sm:$0xff]
        %v476 = vld [vmem:[#allocation2 + $0x1e0] sm:$0xff]
        %v477 = vld [vmem:[#allocation2 + $0x1e8] sm:$0xff]
        %v478 = vld [vmem:[#allocation2 + $0x1f0] sm:$0xff]
        %v479 = vld [vmem:[#allocation2 + $0x1f8] sm:$0xff]
        %v480 = vld [vmem:[%s2] sm:$0xf]
        %v481 = vld [vmem:[%s3] sm:$0xf]
        %490 = vrot.lane.b32.xlu0 %v354, 32
        %v491 = vpop.permute.xlu0 %490
        %492 = vrot.lane.b32.xlu0 %v362, 32
        %v493 = vpop.permute.xlu0 %492
        %494 = vrot.lane.b32.xlu0 %v370, 32
        %v495 = vpop.permute.xlu0 %494
        %496 = vrot.lane.b32.xlu0 %v378, 32
        %v497 = vpop.permute.xlu0 %496
        %498 = vrot.lane.b32.xlu0 %v386, 32
        %v499 = vpop.permute.xlu0 %498
        %500 = vrot.lane.b32.xlu0 %v394, 32
        %v501 = vpop.permute.xlu0 %500
        %502 = vrot.lane.b32.xlu0 %v402, 32
        %v503 = vpop.permute.xlu0 %502
        %504 = vrot.lane.b32.xlu0 %v410, 32
        %v505 = vpop.permute.xlu0 %504
        %522 = vrot.lane.b32.xlu0 %v356, 64
        %v523 = vpop.permute.xlu0 %522
        %524 = vrot.lane.b32.xlu0 %v364, 64
        %v525 = vpop.permute.xlu0 %524
        %526 = vrot.lane.b32.xlu0 %v372, 64
        %v527 = vpop.permute.xlu0 %526
        %528 = vrot.lane.b32.xlu0 %v380, 64
        %v529 = vpop.permute.xlu0 %528
        %530 = vrot.lane.b32.xlu0 %v388, 64
        %v531 = vpop.permute.xlu0 %530
        %532 = vrot.lane.b32.xlu0 %v396, 64
        %v533 = vpop.permute.xlu0 %532
        %534 = vrot.lane.b32.xlu0 %v404, 64
        %v535 = vpop.permute.xlu0 %534
        %536 = vrot.lane.b32.xlu0 %v412, 64
        %v537 = vpop.permute.xlu0 %536
        %554 = vrot.lane.b32.xlu0 %v358, 96
        %v555 = vpop.permute.xlu0 %554
        %556 = vrot.lane.b32.xlu0 %v366, 96
        %v557 = vpop.permute.xlu0 %556
        %558 = vrot.lane.b32.xlu0 %v374, 96
        %v559 = vpop.permute.xlu0 %558
        %560 = vrot.lane.b32.xlu0 %v382, 96
        %v561 = vpop.permute.xlu0 %560
        %562 = vrot.lane.b32.xlu0 %v390, 96
        %v563 = vpop.permute.xlu0 %562
        %564 = vrot.lane.b32.xlu0 %v398, 96
        %v565 = vpop.permute.xlu0 %564
        %566 = vrot.lane.b32.xlu0 %v406, 96
        %v567 = vpop.permute.xlu0 %566
        %568 = vrot.lane.b32.xlu0 %v414, 96
        %v569 = vpop.permute.xlu0 %568
        %vm594 = vcmask 1046528
        %v595 = vrot.slane %v352, 1
        %v596 = vrot.slane %v353, 1
        %v597 = vsel %vm594, %v595, %v596
        %v598 = vrot.slane %v360, 1
        %v599 = vrot.slane %v361, 1
        %v600 = vsel %vm594, %v598, %v599
        %v601 = vrot.slane %v368, 1
        %v602 = vrot.slane %v369, 1
        %v603 = vsel %vm594, %v601, %v602
        %v604 = vrot.slane %v376, 1
        %v605 = vrot.slane %v377, 1
        %v606 = vsel %vm594, %v604, %v605
        %v607 = vrot.slane %v384, 1
        %v608 = vrot.slane %v385, 1
        %v609 = vsel %vm594, %v607, %v608
        %v610 = vrot.slane %v392, 1
        %v611 = vrot.slane %v393, 1
        %v612 = vsel %vm594, %v610, %v611
        %v613 = vrot.slane %v400, 1
        %v614 = vrot.slane %v401, 1
        %v615 = vsel %vm594, %v613, %v614
        %v616 = vrot.slane %v408, 1
        %v617 = vrot.slane %v409, 1
        %v618 = vsel %vm594, %v616, %v617
        %vm627 = vcmask 261120
        %v628 = vsel %vm627, %v352, %v491
        %v629 = vsel %vm627, %v360, %v493
        %v630 = vsel %vm627, %v368, %v495
        %v631 = vsel %vm627, %v376, %v497
        %v632 = vsel %vm627, %v384, %v499
        %v633 = vsel %vm627, %v392, %v501
        %v634 = vsel %vm627, %v400, %v503
        %v635 = vsel %vm627, %v408, %v505
        %vm636 = vcmask 523264
        %v637 = vsel %vm636, %v628, %v523
        %v638 = vsel %vm636, %v629, %v525
        %v639 = vsel %vm636, %v630, %v527
        %v640 = vsel %vm636, %v631, %v529
        %v641 = vsel %vm636, %v632, %v531
        %v642 = vsel %vm636, %v633, %v533
        %v643 = vsel %vm636, %v634, %v535
        %v644 = vsel %vm636, %v635, %v537
        %vm645 = vcmask 785408
        %v646 = vsel %vm645, %v637, %v555
        %v647 = vsel %vm645, %v638, %v557
        %v648 = vsel %vm645, %v639, %v559
        %v649 = vsel %vm645, %v640, %v561
        %v650 = vsel %vm645, %v641, %v563
        %v651 = vsel %vm645, %v642, %v565
        %v652 = vsel %vm645, %v643, %v567
        %v653 = vsel %vm645, %v644, %v569
        %v654 = vsel %vm627, %v597, 0.0
        %v655 = vsel %vm627, %v600, 0.0
        %v656 = vsel %vm627, %v603, 0.0
        %v657 = vsel %vm627, %v606, 0.0
        %v658 = vsel %vm627, %v609, 0.0
        %v659 = vsel %vm627, %v612, 0.0
        %v660 = vsel %vm627, %v615, 0.0
        %v661 = vsel %vm627, %v618, 0.0
        %v662 = vpack.c.bf16 %v647, %v646
        %v663 = vpack.c.bf16 %v655, %v654
        %v664 = vpack.c.bf16 %v649, %v648
        %v665 = vpack.c.bf16 %v657, %v656
        %v666 = vpack.c.bf16 %v651, %v650
        %v667 = vpack.c.bf16 %v659, %v658
        %v668 = vpack.c.bf16 %v653, %v652
        %v669 = vpack.c.bf16 %v661, %v660
        %v734 = vunpack.c.l.b16 %v416
        %v735 = vunpack.c.h.b16 %v416
        %v736 = vunpack.c.l.b16 %v417
        %v737 = vunpack.c.h.b16 %v417
        %v738 = vunpack.c.l.b16 %v418
        %v739 = vunpack.c.h.b16 %v418
        %v740 = vunpack.c.l.b16 %v419
        %v741 = vunpack.c.h.b16 %v419
        %v742 = vunpack.c.l.b16 %v420
        %v743 = vunpack.c.h.b16 %v420
        %v744 = vunpack.c.l.b16 %v421
        %v745 = vunpack.c.h.b16 %v421
        %v746 = vunpack.c.l.b16 %v422
        %v747 = vunpack.c.h.b16 %v422
        %v748 = vunpack.c.l.b16 %v423
        %v749 = vunpack.c.h.b16 %v423
        %v750 = vunpack.c.l.b16 %v424
        %v751 = vunpack.c.h.b16 %v424
        %v752 = vunpack.c.l.b16 %v425
        %v753 = vunpack.c.h.b16 %v425
        %v754 = vunpack.c.l.b16 %v426
        %v755 = vunpack.c.h.b16 %v426
        %v756 = vunpack.c.l.b16 %v427
        %v757 = vunpack.c.h.b16 %v427
        %v758 = vunpack.c.l.b16 %v428
        %v759 = vunpack.c.h.b16 %v428
        %v760 = vunpack.c.l.b16 %v429
        %v761 = vunpack.c.h.b16 %v429
        %v762 = vunpack.c.l.b16 %v430
        %v763 = vunpack.c.h.b16 %v430
        %v764 = vunpack.c.l.b16 %v431
        %v765 = vunpack.c.h.b16 %v431
        %v766 = vunpack.c.l.b16 %v432
        %v767 = vunpack.c.h.b16 %v432
        %v768 = vunpack.c.l.b16 %v433
        %v769 = vunpack.c.h.b16 %v433
        %v770 = vunpack.c.l.b16 %v434
        %v771 = vunpack.c.h.b16 %v434
        %v772 = vunpack.c.l.b16 %v435
        %v773 = vunpack.c.h.b16 %v435
        %v774 = vunpack.c.l.b16 %v436
        %v775 = vunpack.c.h.b16 %v436
        %v776 = vunpack.c.l.b16 %v437
        %v777 = vunpack.c.h.b16 %v437
        %v778 = vunpack.c.l.b16 %v438
        %v779 = vunpack.c.h.b16 %v438
        %v780 = vunpack.c.l.b16 %v439
        %v781 = vunpack.c.h.b16 %v439
        %v782 = vunpack.c.l.b16 %v440
        %v783 = vunpack.c.h.b16 %v440
        %v784 = vunpack.c.l.b16 %v441
        %v785 = vunpack.c.h.b16 %v441
        %v786 = vunpack.c.l.b16 %v442
        %v787 = vunpack.c.h.b16 %v442
        %v788 = vunpack.c.l.b16 %v443
        %v789 = vunpack.c.h.b16 %v443
        %v790 = vunpack.c.l.b16 %v444
        %v791 = vunpack.c.h.b16 %v444
        %v792 = vunpack.c.l.b16 %v445
        %v793 = vunpack.c.h.b16 %v445
        %v794 = vunpack.c.l.b16 %v446
        %v795 = vunpack.c.h.b16 %v446
        %v796 = vunpack.c.l.b16 %v447
        %v797 = vunpack.c.h.b16 %v447
        %v798 = vunpack.c.l.b16 %v448
        %v799 = vunpack.c.h.b16 %v448
        %v800 = vunpack.c.l.b16 %v449
        %v801 = vunpack.c.h.b16 %v449
        %v802 = vunpack.c.l.b16 %v450
        %v803 = vunpack.c.h.b16 %v450
        %v804 = vunpack.c.l.b16 %v451
        %v805 = vunpack.c.h.b16 %v451
        %v806 = vunpack.c.l.b16 %v452
        %v807 = vunpack.c.h.b16 %v452
        %v808 = vunpack.c.l.b16 %v453
        %v809 = vunpack.c.h.b16 %v453
        %v810 = vunpack.c.l.b16 %v454
        %v811 = vunpack.c.h.b16 %v454
        %v812 = vunpack.c.l.b16 %v455
        %v813 = vunpack.c.h.b16 %v455
        %v814 = vunpack.c.l.b16 %v456
        %v815 = vunpack.c.h.b16 %v456
        %v816 = vunpack.c.l.b16 %v457
        %v817 = vunpack.c.h.b16 %v457
        %v818 = vunpack.c.l.b16 %v458
        %v819 = vunpack.c.h.b16 %v458
        %v820 = vunpack.c.l.b16 %v459
        %v821 = vunpack.c.h.b16 %v459
        %v822 = vunpack.c.l.b16 %v460
        %v823 = vunpack.c.h.b16 %v460
        %v824 = vunpack.c.l.b16 %v461
        %v825 = vunpack.c.h.b16 %v461
        %v826 = vunpack.c.l.b16 %v462
        %v827 = vunpack.c.h.b16 %v462
        %v828 = vunpack.c.l.b16 %v463
        %v829 = vunpack.c.h.b16 %v463
        %v830 = vunpack.c.l.b16 %v464
        %v831 = vunpack.c.h.b16 %v464
        %v832 = vunpack.c.l.b16 %v465
        %v833 = vunpack.c.h.b16 %v465
        %v834 = vunpack.c.l.b16 %v466
        %v835 = vunpack.c.h.b16 %v466
        %v836 = vunpack.c.l.b16 %v467
        %v837 = vunpack.c.h.b16 %v467
        %v838 = vunpack.c.l.b16 %v468
        %v839 = vunpack.c.h.b16 %v468
        %v840 = vunpack.c.l.b16 %v469
        %v841 = vunpack.c.h.b16 %v469
        %v842 = vunpack.c.l.b16 %v470
        %v843 = vunpack.c.h.b16 %v470
        %v844 = vunpack.c.l.b16 %v471
        %v845 = vunpack.c.h.b16 %v471
        %v846 = vunpack.c.l.b16 %v472
        %v847 = vunpack.c.h.b16 %v472
        %v848 = vunpack.c.l.b16 %v473
        %v849 = vunpack.c.h.b16 %v473
        %v850 = vunpack.c.l.b16 %v474
        %v851 = vunpack.c.h.b16 %v474
        %v852 = vunpack.c.l.b16 %v475
        %v853 = vunpack.c.h.b16 %v475
        %v854 = vunpack.c.l.b16 %v476
        %v855 = vunpack.c.h.b16 %v476
        %v856 = vunpack.c.l.b16 %v477
        %v857 = vunpack.c.h.b16 %v477
        %v858 = vunpack.c.l.b16 %v478
        %v859 = vunpack.c.h.b16 %v478
        %v860 = vunpack.c.l.b16 %v479
        %v861 = vunpack.c.h.b16 %v479
        %v862 = vpack.c.b16 %v738, %v734
        %v863 = vpack.c.b16 %v739, %v735
        %v864 = vpack.c.b16 %v740, %v736
        %v865 = vpack.c.b16 %v741, %v737
        %v866 = vpack.c.b16 %v746, %v742
        %v867 = vpack.c.b16 %v747, %v743
        %v868 = vpack.c.b16 %v748, %v744
        %v869 = vpack.c.b16 %v749, %v745
        %v870 = vpack.c.b16 %v754, %v750
        %v871 = vpack.c.b16 %v755, %v751
        %v872 = vpack.c.b16 %v756, %v752
        %v873 = vpack.c.b16 %v757, %v753
        %v874 = vpack.c.b16 %v762, %v758
        %v875 = vpack.c.b16 %v763, %v759
        %v876 = vpack.c.b16 %v764, %v760
        %v877 = vpack.c.b16 %v765, %v761
        %v878 = vpack.c.b16 %v770, %v766
        %v879 = vpack.c.b16 %v771, %v767
        %v880 = vpack.c.b16 %v772, %v768
        %v881 = vpack.c.b16 %v773, %v769
        %v882 = vpack.c.b16 %v778, %v774
        %v883 = vpack.c.b16 %v779, %v775
        %v884 = vpack.c.b16 %v780, %v776
        %v885 = vpack.c.b16 %v781, %v777
        %v886 = vpack.c.b16 %v786, %v782
        %v887 = vpack.c.b16 %v787, %v783
        %v888 = vpack.c.b16 %v788, %v784
        %v889 = vpack.c.b16 %v789, %v785
        %v890 = vpack.c.b16 %v794, %v790
        %v891 = vpack.c.b16 %v795, %v791
        %v892 = vpack.c.b16 %v796, %v792
        %v893 = vpack.c.b16 %v797, %v793
        %v894 = vpack.c.b16 %v802, %v798
        %v895 = vpack.c.b16 %v803, %v799
        %v896 = vpack.c.b16 %v804, %v800
        %v897 = vpack.c.b16 %v805, %v801
        %v898 = vpack.c.b16 %v810, %v806
        %v899 = vpack.c.b16 %v811, %v807
        %v900 = vpack.c.b16 %v812, %v808
        %v901 = vpack.c.b16 %v813, %v809
        %v902 = vpack.c.b16 %v818, %v814
        %v903 = vpack.c.b16 %v819, %v815
        %v904 = vpack.c.b16 %v820, %v816
        %v905 = vpack.c.b16 %v821, %v817
        %v906 = vpack.c.b16 %v826, %v822
        %v907 = vpack.c.b16 %v827, %v823
        %v908 = vpack.c.b16 %v828, %v824
        %v909 = vpack.c.b16 %v829, %v825
        %v910 = vpack.c.b16 %v834, %v830
        %v911 = vpack.c.b16 %v835, %v831
        %v912 = vpack.c.b16 %v836, %v832
        %v913 = vpack.c.b16 %v837, %v833
        %v914 = vpack.c.b16 %v842, %v838
        %v915 = vpack.c.b16 %v843, %v839
        %v916 = vpack.c.b16 %v844, %v840
        %v917 = vpack.c.b16 %v845, %v841
        %v918 = vpack.c.b16 %v850, %v846
        %v919 = vpack.c.b16 %v851, %v847
        %v920 = vpack.c.b16 %v852, %v848
        %v921 = vpack.c.b16 %v853, %v849
        %v922 = vpack.c.b16 %v858, %v854
        %v923 = vpack.c.b16 %v859, %v855
        %v924 = vpack.c.b16 %v860, %v856
        %v925 = vpack.c.b16 %v861, %v857
        %990 = vmatprep.subr.bf16.mxu0 %v891
        %991 = vmatpush1.bf16.msra.mxu0 %v890
        %992 = vmatprep.subr.bf16.mxu0 %v887
        %993 = vmatpush1.bf16.msra.mxu0 %v886
        %994 = vmatprep.subr.bf16.mxu0 %v883
        %995 = vmatpush1.bf16.msra.mxu0 %v882
        %996 = vmatprep.subr.bf16.mxu0 %v879
        %997 = vmatpush1.bf16.msra.mxu0 %v878
        %998 = vmatprep.subr.bf16.mxu0 %v875
        %999 = vmatpush1.bf16.msra.mxu0 %v874
        %1000 = vmatprep.subr.bf16.mxu0 %v871
        %1001 = vmatpush1.bf16.msra.mxu0 %v870
        %1002 = vmatprep.subr.bf16.mxu0 %v867
        %1003 = vmatpush1.bf16.msra.mxu0 %v866
        %1004 = vmatprep.subr.bf16.mxu0 %v863
        %1005 = vmatpush1.bf16.msra.mxu0 %v862
        %1006 = vmatprep.subr.bf16.mxu0 %v923
        %1007 = vmatpush2.bf16.msra.mxu0 %v922
        %1008 = vmatprep.subr.bf16.mxu0 %v919
        %1009 = vmatpush2.bf16.msra.mxu0 %v918
        %1010 = vmatprep.subr.bf16.mxu0 %v915
        %1011 = vmatpush2.bf16.msra.mxu0 %v914
        %1012 = vmatprep.subr.bf16.mxu0 %v911
        %1013 = vmatpush2.bf16.msra.mxu0 %v910
        %1014 = vmatprep.subr.bf16.mxu0 %v907
        %1015 = vmatpush2.bf16.msra.mxu0 %v906
        %1016 = vmatprep.subr.bf16.mxu0 %v903
        %1017 = vmatpush2.bf16.msra.mxu0 %v902
        %1018 = vmatprep.subr.bf16.mxu0 %v899
        %1019 = vmatpush2.bf16.msra.mxu0 %v898
        %1020 = vmatprep.subr.bf16.mxu0 %v895
        %1021 = vmatpush2.bf16.msra.mxu0 %v894
        %1022 = vmatprep.mubr.bf16.mxu0 %v663
        %1023 = vmatmul.mubr.bf16.gmra.mxu0 %v662
        %v1024 = vpop.f32.mrf.mxu0
        %v1025 = vadd.f32 0.0, %v1024
        %v1026 = vpop.f32.mrf.mxu0
        %v1027 = vadd.f32 0.0, %v1026
        %v1028 = vpop.f32.mrf.mxu0
        %v1029 = vadd.f32 0.0, %v1028
        %v1030 = vpop.f32.mrf.mxu0
        %v1031 = vadd.f32 0.0, %v1030
        %1032 = vmatprep.mubr.bf16.mxu0 %v665
        %1033 = vmatmul.mubr.bf16.gmra.mxu0 %v664
        %v1034 = vpop.f32.mrf.mxu0
        %v1035 = vadd.f32 0.0, %v1034
        %v1036 = vpop.f32.mrf.mxu0
        %v1037 = vadd.f32 0.0, %v1036
        %v1038 = vpop.f32.mrf.mxu0
        %v1039 = vadd.f32 0.0, %v1038
        %v1040 = vpop.f32.mrf.mxu0
        %v1041 = vadd.f32 0.0, %v1040
        %1042 = vmatprep.mubr.bf16.mxu0 %v667
        %1043 = vmatmul.mubr.bf16.gmra.mxu0 %v666
        %v1044 = vpop.f32.mrf.mxu0
        %v1045 = vadd.f32 0.0, %v1044
        %v1046 = vpop.f32.mrf.mxu0
        %v1047 = vadd.f32 0.0, %v1046
        %v1048 = vpop.f32.mrf.mxu0
        %v1049 = vadd.f32 0.0, %v1048
        %v1050 = vpop.f32.mrf.mxu0
        %v1051 = vadd.f32 0.0, %v1050
        %1052 = vmatprep.mubr.bf16.mxu0 %v669
        %1053 = vmatmul.mubr.bf16.gmra.mxu0 %v668
        %v1054 = vpop.f32.mrf.mxu0
        %v1055 = vadd.f32 0.0, %v1054
        %v1056 = vpop.f32.mrf.mxu0
        %v1057 = vadd.f32 0.0, %v1056
        %v1058 = vpop.f32.mrf.mxu0
        %v1059 = vadd.f32 0.0, %v1058
        %v1060 = vpop.f32.mrf.mxu0
        %v1061 = vadd.f32 0.0, %v1060
        %1062 = vdwg.mxu0
        %1063 = vmatprep.subr.bf16.mxu0 %v893
        %1064 = vmatpush1.bf16.msra.mxu0 %v892
        %1065 = vmatprep.subr.bf16.mxu0 %v889
        %1066 = vmatpush1.bf16.msra.mxu0 %v888
        %1067 = vmatprep.subr.bf16.mxu0 %v885
        %1068 = vmatpush1.bf16.msra.mxu0 %v884
        %1069 = vmatprep.subr.bf16.mxu0 %v881
        %1070 = vmatpush1.bf16.msra.mxu0 %v880
        %1071 = vmatprep.subr.bf16.mxu0 %v877
        %1072 = vmatpush1.bf16.msra.mxu0 %v876
        %1073 = vmatprep.subr.bf16.mxu0 %v873
        %1074 = vmatpush1.bf16.msra.mxu0 %v872
        %1075 = vmatprep.subr.bf16.mxu0 %v869
        %1076 = vmatpush1.bf16.msra.mxu0 %v868
        %1077 = vmatprep.subr.bf16.mxu0 %v865
        %1078 = vmatpush1.bf16.msra.mxu0 %v864
        %1079 = vmatprep.subr.bf16.mxu0 %v925
        %1080 = vmatpush2.bf16.msra.mxu0 %v924
        %1081 = vmatprep.subr.bf16.mxu0 %v921
        %1082 = vmatpush2.bf16.msra.mxu0 %v920
        %1083 = vmatprep.subr.bf16.mxu0 %v917
        %1084 = vmatpush2.bf16.msra.mxu0 %v916
        %1085 = vmatprep.subr.bf16.mxu0 %v913
        %1086 = vmatpush2.bf16.msra.mxu0 %v912
        %1087 = vmatprep.subr.bf16.mxu0 %v909
        %1088 = vmatpush2.bf16.msra.mxu0 %v908
        %1089 = vmatprep.subr.bf16.mxu0 %v905
        %1090 = vmatpush2.bf16.msra.mxu0 %v904
        %1091 = vmatprep.subr.bf16.mxu0 %v901
        %1092 = vmatpush2.bf16.msra.mxu0 %v900
        %1093 = vmatprep.subr.bf16.mxu0 %v897
        %1094 = vmatpush2.bf16.msra.mxu0 %v896
        %1095 = vmatprep.mubr.bf16.mxu0 %v663
        %1096 = vmatmul.mubr.bf16.gmra.mxu0 %v662
        %v1097 = vpop.f32.mrf.mxu0
        %v1098 = vadd.f32 0.0, %v1097
        %v1099 = vpop.f32.mrf.mxu0
        %v1100 = vadd.f32 0.0, %v1099
        %v1101 = vpop.f32.mrf.mxu0
        %v1102 = vadd.f32 0.0, %v1101
        %v1103 = vpop.f32.mrf.mxu0
        %v1104 = vadd.f32 0.0, %v1103
        %1105 = vmatprep.mubr.bf16.mxu0 %v665
        %1106 = vmatmul.mubr.bf16.gmra.mxu0 %v664
        %v1107 = vpop.f32.mrf.mxu0
        %v1108 = vadd.f32 0.0, %v1107
        %v1109 = vpop.f32.mrf.mxu0
        %v1110 = vadd.f32 0.0, %v1109
        %v1111 = vpop.f32.mrf.mxu0
        %v1112 = vadd.f32 0.0, %v1111
        %v1113 = vpop.f32.mrf.mxu0
        %v1114 = vadd.f32 0.0, %v1113
        %1115 = vmatprep.mubr.bf16.mxu0 %v667
        %1116 = vmatmul.mubr.bf16.gmra.mxu0 %v666
        %v1117 = vpop.f32.mrf.mxu0
        %v1118 = vadd.f32 0.0, %v1117
        %v1119 = vpop.f32.mrf.mxu0
        %v1120 = vadd.f32 0.0, %v1119
        %v1121 = vpop.f32.mrf.mxu0
        %v1122 = vadd.f32 0.0, %v1121
        %v1123 = vpop.f32.mrf.mxu0
        %v1124 = vadd.f32 0.0, %v1123
        %1125 = vmatprep.mubr.bf16.mxu0 %v669
        %1126 = vmatmul.mubr.bf16.gmra.mxu0 %v668
        %v1127 = vpop.f32.mrf.mxu0
        %v1128 = vadd.f32 0.0, %v1127
        %v1129 = vpop.f32.mrf.mxu0
        %v1130 = vadd.f32 0.0, %v1129
        %v1131 = vpop.f32.mrf.mxu0
        %v1132 = vadd.f32 0.0, %v1131
        %v1133 = vpop.f32.mrf.mxu0
        %v1134 = vadd.f32 0.0, %v1133
        %1135 = vdwg.mxu0
        %v1137 = vlaneseq
        %v1138 = vshrl.u32 %v1137, 7
        %v1139 = vsub.s32 0, %v1138
        %v1140 = vrot.slane %v480, %v1139
        %v1141 = vlaneseq
        %v1142 = vshrl.u32 %v1141, 7
        %v1143 = vsub.s32 1, %v1142
        %v1144 = vrot.slane %v480, %v1143
        %v1145 = vlaneseq
        %v1146 = vshrl.u32 %v1145, 7
        %v1147 = vsub.s32 2, %v1146
        %v1148 = vrot.slane %v480, %v1147
        %v1149 = vlaneseq
        %v1150 = vshrl.u32 %v1149, 7
        %v1151 = vsub.s32 3, %v1150
        %v1152 = vrot.slane %v480, %v1151
        %v1157 = vmul.f32 %v1025, %v1140
        %v1158 = vmul.f32 %v1027, %v1144
        %v1159 = vmul.f32 %v1098, %v1148
        %v1160 = vmul.f32 %v1100, %v1152
        %v1161 = vmul.f32 %v1029, %v1140
        %v1162 = vmul.f32 %v1031, %v1144
        %v1163 = vmul.f32 %v1102, %v1148
        %v1164 = vmul.f32 %v1104, %v1152
        %v1165 = vmul.f32 %v1035, %v1140
        %v1166 = vmul.f32 %v1037, %v1144
        %v1167 = vmul.f32 %v1108, %v1148
        %v1168 = vmul.f32 %v1110, %v1152
        %v1169 = vmul.f32 %v1039, %v1140
        %v1170 = vmul.f32 %v1041, %v1144
        %v1171 = vmul.f32 %v1112, %v1148
        %v1172 = vmul.f32 %v1114, %v1152
        %v1173 = vmul.f32 %v1045, %v1140
        %v1174 = vmul.f32 %v1047, %v1144
        %v1175 = vmul.f32 %v1118, %v1148
        %v1176 = vmul.f32 %v1120, %v1152
        %v1177 = vmul.f32 %v1049, %v1140
        %v1178 = vmul.f32 %v1051, %v1144
        %v1179 = vmul.f32 %v1122, %v1148
        %v1180 = vmul.f32 %v1124, %v1152
        %v1181 = vmul.f32 %v1055, %v1140
        %v1182 = vmul.f32 %v1057, %v1144
        %v1183 = vmul.f32 %v1128, %v1148
        %v1184 = vmul.f32 %v1130, %v1152
        %v1185 = vmul.f32 %v1059, %v1140
        %v1186 = vmul.f32 %v1061, %v1144
        %v1187 = vmul.f32 %v1132, %v1148
        %v1188 = vmul.f32 %v1134, %v1152
        %v1190 = vlaneseq
        %v1191 = vshrl.u32 %v1190, 7
        %v1192 = vsub.s32 0, %v1191
        %v1193 = vrot.slane %v481, %v1192
        %v1194 = vlaneseq
        %v1195 = vshrl.u32 %v1194, 7
        %v1196 = vsub.s32 1, %v1195
        %v1197 = vrot.slane %v481, %v1196
        %v1198 = vlaneseq
        %v1199 = vshrl.u32 %v1198, 7
        %v1200 = vsub.s32 2, %v1199
        %v1201 = vrot.slane %v481, %v1200
        %v1202 = vlaneseq
        %v1203 = vshrl.u32 %v1202, 7
        %v1204 = vsub.s32 3, %v1203
        %v1205 = vrot.slane %v481, %v1204
        %v1210 = vadd.f32 %v1157, %v1193
        %v1211 = vadd.f32 %v1158, %v1197
        %v1212 = vadd.f32 %v1159, %v1201
        %v1213 = vadd.f32 %v1160, %v1205
        %v1214 = vadd.f32 %v1161, %v1193
        %v1215 = vadd.f32 %v1162, %v1197
        %v1216 = vadd.f32 %v1163, %v1201
        %v1217 = vadd.f32 %v1164, %v1205
        %v1218 = vadd.f32 %v1165, %v1193
        %v1219 = vadd.f32 %v1166, %v1197
        %v1220 = vadd.f32 %v1167, %v1201
        %v1221 = vadd.f32 %v1168, %v1205
        %v1222 = vadd.f32 %v1169, %v1193
        %v1223 = vadd.f32 %v1170, %v1197
        %v1224 = vadd.f32 %v1171, %v1201
        %v1225 = vadd.f32 %v1172, %v1205
        %v1226 = vadd.f32 %v1173, %v1193
        %v1227 = vadd.f32 %v1174, %v1197
        %v1228 = vadd.f32 %v1175, %v1201
        %v1229 = vadd.f32 %v1176, %v1205
        %v1230 = vadd.f32 %v1177, %v1193
        %v1231 = vadd.f32 %v1178, %v1197
        %v1232 = vadd.f32 %v1179, %v1201
        %v1233 = vadd.f32 %v1180, %v1205
        %v1234 = vadd.f32 %v1181, %v1193
        %v1235 = vadd.f32 %v1182, %v1197
        %v1236 = vadd.f32 %v1183, %v1201
        %v1237 = vadd.f32 %v1184, %v1205
        %v1238 = vadd.f32 %v1185, %v1193
        %v1239 = vadd.f32 %v1186, %v1197
        %v1240 = vadd.f32 %v1187, %v1201
        %v1241 = vadd.f32 %v1188, %v1205
        %v1242 = vmax.f32 %v1210, 0.0
        %v1243 = vmax.f32 %v1211, 0.0
        %v1244 = vmax.f32 %v1212, 0.0
        %v1245 = vmax.f32 %v1213, 0.0
        %v1246 = vmax.f32 %v1214, 0.0
        %v1247 = vmax.f32 %v1215, 0.0
        %v1248 = vmax.f32 %v1216, 0.0
        %v1249 = vmax.f32 %v1217, 0.0
        %v1250 = vmax.f32 %v1218, 0.0
        %v1251 = vmax.f32 %v1219, 0.0
        %v1252 = vmax.f32 %v1220, 0.0
        %v1253 = vmax.f32 %v1221, 0.0
        %v1254 = vmax.f32 %v1222, 0.0
        %v1255 = vmax.f32 %v1223, 0.0
        %v1256 = vmax.f32 %v1224, 0.0
        %v1257 = vmax.f32 %v1225, 0.0
        %v1258 = vmax.f32 %v1226, 0.0
        %v1259 = vmax.f32 %v1227, 0.0
        %v1260 = vmax.f32 %v1228, 0.0
        %v1261 = vmax.f32 %v1229, 0.0
        %v1262 = vmax.f32 %v1230, 0.0
        %v1263 = vmax.f32 %v1231, 0.0
        %v1264 = vmax.f32 %v1232, 0.0
        %v1265 = vmax.f32 %v1233, 0.0
        %v1266 = vmax.f32 %v1234, 0.0
        %v1267 = vmax.f32 %v1235, 0.0
        %v1268 = vmax.f32 %v1236, 0.0
        %v1269 = vmax.f32 %v1237, 0.0
        %v1270 = vmax.f32 %v1238, 0.0
        %v1271 = vmax.f32 %v1239, 0.0
        %v1272 = vmax.f32 %v1240, 0.0
        %v1273 = vmax.f32 %v1241, 0.0
        %1274 = vrot.lane.b32.xlu0 %v356, 32
        %v1275 = vpop.permute.xlu0 %1274
        %1276 = vrot.lane.b32.xlu0 %v364, 32
        %v1277 = vpop.permute.xlu0 %1276
        %1278 = vrot.lane.b32.xlu0 %v372, 32
        %v1279 = vpop.permute.xlu0 %1278
        %1280 = vrot.lane.b32.xlu0 %v380, 32
        %v1281 = vpop.permute.xlu0 %1280
        %1282 = vrot.lane.b32.xlu0 %v388, 32
        %v1283 = vpop.permute.xlu0 %1282
        %1284 = vrot.lane.b32.xlu0 %v396, 32
        %v1285 = vpop.permute.xlu0 %1284
        %1286 = vrot.lane.b32.xlu0 %v404, 32
        %v1287 = vpop.permute.xlu0 %1286
        %1288 = vrot.lane.b32.xlu0 %v412, 32
        %v1289 = vpop.permute.xlu0 %1288
        %1298 = vrot.lane.b32.xlu0 %v358, 64
        %v1299 = vpop.permute.xlu0 %1298
        %1300 = vrot.lane.b32.xlu0 %v366, 64
        %v1301 = vpop.permute.xlu0 %1300
        %1302 = vrot.lane.b32.xlu0 %v374, 64
        %v1303 = vpop.permute.xlu0 %1302
        %1304 = vrot.lane.b32.xlu0 %v382, 64
        %v1305 = vpop.permute.xlu0 %1304
        %1306 = vrot.lane.b32.xlu0 %v390, 64
        %v1307 = vpop.permute.xlu0 %1306
        %1308 = vrot.lane.b32.xlu0 %v398, 64
        %v1309 = vpop.permute.xlu0 %1308
        %1310 = vrot.lane.b32.xlu0 %v406, 64
        %v1311 = vpop.permute.xlu0 %1310
        %1312 = vrot.lane.b32.xlu0 %v414, 64
        %v1313 = vpop.permute.xlu0 %1312
        %1322 = vrot.lane.b32.xlu0 %v597, 96
        %v1323 = vpop.permute.xlu0 %1322
        %1324 = vrot.lane.b32.xlu0 %v600, 96
        %v1325 = vpop.permute.xlu0 %1324
        %1326 = vrot.lane.b32.xlu0 %v603, 96
        %v1327 = vpop.permute.xlu0 %1326
        %1328 = vrot.lane.b32.xlu0 %v606, 96
        %v1329 = vpop.permute.xlu0 %1328
        %1330 = vrot.lane.b32.xlu0 %v609, 96
        %v1331 = vpop.permute.xlu0 %1330
        %1332 = vrot.lane.b32.xlu0 %v612, 96
        %v1333 = vpop.permute.xlu0 %1332
        %1334 = vrot.lane.b32.xlu0 %v615, 96
        %v1335 = vpop.permute.xlu0 %1334
        %1336 = vrot.lane.b32.xlu0 %v618, 96
        %v1337 = vpop.permute.xlu0 %1336
        %v1354 = vrot.slane %v354, 1
        %v1355 = vrot.slane %v355, 1
        %v1356 = vsel %vm594, %v1354, %v1355
        %v1357 = vrot.slane %v362, 1
        %v1358 = vrot.slane %v363, 1
        %v1359 = vsel %vm594, %v1357, %v1358
        %v1360 = vrot.slane %v370, 1
        %v1361 = vrot.slane %v371, 1
        %v1362 = vsel %vm594, %v1360, %v1361
        %v1363 = vrot.slane %v378, 1
        %v1364 = vrot.slane %v379, 1
        %v1365 = vsel %vm594, %v1363, %v1364
        %v1366 = vrot.slane %v386, 1
        %v1367 = vrot.slane %v387, 1
        %v1368 = vsel %vm594, %v1366, %v1367
        %v1369 = vrot.slane %v394, 1
        %v1370 = vrot.slane %v395, 1
        %v1371 = vsel %vm594, %v1369, %v1370
        %v1372 = vrot.slane %v402, 1
        %v1373 = vrot.slane %v403, 1
        %v1374 = vsel %vm594, %v1372, %v1373
        %v1375 = vrot.slane %v410, 1
        %v1376 = vrot.slane %v411, 1
        %v1377 = vsel %vm594, %v1375, %v1376
        %v1386 = vsel %vm627, %v354, %v1275
        %v1387 = vsel %vm627, %v362, %v1277
        %v1388 = vsel %vm627, %v370, %v1279
        %v1389 = vsel %vm627, %v378, %v1281
        %v1390 = vsel %vm627, %v386, %v1283
        %v1391 = vsel %vm627, %v394, %v1285
        %v1392 = vsel %vm627, %v402, %v1287
        %v1393 = vsel %vm627, %v410, %v1289
        %v1394 = vsel %vm636, %v1386, %v1299
        %v1395 = vsel %vm636, %v1387, %v1301
        %v1396 = vsel %vm636, %v1388, %v1303
        %v1397 = vsel %vm636, %v1389, %v1305
        %v1398 = vsel %vm636, %v1390, %v1307
        %v1399 = vsel %vm636, %v1391, %v1309
        %v1400 = vsel %vm636, %v1392, %v1311
        %v1401 = vsel %vm636, %v1393, %v1313
        %v1402 = vsel %vm645, %v1394, %v1323
        %v1403 = vsel %vm645, %v1395, %v1325
        %v1404 = vsel %vm645, %v1396, %v1327
        %v1405 = vsel %vm645, %v1397, %v1329
        %v1406 = vsel %vm645, %v1398, %v1331
        %v1407 = vsel %vm645, %v1399, %v1333
        %v1408 = vsel %vm645, %v1400, %v1335
        %v1409 = vsel %vm645, %v1401, %v1337
        %v1410 = vsel %vm627, %v1356, 0.0
        %v1411 = vsel %vm627, %v1359, 0.0
        %v1412 = vsel %vm627, %v1362, 0.0
        %v1413 = vsel %vm627, %v1365, 0.0
        %v1414 = vsel %vm627, %v1368, 0.0
        %v1415 = vsel %vm627, %v1371, 0.0
        %v1416 = vsel %vm627, %v1374, 0.0
        %v1417 = vsel %vm627, %v1377, 0.0
        %v1418 = vpack.c.bf16 %v1403, %v1402
        %v1419 = vpack.c.bf16 %v1411, %v1410
        %v1420 = vpack.c.bf16 %v1405, %v1404
        %v1421 = vpack.c.bf16 %v1413, %v1412
        %v1422 = vpack.c.bf16 %v1407, %v1406
        %v1423 = vpack.c.bf16 %v1415, %v1414
        %v1424 = vpack.c.bf16 %v1409, %v1408
        %v1425 = vpack.c.bf16 %v1417, %v1416
        %1426 = vmatprep.subr.bf16.mxu0 %v891
        %1427 = vmatpush1.bf16.msra.mxu0 %v890
        %1428 = vmatprep.subr.bf16.mxu0 %v887
        %1429 = vmatpush1.bf16.msra.mxu0 %v886
        %1430 = vmatprep.subr.bf16.mxu0 %v883
        %1431 = vmatpush1.bf16.msra.mxu0 %v882
        %1432 = vmatprep.subr.bf16.mxu0 %v879
        %1433 = vmatpush1.bf16.msra.mxu0 %v878
        %1434 = vmatprep.subr.bf16.mxu0 %v875
        %1435 = vmatpush1.bf16.msra.mxu0 %v874
        %1436 = vmatprep.subr.bf16.mxu0 %v871
        %1437 = vmatpush1.bf16.msra.mxu0 %v870
        %1438 = vmatprep.subr.bf16.mxu0 %v867
        %1439 = vmatpush1.bf16.msra.mxu0 %v866
        %1440 = vmatprep.subr.bf16.mxu0 %v863
        %1441 = vmatpush1.bf16.msra.mxu0 %v862
        %1442 = vmatprep.subr.bf16.mxu0 %v923
        %1443 = vmatpush2.bf16.msra.mxu0 %v922
        %1444 = vmatprep.subr.bf16.mxu0 %v919
        %1445 = vmatpush2.bf16.msra.mxu0 %v918
        %1446 = vmatprep.subr.bf16.mxu0 %v915
        %1447 = vmatpush2.bf16.msra.mxu0 %v914
        %1448 = vmatprep.subr.bf16.mxu0 %v911
        %1449 = vmatpush2.bf16.msra.mxu0 %v910
        %1450 = vmatprep.subr.bf16.mxu0 %v907
        %1451 = vmatpush2.bf16.msra.mxu0 %v906
        %1452 = vmatprep.subr.bf16.mxu0 %v903
        %1453 = vmatpush2.bf16.msra.mxu0 %v902
        %1454 = vmatprep.subr.bf16.mxu0 %v899
        %1455 = vmatpush2.bf16.msra.mxu0 %v898
        %1456 = vmatprep.subr.bf16.mxu0 %v895
        %1457 = vmatpush2.bf16.msra.mxu0 %v894
        %1458 = vmatprep.mubr.bf16.mxu0 %v1419
        %1459 = vmatmul.mubr.bf16.gmra.mxu0 %v1418
        %v1460 = vpop.f32.mrf.mxu0
        %v1461 = vadd.f32 0.0, %v1460
        %v1462 = vpop.f32.mrf.mxu0
        %v1463 = vadd.f32 0.0, %v1462
        %v1464 = vpop.f32.mrf.mxu0
        %v1465 = vadd.f32 0.0, %v1464
        %v1466 = vpop.f32.mrf.mxu0
        %v1467 = vadd.f32 0.0, %v1466
        %1468 = vmatprep.mubr.bf16.mxu0 %v1421
        %1469 = vmatmul.mubr.bf16.gmra.mxu0 %v1420
        %v1470 = vpop.f32.mrf.mxu0
        %v1471 = vadd.f32 0.0, %v1470
        %v1472 = vpop.f32.mrf.mxu0
        %v1473 = vadd.f32 0.0, %v1472
        %v1474 = vpop.f32.mrf.mxu0
        %v1475 = vadd.f32 0.0, %v1474
        %v1476 = vpop.f32.mrf.mxu0
        %v1477 = vadd.f32 0.0, %v1476
        %1478 = vmatprep.mubr.bf16.mxu0 %v1423
        %1479 = vmatmul.mubr.bf16.gmra.mxu0 %v1422
        %v1480 = vpop.f32.mrf.mxu0
        %v1481 = vadd.f32 0.0, %v1480
        %v1482 = vpop.f32.mrf.mxu0
        %v1483 = vadd.f32 0.0, %v1482
        %v1484 = vpop.f32.mrf.mxu0
        %v1485 = vadd.f32 0.0, %v1484
        %v1486 = vpop.f32.mrf.mxu0
        %v1487 = vadd.f32 0.0, %v1486
        %1488 = vmatprep.mubr.bf16.mxu0 %v1425
        %1489 = vmatmul.mubr.bf16.gmra.mxu0 %v1424
        %v1490 = vpop.f32.mrf.mxu0
        %v1491 = vadd.f32 0.0, %v1490
        %v1492 = vpop.f32.mrf.mxu0
        %v1493 = vadd.f32 0.0, %v1492
        %v1494 = vpop.f32.mrf.mxu0
        %v1495 = vadd.f32 0.0, %v1494
        %v1496 = vpop.f32.mrf.mxu0
        %v1497 = vadd.f32 0.0, %v1496
        %1498 = vdwg.mxu0
        %1499 = vmatprep.subr.bf16.mxu0 %v893
        %1500 = vmatpush1.bf16.msra.mxu0 %v892
        %1501 = vmatprep.subr.bf16.mxu0 %v889
        %1502 = vmatpush1.bf16.msra.mxu0 %v888
        %1503 = vmatprep.subr.bf16.mxu0 %v885
        %1504 = vmatpush1.bf16.msra.mxu0 %v884
        %1505 = vmatprep.subr.bf16.mxu0 %v881
        %1506 = vmatpush1.bf16.msra.mxu0 %v880
        %1507 = vmatprep.subr.bf16.mxu0 %v877
        %1508 = vmatpush1.bf16.msra.mxu0 %v876
        %1509 = vmatprep.subr.bf16.mxu0 %v873
        %1510 = vmatpush1.bf16.msra.mxu0 %v872
        %1511 = vmatprep.subr.bf16.mxu0 %v869
        %1512 = vmatpush1.bf16.msra.mxu0 %v868
        %1513 = vmatprep.subr.bf16.mxu0 %v865
        %1514 = vmatpush1.bf16.msra.mxu0 %v864
        %1515 = vmatprep.subr.bf16.mxu0 %v925
        %1516 = vmatpush2.bf16.msra.mxu0 %v924
        %1517 = vmatprep.subr.bf16.mxu0 %v921
        %1518 = vmatpush2.bf16.msra.mxu0 %v920
        %1519 = vmatprep.subr.bf16.mxu0 %v917
        %1520 = vmatpush2.bf16.msra.mxu0 %v916
        %1521 = vmatprep.subr.bf16.mxu0 %v913
        %1522 = vmatpush2.bf16.msra.mxu0 %v912
        %1523 = vmatprep.subr.bf16.mxu0 %v909
        %1524 = vmatpush2.bf16.msra.mxu0 %v908
        %1525 = vmatprep.subr.bf16.mxu0 %v905
        %1526 = vmatpush2.bf16.msra.mxu0 %v904
        %1527 = vmatprep.subr.bf16.mxu0 %v901
        %1528 = vmatpush2.bf16.msra.mxu0 %v900
        %1529 = vmatprep.subr.bf16.mxu0 %v897
        %1530 = vmatpush2.bf16.msra.mxu0 %v896
        %1531 = vmatprep.mubr.bf16.mxu0 %v1419
        %1532 = vmatmul.mubr.bf16.gmra.mxu0 %v1418
        %v1533 = vpop.f32.mrf.mxu0
        %v1534 = vadd.f32 0.0, %v1533
        %v1535 = vpop.f32.mrf.mxu0
        %v1536 = vadd.f32 0.0, %v1535
        %v1537 = vpop.f32.mrf.mxu0
        %v1538 = vadd.f32 0.0, %v1537
        %v1539 = vpop.f32.mrf.mxu0
        %v1540 = vadd.f32 0.0, %v1539
        %1541 = vmatprep.mubr.bf16.mxu0 %v1421
        %1542 = vmatmul.mubr.bf16.gmra.mxu0 %v1420
        %v1543 = vpop.f32.mrf.mxu0
        %v1544 = vadd.f32 0.0, %v1543
        %v1545 = vpop.f32.mrf.mxu0
        %v1546 = vadd.f32 0.0, %v1545
        %v1547 = vpop.f32.mrf.mxu0
        %v1548 = vadd.f32 0.0, %v1547
        %v1549 = vpop.f32.mrf.mxu0
        %v1550 = vadd.f32 0.0, %v1549
        %1551 = vmatprep.mubr.bf16.mxu0 %v1423
        %1552 = vmatmul.mubr.bf16.gmra.mxu0 %v1422
        %v1553 = vpop.f32.mrf.mxu0
        %v1554 = vadd.f32 0.0, %v1553
        %v1555 = vpop.f32.mrf.mxu0
        %v1556 = vadd.f32 0.0, %v1555
        %v1557 = vpop.f32.mrf.mxu0
        %v1558 = vadd.f32 0.0, %v1557
        %v1559 = vpop.f32.mrf.mxu0
        %v1560 = vadd.f32 0.0, %v1559
        %1561 = vmatprep.mubr.bf16.mxu0 %v1425
        %1562 = vmatmul.mubr.bf16.gmra.mxu0 %v1424
        %v1563 = vpop.f32.mrf.mxu0
        %v1564 = vadd.f32 0.0, %v1563
        %v1565 = vpop.f32.mrf.mxu0
        %v1566 = vadd.f32 0.0, %v1565
        %v1567 = vpop.f32.mrf.mxu0
        %v1568 = vadd.f32 0.0, %v1567
        %v1569 = vpop.f32.mrf.mxu0
        %v1570 = vadd.f32 0.0, %v1569
        %1571 = vdwg.mxu0
        %v1572 = vmul.f32 %v1461, %v1140
        %v1573 = vmul.f32 %v1463, %v1144
        %v1574 = vmul.f32 %v1534, %v1148
        %v1575 = vmul.f32 %v1536, %v1152
        %v1576 = vmul.f32 %v1465, %v1140
        %v1577 = vmul.f32 %v1467, %v1144
        %v1578 = vmul.f32 %v1538, %v1148
        %v1579 = vmul.f32 %v1540, %v1152
        %v1580 = vmul.f32 %v1471, %v1140
        %v1581 = vmul.f32 %v1473, %v1144
        %v1582 = vmul.f32 %v1544, %v1148
        %v1583 = vmul.f32 %v1546, %v1152
        %v1584 = vmul.f32 %v1475, %v1140
        %v1585 = vmul.f32 %v1477, %v1144
        %v1586 = vmul.f32 %v1548, %v1148
        %v1587 = vmul.f32 %v1550, %v1152
        %v1588 = vmul.f32 %v1481, %v1140
        %v1589 = vmul.f32 %v1483, %v1144
        %v1590 = vmul.f32 %v1554, %v1148
        %v1591 = vmul.f32 %v1556, %v1152
        %v1592 = vmul.f32 %v1485, %v1140
        %v1593 = vmul.f32 %v1487, %v1144
        %v1594 = vmul.f32 %v1558, %v1148
        %v1595 = vmul.f32 %v1560, %v1152
        %v1596 = vmul.f32 %v1491, %v1140
        %v1597 = vmul.f32 %v1493, %v1144
        %v1598 = vmul.f32 %v1564, %v1148
        %v1599 = vmul.f32 %v1566, %v1152
        %v1600 = vmul.f32 %v1495, %v1140
        %v1601 = vmul.f32 %v1497, %v1144
        %v1602 = vmul.f32 %v1568, %v1148
        %v1603 = vmul.f32 %v1570, %v1152
        %v1604 = vadd.f32 %v1572, %v1193
        %v1605 = vadd.f32 %v1573, %v1197
        %v1606 = vadd.f32 %v1574, %v1201
        %v1607 = vadd.f32 %v1575, %v1205
        %v1608 = vadd.f32 %v1576, %v1193
        %v1609 = vadd.f32 %v1577, %v1197
        %v1610 = vadd.f32 %v1578, %v1201
        %v1611 = vadd.f32 %v1579, %v1205
        %v1612 = vadd.f32 %v1580, %v1193
        %v1613 = vadd.f32 %v1581, %v1197
        %v1614 = vadd.f32 %v1582, %v1201
        %v1615 = vadd.f32 %v1583, %v1205
        %v1616 = vadd.f32 %v1584, %v1193
        %v1617 = vadd.f32 %v1585, %v1197
        %v1618 = vadd.f32 %v1586, %v1201
        %v1619 = vadd.f32 %v1587, %v1205
        %v1620 = vadd.f32 %v1588, %v1193
        %v1621 = vadd.f32 %v1589, %v1197
        %v1622 = vadd.f32 %v1590, %v1201
        %v1623 = vadd.f32 %v1591, %v1205
        %v1624 = vadd.f32 %v1592, %v1193
        %v1625 = vadd.f32 %v1593, %v1197
        %v1626 = vadd.f32 %v1594, %v1201
        %v1627 = vadd.f32 %v1595, %v1205
        %v1628 = vadd.f32 %v1596, %v1193
        %v1629 = vadd.f32 %v1597, %v1197
        %v1630 = vadd.f32 %v1598, %v1201
        %v1631 = vadd.f32 %v1599, %v1205
        %v1632 = vadd.f32 %v1600, %v1193
        %v1633 = vadd.f32 %v1601, %v1197
        %v1634 = vadd.f32 %v1602, %v1201
        %v1635 = vadd.f32 %v1603, %v1205
        %v1636 = vmax.f32 %v1604, 0.0
        %v1637 = vmax.f32 %v1605, 0.0
        %v1638 = vmax.f32 %v1606, 0.0
        %v1639 = vmax.f32 %v1607, 0.0
        %v1640 = vmax.f32 %v1608, 0.0
        %v1641 = vmax.f32 %v1609, 0.0
        %v1642 = vmax.f32 %v1610, 0.0
        %v1643 = vmax.f32 %v1611, 0.0
        %v1644 = vmax.f32 %v1612, 0.0
        %v1645 = vmax.f32 %v1613, 0.0
        %v1646 = vmax.f32 %v1614, 0.0
        %v1647 = vmax.f32 %v1615, 0.0
        %v1648 = vmax.f32 %v1616, 0.0
        %v1649 = vmax.f32 %v1617, 0.0
        %v1650 = vmax.f32 %v1618, 0.0
        %v1651 = vmax.f32 %v1619, 0.0
        %v1652 = vmax.f32 %v1620, 0.0
        %v1653 = vmax.f32 %v1621, 0.0
        %v1654 = vmax.f32 %v1622, 0.0
        %v1655 = vmax.f32 %v1623, 0.0
        %v1656 = vmax.f32 %v1624, 0.0
        %v1657 = vmax.f32 %v1625, 0.0
        %v1658 = vmax.f32 %v1626, 0.0
        %v1659 = vmax.f32 %v1627, 0.0
        %v1660 = vmax.f32 %v1628, 0.0
        %v1661 = vmax.f32 %v1629, 0.0
        %v1662 = vmax.f32 %v1630, 0.0
        %v1663 = vmax.f32 %v1631, 0.0
        %v1664 = vmax.f32 %v1632, 0.0
        %v1665 = vmax.f32 %v1633, 0.0
        %v1666 = vmax.f32 %v1634, 0.0
        %v1667 = vmax.f32 %v1635, 0.0
        %1668 = vrot.lane.b32.xlu0 %v358, 32
        %v1669 = vpop.permute.xlu0 %1668
        %1670 = vrot.lane.b32.xlu0 %v366, 32
        %v1671 = vpop.permute.xlu0 %1670
        %1672 = vrot.lane.b32.xlu0 %v374, 32
        %v1673 = vpop.permute.xlu0 %1672
        %1674 = vrot.lane.b32.xlu0 %v382, 32
        %v1675 = vpop.permute.xlu0 %1674
        %1676 = vrot.lane.b32.xlu0 %v390, 32
        %v1677 = vpop.permute.xlu0 %1676
        %1678 = vrot.lane.b32.xlu0 %v398, 32
        %v1679 = vpop.permute.xlu0 %1678
        %1680 = vrot.lane.b32.xlu0 %v406, 32
        %v1681 = vpop.permute.xlu0 %1680
        %1682 = vrot.lane.b32.xlu0 %v414, 32
        %v1683 = vpop.permute.xlu0 %1682
        %1692 = vrot.lane.b32.xlu0 %v597, 64
        %v1693 = vpop.permute.xlu0 %1692
        %1694 = vrot.lane.b32.xlu0 %v600, 64
        %v1695 = vpop.permute.xlu0 %1694
        %1696 = vrot.lane.b32.xlu0 %v603, 64
        %v1697 = vpop.permute.xlu0 %1696
        %1698 = vrot.lane.b32.xlu0 %v606, 64
        %v1699 = vpop.permute.xlu0 %1698
        %1700 = vrot.lane.b32.xlu0 %v609, 64
        %v1701 = vpop.permute.xlu0 %1700
        %1702 = vrot.lane.b32.xlu0 %v612, 64
        %v1703 = vpop.permute.xlu0 %1702
        %1704 = vrot.lane.b32.xlu0 %v615, 64
        %v1705 = vpop.permute.xlu0 %1704
        %1706 = vrot.lane.b32.xlu0 %v618, 64
        %v1707 = vpop.permute.xlu0 %1706
        %1716 = vrot.lane.b32.xlu0 %v1356, 96
        %v1717 = vpop.permute.xlu0 %1716
        %1718 = vrot.lane.b32.xlu0 %v1359, 96
        %v1719 = vpop.permute.xlu0 %1718
        %1720 = vrot.lane.b32.xlu0 %v1362, 96
        %v1721 = vpop.permute.xlu0 %1720
        %1722 = vrot.lane.b32.xlu0 %v1365, 96
        %v1723 = vpop.permute.xlu0 %1722
        %1724 = vrot.lane.b32.xlu0 %v1368, 96
        %v1725 = vpop.permute.xlu0 %1724
        %1726 = vrot.lane.b32.xlu0 %v1371, 96
        %v1727 = vpop.permute.xlu0 %1726
        %1728 = vrot.lane.b32.xlu0 %v1374, 96
        %v1729 = vpop.permute.xlu0 %1728
        %1730 = vrot.lane.b32.xlu0 %v1377, 96
        %v1731 = vpop.permute.xlu0 %1730
        %v1748 = vrot.slane %v356, 1
        %v1749 = vrot.slane %v357, 1
        %v1750 = vsel %vm594, %v1748, %v1749
        %v1751 = vrot.slane %v364, 1
        %v1752 = vrot.slane %v365, 1
        %v1753 = vsel %vm594, %v1751, %v1752
        %v1754 = vrot.slane %v372, 1
        %v1755 = vrot.slane %v373, 1
        %v1756 = vsel %vm594, %v1754, %v1755
        %v1757 = vrot.slane %v380, 1
        %v1758 = vrot.slane %v381, 1
        %v1759 = vsel %vm594, %v1757, %v1758
        %v1760 = vrot.slane %v388, 1
        %v1761 = vrot.slane %v389, 1
        %v1762 = vsel %vm594, %v1760, %v1761
        %v1763 = vrot.slane %v396, 1
        %v1764 = vrot.slane %v397, 1
        %v1765 = vsel %vm594, %v1763, %v1764
        %v1766 = vrot.slane %v404, 1
        %v1767 = vrot.slane %v405, 1
        %v1768 = vsel %vm594, %v1766, %v1767
        %v1769 = vrot.slane %v412, 1
        %v1770 = vrot.slane %v413, 1
        %v1771 = vsel %vm594, %v1769, %v1770
        %v1780 = vsel %vm627, %v356, %v1669
        %v1781 = vsel %vm627, %v364, %v1671
        %v1782 = vsel %vm627, %v372, %v1673
        %v1783 = vsel %vm627, %v380, %v1675
        %v1784 = vsel %vm627, %v388, %v1677
        %v1785 = vsel %vm627, %v396, %v1679
        %v1786 = vsel %vm627, %v404, %v1681
        %v1787 = vsel %vm627, %v412, %v1683
        %v1788 = vsel %vm636, %v1780, %v1693
        %v1789 = vsel %vm636, %v1781, %v1695
        %v1790 = vsel %vm636, %v1782, %v1697
        %v1791 = vsel %vm636, %v1783, %v1699
        %v1792 = vsel %vm636, %v1784, %v1701
        %v1793 = vsel %vm636, %v1785, %v1703
        %v1794 = vsel %vm636, %v1786, %v1705
        %v1795 = vsel %vm636, %v1787, %v1707
        %v1796 = vsel %vm645, %v1788, %v1717
        %v1797 = vsel %vm645, %v1789, %v1719
        %v1798 = vsel %vm645, %v1790, %v1721
        %v1799 = vsel %vm645, %v1791, %v1723
        %v1800 = vsel %vm645, %v1792, %v1725
        %v1801 = vsel %vm645, %v1793, %v1727
        %v1802 = vsel %vm645, %v1794, %v1729
        %v1803 = vsel %vm645, %v1795, %v1731
        %v1804 = vsel %vm627, %v1750, 0.0
        %v1805 = vsel %vm627, %v1753, 0.0
        %v1806 = vsel %vm627, %v1756, 0.0
        %v1807 = vsel %vm627, %v1759, 0.0
        %v1808 = vsel %vm627, %v1762, 0.0
        %v1809 = vsel %vm627, %v1765, 0.0
        %v1810 = vsel %vm627, %v1768, 0.0
        %v1811 = vsel %vm627, %v1771, 0.0
        %v1812 = vpack.c.bf16 %v1797, %v1796
        %v1813 = vpack.c.bf16 %v1805, %v1804
        %v1814 = vpack.c.bf16 %v1799, %v1798
        %v1815 = vpack.c.bf16 %v1807, %v1806
        %v1816 = vpack.c.bf16 %v1801, %v1800
        %v1817 = vpack.c.bf16 %v1809, %v1808
        %v1818 = vpack.c.bf16 %v1803, %v1802
        %v1819 = vpack.c.bf16 %v1811, %v1810
        %1820 = vmatprep.subr.bf16.mxu0 %v891
        %1821 = vmatpush1.bf16.msra.mxu0 %v890
        %1822 = vmatprep.subr.bf16.mxu0 %v887
        %1823 = vmatpush1.bf16.msra.mxu0 %v886
        %1824 = vmatprep.subr.bf16.mxu0 %v883
        %1825 = vmatpush1.bf16.msra.mxu0 %v882
        %1826 = vmatprep.subr.bf16.mxu0 %v879
        %1827 = vmatpush1.bf16.msra.mxu0 %v878
        %1828 = vmatprep.subr.bf16.mxu0 %v875
        %1829 = vmatpush1.bf16.msra.mxu0 %v874
        %1830 = vmatprep.subr.bf16.mxu0 %v871
        %1831 = vmatpush1.bf16.msra.mxu0 %v870
        %1832 = vmatprep.subr.bf16.mxu0 %v867
        %1833 = vmatpush1.bf16.msra.mxu0 %v866
        %1834 = vmatprep.subr.bf16.mxu0 %v863
        %1835 = vmatpush1.bf16.msra.mxu0 %v862
        %1836 = vmatprep.subr.bf16.mxu0 %v923
        %1837 = vmatpush2.bf16.msra.mxu0 %v922
        %1838 = vmatprep.subr.bf16.mxu0 %v919
        %1839 = vmatpush2.bf16.msra.mxu0 %v918
        %1840 = vmatprep.subr.bf16.mxu0 %v915
        %1841 = vmatpush2.bf16.msra.mxu0 %v914
        %1842 = vmatprep.subr.bf16.mxu0 %v911
        %1843 = vmatpush2.bf16.msra.mxu0 %v910
        %1844 = vmatprep.subr.bf16.mxu0 %v907
        %1845 = vmatpush2.bf16.msra.mxu0 %v906
        %1846 = vmatprep.subr.bf16.mxu0 %v903
        %1847 = vmatpush2.bf16.msra.mxu0 %v902
        %1848 = vmatprep.subr.bf16.mxu0 %v899
        %1849 = vmatpush2.bf16.msra.mxu0 %v898
        %1850 = vmatprep.subr.bf16.mxu0 %v895
        %1851 = vmatpush2.bf16.msra.mxu0 %v894
        %1852 = vmatprep.mubr.bf16.mxu0 %v1813
        %1853 = vmatmul.mubr.bf16.gmra.mxu0 %v1812
        %v1854 = vpop.f32.mrf.mxu0
        %v1855 = vadd.f32 0.0, %v1854
        %v1856 = vpop.f32.mrf.mxu0
        %v1857 = vadd.f32 0.0, %v1856
        %v1858 = vpop.f32.mrf.mxu0
        %v1859 = vadd.f32 0.0, %v1858
        %v1860 = vpop.f32.mrf.mxu0
        %v1861 = vadd.f32 0.0, %v1860
        %1862 = vmatprep.mubr.bf16.mxu0 %v1815
        %1863 = vmatmul.mubr.bf16.gmra.mxu0 %v1814
        %v1864 = vpop.f32.mrf.mxu0
        %v1865 = vadd.f32 0.0, %v1864
        %v1866 = vpop.f32.mrf.mxu0
        %v1867 = vadd.f32 0.0, %v1866
        %v1868 = vpop.f32.mrf.mxu0
        %v1869 = vadd.f32 0.0, %v1868
        %v1870 = vpop.f32.mrf.mxu0
        %v1871 = vadd.f32 0.0, %v1870
        %1872 = vmatprep.mubr.bf16.mxu0 %v1817
        %1873 = vmatmul.mubr.bf16.gmra.mxu0 %v1816
        %v1874 = vpop.f32.mrf.mxu0
        %v1875 = vadd.f32 0.0, %v1874
        %v1876 = vpop.f32.mrf.mxu0
        %v1877 = vadd.f32 0.0, %v1876
        %v1878 = vpop.f32.mrf.mxu0
        %v1879 = vadd.f32 0.0, %v1878
        %v1880 = vpop.f32.mrf.mxu0
        %v1881 = vadd.f32 0.0, %v1880
        %1882 = vmatprep.mubr.bf16.mxu0 %v1819
        %1883 = vmatmul.mubr.bf16.gmra.mxu0 %v1818
        %v1884 = vpop.f32.mrf.mxu0
        %v1885 = vadd.f32 0.0, %v1884
        %v1886 = vpop.f32.mrf.mxu0
        %v1887 = vadd.f32 0.0, %v1886
        %v1888 = vpop.f32.mrf.mxu0
        %v1889 = vadd.f32 0.0, %v1888
        %v1890 = vpop.f32.mrf.mxu0
        %v1891 = vadd.f32 0.0, %v1890
        %1892 = vdwg.mxu0
        %1893 = vmatprep.subr.bf16.mxu0 %v893
        %1894 = vmatpush1.bf16.msra.mxu0 %v892
        %1895 = vmatprep.subr.bf16.mxu0 %v889
        %1896 = vmatpush1.bf16.msra.mxu0 %v888
        %1897 = vmatprep.subr.bf16.mxu0 %v885
        %1898 = vmatpush1.bf16.msra.mxu0 %v884
        %1899 = vmatprep.subr.bf16.mxu0 %v881
        %1900 = vmatpush1.bf16.msra.mxu0 %v880
        %1901 = vmatprep.subr.bf16.mxu0 %v877
        %1902 = vmatpush1.bf16.msra.mxu0 %v876
        %1903 = vmatprep.subr.bf16.mxu0 %v873
        %1904 = vmatpush1.bf16.msra.mxu0 %v872
        %1905 = vmatprep.subr.bf16.mxu0 %v869
        %1906 = vmatpush1.bf16.msra.mxu0 %v868
        %1907 = vmatprep.subr.bf16.mxu0 %v865
        %1908 = vmatpush1.bf16.msra.mxu0 %v864
        %1909 = vmatprep.subr.bf16.mxu0 %v925
        %1910 = vmatpush2.bf16.msra.mxu0 %v924
        %1911 = vmatprep.subr.bf16.mxu0 %v921
        %1912 = vmatpush2.bf16.msra.mxu0 %v920
        %1913 = vmatprep.subr.bf16.mxu0 %v917
        %1914 = vmatpush2.bf16.msra.mxu0 %v916
        %1915 = vmatprep.subr.bf16.mxu0 %v913
        %1916 = vmatpush2.bf16.msra.mxu0 %v912
        %1917 = vmatprep.subr.bf16.mxu0 %v909
        %1918 = vmatpush2.bf16.msra.mxu0 %v908
        %1919 = vmatprep.subr.bf16.mxu0 %v905
        %1920 = vmatpush2.bf16.msra.mxu0 %v904
        %1921 = vmatprep.subr.bf16.mxu0 %v901
        %1922 = vmatpush2.bf16.msra.mxu0 %v900
        %1923 = vmatprep.subr.bf16.mxu0 %v897
        %1924 = vmatpush2.bf16.msra.mxu0 %v896
        %1925 = vmatprep.mubr.bf16.mxu0 %v1813
        %1926 = vmatmul.mubr.bf16.gmra.mxu0 %v1812
        %v1927 = vpop.f32.mrf.mxu0
        %v1928 = vadd.f32 0.0, %v1927
        %v1929 = vpop.f32.mrf.mxu0
        %v1930 = vadd.f32 0.0, %v1929
        %v1931 = vpop.f32.mrf.mxu0
        %v1932 = vadd.f32 0.0, %v1931
        %v1933 = vpop.f32.mrf.mxu0
        %v1934 = vadd.f32 0.0, %v1933
        %1935 = vmatprep.mubr.bf16.mxu0 %v1815
        %1936 = vmatmul.mubr.bf16.gmra.mxu0 %v1814
        %v1937 = vpop.f32.mrf.mxu0
        %v1938 = vadd.f32 0.0, %v1937
        %v1939 = vpop.f32.mrf.mxu0
        %v1940 = vadd.f32 0.0, %v1939
        %v1941 = vpop.f32.mrf.mxu0
        %v1942 = vadd.f32 0.0, %v1941
        %v1943 = vpop.f32.mrf.mxu0
        %v1944 = vadd.f32 0.0, %v1943
        %1945 = vmatprep.mubr.bf16.mxu0 %v1817
        %1946 = vmatmul.mubr.bf16.gmra.mxu0 %v1816
        %v1947 = vpop.f32.mrf.mxu0
        %v1948 = vadd.f32 0.0, %v1947
        %v1949 = vpop.f32.mrf.mxu0
        %v1950 = vadd.f32 0.0, %v1949
        %v1951 = vpop.f32.mrf.mxu0
        %v1952 = vadd.f32 0.0, %v1951
        %v1953 = vpop.f32.mrf.mxu0
        %v1954 = vadd.f32 0.0, %v1953
        %1955 = vmatprep.mubr.bf16.mxu0 %v1819
        %1956 = vmatmul.mubr.bf16.gmra.mxu0 %v1818
        %v1957 = vpop.f32.mrf.mxu0
        %v1958 = vadd.f32 0.0, %v1957
        %v1959 = vpop.f32.mrf.mxu0
        %v1960 = vadd.f32 0.0, %v1959
        %v1961 = vpop.f32.mrf.mxu0
        %v1962 = vadd.f32 0.0, %v1961
        %v1963 = vpop.f32.mrf.mxu0
        %v1964 = vadd.f32 0.0, %v1963
        %1965 = vdwg.mxu0
        %v1966 = vmul.f32 %v1855, %v1140
        %v1967 = vmul.f32 %v1857, %v1144
        %v1968 = vmul.f32 %v1928, %v1148
        %v1969 = vmul.f32 %v1930, %v1152
        %v1970 = vmul.f32 %v1859, %v1140
        %v1971 = vmul.f32 %v1861, %v1144
        %v1972 = vmul.f32 %v1932, %v1148
        %v1973 = vmul.f32 %v1934, %v1152
        %v1974 = vmul.f32 %v1865, %v1140
        %v1975 = vmul.f32 %v1867, %v1144
        %v1976 = vmul.f32 %v1938, %v1148
        %v1977 = vmul.f32 %v1940, %v1152
        %v1978 = vmul.f32 %v1869, %v1140
        %v1979 = vmul.f32 %v1871, %v1144
        %v1980 = vmul.f32 %v1942, %v1148
        %v1981 = vmul.f32 %v1944, %v1152
        %v1982 = vmul.f32 %v1875, %v1140
        %v1983 = vmul.f32 %v1877, %v1144
        %v1984 = vmul.f32 %v1948, %v1148
        %v1985 = vmul.f32 %v1950, %v1152
        %v1986 = vmul.f32 %v1879, %v1140
        %v1987 = vmul.f32 %v1881, %v1144
        %v1988 = vmul.f32 %v1952, %v1148
        %v1989 = vmul.f32 %v1954, %v1152
        %v1990 = vmul.f32 %v1885, %v1140
        %v1991 = vmul.f32 %v1887, %v1144
        %v1992 = vmul.f32 %v1958, %v1148
        %v1993 = vmul.f32 %v1960, %v1152
        %v1994 = vmul.f32 %v1889, %v1140
        %v1995 = vmul.f32 %v1891, %v1144
        %v1996 = vmul.f32 %v1962, %v1148
        %v1997 = vmul.f32 %v1964, %v1152
        %v1998 = vadd.f32 %v1966, %v1193
        %v1999 = vadd.f32 %v1967, %v1197
        %v2000 = vadd.f32 %v1968, %v1201
        %v2001 = vadd.f32 %v1969, %v1205
        %v2002 = vadd.f32 %v1970, %v1193
        %v2003 = vadd.f32 %v1971, %v1197
        %v2004 = vadd.f32 %v1972, %v1201
        %v2005 = vadd.f32 %v1973, %v1205
        %v2006 = vadd.f32 %v1974, %v1193
        %v2007 = vadd.f32 %v1975, %v1197
        %v2008 = vadd.f32 %v1976, %v1201
        %v2009 = vadd.f32 %v1977, %v1205
        %v2010 = vadd.f32 %v1978, %v1193
        %v2011 = vadd.f32 %v1979, %v1197
        %v2012 = vadd.f32 %v1980, %v1201
        %v2013 = vadd.f32 %v1981, %v1205
        %v2014 = vadd.f32 %v1982, %v1193
        %v2015 = vadd.f32 %v1983, %v1197
        %v2016 = vadd.f32 %v1984, %v1201
        %v2017 = vadd.f32 %v1985, %v1205
        %v2018 = vadd.f32 %v1986, %v1193
        %v2019 = vadd.f32 %v1987, %v1197
        %v2020 = vadd.f32 %v1988, %v1201
        %v2021 = vadd.f32 %v1989, %v1205
        %v2022 = vadd.f32 %v1990, %v1193
        %v2023 = vadd.f32 %v1991, %v1197
        %v2024 = vadd.f32 %v1992, %v1201
        %v2025 = vadd.f32 %v1993, %v1205
        %v2026 = vadd.f32 %v1994, %v1193
        %v2027 = vadd.f32 %v1995, %v1197
        %v2028 = vadd.f32 %v1996, %v1201
        %v2029 = vadd.f32 %v1997, %v1205
        %v2030 = vmax.f32 %v1998, 0.0
        %v2031 = vmax.f32 %v1999, 0.0
        %v2032 = vmax.f32 %v2000, 0.0
        %v2033 = vmax.f32 %v2001, 0.0
        %v2034 = vmax.f32 %v2002, 0.0
        %v2035 = vmax.f32 %v2003, 0.0
        %v2036 = vmax.f32 %v2004, 0.0
        %v2037 = vmax.f32 %v2005, 0.0
        %v2038 = vmax.f32 %v2006, 0.0
        %v2039 = vmax.f32 %v2007, 0.0
        %v2040 = vmax.f32 %v2008, 0.0
        %v2041 = vmax.f32 %v2009, 0.0
        %v2042 = vmax.f32 %v2010, 0.0
        %v2043 = vmax.f32 %v2011, 0.0
        %v2044 = vmax.f32 %v2012, 0.0
        %v2045 = vmax.f32 %v2013, 0.0
        %v2046 = vmax.f32 %v2014, 0.0
        %v2047 = vmax.f32 %v2015, 0.0
        %v2048 = vmax.f32 %v2016, 0.0
        %v2049 = vmax.f32 %v2017, 0.0
        %v2050 = vmax.f32 %v2018, 0.0
        %v2051 = vmax.f32 %v2019, 0.0
        %v2052 = vmax.f32 %v2020, 0.0
        %v2053 = vmax.f32 %v2021, 0.0
        %v2054 = vmax.f32 %v2022, 0.0
        %v2055 = vmax.f32 %v2023, 0.0
        %v2056 = vmax.f32 %v2024, 0.0
        %v2057 = vmax.f32 %v2025, 0.0
        %v2058 = vmax.f32 %v2026, 0.0
        %v2059 = vmax.f32 %v2027, 0.0
        %v2060 = vmax.f32 %v2028, 0.0
        %v2061 = vmax.f32 %v2029, 0.0
        %2062 = vrot.lane.b32.xlu0 %v597, 32
        %v2063 = vpop.permute.xlu0 %2062
        %2064 = vrot.lane.b32.xlu0 %v600, 32
        %v2065 = vpop.permute.xlu0 %2064
        %2066 = vrot.lane.b32.xlu0 %v603, 32
        %v2067 = vpop.permute.xlu0 %2066
        %2068 = vrot.lane.b32.xlu0 %v606, 32
        %v2069 = vpop.permute.xlu0 %2068
        %2070 = vrot.lane.b32.xlu0 %v609, 32
        %v2071 = vpop.permute.xlu0 %2070
        %2072 = vrot.lane.b32.xlu0 %v612, 32
        %v2073 = vpop.permute.xlu0 %2072
        %2074 = vrot.lane.b32.xlu0 %v615, 32
        %v2075 = vpop.permute.xlu0 %2074
        %2076 = vrot.lane.b32.xlu0 %v618, 32
        %v2077 = vpop.permute.xlu0 %2076
        %2086 = vrot.lane.b32.xlu0 %v1356, 64
        %v2087 = vpop.permute.xlu0 %2086
        %2088 = vrot.lane.b32.xlu0 %v1359, 64
        %v2089 = vpop.permute.xlu0 %2088
        %2090 = vrot.lane.b32.xlu0 %v1362, 64
        %v2091 = vpop.permute.xlu0 %2090
        %2092 = vrot.lane.b32.xlu0 %v1365, 64
        %v2093 = vpop.permute.xlu0 %2092
        %2094 = vrot.lane.b32.xlu0 %v1368, 64
        %v2095 = vpop.permute.xlu0 %2094
        %2096 = vrot.lane.b32.xlu0 %v1371, 64
        %v2097 = vpop.permute.xlu0 %2096
        %2098 = vrot.lane.b32.xlu0 %v1374, 64
        %v2099 = vpop.permute.xlu0 %2098
        %2100 = vrot.lane.b32.xlu0 %v1377, 64
        %v2101 = vpop.permute.xlu0 %2100
        %2110 = vrot.lane.b32.xlu0 %v1750, 96
        %v2111 = vpop.permute.xlu0 %2110
        %2112 = vrot.lane.b32.xlu0 %v1753, 96
        %v2113 = vpop.permute.xlu0 %2112
        %2114 = vrot.lane.b32.xlu0 %v1756, 96
        %v2115 = vpop.permute.xlu0 %2114
        %2116 = vrot.lane.b32.xlu0 %v1759, 96
        %v2117 = vpop.permute.xlu0 %2116
        %2118 = vrot.lane.b32.xlu0 %v1762, 96
        %v2119 = vpop.permute.xlu0 %2118
        %2120 = vrot.lane.b32.xlu0 %v1765, 96
        %v2121 = vpop.permute.xlu0 %2120
        %2122 = vrot.lane.b32.xlu0 %v1768, 96
        %v2123 = vpop.permute.xlu0 %2122
        %2124 = vrot.lane.b32.xlu0 %v1771, 96
        %v2125 = vpop.permute.xlu0 %2124
        %v2142 = vrot.slane %v358, 1
        %v2143 = vrot.slane %v359, 1
        %v2144 = vsel %vm594, %v2142, %v2143
        %v2145 = vrot.slane %v366, 1
        %v2146 = vrot.slane %v367, 1
        %v2147 = vsel %vm594, %v2145, %v2146
        %v2148 = vrot.slane %v374, 1
        %v2149 = vrot.slane %v375, 1
        %v2150 = vsel %vm594, %v2148, %v2149
        %v2151 = vrot.slane %v382, 1
        %v2152 = vrot.slane %v383, 1
        %v2153 = vsel %vm594, %v2151, %v2152
        %v2154 = vrot.slane %v390, 1
        %v2155 = vrot.slane %v391, 1
        %v2156 = vsel %vm594, %v2154, %v2155
        %v2157 = vrot.slane %v398, 1
        %v2158 = vrot.slane %v399, 1
        %v2159 = vsel %vm594, %v2157, %v2158
        %v2160 = vrot.slane %v406, 1
        %v2161 = vrot.slane %v407, 1
        %v2162 = vsel %vm594, %v2160, %v2161
        %v2163 = vrot.slane %v414, 1
        %v2164 = vrot.slane %v415, 1
        %v2165 = vsel %vm594, %v2163, %v2164
        %v2174 = vsel %vm627, %v358, %v2063
        %v2175 = vsel %vm627, %v366, %v2065
        %v2176 = vsel %vm627, %v374, %v2067
        %v2177 = vsel %vm627, %v382, %v2069
        %v2178 = vsel %vm627, %v390, %v2071
        %v2179 = vsel %vm627, %v398, %v2073
        %v2180 = vsel %vm627, %v406, %v2075
        %v2181 = vsel %vm627, %v414, %v2077
        %v2182 = vsel %vm636, %v2174, %v2087
        %v2183 = vsel %vm636, %v2175, %v2089
        %v2184 = vsel %vm636, %v2176, %v2091
        %v2185 = vsel %vm636, %v2177, %v2093
        %v2186 = vsel %vm636, %v2178, %v2095
        %v2187 = vsel %vm636, %v2179, %v2097
        %v2188 = vsel %vm636, %v2180, %v2099
        %v2189 = vsel %vm636, %v2181, %v2101
        %v2190 = vsel %vm645, %v2182, %v2111
        %v2191 = vsel %vm645, %v2183, %v2113
        %v2192 = vsel %vm645, %v2184, %v2115
        %v2193 = vsel %vm645, %v2185, %v2117
        %v2194 = vsel %vm645, %v2186, %v2119
        %v2195 = vsel %vm645, %v2187, %v2121
        %v2196 = vsel %vm645, %v2188, %v2123
        %v2197 = vsel %vm645, %v2189, %v2125
        %v2198 = vsel %vm627, %v2144, 0.0
        %v2199 = vsel %vm627, %v2147, 0.0
        %v2200 = vsel %vm627, %v2150, 0.0
        %v2201 = vsel %vm627, %v2153, 0.0
        %v2202 = vsel %vm627, %v2156, 0.0
        %v2203 = vsel %vm627, %v2159, 0.0
        %v2204 = vsel %vm627, %v2162, 0.0
        %v2205 = vsel %vm627, %v2165, 0.0
        %v2206 = vpack.c.bf16 %v2191, %v2190
        %v2207 = vpack.c.bf16 %v2199, %v2198
        %v2208 = vpack.c.bf16 %v2193, %v2192
        %v2209 = vpack.c.bf16 %v2201, %v2200
        %v2210 = vpack.c.bf16 %v2195, %v2194
        %v2211 = vpack.c.bf16 %v2203, %v2202
        %v2212 = vpack.c.bf16 %v2197, %v2196
        %v2213 = vpack.c.bf16 %v2205, %v2204
        %2214 = vmatprep.subr.bf16.mxu0 %v891
        %2215 = vmatpush1.bf16.msra.mxu0 %v890
        %2216 = vmatprep.subr.bf16.mxu0 %v887
        %2217 = vmatpush1.bf16.msra.mxu0 %v886
        %2218 = vmatprep.subr.bf16.mxu0 %v883
        %2219 = vmatpush1.bf16.msra.mxu0 %v882
        %2220 = vmatprep.subr.bf16.mxu0 %v879
        %2221 = vmatpush1.bf16.msra.mxu0 %v878
        %2222 = vmatprep.subr.bf16.mxu0 %v875
        %2223 = vmatpush1.bf16.msra.mxu0 %v874
        %2224 = vmatprep.subr.bf16.mxu0 %v871
        %2225 = vmatpush1.bf16.msra.mxu0 %v870
        %2226 = vmatprep.subr.bf16.mxu0 %v867
        %2227 = vmatpush1.bf16.msra.mxu0 %v866
        %2228 = vmatprep.subr.bf16.mxu0 %v863
        %2229 = vmatpush1.bf16.msra.mxu0 %v862
        %2230 = vmatprep.subr.bf16.mxu0 %v923
        %2231 = vmatpush2.bf16.msra.mxu0 %v922
        %2232 = vmatprep.subr.bf16.mxu0 %v919
        %2233 = vmatpush2.bf16.msra.mxu0 %v918
        %2234 = vmatprep.subr.bf16.mxu0 %v915
        %2235 = vmatpush2.bf16.msra.mxu0 %v914
        %2236 = vmatprep.subr.bf16.mxu0 %v911
        %2237 = vmatpush2.bf16.msra.mxu0 %v910
        %2238 = vmatprep.subr.bf16.mxu0 %v907
        %2239 = vmatpush2.bf16.msra.mxu0 %v906
        %2240 = vmatprep.subr.bf16.mxu0 %v903
        %2241 = vmatpush2.bf16.msra.mxu0 %v902
        %2242 = vmatprep.subr.bf16.mxu0 %v899
        %2243 = vmatpush2.bf16.msra.mxu0 %v898
        %2244 = vmatprep.subr.bf16.mxu0 %v895
        %2245 = vmatpush2.bf16.msra.mxu0 %v894
        %2246 = vmatprep.mubr.bf16.mxu0 %v2207
        %2247 = vmatmul.mubr.bf16.gmra.mxu0 %v2206
        %v2248 = vpop.f32.mrf.mxu0
        %v2249 = vadd.f32 0.0, %v2248
        %v2250 = vpop.f32.mrf.mxu0
        %v2251 = vadd.f32 0.0, %v2250
        %v2252 = vpop.f32.mrf.mxu0
        %v2253 = vadd.f32 0.0, %v2252
        %v2254 = vpop.f32.mrf.mxu0
        %v2255 = vadd.f32 0.0, %v2254
        %2256 = vmatprep.mubr.bf16.mxu0 %v2209
        %2257 = vmatmul.mubr.bf16.gmra.mxu0 %v2208
        %v2258 = vpop.f32.mrf.mxu0
        %v2259 = vadd.f32 0.0, %v2258
        %v2260 = vpop.f32.mrf.mxu0
        %v2261 = vadd.f32 0.0, %v2260
        %v2262 = vpop.f32.mrf.mxu0
        %v2263 = vadd.f32 0.0, %v2262
        %v2264 = vpop.f32.mrf.mxu0
        %v2265 = vadd.f32 0.0, %v2264
        %2266 = vmatprep.mubr.bf16.mxu0 %v2211
        %2267 = vmatmul.mubr.bf16.gmra.mxu0 %v2210
        %v2268 = vpop.f32.mrf.mxu0
        %v2269 = vadd.f32 0.0, %v2268
        %v2270 = vpop.f32.mrf.mxu0
        %v2271 = vadd.f32 0.0, %v2270
        %v2272 = vpop.f32.mrf.mxu0
        %v2273 = vadd.f32 0.0, %v2272
        %v2274 = vpop.f32.mrf.mxu0
        %v2275 = vadd.f32 0.0, %v2274
        %2276 = vmatprep.mubr.bf16.mxu0 %v2213
        %2277 = vmatmul.mubr.bf16.gmra.mxu0 %v2212
        %v2278 = vpop.f32.mrf.mxu0
        %v2279 = vadd.f32 0.0, %v2278
        %v2280 = vpop.f32.mrf.mxu0
        %v2281 = vadd.f32 0.0, %v2280
        %v2282 = vpop.f32.mrf.mxu0
        %v2283 = vadd.f32 0.0, %v2282
        %v2284 = vpop.f32.mrf.mxu0
        %v2285 = vadd.f32 0.0, %v2284
        %2286 = vdwg.mxu0
        %2287 = vmatprep.subr.bf16.mxu0 %v893
        %2288 = vmatpush1.bf16.msra.mxu0 %v892
        %2289 = vmatprep.subr.bf16.mxu0 %v889
        %2290 = vmatpush1.bf16.msra.mxu0 %v888
        %2291 = vmatprep.subr.bf16.mxu0 %v885
        %2292 = vmatpush1.bf16.msra.mxu0 %v884
        %2293 = vmatprep.subr.bf16.mxu0 %v881
        %2294 = vmatpush1.bf16.msra.mxu0 %v880
        %2295 = vmatprep.subr.bf16.mxu0 %v877
        %2296 = vmatpush1.bf16.msra.mxu0 %v876
        %2297 = vmatprep.subr.bf16.mxu0 %v873
        %2298 = vmatpush1.bf16.msra.mxu0 %v872
        %2299 = vmatprep.subr.bf16.mxu0 %v869
        %2300 = vmatpush1.bf16.msra.mxu0 %v868
        %2301 = vmatprep.subr.bf16.mxu0 %v865
        %2302 = vmatpush1.bf16.msra.mxu0 %v864
        %2303 = vmatprep.subr.bf16.mxu0 %v925
        %2304 = vmatpush2.bf16.msra.mxu0 %v924
        %2305 = vmatprep.subr.bf16.mxu0 %v921
        %2306 = vmatpush2.bf16.msra.mxu0 %v920
        %2307 = vmatprep.subr.bf16.mxu0 %v917
        %2308 = vmatpush2.bf16.msra.mxu0 %v916
        %2309 = vmatprep.subr.bf16.mxu0 %v913
        %2310 = vmatpush2.bf16.msra.mxu0 %v912
        %2311 = vmatprep.subr.bf16.mxu0 %v909
        %2312 = vmatpush2.bf16.msra.mxu0 %v908
        %2313 = vmatprep.subr.bf16.mxu0 %v905
        %2314 = vmatpush2.bf16.msra.mxu0 %v904
        %2315 = vmatprep.subr.bf16.mxu0 %v901
        %2316 = vmatpush2.bf16.msra.mxu0 %v900
        %2317 = vmatprep.subr.bf16.mxu0 %v897
        %2318 = vmatpush2.bf16.msra.mxu0 %v896
        %2319 = vmatprep.mubr.bf16.mxu0 %v2207
        %2320 = vmatmul.mubr.bf16.gmra.mxu0 %v2206
        %v2321 = vpop.f32.mrf.mxu0
        %v2322 = vadd.f32 0.0, %v2321
        %v2323 = vpop.f32.mrf.mxu0
        %v2324 = vadd.f32 0.0, %v2323
        %v2325 = vpop.f32.mrf.mxu0
        %v2326 = vadd.f32 0.0, %v2325
        %v2327 = vpop.f32.mrf.mxu0
        %v2328 = vadd.f32 0.0, %v2327
        %2329 = vmatprep.mubr.bf16.mxu0 %v2209
        %2330 = vmatmul.mubr.bf16.gmra.mxu0 %v2208
        %v2331 = vpop.f32.mrf.mxu0
        %v2332 = vadd.f32 0.0, %v2331
        %v2333 = vpop.f32.mrf.mxu0
        %v2334 = vadd.f32 0.0, %v2333
        %v2335 = vpop.f32.mrf.mxu0
        %v2336 = vadd.f32 0.0, %v2335
        %v2337 = vpop.f32.mrf.mxu0
        %v2338 = vadd.f32 0.0, %v2337
        %2339 = vmatprep.mubr.bf16.mxu0 %v2211
        %2340 = vmatmul.mubr.bf16.gmra.mxu0 %v2210
        %v2341 = vpop.f32.mrf.mxu0
        %v2342 = vadd.f32 0.0, %v2341
        %v2343 = vpop.f32.mrf.mxu0
        %v2344 = vadd.f32 0.0, %v2343
        %v2345 = vpop.f32.mrf.mxu0
        %v2346 = vadd.f32 0.0, %v2345
        %v2347 = vpop.f32.mrf.mxu0
        %v2348 = vadd.f32 0.0, %v2347
        %2349 = vmatprep.mubr.bf16.mxu0 %v2213
        %2350 = vmatmul.mubr.bf16.gmra.mxu0 %v2212
        %v2351 = vpop.f32.mrf.mxu0
        %v2352 = vadd.f32 0.0, %v2351
        %v2353 = vpop.f32.mrf.mxu0
        %v2354 = vadd.f32 0.0, %v2353
        %v2355 = vpop.f32.mrf.mxu0
        %v2356 = vadd.f32 0.0, %v2355
        %v2357 = vpop.f32.mrf.mxu0
        %v2358 = vadd.f32 0.0, %v2357
        %2359 = vdwg.mxu0
        %v2360 = vmul.f32 %v2249, %v1140
        %v2361 = vmul.f32 %v2251, %v1144
        %v2362 = vmul.f32 %v2322, %v1148
        %v2363 = vmul.f32 %v2324, %v1152
        %v2364 = vmul.f32 %v2253, %v1140
        %v2365 = vmul.f32 %v2255, %v1144
        %v2366 = vmul.f32 %v2326, %v1148
        %v2367 = vmul.f32 %v2328, %v1152
        %v2368 = vmul.f32 %v2259, %v1140
        %v2369 = vmul.f32 %v2261, %v1144
        %v2370 = vmul.f32 %v2332, %v1148
        %v2371 = vmul.f32 %v2334, %v1152
        %v2372 = vmul.f32 %v2263, %v1140
        %v2373 = vmul.f32 %v2265, %v1144
        %v2374 = vmul.f32 %v2336, %v1148
        %v2375 = vmul.f32 %v2338, %v1152
        %v2376 = vmul.f32 %v2269, %v1140
        %v2377 = vmul.f32 %v2271, %v1144
        %v2378 = vmul.f32 %v2342, %v1148
        %v2379 = vmul.f32 %v2344, %v1152
        %v2380 = vmul.f32 %v2273, %v1140
        %v2381 = vmul.f32 %v2275, %v1144
        %v2382 = vmul.f32 %v2346, %v1148
        %v2383 = vmul.f32 %v2348, %v1152
        %v2384 = vmul.f32 %v2279, %v1140
        %v2385 = vmul.f32 %v2281, %v1144
        %v2386 = vmul.f32 %v2352, %v1148
        %v2387 = vmul.f32 %v2354, %v1152
        %v2388 = vmul.f32 %v2283, %v1140
        %v2389 = vmul.f32 %v2285, %v1144
        %v2390 = vmul.f32 %v2356, %v1148
        %v2391 = vmul.f32 %v2358, %v1152
        %v2392 = vadd.f32 %v2360, %v1193
        %v2393 = vadd.f32 %v2361, %v1197
        %v2394 = vadd.f32 %v2362, %v1201
        %v2395 = vadd.f32 %v2363, %v1205
        %v2396 = vadd.f32 %v2364, %v1193
        %v2397 = vadd.f32 %v2365, %v1197
        %v2398 = vadd.f32 %v2366, %v1201
        %v2399 = vadd.f32 %v2367, %v1205
        %v2400 = vadd.f32 %v2368, %v1193
        %v2401 = vadd.f32 %v2369, %v1197
        %v2402 = vadd.f32 %v2370, %v1201
        %v2403 = vadd.f32 %v2371, %v1205
        %v2404 = vadd.f32 %v2372, %v1193
        %v2405 = vadd.f32 %v2373, %v1197
        %v2406 = vadd.f32 %v2374, %v1201
        %v2407 = vadd.f32 %v2375, %v1205
        %v2408 = vadd.f32 %v2376, %v1193
        %v2409 = vadd.f32 %v2377, %v1197
        %v2410 = vadd.f32 %v2378, %v1201
        %v2411 = vadd.f32 %v2379, %v1205
        %v2412 = vadd.f32 %v2380, %v1193
        %v2413 = vadd.f32 %v2381, %v1197
        %v2414 = vadd.f32 %v2382, %v1201
        %v2415 = vadd.f32 %v2383, %v1205
        %v2416 = vadd.f32 %v2384, %v1193
        %v2417 = vadd.f32 %v2385, %v1197
        %v2418 = vadd.f32 %v2386, %v1201
        %v2419 = vadd.f32 %v2387, %v1205
        %v2420 = vadd.f32 %v2388, %v1193
        %v2421 = vadd.f32 %v2389, %v1197
        %v2422 = vadd.f32 %v2390, %v1201
        %v2423 = vadd.f32 %v2391, %v1205
        %v2424 = vmax.f32 %v2392, 0.0
        %v2425 = vmax.f32 %v2393, 0.0
        %v2426 = vmax.f32 %v2394, 0.0
        %v2427 = vmax.f32 %v2395, 0.0
        %v2428 = vmax.f32 %v2396, 0.0
        %v2429 = vmax.f32 %v2397, 0.0
        %v2430 = vmax.f32 %v2398, 0.0
        %v2431 = vmax.f32 %v2399, 0.0
        %v2432 = vmax.f32 %v2400, 0.0
        %v2433 = vmax.f32 %v2401, 0.0
        %v2434 = vmax.f32 %v2402, 0.0
        %v2435 = vmax.f32 %v2403, 0.0
        %v2436 = vmax.f32 %v2404, 0.0
        %v2437 = vmax.f32 %v2405, 0.0
        %v2438 = vmax.f32 %v2406, 0.0
        %v2439 = vmax.f32 %v2407, 0.0
        %v2440 = vmax.f32 %v2408, 0.0
        %v2441 = vmax.f32 %v2409, 0.0
        %v2442 = vmax.f32 %v2410, 0.0
        %v2443 = vmax.f32 %v2411, 0.0
        %v2444 = vmax.f32 %v2412, 0.0
        %v2445 = vmax.f32 %v2413, 0.0
        %v2446 = vmax.f32 %v2414, 0.0
        %v2447 = vmax.f32 %v2415, 0.0
        %v2448 = vmax.f32 %v2416, 0.0
        %v2449 = vmax.f32 %v2417, 0.0
        %v2450 = vmax.f32 %v2418, 0.0
        %v2451 = vmax.f32 %v2419, 0.0
        %v2452 = vmax.f32 %v2420, 0.0
        %v2453 = vmax.f32 %v2421, 0.0
        %v2454 = vmax.f32 %v2422, 0.0
        %v2455 = vmax.f32 %v2423, 0.0
        %v2456 = vmax.f32 %v1242, %v1244
        %v2457 = vmax.f32 %v1243, %v1245
        %v2458 = vmax.f32 %v1246, %v1248
        %v2459 = vmax.f32 %v1247, %v1249
        %v2460 = vmax.f32 %v1250, %v1252
        %v2461 = vmax.f32 %v1251, %v1253
        %v2462 = vmax.f32 %v1254, %v1256
        %v2463 = vmax.f32 %v1255, %v1257
        %v2464 = vmax.f32 %v1258, %v1260
        %v2465 = vmax.f32 %v1259, %v1261
        %v2466 = vmax.f32 %v1262, %v1264
        %v2467 = vmax.f32 %v1263, %v1265
        %v2468 = vmax.f32 %v1266, %v1268
        %v2469 = vmax.f32 %v1267, %v1269
        %v2470 = vmax.f32 %v1270, %v1272
        %v2471 = vmax.f32 %v1271, %v1273
        %v2472 = vmax.f32 %v1636, %v1638
        %v2473 = vmax.f32 %v1637, %v1639
        %v2474 = vmax.f32 %v1640, %v1642
        %v2475 = vmax.f32 %v1641, %v1643
        %v2476 = vmax.f32 %v1644, %v1646
        %v2477 = vmax.f32 %v1645, %v1647
        %v2478 = vmax.f32 %v1648, %v1650
        %v2479 = vmax.f32 %v1649, %v1651
        %v2480 = vmax.f32 %v1652, %v1654
        %v2481 = vmax.f32 %v1653, %v1655
        %v2482 = vmax.f32 %v1656, %v1658
        %v2483 = vmax.f32 %v1657, %v1659
        %v2484 = vmax.f32 %v1660, %v1662
        %v2485 = vmax.f32 %v1661, %v1663
        %v2486 = vmax.f32 %v1664, %v1666
        %v2487 = vmax.f32 %v1665, %v1667
        %v2488 = vmax.f32 %v2456, %v2472
        %v2489 = vmax.f32 %v2457, %v2473
        %v2490 = vmax.f32 %v2458, %v2474
        %v2491 = vmax.f32 %v2459, %v2475
        %v2492 = vmax.f32 %v2460, %v2476
        %v2493 = vmax.f32 %v2461, %v2477
        %v2494 = vmax.f32 %v2462, %v2478
        %v2495 = vmax.f32 %v2463, %v2479
        %v2496 = vmax.f32 %v2464, %v2480
        %v2497 = vmax.f32 %v2465, %v2481
        %v2498 = vmax.f32 %v2466, %v2482
        %v2499 = vmax.f32 %v2467, %v2483
        %v2500 = vmax.f32 %v2468, %v2484
        %v2501 = vmax.f32 %v2469, %v2485
        %v2502 = vmax.f32 %v2470, %v2486
        %v2503 = vmax.f32 %v2471, %v2487
        %v2504 = vmax.f32 %v2030, %v2032
        %v2505 = vmax.f32 %v2031, %v2033
        %v2506 = vmax.f32 %v2034, %v2036
        %v2507 = vmax.f32 %v2035, %v2037
        %v2508 = vmax.f32 %v2038, %v2040
        %v2509 = vmax.f32 %v2039, %v2041
        %v2510 = vmax.f32 %v2042, %v2044
        %v2511 = vmax.f32 %v2043, %v2045
        %v2512 = vmax.f32 %v2046, %v2048
        %v2513 = vmax.f32 %v2047, %v2049
        %v2514 = vmax.f32 %v2050, %v2052
        %v2515 = vmax.f32 %v2051, %v2053
        %v2516 = vmax.f32 %v2054, %v2056
        %v2517 = vmax.f32 %v2055, %v2057
        %v2518 = vmax.f32 %v2058, %v2060
        %v2519 = vmax.f32 %v2059, %v2061
        %v2520 = vmax.f32 %v2424, %v2426
        %v2521 = vmax.f32 %v2425, %v2427
        %v2522 = vmax.f32 %v2428, %v2430
        %v2523 = vmax.f32 %v2429, %v2431
        %v2524 = vmax.f32 %v2432, %v2434
        %v2525 = vmax.f32 %v2433, %v2435
        %v2526 = vmax.f32 %v2436, %v2438
        %v2527 = vmax.f32 %v2437, %v2439
        %v2528 = vmax.f32 %v2440, %v2442
        %v2529 = vmax.f32 %v2441, %v2443
        %v2530 = vmax.f32 %v2444, %v2446
        %v2531 = vmax.f32 %v2445, %v2447
        %v2532 = vmax.f32 %v2448, %v2450
        %v2533 = vmax.f32 %v2449, %v2451
        %v2534 = vmax.f32 %v2452, %v2454
        %v2535 = vmax.f32 %v2453, %v2455
        %v2536 = vmax.f32 %v2504, %v2520
        %v2537 = vmax.f32 %v2505, %v2521
        %v2538 = vmax.f32 %v2506, %v2522
        %v2539 = vmax.f32 %v2507, %v2523
        %v2540 = vmax.f32 %v2508, %v2524
        %v2541 = vmax.f32 %v2509, %v2525
        %v2542 = vmax.f32 %v2510, %v2526
        %v2543 = vmax.f32 %v2511, %v2527
        %v2544 = vmax.f32 %v2512, %v2528
        %v2545 = vmax.f32 %v2513, %v2529
        %v2546 = vmax.f32 %v2514, %v2530
        %v2547 = vmax.f32 %v2515, %v2531
        %v2548 = vmax.f32 %v2516, %v2532
        %v2549 = vmax.f32 %v2517, %v2533
        %v2550 = vmax.f32 %v2518, %v2534
        %v2551 = vmax.f32 %v2519, %v2535
        %v2568 = vrot.slane %v2488, 7
        %v2569 = vrot.slane %v2489, 7
        %v2570 = vrot.slane %v2490, 7
        %v2571 = vrot.slane %v2491, 7
        %v2572 = vrot.slane %v2492, 7
        %v2573 = vrot.slane %v2493, 7
        %v2574 = vrot.slane %v2494, 7
        %v2575 = vrot.slane %v2495, 7
        %v2576 = vrot.slane %v2496, 7
        %v2577 = vrot.slane %v2497, 7
        %v2578 = vrot.slane %v2498, 7
        %v2579 = vrot.slane %v2499, 7
        %v2580 = vrot.slane %v2500, 7
        %v2581 = vrot.slane %v2501, 7
        %v2582 = vrot.slane %v2502, 7
        %v2583 = vrot.slane %v2503, 7
        %vm2600 = vcmask 1040384
        %v2601 = vsel %vm2600, 0.0, %v2568
        %v2602 = vsel %vm2600, 0.0, %v2569
        %v2603 = vsel %vm2600, 0.0, %v2570
        %v2604 = vsel %vm2600, 0.0, %v2571
        %v2605 = vsel %vm2600, 0.0, %v2572
        %v2606 = vsel %vm2600, 0.0, %v2573
        %v2607 = vsel %vm2600, 0.0, %v2574
        %v2608 = vsel %vm2600, 0.0, %v2575
        %v2609 = vsel %vm2600, 0.0, %v2576
        %v2610 = vsel %vm2600, 0.0, %v2577
        %v2611 = vsel %vm2600, 0.0, %v2578
        %v2612 = vsel %vm2600, 0.0, %v2579
        %v2613 = vsel %vm2600, 0.0, %v2580
        %v2614 = vsel %vm2600, 0.0, %v2581
        %v2615 = vsel %vm2600, 0.0, %v2582
        %v2616 = vsel %vm2600, 0.0, %v2583
        %v2617 = vpack.c.bf16 %v2603, %v2601
        %v2618 = vpack.c.bf16 %v2604, %v2602
        %v2619 = vpack.c.bf16 %v2607, %v2605
        %v2620 = vpack.c.bf16 %v2608, %v2606
        %v2621 = vpack.c.bf16 %v2611, %v2609
        %v2622 = vpack.c.bf16 %v2612, %v2610
        %v2623 = vpack.c.bf16 %v2615, %v2613
        %v2624 = vpack.c.bf16 %v2616, %v2614
        %v2641 = vrot.slane %v2536, 7
        %v2642 = vrot.slane %v2537, 7
        %v2643 = vrot.slane %v2538, 7
        %v2644 = vrot.slane %v2539, 7
        %v2645 = vrot.slane %v2540, 7
        %v2646 = vrot.slane %v2541, 7
        %v2647 = vrot.slane %v2542, 7
        %v2648 = vrot.slane %v2543, 7
        %v2649 = vrot.slane %v2544, 7
        %v2650 = vrot.slane %v2545, 7
        %v2651 = vrot.slane %v2546, 7
        %v2652 = vrot.slane %v2547, 7
        %v2653 = vrot.slane %v2548, 7
        %v2654 = vrot.slane %v2549, 7
        %v2655 = vrot.slane %v2550, 7
        %v2656 = vrot.slane %v2551, 7
        %v2673 = vsel %vm2600, 0.0, %v2641
        %v2674 = vsel %vm2600, 0.0, %v2642
        %v2675 = vsel %vm2600, 0.0, %v2643
        %v2676 = vsel %vm2600, 0.0, %v2644
        %v2677 = vsel %vm2600, 0.0, %v2645
        %v2678 = vsel %vm2600, 0.0, %v2646
        %v2679 = vsel %vm2600, 0.0, %v2647
        %v2680 = vsel %vm2600, 0.0, %v2648
        %v2681 = vsel %vm2600, 0.0, %v2649
        %v2682 = vsel %vm2600, 0.0, %v2650
        %v2683 = vsel %vm2600, 0.0, %v2651
        %v2684 = vsel %vm2600, 0.0, %v2652
        %v2685 = vsel %vm2600, 0.0, %v2653
        %v2686 = vsel %vm2600, 0.0, %v2654
        %v2687 = vsel %vm2600, 0.0, %v2655
        %v2688 = vsel %vm2600, 0.0, %v2656
        %v2689 = vpack.c.bf16 %v2675, %v2673
        %v2690 = vpack.c.bf16 %v2676, %v2674
        %v2691 = vpack.c.bf16 %v2679, %v2677
        %v2692 = vpack.c.bf16 %v2680, %v2678
        %v2693 = vpack.c.bf16 %v2683, %v2681
        %v2694 = vpack.c.bf16 %v2684, %v2682
        %v2695 = vpack.c.bf16 %v2687, %v2685
        %v2696 = vpack.c.bf16 %v2688, %v2686
        %v2697 = vpack.c.bf16 %v2490, %v2488
        %v2698 = vpack.c.bf16 %v2491, %v2489
        %v2699 = vpack.c.bf16 %v2494, %v2492
        %v2700 = vpack.c.bf16 %v2495, %v2493
        %v2701 = vpack.c.bf16 %v2498, %v2496
        %v2702 = vpack.c.bf16 %v2499, %v2497
        %v2703 = vpack.c.bf16 %v2502, %v2500
        %v2704 = vpack.c.bf16 %v2503, %v2501
        %v2705 = vpack.c.bf16 %v2538, %v2536
        %v2706 = vpack.c.bf16 %v2539, %v2537
        %v2707 = vpack.c.bf16 %v2542, %v2540
        %v2708 = vpack.c.bf16 %v2543, %v2541
        %v2709 = vpack.c.bf16 %v2546, %v2544
        %v2710 = vpack.c.bf16 %v2547, %v2545
        %v2711 = vpack.c.bf16 %v2550, %v2548
        %v2712 = vpack.c.bf16 %v2551, %v2549
        %v2713 = vrot.slane %v2488, 1
        %v2714 = vrot.slane %v2489, 1
        %v2715 = vrot.slane %v2490, 1
        %v2716 = vrot.slane %v2491, 1
        %v2717 = vrot.slane %v2492, 1
        %v2718 = vrot.slane %v2493, 1
        %v2719 = vrot.slane %v2494, 1
        %v2720 = vrot.slane %v2495, 1
        %v2721 = vrot.slane %v2496, 1
        %v2722 = vrot.slane %v2497, 1
        %v2723 = vrot.slane %v2498, 1
        %v2724 = vrot.slane %v2499, 1
        %v2725 = vrot.slane %v2500, 1
        %v2726 = vrot.slane %v2501, 1
        %v2727 = vrot.slane %v2502, 1
        %v2728 = vrot.slane %v2503, 1
        %vm2745 = vcmask 1045504
        %v2746 = vsel %vm2745, %v2713, 0.0
        %v2747 = vsel %vm2745, %v2714, 0.0
        %v2748 = vsel %vm2745, %v2715, 0.0
        %v2749 = vsel %vm2745, %v2716, 0.0
        %v2750 = vsel %vm2745, %v2717, 0.0
        %v2751 = vsel %vm2745, %v2718, 0.0
        %v2752 = vsel %vm2745, %v2719, 0.0
        %v2753 = vsel %vm2745, %v2720, 0.0
        %v2754 = vsel %vm2745, %v2721, 0.0
        %v2755 = vsel %vm2745, %v2722, 0.0
        %v2756 = vsel %vm2745, %v2723, 0.0
        %v2757 = vsel %vm2745, %v2724, 0.0
        %v2758 = vsel %vm2745, %v2725, 0.0
        %v2759 = vsel %vm2745, %v2726, 0.0
        %v2760 = vsel %vm2745, %v2727, 0.0
        %v2761 = vsel %vm2745, %v2728, 0.0
        %v2762 = vpack.c.bf16 %v2748, %v2746
        %v2763 = vpack.c.bf16 %v2749, %v2747
        %v2764 = vpack.c.bf16 %v2752, %v2750
        %v2765 = vpack.c.bf16 %v2753, %v2751
        %v2766 = vpack.c.bf16 %v2756, %v2754
        %v2767 = vpack.c.bf16 %v2757, %v2755
        %v2768 = vpack.c.bf16 %v2760, %v2758
        %v2769 = vpack.c.bf16 %v2761, %v2759
        %v2770 = vrot.slane %v2536, 1
        %v2771 = vrot.slane %v2537, 1
        %v2772 = vrot.slane %v2538, 1
        %v2773 = vrot.slane %v2539, 1
        %v2774 = vrot.slane %v2540, 1
        %v2775 = vrot.slane %v2541, 1
        %v2776 = vrot.slane %v2542, 1
        %v2777 = vrot.slane %v2543, 1
        %v2778 = vrot.slane %v2544, 1
        %v2779 = vrot.slane %v2545, 1
        %v2780 = vrot.slane %v2546, 1
        %v2781 = vrot.slane %v2547, 1
        %v2782 = vrot.slane %v2548, 1
        %v2783 = vrot.slane %v2549, 1
        %v2784 = vrot.slane %v2550, 1
        %v2785 = vrot.slane %v2551, 1
        %v2802 = vsel %vm2745, %v2770, 0.0
        %v2803 = vsel %vm2745, %v2771, 0.0
        %v2804 = vsel %vm2745, %v2772, 0.0
        %v2805 = vsel %vm2745, %v2773, 0.0
        %v2806 = vsel %vm2745, %v2774, 0.0
        %v2807 = vsel %vm2745, %v2775, 0.0
        %v2808 = vsel %vm2745, %v2776, 0.0
        %v2809 = vsel %vm2745, %v2777, 0.0
        %v2810 = vsel %vm2745, %v2778, 0.0
        %v2811 = vsel %vm2745, %v2779, 0.0
        %v2812 = vsel %vm2745, %v2780, 0.0
        %v2813 = vsel %vm2745, %v2781, 0.0
        %v2814 = vsel %vm2745, %v2782, 0.0
        %v2815 = vsel %vm2745, %v2783, 0.0
        %v2816 = vsel %vm2745, %v2784, 0.0
        %v2817 = vsel %vm2745, %v2785, 0.0
        %v2818 = vpack.c.bf16 %v2804, %v2802
        %v2819 = vpack.c.bf16 %v2805, %v2803
        %v2820 = vpack.c.bf16 %v2808, %v2806
        %v2821 = vpack.c.bf16 %v2809, %v2807
        %v2822 = vpack.c.bf16 %v2812, %v2810
        %v2823 = vpack.c.bf16 %v2813, %v2811
        %v2824 = vpack.c.bf16 %v2816, %v2814
        %v2825 = vpack.c.bf16 %v2817, %v2815
        %v2826 = vld [vmem:[%s4] sm:$0xff]
        %v2827 = vld [vmem:[%s4 + $0x8] sm:$0xff]
        %v2828 = vld [vmem:[%s4 + $0x10] sm:$0xff]
        %v2829 = vld [vmem:[%s4 + $0x18] sm:$0xff]
        %v2830 = vld [vmem:[%s4 + $0x20] sm:$0xff]
        %v2831 = vld [vmem:[%s4 + $0x28] sm:$0xff]
        %v2832 = vld [vmem:[%s4 + $0x30] sm:$0xff]
        %v2833 = vld [vmem:[%s4 + $0x38] sm:$0xff]
        %v2834 = vld [vmem:[%s4 + $0x40] sm:$0xff]
        %v2835 = vld [vmem:[%s4 + $0x48] sm:$0xff]
        %v2836 = vld [vmem:[%s4 + $0x50] sm:$0xff]
        %v2837 = vld [vmem:[%s4 + $0x58] sm:$0xff]
        %v2838 = vld [vmem:[%s4 + $0x60] sm:$0xff]
        %v2839 = vld [vmem:[%s4 + $0x68] sm:$0xff]
        %v2840 = vld [vmem:[%s4 + $0x70] sm:$0xff]
        %v2841 = vld [vmem:[%s4 + $0x78] sm:$0xff]
        %v2842 = vld [vmem:[%s4 + $0x80] sm:$0xff]
        %v2843 = vld [vmem:[%s4 + $0x88] sm:$0xff]
        %v2844 = vld [vmem:[%s4 + $0x90] sm:$0xff]
        %v2845 = vld [vmem:[%s4 + $0x98] sm:$0xff]
        %v2846 = vld [vmem:[%s4 + $0xa0] sm:$0xff]
        %v2847 = vld [vmem:[%s4 + $0xa8] sm:$0xff]
        %v2848 = vld [vmem:[%s4 + $0xb0] sm:$0xff]
        %v2849 = vld [vmem:[%s4 + $0xb8] sm:$0xff]
        %v2850 = vld [vmem:[%s4 + $0xc0] sm:$0xff]
        %v2851 = vld [vmem:[%s4 + $0xc8] sm:$0xff]
        %v2852 = vld [vmem:[%s4 + $0xd0] sm:$0xff]
        %v2853 = vld [vmem:[%s4 + $0xd8] sm:$0xff]
        %v2854 = vld [vmem:[%s4 + $0xe0] sm:$0xff]
        %v2855 = vld [vmem:[%s4 + $0xe8] sm:$0xff]
        %v2856 = vld [vmem:[%s4 + $0xf0] sm:$0xff]
        %v2857 = vld [vmem:[%s4 + $0xf8] sm:$0xff]
        %v2858 = vld [vmem:[%s4 + $0x100] sm:$0xff]
        %v2859 = vld [vmem:[%s4 + $0x108] sm:$0xff]
        %v2860 = vld [vmem:[%s4 + $0x110] sm:$0xff]
        %v2861 = vld [vmem:[%s4 + $0x118] sm:$0xff]
        %v2862 = vld [vmem:[%s4 + $0x120] sm:$0xff]
        %v2863 = vld [vmem:[%s4 + $0x128] sm:$0xff]
        %v2864 = vld [vmem:[%s4 + $0x130] sm:$0xff]
        %v2865 = vld [vmem:[%s4 + $0x138] sm:$0xff]
        %v2866 = vld [vmem:[%s4 + $0x140] sm:$0xff]
        %v2867 = vld [vmem:[%s4 + $0x148] sm:$0xff]
        %v2868 = vld [vmem:[%s4 + $0x150] sm:$0xff]
        %v2869 = vld [vmem:[%s4 + $0x158] sm:$0xff]
        %v2870 = vld [vmem:[%s4 + $0x160] sm:$0xff]
        %v2871 = vld [vmem:[%s4 + $0x168] sm:$0xff]
        %v2872 = vld [vmem:[%s4 + $0x170] sm:$0xff]
        %v2873 = vld [vmem:[%s4 + $0x178] sm:$0xff]
        %v2874 = vld [vmem:[%s4 + $0x180] sm:$0xff]
        %v2875 = vld [vmem:[%s4 + $0x188] sm:$0xff]
        %v2876 = vld [vmem:[%s4 + $0x190] sm:$0xff]
        %v2877 = vld [vmem:[%s4 + $0x198] sm:$0xff]
        %v2878 = vld [vmem:[%s4 + $0x1a0] sm:$0xff]
        %v2879 = vld [vmem:[%s4 + $0x1a8] sm:$0xff]
        %v2880 = vld [vmem:[%s4 + $0x1b0] sm:$0xff]
        %v2881 = vld [vmem:[%s4 + $0x1b8] sm:$0xff]
        %v2882 = vld [vmem:[%s4 + $0x1c0] sm:$0xff]
        %v2883 = vld [vmem:[%s4 + $0x1c8] sm:$0xff]
        %v2884 = vld [vmem:[%s4 + $0x1d0] sm:$0xff]
        %v2885 = vld [vmem:[%s4 + $0x1d8] sm:$0xff]
        %v2886 = vld [vmem:[%s4 + $0x1e0] sm:$0xff]
        %v2887 = vld [vmem:[%s4 + $0x1e8] sm:$0xff]
        %v2888 = vld [vmem:[%s4 + $0x1f0] sm:$0xff]
        %v2889 = vld [vmem:[%s4 + $0x1f8] sm:$0xff]
        %v2890 = vld [vmem:[%s4 + $0x200] sm:$0xff]
        %v2891 = vld [vmem:[%s4 + $0x208] sm:$0xff]
        %v2892 = vld [vmem:[%s4 + $0x210] sm:$0xff]
        %v2893 = vld [vmem:[%s4 + $0x218] sm:$0xff]
        %v2894 = vld [vmem:[%s4 + $0x220] sm:$0xff]
        %v2895 = vld [vmem:[%s4 + $0x228] sm:$0xff]
        %v2896 = vld [vmem:[%s4 + $0x230] sm:$0xff]
        %v2897 = vld [vmem:[%s4 + $0x238] sm:$0xff]
        %v2898 = vld [vmem:[%s4 + $0x240] sm:$0xff]
        %v2899 = vld [vmem:[%s4 + $0x248] sm:$0xff]
        %v2900 = vld [vmem:[%s4 + $0x250] sm:$0xff]
        %v2901 = vld [vmem:[%s4 + $0x258] sm:$0xff]
        %v2902 = vld [vmem:[%s4 + $0x260] sm:$0xff]
        %v2903 = vld [vmem:[%s4 + $0x268] sm:$0xff]
        %v2904 = vld [vmem:[%s4 + $0x270] sm:$0xff]
        %v2905 = vld [vmem:[%s4 + $0x278] sm:$0xff]
        %v2906 = vld [vmem:[%s4 + $0x280] sm:$0xff]
        %v2907 = vld [vmem:[%s4 + $0x288] sm:$0xff]
        %v2908 = vld [vmem:[%s4 + $0x290] sm:$0xff]
        %v2909 = vld [vmem:[%s4 + $0x298] sm:$0xff]
        %v2910 = vld [vmem:[%s4 + $0x2a0] sm:$0xff]
        %v2911 = vld [vmem:[%s4 + $0x2a8] sm:$0xff]
        %v2912 = vld [vmem:[%s4 + $0x2b0] sm:$0xff]
        %v2913 = vld [vmem:[%s4 + $0x2b8] sm:$0xff]
        %v2914 = vld [vmem:[%s4 + $0x2c0] sm:$0xff]
        %v2915 = vld [vmem:[%s4 + $0x2c8] sm:$0xff]
        %v2916 = vld [vmem:[%s4 + $0x2d0] sm:$0xff]
        %v2917 = vld [vmem:[%s4 + $0x2d8] sm:$0xff]
        %v2918 = vld [vmem:[%s4 + $0x2e0] sm:$0xff]
        %v2919 = vld [vmem:[%s4 + $0x2e8] sm:$0xff]
        %v2920 = vld [vmem:[%s4 + $0x2f0] sm:$0xff]
        %v2921 = vld [vmem:[%s4 + $0x2f8] sm:$0xff]
        %v2922 = vld [vmem:[%s4 + $0x300] sm:$0xff]
        %v2923 = vld [vmem:[%s4 + $0x308] sm:$0xff]
        %v2924 = vld [vmem:[%s4 + $0x310] sm:$0xff]
        %v2925 = vld [vmem:[%s4 + $0x318] sm:$0xff]
        %v2926 = vld [vmem:[%s4 + $0x320] sm:$0xff]
        %v2927 = vld [vmem:[%s4 + $0x328] sm:$0xff]
        %v2928 = vld [vmem:[%s4 + $0x330] sm:$0xff]
        %v2929 = vld [vmem:[%s4 + $0x338] sm:$0xff]
        %v2930 = vld [vmem:[%s4 + $0x340] sm:$0xff]
        %v2931 = vld [vmem:[%s4 + $0x348] sm:$0xff]
        %v2932 = vld [vmem:[%s4 + $0x350] sm:$0xff]
        %v2933 = vld [vmem:[%s4 + $0x358] sm:$0xff]
        %v2934 = vld [vmem:[%s4 + $0x360] sm:$0xff]
        %v2935 = vld [vmem:[%s4 + $0x368] sm:$0xff]
        %v2936 = vld [vmem:[%s4 + $0x370] sm:$0xff]
        %v2937 = vld [vmem:[%s4 + $0x378] sm:$0xff]
        %v2938 = vld [vmem:[%s4 + $0x380] sm:$0xff]
        %v2939 = vld [vmem:[%s4 + $0x388] sm:$0xff]
        %v2940 = vld [vmem:[%s4 + $0x390] sm:$0xff]
        %v2941 = vld [vmem:[%s4 + $0x398] sm:$0xff]
        %v2942 = vld [vmem:[%s4 + $0x3a0] sm:$0xff]
        %v2943 = vld [vmem:[%s4 + $0x3a8] sm:$0xff]
        %v2944 = vld [vmem:[%s4 + $0x3b0] sm:$0xff]
        %v2945 = vld [vmem:[%s4 + $0x3b8] sm:$0xff]
        %v2946 = vld [vmem:[%s4 + $0x3c0] sm:$0xff]
        %v2947 = vld [vmem:[%s4 + $0x3c8] sm:$0xff]
        %v2948 = vld [vmem:[%s4 + $0x3d0] sm:$0xff]
        %v2949 = vld [vmem:[%s4 + $0x3d8] sm:$0xff]
        %v2950 = vld [vmem:[%s4 + $0x3e0] sm:$0xff]
        %v2951 = vld [vmem:[%s4 + $0x3e8] sm:$0xff]
        %v2952 = vld [vmem:[%s4 + $0x3f0] sm:$0xff]
        %v2953 = vld [vmem:[%s4 + $0x3f8] sm:$0xff]
        %v3018 = vunpack.c.l.b16 %v2890
        %v3019 = vunpack.c.h.b16 %v2890
        %v3020 = vunpack.c.l.b16 %v2891
        %v3021 = vunpack.c.h.b16 %v2891
        %v3022 = vunpack.c.l.b16 %v2892
        %v3023 = vunpack.c.h.b16 %v2892
        %v3024 = vunpack.c.l.b16 %v2893
        %v3025 = vunpack.c.h.b16 %v2893
        %v3026 = vunpack.c.l.b16 %v2894
        %v3027 = vunpack.c.h.b16 %v2894
        %v3028 = vunpack.c.l.b16 %v2895
        %v3029 = vunpack.c.h.b16 %v2895
        %v3030 = vunpack.c.l.b16 %v2896
        %v3031 = vunpack.c.h.b16 %v2896
        %v3032 = vunpack.c.l.b16 %v2897
        %v3033 = vunpack.c.h.b16 %v2897
        %v3034 = vunpack.c.l.b16 %v2898
        %v3035 = vunpack.c.h.b16 %v2898
        %v3036 = vunpack.c.l.b16 %v2899
        %v3037 = vunpack.c.h.b16 %v2899
        %v3038 = vunpack.c.l.b16 %v2900
        %v3039 = vunpack.c.h.b16 %v2900
        %v3040 = vunpack.c.l.b16 %v2901
        %v3041 = vunpack.c.h.b16 %v2901
        %v3042 = vunpack.c.l.b16 %v2902
        %v3043 = vunpack.c.h.b16 %v2902
        %v3044 = vunpack.c.l.b16 %v2903
        %v3045 = vunpack.c.h.b16 %v2903
        %v3046 = vunpack.c.l.b16 %v2904
        %v3047 = vunpack.c.h.b16 %v2904
        %v3048 = vunpack.c.l.b16 %v2905
        %v3049 = vunpack.c.h.b16 %v2905
        %v3050 = vunpack.c.l.b16 %v2906
        %v3051 = vunpack.c.h.b16 %v2906
        %v3052 = vunpack.c.l.b16 %v2907
        %v3053 = vunpack.c.h.b16 %v2907
        %v3054 = vunpack.c.l.b16 %v2908
        %v3055 = vunpack.c.h.b16 %v2908
        %v3056 = vunpack.c.l.b16 %v2909
        %v3057 = vunpack.c.h.b16 %v2909
        %v3058 = vunpack.c.l.b16 %v2910
        %v3059 = vunpack.c.h.b16 %v2910
        %v3060 = vunpack.c.l.b16 %v2911
        %v3061 = vunpack.c.h.b16 %v2911
        %v3062 = vunpack.c.l.b16 %v2912
        %v3063 = vunpack.c.h.b16 %v2912
        %v3064 = vunpack.c.l.b16 %v2913
        %v3065 = vunpack.c.h.b16 %v2913
        %v3066 = vunpack.c.l.b16 %v2914
        %v3067 = vunpack.c.h.b16 %v2914
        %v3068 = vunpack.c.l.b16 %v2915
        %v3069 = vunpack.c.h.b16 %v2915
        %v3070 = vunpack.c.l.b16 %v2916
        %v3071 = vunpack.c.h.b16 %v2916
        %v3072 = vunpack.c.l.b16 %v2917
        %v3073 = vunpack.c.h.b16 %v2917
        %v3074 = vunpack.c.l.b16 %v2918
        %v3075 = vunpack.c.h.b16 %v2918
        %v3076 = vunpack.c.l.b16 %v2919
        %v3077 = vunpack.c.h.b16 %v2919
        %v3078 = vunpack.c.l.b16 %v2920
        %v3079 = vunpack.c.h.b16 %v2920
        %v3080 = vunpack.c.l.b16 %v2921
        %v3081 = vunpack.c.h.b16 %v2921
        %v3082 = vunpack.c.l.b16 %v2922
        %v3083 = vunpack.c.h.b16 %v2922
        %v3084 = vunpack.c.l.b16 %v2923
        %v3085 = vunpack.c.h.b16 %v2923
        %v3086 = vunpack.c.l.b16 %v2924
        %v3087 = vunpack.c.h.b16 %v2924
        %v3088 = vunpack.c.l.b16 %v2925
        %v3089 = vunpack.c.h.b16 %v2925
        %v3090 = vunpack.c.l.b16 %v2926
        %v3091 = vunpack.c.h.b16 %v2926
        %v3092 = vunpack.c.l.b16 %v2927
        %v3093 = vunpack.c.h.b16 %v2927
        %v3094 = vunpack.c.l.b16 %v2928
        %v3095 = vunpack.c.h.b16 %v2928
        %v3096 = vunpack.c.l.b16 %v2929
        %v3097 = vunpack.c.h.b16 %v2929
        %v3098 = vunpack.c.l.b16 %v2930
        %v3099 = vunpack.c.h.b16 %v2930
        %v3100 = vunpack.c.l.b16 %v2931
        %v3101 = vunpack.c.h.b16 %v2931
        %v3102 = vunpack.c.l.b16 %v2932
        %v3103 = vunpack.c.h.b16 %v2932
        %v3104 = vunpack.c.l.b16 %v2933
        %v3105 = vunpack.c.h.b16 %v2933
        %v3106 = vunpack.c.l.b16 %v2934
        %v3107 = vunpack.c.h.b16 %v2934
        %v3108 = vunpack.c.l.b16 %v2935
        %v3109 = vunpack.c.h.b16 %v2935
        %v3110 = vunpack.c.l.b16 %v2936
        %v3111 = vunpack.c.h.b16 %v2936
        %v3112 = vunpack.c.l.b16 %v2937
        %v3113 = vunpack.c.h.b16 %v2937
        %v3114 = vunpack.c.l.b16 %v2938
        %v3115 = vunpack.c.h.b16 %v2938
        %v3116 = vunpack.c.l.b16 %v2939
        %v3117 = vunpack.c.h.b16 %v2939
        %v3118 = vunpack.c.l.b16 %v2940
        %v3119 = vunpack.c.h.b16 %v2940
        %v3120 = vunpack.c.l.b16 %v2941
        %v3121 = vunpack.c.h.b16 %v2941
        %v3122 = vunpack.c.l.b16 %v2942
        %v3123 = vunpack.c.h.b16 %v2942
        %v3124 = vunpack.c.l.b16 %v2943
        %v3125 = vunpack.c.h.b16 %v2943
        %v3126 = vunpack.c.l.b16 %v2944
        %v3127 = vunpack.c.h.b16 %v2944
        %v3128 = vunpack.c.l.b16 %v2945
        %v3129 = vunpack.c.h.b16 %v2945
        %v3130 = vunpack.c.l.b16 %v2946
        %v3131 = vunpack.c.h.b16 %v2946
        %v3132 = vunpack.c.l.b16 %v2947
        %v3133 = vunpack.c.h.b16 %v2947
        %v3134 = vunpack.c.l.b16 %v2948
        %v3135 = vunpack.c.h.b16 %v2948
        %v3136 = vunpack.c.l.b16 %v2949
        %v3137 = vunpack.c.h.b16 %v2949
        %v3138 = vunpack.c.l.b16 %v2950
        %v3139 = vunpack.c.h.b16 %v2950
        %v3140 = vunpack.c.l.b16 %v2951
        %v3141 = vunpack.c.h.b16 %v2951
        %v3142 = vunpack.c.l.b16 %v2952
        %v3143 = vunpack.c.h.b16 %v2952
        %v3144 = vunpack.c.l.b16 %v2953
        %v3145 = vunpack.c.h.b16 %v2953
        %v3146 = vpack.c.b16 %v3022, %v3018
        %v3147 = vpack.c.b16 %v3023, %v3019
        %v3148 = vpack.c.b16 %v3024, %v3020
        %v3149 = vpack.c.b16 %v3025, %v3021
        %v3150 = vpack.c.b16 %v3030, %v3026
        %v3151 = vpack.c.b16 %v3031, %v3027
        %v3152 = vpack.c.b16 %v3032, %v3028
        %v3153 = vpack.c.b16 %v3033, %v3029
        %v3154 = vpack.c.b16 %v3038, %v3034
        %v3155 = vpack.c.b16 %v3039, %v3035
        %v3156 = vpack.c.b16 %v3040, %v3036
        %v3157 = vpack.c.b16 %v3041, %v3037
        %v3158 = vpack.c.b16 %v3046, %v3042
        %v3159 = vpack.c.b16 %v3047, %v3043
        %v3160 = vpack.c.b16 %v3048, %v3044
        %v3161 = vpack.c.b16 %v3049, %v3045
        %v3162 = vpack.c.b16 %v3054, %v3050
        %v3163 = vpack.c.b16 %v3055, %v3051
        %v3164 = vpack.c.b16 %v3056, %v3052
        %v3165 = vpack.c.b16 %v3057, %v3053
        %v3166 = vpack.c.b16 %v3062, %v3058
        %v3167 = vpack.c.b16 %v3063, %v3059
        %v3168 = vpack.c.b16 %v3064, %v3060
        %v3169 = vpack.c.b16 %v3065, %v3061
        %v3170 = vpack.c.b16 %v3070, %v3066
        %v3171 = vpack.c.b16 %v3071, %v3067
        %v3172 = vpack.c.b16 %v3072, %v3068
        %v3173 = vpack.c.b16 %v3073, %v3069
        %v3174 = vpack.c.b16 %v3078, %v3074
        %v3175 = vpack.c.b16 %v3079, %v3075
        %v3176 = vpack.c.b16 %v3080, %v3076
        %v3177 = vpack.c.b16 %v3081, %v3077
        %v3178 = vpack.c.b16 %v3086, %v3082
        %v3179 = vpack.c.b16 %v3087, %v3083
        %v3180 = vpack.c.b16 %v3088, %v3084
        %v3181 = vpack.c.b16 %v3089, %v3085
        %v3182 = vpack.c.b16 %v3094, %v3090
        %v3183 = vpack.c.b16 %v3095, %v3091
        %v3184 = vpack.c.b16 %v3096, %v3092
        %v3185 = vpack.c.b16 %v3097, %v3093
        %v3186 = vpack.c.b16 %v3102, %v3098
        %v3187 = vpack.c.b16 %v3103, %v3099
        %v3188 = vpack.c.b16 %v3104, %v3100
        %v3189 = vpack.c.b16 %v3105, %v3101
        %v3190 = vpack.c.b16 %v3110, %v3106
        %v3191 = vpack.c.b16 %v3111, %v3107
        %v3192 = vpack.c.b16 %v3112, %v3108
        %v3193 = vpack.c.b16 %v3113, %v3109
        %v3194 = vpack.c.b16 %v3118, %v3114
        %v3195 = vpack.c.b16 %v3119, %v3115
        %v3196 = vpack.c.b16 %v3120, %v3116
        %v3197 = vpack.c.b16 %v3121, %v3117
        %v3198 = vpack.c.b16 %v3126, %v3122
        %v3199 = vpack.c.b16 %v3127, %v3123
        %v3200 = vpack.c.b16 %v3128, %v3124
        %v3201 = vpack.c.b16 %v3129, %v3125
        %v3202 = vpack.c.b16 %v3134, %v3130
        %v3203 = vpack.c.b16 %v3135, %v3131
        %v3204 = vpack.c.b16 %v3136, %v3132
        %v3205 = vpack.c.b16 %v3137, %v3133
        %v3206 = vpack.c.b16 %v3142, %v3138
        %v3207 = vpack.c.b16 %v3143, %v3139
        %v3208 = vpack.c.b16 %v3144, %v3140
        %v3209 = vpack.c.b16 %v3145, %v3141
        %3274 = vmatprep.subr.bf16.mxu0 %v3175
        %3275 = vmatpush1.bf16.msra.mxu0 %v3174
        %3276 = vmatprep.subr.bf16.mxu0 %v3171
        %3277 = vmatpush1.bf16.msra.mxu0 %v3170
        %3278 = vmatprep.subr.bf16.mxu0 %v3167
        %3279 = vmatpush1.bf16.msra.mxu0 %v3166
        %3280 = vmatprep.subr.bf16.mxu0 %v3163
        %3281 = vmatpush1.bf16.msra.mxu0 %v3162
        %3282 = vmatprep.subr.bf16.mxu0 %v3159
        %3283 = vmatpush1.bf16.msra.mxu0 %v3158
        %3284 = vmatprep.subr.bf16.mxu0 %v3155
        %3285 = vmatpush1.bf16.msra.mxu0 %v3154
        %3286 = vmatprep.subr.bf16.mxu0 %v3151
        %3287 = vmatpush1.bf16.msra.mxu0 %v3150
        %3288 = vmatprep.subr.bf16.mxu0 %v3147
        %3289 = vmatpush1.bf16.msra.mxu0 %v3146
        %3290 = vmatprep.subr.bf16.mxu0 %v3207
        %3291 = vmatpush2.bf16.msra.mxu0 %v3206
        %3292 = vmatprep.subr.bf16.mxu0 %v3203
        %3293 = vmatpush2.bf16.msra.mxu0 %v3202
        %3294 = vmatprep.subr.bf16.mxu0 %v3199
        %3295 = vmatpush2.bf16.msra.mxu0 %v3198
        %3296 = vmatprep.subr.bf16.mxu0 %v3195
        %3297 = vmatpush2.bf16.msra.mxu0 %v3194
        %3298 = vmatprep.subr.bf16.mxu0 %v3191
        %3299 = vmatpush2.bf16.msra.mxu0 %v3190
        %3300 = vmatprep.subr.bf16.mxu0 %v3187
        %3301 = vmatpush2.bf16.msra.mxu0 %v3186
        %3302 = vmatprep.subr.bf16.mxu0 %v3183
        %3303 = vmatpush2.bf16.msra.mxu0 %v3182
        %3304 = vmatprep.subr.bf16.mxu0 %v3179
        %3305 = vmatpush2.bf16.msra.mxu0 %v3178
        %3306 = vmatprep.mubr.bf16.mxu0 %v2690
        %3307 = vmatmul.mubr.bf16.gmra.mxu0 %v2689
        %v3308 = vpop.f32.mrf.mxu0
        %v3309 = vadd.f32 0.0, %v3308
        %v3310 = vpop.f32.mrf.mxu0
        %v3311 = vadd.f32 0.0, %v3310
        %v3312 = vpop.f32.mrf.mxu0
        %v3313 = vadd.f32 0.0, %v3312
        %v3314 = vpop.f32.mrf.mxu0
        %v3315 = vadd.f32 0.0, %v3314
        %3316 = vmatprep.mubr.bf16.mxu0 %v2692
        %3317 = vmatmul.mubr.bf16.gmra.mxu0 %v2691
        %v3318 = vpop.f32.mrf.mxu0
        %v3319 = vadd.f32 0.0, %v3318
        %v3320 = vpop.f32.mrf.mxu0
        %v3321 = vadd.f32 0.0, %v3320
        %v3322 = vpop.f32.mrf.mxu0
        %v3323 = vadd.f32 0.0, %v3322
        %v3324 = vpop.f32.mrf.mxu0
        %v3325 = vadd.f32 0.0, %v3324
        %3326 = vmatprep.mubr.bf16.mxu0 %v2694
        %3327 = vmatmul.mubr.bf16.gmra.mxu0 %v2693
        %v3328 = vpop.f32.mrf.mxu0
        %v3329 = vadd.f32 0.0, %v3328
        %v3330 = vpop.f32.mrf.mxu0
        %v3331 = vadd.f32 0.0, %v3330
        %v3332 = vpop.f32.mrf.mxu0
        %v3333 = vadd.f32 0.0, %v3332
        %v3334 = vpop.f32.mrf.mxu0
        %v3335 = vadd.f32 0.0, %v3334
        %3336 = vmatprep.mubr.bf16.mxu0 %v2696
        %3337 = vmatmul.mubr.bf16.gmra.mxu0 %v2695
        %v3338 = vpop.f32.mrf.mxu0
        %v3339 = vadd.f32 0.0, %v3338
        %v3340 = vpop.f32.mrf.mxu0
        %v3341 = vadd.f32 0.0, %v3340
        %v3342 = vpop.f32.mrf.mxu0
        %v3343 = vadd.f32 0.0, %v3342
        %v3344 = vpop.f32.mrf.mxu0
        %v3345 = vadd.f32 0.0, %v3344
        %3346 = vdwg.mxu0
        %3347 = vmatprep.subr.bf16.mxu0 %v3177
        %3348 = vmatpush1.bf16.msra.mxu0 %v3176
        %3349 = vmatprep.subr.bf16.mxu0 %v3173
        %3350 = vmatpush1.bf16.msra.mxu0 %v3172
        %3351 = vmatprep.subr.bf16.mxu0 %v3169
        %3352 = vmatpush1.bf16.msra.mxu0 %v3168
        %3353 = vmatprep.subr.bf16.mxu0 %v3165
        %3354 = vmatpush1.bf16.msra.mxu0 %v3164
        %3355 = vmatprep.subr.bf16.mxu0 %v3161
        %3356 = vmatpush1.bf16.msra.mxu0 %v3160
        %3357 = vmatprep.subr.bf16.mxu0 %v3157
        %3358 = vmatpush1.bf16.msra.mxu0 %v3156
        %3359 = vmatprep.subr.bf16.mxu0 %v3153
        %3360 = vmatpush1.bf16.msra.mxu0 %v3152
        %3361 = vmatprep.subr.bf16.mxu0 %v3149
        %3362 = vmatpush1.bf16.msra.mxu0 %v3148
        %3363 = vmatprep.subr.bf16.mxu0 %v3209
        %3364 = vmatpush2.bf16.msra.mxu0 %v3208
        %3365 = vmatprep.subr.bf16.mxu0 %v3205
        %3366 = vmatpush2.bf16.msra.mxu0 %v3204
        %3367 = vmatprep.subr.bf16.mxu0 %v3201
        %3368 = vmatpush2.bf16.msra.mxu0 %v3200
        %3369 = vmatprep.subr.bf16.mxu0 %v3197
        %3370 = vmatpush2.bf16.msra.mxu0 %v3196
        %3371 = vmatprep.subr.bf16.mxu0 %v3193
        %3372 = vmatpush2.bf16.msra.mxu0 %v3192
        %3373 = vmatprep.subr.bf16.mxu0 %v3189
        %3374 = vmatpush2.bf16.msra.mxu0 %v3188
        %3375 = vmatprep.subr.bf16.mxu0 %v3185
        %3376 = vmatpush2.bf16.msra.mxu0 %v3184
        %3377 = vmatprep.subr.bf16.mxu0 %v3181
        %3378 = vmatpush2.bf16.msra.mxu0 %v3180
        %3379 = vmatprep.mubr.bf16.mxu0 %v2690
        %3380 = vmatmul.mubr.bf16.gmra.mxu0 %v2689
        %v3381 = vpop.f32.mrf.mxu0
        %v3382 = vadd.f32 0.0, %v3381
        %v3383 = vpop.f32.mrf.mxu0
        %v3384 = vadd.f32 0.0, %v3383
        %v3385 = vpop.f32.mrf.mxu0
        %v3386 = vadd.f32 0.0, %v3385
        %v3387 = vpop.f32.mrf.mxu0
        %v3388 = vadd.f32 0.0, %v3387
        %3389 = vmatprep.mubr.bf16.mxu0 %v2692
        %3390 = vmatmul.mubr.bf16.gmra.mxu0 %v2691
        %v3391 = vpop.f32.mrf.mxu0
        %v3392 = vadd.f32 0.0, %v3391
        %v3393 = vpop.f32.mrf.mxu0
        %v3394 = vadd.f32 0.0, %v3393
        %v3395 = vpop.f32.mrf.mxu0
        %v3396 = vadd.f32 0.0, %v3395
        %v3397 = vpop.f32.mrf.mxu0
        %v3398 = vadd.f32 0.0, %v3397
        %3399 = vmatprep.mubr.bf16.mxu0 %v2694
        %3400 = vmatmul.mubr.bf16.gmra.mxu0 %v2693
        %v3401 = vpop.f32.mrf.mxu0
        %v3402 = vadd.f32 0.0, %v3401
        %v3403 = vpop.f32.mrf.mxu0
        %v3404 = vadd.f32 0.0, %v3403
        %v3405 = vpop.f32.mrf.mxu0
        %v3406 = vadd.f32 0.0, %v3405
        %v3407 = vpop.f32.mrf.mxu0
        %v3408 = vadd.f32 0.0, %v3407
        %3409 = vmatprep.mubr.bf16.mxu0 %v2696
        %3410 = vmatmul.mubr.bf16.gmra.mxu0 %v2695
        %v3411 = vpop.f32.mrf.mxu0
        %v3412 = vadd.f32 0.0, %v3411
        %v3413 = vpop.f32.mrf.mxu0
        %v3414 = vadd.f32 0.0, %v3413
        %v3415 = vpop.f32.mrf.mxu0
        %v3416 = vadd.f32 0.0, %v3415
        %v3417 = vpop.f32.mrf.mxu0
        %v3418 = vadd.f32 0.0, %v3417
        %3419 = vdwg.mxu0
        %3420 = vmatprep.subr.bf16.mxu0 %v3175
        %3421 = vmatpush1.bf16.msra.mxu0 %v3174
        %3422 = vmatprep.subr.bf16.mxu0 %v3171
        %3423 = vmatpush1.bf16.msra.mxu0 %v3170
        %3424 = vmatprep.subr.bf16.mxu0 %v3167
        %3425 = vmatpush1.bf16.msra.mxu0 %v3166
        %3426 = vmatprep.subr.bf16.mxu0 %v3163
        %3427 = vmatpush1.bf16.msra.mxu0 %v3162
        %3428 = vmatprep.subr.bf16.mxu0 %v3159
        %3429 = vmatpush1.bf16.msra.mxu0 %v3158
        %3430 = vmatprep.subr.bf16.mxu0 %v3155
        %3431 = vmatpush1.bf16.msra.mxu0 %v3154
        %3432 = vmatprep.subr.bf16.mxu0 %v3151
        %3433 = vmatpush1.bf16.msra.mxu0 %v3150
        %3434 = vmatprep.subr.bf16.mxu0 %v3147
        %3435 = vmatpush1.bf16.msra.mxu0 %v3146
        %3436 = vmatprep.subr.bf16.mxu0 %v3207
        %3437 = vmatpush2.bf16.msra.mxu0 %v3206
        %3438 = vmatprep.subr.bf16.mxu0 %v3203
        %3439 = vmatpush2.bf16.msra.mxu0 %v3202
        %3440 = vmatprep.subr.bf16.mxu0 %v3199
        %3441 = vmatpush2.bf16.msra.mxu0 %v3198
        %3442 = vmatprep.subr.bf16.mxu0 %v3195
        %3443 = vmatpush2.bf16.msra.mxu0 %v3194
        %3444 = vmatprep.subr.bf16.mxu0 %v3191
        %3445 = vmatpush2.bf16.msra.mxu0 %v3190
        %3446 = vmatprep.subr.bf16.mxu0 %v3187
        %3447 = vmatpush2.bf16.msra.mxu0 %v3186
        %3448 = vmatprep.subr.bf16.mxu0 %v3183
        %3449 = vmatpush2.bf16.msra.mxu0 %v3182
        %3450 = vmatprep.subr.bf16.mxu0 %v3179
        %3451 = vmatpush2.bf16.msra.mxu0 %v3178
        %3452 = vmatprep.mubr.bf16.mxu0 %v2698
        %3453 = vmatmul.mubr.bf16.gmra.mxu0 %v2697
        %v3454 = vpop.f32.mrf.mxu0
        %v3455 = vadd.f32 0.0, %v3454
        %v3456 = vpop.f32.mrf.mxu0
        %v3457 = vadd.f32 0.0, %v3456
        %v3458 = vpop.f32.mrf.mxu0
        %v3459 = vadd.f32 0.0, %v3458
        %v3460 = vpop.f32.mrf.mxu0
        %v3461 = vadd.f32 0.0, %v3460
        %3462 = vmatprep.mubr.bf16.mxu0 %v2700
        %3463 = vmatmul.mubr.bf16.gmra.mxu0 %v2699
        %v3464 = vpop.f32.mrf.mxu0
        %v3465 = vadd.f32 0.0, %v3464
        %v3466 = vpop.f32.mrf.mxu0
        %v3467 = vadd.f32 0.0, %v3466
        %v3468 = vpop.f32.mrf.mxu0
        %v3469 = vadd.f32 0.0, %v3468
        %v3470 = vpop.f32.mrf.mxu0
        %v3471 = vadd.f32 0.0, %v3470
        %3472 = vmatprep.mubr.bf16.mxu0 %v2702
        %3473 = vmatmul.mubr.bf16.gmra.mxu0 %v2701
        %v3474 = vpop.f32.mrf.mxu0
        %v3475 = vadd.f32 0.0, %v3474
        %v3476 = vpop.f32.mrf.mxu0
        %v3477 = vadd.f32 0.0, %v3476
        %v3478 = vpop.f32.mrf.mxu0
        %v3479 = vadd.f32 0.0, %v3478
        %v3480 = vpop.f32.mrf.mxu0
        %v3481 = vadd.f32 0.0, %v3480
        %3482 = vmatprep.mubr.bf16.mxu0 %v2704
        %3483 = vmatmul.mubr.bf16.gmra.mxu0 %v2703
        %v3484 = vpop.f32.mrf.mxu0
        %v3485 = vadd.f32 0.0, %v3484
        %v3486 = vpop.f32.mrf.mxu0
        %v3487 = vadd.f32 0.0, %v3486
        %v3488 = vpop.f32.mrf.mxu0
        %v3489 = vadd.f32 0.0, %v3488
        %v3490 = vpop.f32.mrf.mxu0
        %v3491 = vadd.f32 0.0, %v3490
        %3492 = vdwg.mxu0
        %3493 = vmatprep.subr.bf16.mxu0 %v3177
        %3494 = vmatpush1.bf16.msra.mxu0 %v3176
        %3495 = vmatprep.subr.bf16.mxu0 %v3173
        %3496 = vmatpush1.bf16.msra.mxu0 %v3172
        %3497 = vmatprep.subr.bf16.mxu0 %v3169
        %3498 = vmatpush1.bf16.msra.mxu0 %v3168
        %3499 = vmatprep.subr.bf16.mxu0 %v3165
        %3500 = vmatpush1.bf16.msra.mxu0 %v3164
        %3501 = vmatprep.subr.bf16.mxu0 %v3161
        %3502 = vmatpush1.bf16.msra.mxu0 %v3160
        %3503 = vmatprep.subr.bf16.mxu0 %v3157
        %3504 = vmatpush1.bf16.msra.mxu0 %v3156
        %3505 = vmatprep.subr.bf16.mxu0 %v3153
        %3506 = vmatpush1.bf16.msra.mxu0 %v3152
        %3507 = vmatprep.subr.bf16.mxu0 %v3149
        %3508 = vmatpush1.bf16.msra.mxu0 %v3148
        %3509 = vmatprep.subr.bf16.mxu0 %v3209
        %3510 = vmatpush2.bf16.msra.mxu0 %v3208
        %3511 = vmatprep.subr.bf16.mxu0 %v3205
        %3512 = vmatpush2.bf16.msra.mxu0 %v3204
        %3513 = vmatprep.subr.bf16.mxu0 %v3201
        %3514 = vmatpush2.bf16.msra.mxu0 %v3200
        %3515 = vmatprep.subr.bf16.mxu0 %v3197
        %3516 = vmatpush2.bf16.msra.mxu0 %v3196
        %3517 = vmatprep.subr.bf16.mxu0 %v3193
        %3518 = vmatpush2.bf16.msra.mxu0 %v3192
        %3519 = vmatprep.subr.bf16.mxu0 %v3189
        %3520 = vmatpush2.bf16.msra.mxu0 %v3188
        %3521 = vmatprep.subr.bf16.mxu0 %v3185
        %3522 = vmatpush2.bf16.msra.mxu0 %v3184
        %3523 = vmatprep.subr.bf16.mxu0 %v3181
        %3524 = vmatpush2.bf16.msra.mxu0 %v3180
        %3525 = vmatprep.mubr.bf16.mxu0 %v2698
        %3526 = vmatmul.mubr.bf16.gmra.mxu0 %v2697
        %v3527 = vpop.f32.mrf.mxu0
        %v3528 = vadd.f32 0.0, %v3527
        %v3529 = vpop.f32.mrf.mxu0
        %v3530 = vadd.f32 0.0, %v3529
        %v3531 = vpop.f32.mrf.mxu0
        %v3532 = vadd.f32 0.0, %v3531
        %v3533 = vpop.f32.mrf.mxu0
        %v3534 = vadd.f32 0.0, %v3533
        %3535 = vmatprep.mubr.bf16.mxu0 %v2700
        %3536 = vmatmul.mubr.bf16.gmra.mxu0 %v2699
        %v3537 = vpop.f32.mrf.mxu0
        %v3538 = vadd.f32 0.0, %v3537
        %v3539 = vpop.f32.mrf.mxu0
        %v3540 = vadd.f32 0.0, %v3539
        %v3541 = vpop.f32.mrf.mxu0
        %v3542 = vadd.f32 0.0, %v3541
        %v3543 = vpop.f32.mrf.mxu0
        %v3544 = vadd.f32 0.0, %v3543
        %3545 = vmatprep.mubr.bf16.mxu0 %v2702
        %3546 = vmatmul.mubr.bf16.gmra.mxu0 %v2701
        %v3547 = vpop.f32.mrf.mxu0
        %v3548 = vadd.f32 0.0, %v3547
        %v3549 = vpop.f32.mrf.mxu0
        %v3550 = vadd.f32 0.0, %v3549
        %v3551 = vpop.f32.mrf.mxu0
        %v3552 = vadd.f32 0.0, %v3551
        %v3553 = vpop.f32.mrf.mxu0
        %v3554 = vadd.f32 0.0, %v3553
        %3555 = vmatprep.mubr.bf16.mxu0 %v2704
        %3556 = vmatmul.mubr.bf16.gmra.mxu0 %v2703
        %v3557 = vpop.f32.mrf.mxu0
        %v3558 = vadd.f32 0.0, %v3557
        %v3559 = vpop.f32.mrf.mxu0
        %v3560 = vadd.f32 0.0, %v3559
        %v3561 = vpop.f32.mrf.mxu0
        %v3562 = vadd.f32 0.0, %v3561
        %v3563 = vpop.f32.mrf.mxu0
        %v3564 = vadd.f32 0.0, %v3563
        %3565 = vdwg.mxu0
        %v3630 = vunpack.c.l.b16 %v2826
        %v3631 = vunpack.c.h.b16 %v2826
        %v3632 = vunpack.c.l.b16 %v2827
        %v3633 = vunpack.c.h.b16 %v2827
        %v3634 = vunpack.c.l.b16 %v2828
        %v3635 = vunpack.c.h.b16 %v2828
        %v3636 = vunpack.c.l.b16 %v2829
        %v3637 = vunpack.c.h.b16 %v2829
        %v3638 = vunpack.c.l.b16 %v2830
        %v3639 = vunpack.c.h.b16 %v2830
        %v3640 = vunpack.c.l.b16 %v2831
        %v3641 = vunpack.c.h.b16 %v2831
        %v3642 = vunpack.c.l.b16 %v2832
        %v3643 = vunpack.c.h.b16 %v2832
        %v3644 = vunpack.c.l.b16 %v2833
        %v3645 = vunpack.c.h.b16 %v2833
        %v3646 = vunpack.c.l.b16 %v2834
        %v3647 = vunpack.c.h.b16 %v2834
        %v3648 = vunpack.c.l.b16 %v2835
        %v3649 = vunpack.c.h.b16 %v2835
        %v3650 = vunpack.c.l.b16 %v2836
        %v3651 = vunpack.c.h.b16 %v2836
        %v3652 = vunpack.c.l.b16 %v2837
        %v3653 = vunpack.c.h.b16 %v2837
        %v3654 = vunpack.c.l.b16 %v2838
        %v3655 = vunpack.c.h.b16 %v2838
        %v3656 = vunpack.c.l.b16 %v2839
        %v3657 = vunpack.c.h.b16 %v2839
        %v3658 = vunpack.c.l.b16 %v2840
        %v3659 = vunpack.c.h.b16 %v2840
        %v3660 = vunpack.c.l.b16 %v2841
        %v3661 = vunpack.c.h.b16 %v2841
        %v3662 = vunpack.c.l.b16 %v2842
        %v3663 = vunpack.c.h.b16 %v2842
        %v3664 = vunpack.c.l.b16 %v2843
        %v3665 = vunpack.c.h.b16 %v2843
        %v3666 = vunpack.c.l.b16 %v2844
        %v3667 = vunpack.c.h.b16 %v2844
        %v3668 = vunpack.c.l.b16 %v2845
        %v3669 = vunpack.c.h.b16 %v2845
        %v3670 = vunpack.c.l.b16 %v2846
        %v3671 = vunpack.c.h.b16 %v2846
        %v3672 = vunpack.c.l.b16 %v2847
        %v3673 = vunpack.c.h.b16 %v2847
        %v3674 = vunpack.c.l.b16 %v2848
        %v3675 = vunpack.c.h.b16 %v2848
        %v3676 = vunpack.c.l.b16 %v2849
        %v3677 = vunpack.c.h.b16 %v2849
        %v3678 = vunpack.c.l.b16 %v2850
        %v3679 = vunpack.c.h.b16 %v2850
        %v3680 = vunpack.c.l.b16 %v2851
        %v3681 = vunpack.c.h.b16 %v2851
        %v3682 = vunpack.c.l.b16 %v2852
        %v3683 = vunpack.c.h.b16 %v2852
        %v3684 = vunpack.c.l.b16 %v2853
        %v3685 = vunpack.c.h.b16 %v2853
        %v3686 = vunpack.c.l.b16 %v2854
        %v3687 = vunpack.c.h.b16 %v2854
        %v3688 = vunpack.c.l.b16 %v2855
        %v3689 = vunpack.c.h.b16 %v2855
        %v3690 = vunpack.c.l.b16 %v2856
        %v3691 = vunpack.c.h.b16 %v2856
        %v3692 = vunpack.c.l.b16 %v2857
        %v3693 = vunpack.c.h.b16 %v2857
        %v3694 = vunpack.c.l.b16 %v2858
        %v3695 = vunpack.c.h.b16 %v2858
        %v3696 = vunpack.c.l.b16 %v2859
        %v3697 = vunpack.c.h.b16 %v2859
        %v3698 = vunpack.c.l.b16 %v2860
        %v3699 = vunpack.c.h.b16 %v2860
        %v3700 = vunpack.c.l.b16 %v2861
        %v3701 = vunpack.c.h.b16 %v2861
        %v3702 = vunpack.c.l.b16 %v2862
        %v3703 = vunpack.c.h.b16 %v2862
        %v3704 = vunpack.c.l.b16 %v2863
        %v3705 = vunpack.c.h.b16 %v2863
        %v3706 = vunpack.c.l.b16 %v2864
        %v3707 = vunpack.c.h.b16 %v2864
        %v3708 = vunpack.c.l.b16 %v2865
        %v3709 = vunpack.c.h.b16 %v2865
        %v3710 = vunpack.c.l.b16 %v2866
        %v3711 = vunpack.c.h.b16 %v2866
        %v3712 = vunpack.c.l.b16 %v2867
        %v3713 = vunpack.c.h.b16 %v2867
        %v3714 = vunpack.c.l.b16 %v2868
        %v3715 = vunpack.c.h.b16 %v2868
        %v3716 = vunpack.c.l.b16 %v2869
        %v3717 = vunpack.c.h.b16 %v2869
        %v3718 = vunpack.c.l.b16 %v2870
        %v3719 = vunpack.c.h.b16 %v2870
        %v3720 = vunpack.c.l.b16 %v2871
        %v3721 = vunpack.c.h.b16 %v2871
        %v3722 = vunpack.c.l.b16 %v2872
        %v3723 = vunpack.c.h.b16 %v2872
        %v3724 = vunpack.c.l.b16 %v2873
        %v3725 = vunpack.c.h.b16 %v2873
        %v3726 = vunpack.c.l.b16 %v2874
        %v3727 = vunpack.c.h.b16 %v2874
        %v3728 = vunpack.c.l.b16 %v2875
        %v3729 = vunpack.c.h.b16 %v2875
        %v3730 = vunpack.c.l.b16 %v2876
        %v3731 = vunpack.c.h.b16 %v2876
        %v3732 = vunpack.c.l.b16 %v2877
        %v3733 = vunpack.c.h.b16 %v2877
        %v3734 = vunpack.c.l.b16 %v2878
        %v3735 = vunpack.c.h.b16 %v2878
        %v3736 = vunpack.c.l.b16 %v2879
        %v3737 = vunpack.c.h.b16 %v2879
        %v3738 = vunpack.c.l.b16 %v2880
        %v3739 = vunpack.c.h.b16 %v2880
        %v3740 = vunpack.c.l.b16 %v2881
        %v3741 = vunpack.c.h.b16 %v2881
        %v3742 = vunpack.c.l.b16 %v2882
        %v3743 = vunpack.c.h.b16 %v2882
        %v3744 = vunpack.c.l.b16 %v2883
        %v3745 = vunpack.c.h.b16 %v2883
        %v3746 = vunpack.c.l.b16 %v2884
        %v3747 = vunpack.c.h.b16 %v2884
        %v3748 = vunpack.c.l.b16 %v2885
        %v3749 = vunpack.c.h.b16 %v2885
        %v3750 = vunpack.c.l.b16 %v2886
        %v3751 = vunpack.c.h.b16 %v2886
        %v3752 = vunpack.c.l.b16 %v2887
        %v3753 = vunpack.c.h.b16 %v2887
        %v3754 = vunpack.c.l.b16 %v2888
        %v3755 = vunpack.c.h.b16 %v2888
        %v3756 = vunpack.c.l.b16 %v2889
        %v3757 = vunpack.c.h.b16 %v2889
        %v3758 = vpack.c.b16 %v3634, %v3630
        %v3759 = vpack.c.b16 %v3635, %v3631
        %v3760 = vpack.c.b16 %v3636, %v3632
        %v3761 = vpack.c.b16 %v3637, %v3633
        %v3762 = vpack.c.b16 %v3642, %v3638
        %v3763 = vpack.c.b16 %v3643, %v3639
        %v3764 = vpack.c.b16 %v3644, %v3640
        %v3765 = vpack.c.b16 %v3645, %v3641
        %v3766 = vpack.c.b16 %v3650, %v3646
        %v3767 = vpack.c.b16 %v3651, %v3647
        %v3768 = vpack.c.b16 %v3652, %v3648
        %v3769 = vpack.c.b16 %v3653, %v3649
        %v3770 = vpack.c.b16 %v3658, %v3654
        %v3771 = vpack.c.b16 %v3659, %v3655
        %v3772 = vpack.c.b16 %v3660, %v3656
        %v3773 = vpack.c.b16 %v3661, %v3657
        %v3774 = vpack.c.b16 %v3666, %v3662
        %v3775 = vpack.c.b16 %v3667, %v3663
        %v3776 = vpack.c.b16 %v3668, %v3664
        %v3777 = vpack.c.b16 %v3669, %v3665
        %v3778 = vpack.c.b16 %v3674, %v3670
        %v3779 = vpack.c.b16 %v3675, %v3671
        %v3780 = vpack.c.b16 %v3676, %v3672
        %v3781 = vpack.c.b16 %v3677, %v3673
        %v3782 = vpack.c.b16 %v3682, %v3678
        %v3783 = vpack.c.b16 %v3683, %v3679
        %v3784 = vpack.c.b16 %v3684, %v3680
        %v3785 = vpack.c.b16 %v3685, %v3681
        %v3786 = vpack.c.b16 %v3690, %v3686
        %v3787 = vpack.c.b16 %v3691, %v3687
        %v3788 = vpack.c.b16 %v3692, %v3688
        %v3789 = vpack.c.b16 %v3693, %v3689
        %v3790 = vpack.c.b16 %v3698, %v3694
        %v3791 = vpack.c.b16 %v3699, %v3695
        %v3792 = vpack.c.b16 %v3700, %v3696
        %v3793 = vpack.c.b16 %v3701, %v3697
        %v3794 = vpack.c.b16 %v3706, %v3702
        %v3795 = vpack.c.b16 %v3707, %v3703
        %v3796 = vpack.c.b16 %v3708, %v3704
        %v3797 = vpack.c.b16 %v3709, %v3705
        %v3798 = vpack.c.b16 %v3714, %v3710
        %v3799 = vpack.c.b16 %v3715, %v3711
        %v3800 = vpack.c.b16 %v3716, %v3712
        %v3801 = vpack.c.b16 %v3717, %v3713
        %v3802 = vpack.c.b16 %v3722, %v3718
        %v3803 = vpack.c.b16 %v3723, %v3719
        %v3804 = vpack.c.b16 %v3724, %v3720
        %v3805 = vpack.c.b16 %v3725, %v3721
        %v3806 = vpack.c.b16 %v3730, %v3726
        %v3807 = vpack.c.b16 %v3731, %v3727
        %v3808 = vpack.c.b16 %v3732, %v3728
        %v3809 = vpack.c.b16 %v3733, %v3729
        %v3810 = vpack.c.b16 %v3738, %v3734
        %v3811 = vpack.c.b16 %v3739, %v3735
        %v3812 = vpack.c.b16 %v3740, %v3736
        %v3813 = vpack.c.b16 %v3741, %v3737
        %v3814 = vpack.c.b16 %v3746, %v3742
        %v3815 = vpack.c.b16 %v3747, %v3743
        %v3816 = vpack.c.b16 %v3748, %v3744
        %v3817 = vpack.c.b16 %v3749, %v3745
        %v3818 = vpack.c.b16 %v3754, %v3750
        %v3819 = vpack.c.b16 %v3755, %v3751
        %v3820 = vpack.c.b16 %v3756, %v3752
        %v3821 = vpack.c.b16 %v3757, %v3753
        %3886 = vmatprep.subr.bf16.mxu0 %v3787
        %3887 = vmatpush1.bf16.msra.mxu0 %v3786
        %3888 = vmatprep.subr.bf16.mxu0 %v3783
        %3889 = vmatpush1.bf16.msra.mxu0 %v3782
        %3890 = vmatprep.subr.bf16.mxu0 %v3779
        %3891 = vmatpush1.bf16.msra.mxu0 %v3778
        %3892 = vmatprep.subr.bf16.mxu0 %v3775
        %3893 = vmatpush1.bf16.msra.mxu0 %v3774
        %3894 = vmatprep.subr.bf16.mxu0 %v3771
        %3895 = vmatpush1.bf16.msra.mxu0 %v3770
        %3896 = vmatprep.subr.bf16.mxu0 %v3767
        %3897 = vmatpush1.bf16.msra.mxu0 %v3766
        %3898 = vmatprep.subr.bf16.mxu0 %v3763
        %3899 = vmatpush1.bf16.msra.mxu0 %v3762
        %3900 = vmatprep.subr.bf16.mxu0 %v3759
        %3901 = vmatpush1.bf16.msra.mxu0 %v3758
        %3902 = vmatprep.subr.bf16.mxu0 %v3819
        %3903 = vmatpush2.bf16.msra.mxu0 %v3818
        %3904 = vmatprep.subr.bf16.mxu0 %v3815
        %3905 = vmatpush2.bf16.msra.mxu0 %v3814
        %3906 = vmatprep.subr.bf16.mxu0 %v3811
        %3907 = vmatpush2.bf16.msra.mxu0 %v3810
        %3908 = vmatprep.subr.bf16.mxu0 %v3807
        %3909 = vmatpush2.bf16.msra.mxu0 %v3806
        %3910 = vmatprep.subr.bf16.mxu0 %v3803
        %3911 = vmatpush2.bf16.msra.mxu0 %v3802
        %3912 = vmatprep.subr.bf16.mxu0 %v3799
        %3913 = vmatpush2.bf16.msra.mxu0 %v3798
        %3914 = vmatprep.subr.bf16.mxu0 %v3795
        %3915 = vmatpush2.bf16.msra.mxu0 %v3794
        %3916 = vmatprep.subr.bf16.mxu0 %v3791
        %3917 = vmatpush2.bf16.msra.mxu0 %v3790
        %3918 = vmatprep.mubr.bf16.mxu0 %v2618
        %3919 = vmatmul.mubr.bf16.gmra.mxu0 %v2617
        %v3920 = vpop.f32.mrf.mxu0
        %v3921 = vadd.f32 %v3309, %v3920
        %v3922 = vpop.f32.mrf.mxu0
        %v3923 = vadd.f32 %v3311, %v3922
        %v3924 = vpop.f32.mrf.mxu0
        %v3925 = vadd.f32 %v3313, %v3924
        %v3926 = vpop.f32.mrf.mxu0
        %v3927 = vadd.f32 %v3315, %v3926
        %3928 = vmatprep.mubr.bf16.mxu0 %v2620
        %3929 = vmatmul.mubr.bf16.gmra.mxu0 %v2619
        %v3930 = vpop.f32.mrf.mxu0
        %v3931 = vadd.f32 %v3319, %v3930
        %v3932 = vpop.f32.mrf.mxu0
        %v3933 = vadd.f32 %v3321, %v3932
        %v3934 = vpop.f32.mrf.mxu0
        %v3935 = vadd.f32 %v3323, %v3934
        %v3936 = vpop.f32.mrf.mxu0
        %v3937 = vadd.f32 %v3325, %v3936
        %3938 = vmatprep.mubr.bf16.mxu0 %v2622
        %3939 = vmatmul.mubr.bf16.gmra.mxu0 %v2621
        %v3940 = vpop.f32.mrf.mxu0
        %v3941 = vadd.f32 %v3329, %v3940
        %v3942 = vpop.f32.mrf.mxu0
        %v3943 = vadd.f32 %v3331, %v3942
        %v3944 = vpop.f32.mrf.mxu0
        %v3945 = vadd.f32 %v3333, %v3944
        %v3946 = vpop.f32.mrf.mxu0
        %v3947 = vadd.f32 %v3335, %v3946
        %3948 = vmatprep.mubr.bf16.mxu0 %v2624
        %3949 = vmatmul.mubr.bf16.gmra.mxu0 %v2623
        %v3950 = vpop.f32.mrf.mxu0
        %v3951 = vadd.f32 %v3339, %v3950
        %v3952 = vpop.f32.mrf.mxu0
        %v3953 = vadd.f32 %v3341, %v3952
        %v3954 = vpop.f32.mrf.mxu0
        %v3955 = vadd.f32 %v3343, %v3954
        %v3956 = vpop.f32.mrf.mxu0
        %v3957 = vadd.f32 %v3345, %v3956
        %3958 = vdwg.mxu0
        %3959 = vmatprep.subr.bf16.mxu0 %v3789
        %3960 = vmatpush1.bf16.msra.mxu0 %v3788
        %3961 = vmatprep.subr.bf16.mxu0 %v3785
        %3962 = vmatpush1.bf16.msra.mxu0 %v3784
        %3963 = vmatprep.subr.bf16.mxu0 %v3781
        %3964 = vmatpush1.bf16.msra.mxu0 %v3780
        %3965 = vmatprep.subr.bf16.mxu0 %v3777
        %3966 = vmatpush1.bf16.msra.mxu0 %v3776
        %3967 = vmatprep.subr.bf16.mxu0 %v3773
        %3968 = vmatpush1.bf16.msra.mxu0 %v3772
        %3969 = vmatprep.subr.bf16.mxu0 %v3769
        %3970 = vmatpush1.bf16.msra.mxu0 %v3768
        %3971 = vmatprep.subr.bf16.mxu0 %v3765
        %3972 = vmatpush1.bf16.msra.mxu0 %v3764
        %3973 = vmatprep.subr.bf16.mxu0 %v3761
        %3974 = vmatpush1.bf16.msra.mxu0 %v3760
        %3975 = vmatprep.subr.bf16.mxu0 %v3821
        %3976 = vmatpush2.bf16.msra.mxu0 %v3820
        %3977 = vmatprep.subr.bf16.mxu0 %v3817
        %3978 = vmatpush2.bf16.msra.mxu0 %v3816
        %3979 = vmatprep.subr.bf16.mxu0 %v3813
        %3980 = vmatpush2.bf16.msra.mxu0 %v3812
        %3981 = vmatprep.subr.bf16.mxu0 %v3809
        %3982 = vmatpush2.bf16.msra.mxu0 %v3808
        %3983 = vmatprep.subr.bf16.mxu0 %v3805
        %3984 = vmatpush2.bf16.msra.mxu0 %v3804
        %3985 = vmatprep.subr.bf16.mxu0 %v3801
        %3986 = vmatpush2.bf16.msra.mxu0 %v3800
        %3987 = vmatprep.subr.bf16.mxu0 %v3797
        %3988 = vmatpush2.bf16.msra.mxu0 %v3796
        %3989 = vmatprep.subr.bf16.mxu0 %v3793
        %3990 = vmatpush2.bf16.msra.mxu0 %v3792
        %3991 = vmatprep.mubr.bf16.mxu0 %v2618
        %3992 = vmatmul.mubr.bf16.gmra.mxu0 %v2617
        %v3993 = vpop.f32.mrf.mxu0
        %v3994 = vadd.f32 %v3382, %v3993
        %v3995 = vpop.f32.mrf.mxu0
        %v3996 = vadd.f32 %v3384, %v3995
        %v3997 = vpop.f32.mrf.mxu0
        %v3998 = vadd.f32 %v3386, %v3997
        %v3999 = vpop.f32.mrf.mxu0
        %v4000 = vadd.f32 %v3388, %v3999
        %4001 = vmatprep.mubr.bf16.mxu0 %v2620
        %4002 = vmatmul.mubr.bf16.gmra.mxu0 %v2619
        %v4003 = vpop.f32.mrf.mxu0
        %v4004 = vadd.f32 %v3392, %v4003
        %v4005 = vpop.f32.mrf.mxu0
        %v4006 = vadd.f32 %v3394, %v4005
        %v4007 = vpop.f32.mrf.mxu0
        %v4008 = vadd.f32 %v3396, %v4007
        %v4009 = vpop.f32.mrf.mxu0
        %v4010 = vadd.f32 %v3398, %v4009
        %4011 = vmatprep.mubr.bf16.mxu0 %v2622
        %4012 = vmatmul.mubr.bf16.gmra.mxu0 %v2621
        %v4013 = vpop.f32.mrf.mxu0
        %v4014 = vadd.f32 %v3402, %v4013
        %v4015 = vpop.f32.mrf.mxu0
        %v4016 = vadd.f32 %v3404, %v4015
        %v4017 = vpop.f32.mrf.mxu0
        %v4018 = vadd.f32 %v3406, %v4017
        %v4019 = vpop.f32.mrf.mxu0
        %v4020 = vadd.f32 %v3408, %v4019
        %4021 = vmatprep.mubr.bf16.mxu0 %v2624
        %4022 = vmatmul.mubr.bf16.gmra.mxu0 %v2623
        %v4023 = vpop.f32.mrf.mxu0
        %v4024 = vadd.f32 %v3412, %v4023
        %v4025 = vpop.f32.mrf.mxu0
        %v4026 = vadd.f32 %v3414, %v4025
        %v4027 = vpop.f32.mrf.mxu0
        %v4028 = vadd.f32 %v3416, %v4027
        %v4029 = vpop.f32.mrf.mxu0
        %v4030 = vadd.f32 %v3418, %v4029
        %4031 = vdwg.mxu0
        %4032 = vmatprep.subr.bf16.mxu0 %v3787
        %4033 = vmatpush1.bf16.msra.mxu0 %v3786
        %4034 = vmatprep.subr.bf16.mxu0 %v3783
        %4035 = vmatpush1.bf16.msra.mxu0 %v3782
        %4036 = vmatprep.subr.bf16.mxu0 %v3779
        %4037 = vmatpush1.bf16.msra.mxu0 %v3778
        %4038 = vmatprep.subr.bf16.mxu0 %v3775
        %4039 = vmatpush1.bf16.msra.mxu0 %v3774
        %4040 = vmatprep.subr.bf16.mxu0 %v3771
        %4041 = vmatpush1.bf16.msra.mxu0 %v3770
        %4042 = vmatprep.subr.bf16.mxu0 %v3767
        %4043 = vmatpush1.bf16.msra.mxu0 %v3766
        %4044 = vmatprep.subr.bf16.mxu0 %v3763
        %4045 = vmatpush1.bf16.msra.mxu0 %v3762
        %4046 = vmatprep.subr.bf16.mxu0 %v3759
        %4047 = vmatpush1.bf16.msra.mxu0 %v3758
        %4048 = vmatprep.subr.bf16.mxu0 %v3819
        %4049 = vmatpush2.bf16.msra.mxu0 %v3818
        %4050 = vmatprep.subr.bf16.mxu0 %v3815
        %4051 = vmatpush2.bf16.msra.mxu0 %v3814
        %4052 = vmatprep.subr.bf16.mxu0 %v3811
        %4053 = vmatpush2.bf16.msra.mxu0 %v3810
        %4054 = vmatprep.subr.bf16.mxu0 %v3807
        %4055 = vmatpush2.bf16.msra.mxu0 %v3806
        %4056 = vmatprep.subr.bf16.mxu0 %v3803
        %4057 = vmatpush2.bf16.msra.mxu0 %v3802
        %4058 = vmatprep.subr.bf16.mxu0 %v3799
        %4059 = vmatpush2.bf16.msra.mxu0 %v3798
        %4060 = vmatprep.subr.bf16.mxu0 %v3795
        %4061 = vmatpush2.bf16.msra.mxu0 %v3794
        %4062 = vmatprep.subr.bf16.mxu0 %v3791
        %4063 = vmatpush2.bf16.msra.mxu0 %v3790
        %4064 = vmatprep.mubr.bf16.mxu0 %v2690
        %4065 = vmatmul.mubr.bf16.gmra.mxu0 %v2689
        %v4066 = vpop.f32.mrf.mxu0
        %v4067 = vadd.f32 %v3455, %v4066
        %v4068 = vpop.f32.mrf.mxu0
        %v4069 = vadd.f32 %v3457, %v4068
        %v4070 = vpop.f32.mrf.mxu0
        %v4071 = vadd.f32 %v3459, %v4070
        %v4072 = vpop.f32.mrf.mxu0
        %v4073 = vadd.f32 %v3461, %v4072
        %4074 = vmatprep.mubr.bf16.mxu0 %v2692
        %4075 = vmatmul.mubr.bf16.gmra.mxu0 %v2691
        %v4076 = vpop.f32.mrf.mxu0
        %v4077 = vadd.f32 %v3465, %v4076
        %v4078 = vpop.f32.mrf.mxu0
        %v4079 = vadd.f32 %v3467, %v4078
        %v4080 = vpop.f32.mrf.mxu0
        %v4081 = vadd.f32 %v3469, %v4080
        %v4082 = vpop.f32.mrf.mxu0
        %v4083 = vadd.f32 %v3471, %v4082
        %4084 = vmatprep.mubr.bf16.mxu0 %v2694
        %4085 = vmatmul.mubr.bf16.gmra.mxu0 %v2693
        %v4086 = vpop.f32.mrf.mxu0
        %v4087 = vadd.f32 %v3475, %v4086
        %v4088 = vpop.f32.mrf.mxu0
        %v4089 = vadd.f32 %v3477, %v4088
        %v4090 = vpop.f32.mrf.mxu0
        %v4091 = vadd.f32 %v3479, %v4090
        %v4092 = vpop.f32.mrf.mxu0
        %v4093 = vadd.f32 %v3481, %v4092
        %4094 = vmatprep.mubr.bf16.mxu0 %v2696
        %4095 = vmatmul.mubr.bf16.gmra.mxu0 %v2695
        %v4096 = vpop.f32.mrf.mxu0
        %v4097 = vadd.f32 %v3485, %v4096
        %v4098 = vpop.f32.mrf.mxu0
        %v4099 = vadd.f32 %v3487, %v4098
        %v4100 = vpop.f32.mrf.mxu0
        %v4101 = vadd.f32 %v3489, %v4100
        %v4102 = vpop.f32.mrf.mxu0
        %v4103 = vadd.f32 %v3491, %v4102
        %4104 = vdwg.mxu0
        %4105 = vmatprep.subr.bf16.mxu0 %v3789
        %4106 = vmatpush1.bf16.msra.mxu0 %v3788
        %4107 = vmatprep.subr.bf16.mxu0 %v3785
        %4108 = vmatpush1.bf16.msra.mxu0 %v3784
        %4109 = vmatprep.subr.bf16.mxu0 %v3781
        %4110 = vmatpush1.bf16.msra.mxu0 %v3780
        %4111 = vmatprep.subr.bf16.mxu0 %v3777
        %4112 = vmatpush1.bf16.msra.mxu0 %v3776
        %4113 = vmatprep.subr.bf16.mxu0 %v3773
        %4114 = vmatpush1.bf16.msra.mxu0 %v3772
        %4115 = vmatprep.subr.bf16.mxu0 %v3769
        %4116 = vmatpush1.bf16.msra.mxu0 %v3768
        %4117 = vmatprep.subr.bf16.mxu0 %v3765
        %4118 = vmatpush1.bf16.msra.mxu0 %v3764
        %4119 = vmatprep.subr.bf16.mxu0 %v3761
        %4120 = vmatpush1.bf16.msra.mxu0 %v3760
        %4121 = vmatprep.subr.bf16.mxu0 %v3821
        %4122 = vmatpush2.bf16.msra.mxu0 %v3820
        %4123 = vmatprep.subr.bf16.mxu0 %v3817
        %4124 = vmatpush2.bf16.msra.mxu0 %v3816
        %4125 = vmatprep.subr.bf16.mxu0 %v3813
        %4126 = vmatpush2.bf16.msra.mxu0 %v3812
        %4127 = vmatprep.subr.bf16.mxu0 %v3809
        %4128 = vmatpush2.bf16.msra.mxu0 %v3808
        %4129 = vmatprep.subr.bf16.mxu0 %v3805
        %4130 = vmatpush2.bf16.msra.mxu0 %v3804
        %4131 = vmatprep.subr.bf16.mxu0 %v3801
        %4132 = vmatpush2.bf16.msra.mxu0 %v3800
        %4133 = vmatprep.subr.bf16.mxu0 %v3797
        %4134 = vmatpush2.bf16.msra.mxu0 %v3796
        %4135 = vmatprep.subr.bf16.mxu0 %v3793
        %4136 = vmatpush2.bf16.msra.mxu0 %v3792
        %4137 = vmatprep.mubr.bf16.mxu0 %v2690
        %4138 = vmatmul.mubr.bf16.gmra.mxu0 %v2689
        %v4139 = vpop.f32.mrf.mxu0
        %v4140 = vadd.f32 %v3528, %v4139
        %v4141 = vpop.f32.mrf.mxu0
        %v4142 = vadd.f32 %v3530, %v4141
        %v4143 = vpop.f32.mrf.mxu0
        %v4144 = vadd.f32 %v3532, %v4143
        %v4145 = vpop.f32.mrf.mxu0
        %v4146 = vadd.f32 %v3534, %v4145
        %4147 = vmatprep.mubr.bf16.mxu0 %v2692
        %4148 = vmatmul.mubr.bf16.gmra.mxu0 %v2691
        %v4149 = vpop.f32.mrf.mxu0
        %v4150 = vadd.f32 %v3538, %v4149
        %v4151 = vpop.f32.mrf.mxu0
        %v4152 = vadd.f32 %v3540, %v4151
        %v4153 = vpop.f32.mrf.mxu0
        %v4154 = vadd.f32 %v3542, %v4153
        %v4155 = vpop.f32.mrf.mxu0
        %v4156 = vadd.f32 %v3544, %v4155
        %4157 = vmatprep.mubr.bf16.mxu0 %v2694
        %4158 = vmatmul.mubr.bf16.gmra.mxu0 %v2693
        %v4159 = vpop.f32.mrf.mxu0
        %v4160 = vadd.f32 %v3548, %v4159
        %v4161 = vpop.f32.mrf.mxu0
        %v4162 = vadd.f32 %v3550, %v4161
        %v4163 = vpop.f32.mrf.mxu0
        %v4164 = vadd.f32 %v3552, %v4163
        %v4165 = vpop.f32.mrf.mxu0
        %v4166 = vadd.f32 %v3554, %v4165
        %4167 = vmatprep.mubr.bf16.mxu0 %v2696
        %4168 = vmatmul.mubr.bf16.gmra.mxu0 %v2695
        %v4169 = vpop.f32.mrf.mxu0
        %v4170 = vadd.f32 %v3558, %v4169
        %v4171 = vpop.f32.mrf.mxu0
        %v4172 = vadd.f32 %v3560, %v4171
        %v4173 = vpop.f32.mrf.mxu0
        %v4174 = vadd.f32 %v3562, %v4173
        %v4175 = vpop.f32.mrf.mxu0
        %v4176 = vadd.f32 %v3564, %v4175
        %4177 = vdwg.mxu0
        %v4178 = vld [vmem:[%s4 + $0x400] sm:$0xff]
        %v4179 = vld [vmem:[%s4 + $0x408] sm:$0xff]
        %v4180 = vld [vmem:[%s4 + $0x410] sm:$0xff]
        %v4181 = vld [vmem:[%s4 + $0x418] sm:$0xff]
        %v4182 = vld [vmem:[%s4 + $0x420] sm:$0xff]
        %v4183 = vld [vmem:[%s4 + $0x428] sm:$0xff]
        %v4184 = vld [vmem:[%s4 + $0x430] sm:$0xff]
        %v4185 = vld [vmem:[%s4 + $0x438] sm:$0xff]
        %v4186 = vld [vmem:[%s4 + $0x440] sm:$0xff]
        %v4187 = vld [vmem:[%s4 + $0x448] sm:$0xff]
        %v4188 = vld [vmem:[%s4 + $0x450] sm:$0xff]
        %v4189 = vld [vmem:[%s4 + $0x458] sm:$0xff]
        %v4190 = vld [vmem:[%s4 + $0x460] sm:$0xff]
        %v4191 = vld [vmem:[%s4 + $0x468] sm:$0xff]
        %v4192 = vld [vmem:[%s4 + $0x470] sm:$0xff]
        %v4193 = vld [vmem:[%s4 + $0x478] sm:$0xff]
        %v4194 = vld [vmem:[%s4 + $0x480] sm:$0xff]
        %v4195 = vld [vmem:[%s4 + $0x488] sm:$0xff]
        %v4196 = vld [vmem:[%s4 + $0x490] sm:$0xff]
        %v4197 = vld [vmem:[%s4 + $0x498] sm:$0xff]
        %v4198 = vld [vmem:[%s4 + $0x4a0] sm:$0xff]
        %v4199 = vld [vmem:[%s4 + $0x4a8] sm:$0xff]
        %v4200 = vld [vmem:[%s4 + $0x4b0] sm:$0xff]
        %v4201 = vld [vmem:[%s4 + $0x4b8] sm:$0xff]
        %v4202 = vld [vmem:[%s4 + $0x4c0] sm:$0xff]
        %v4203 = vld [vmem:[%s4 + $0x4c8] sm:$0xff]
        %v4204 = vld [vmem:[%s4 + $0x4d0] sm:$0xff]
        %v4205 = vld [vmem:[%s4 + $0x4d8] sm:$0xff]
        %v4206 = vld [vmem:[%s4 + $0x4e0] sm:$0xff]
        %v4207 = vld [vmem:[%s4 + $0x4e8] sm:$0xff]
        %v4208 = vld [vmem:[%s4 + $0x4f0] sm:$0xff]
        %v4209 = vld [vmem:[%s4 + $0x4f8] sm:$0xff]
        %v4210 = vld [vmem:[%s4 + $0x500] sm:$0xff]
        %v4211 = vld [vmem:[%s4 + $0x508] sm:$0xff]
        %v4212 = vld [vmem:[%s4 + $0x510] sm:$0xff]
        %v4213 = vld [vmem:[%s4 + $0x518] sm:$0xff]
        %v4214 = vld [vmem:[%s4 + $0x520] sm:$0xff]
        %v4215 = vld [vmem:[%s4 + $0x528] sm:$0xff]
        %v4216 = vld [vmem:[%s4 + $0x530] sm:$0xff]
        %v4217 = vld [vmem:[%s4 + $0x538] sm:$0xff]
        %v4218 = vld [vmem:[%s4 + $0x540] sm:$0xff]
        %v4219 = vld [vmem:[%s4 + $0x548] sm:$0xff]
        %v4220 = vld [vmem:[%s4 + $0x550] sm:$0xff]
        %v4221 = vld [vmem:[%s4 + $0x558] sm:$0xff]
        %v4222 = vld [vmem:[%s4 + $0x560] sm:$0xff]
        %v4223 = vld [vmem:[%s4 + $0x568] sm:$0xff]
        %v4224 = vld [vmem:[%s4 + $0x570] sm:$0xff]
        %v4225 = vld [vmem:[%s4 + $0x578] sm:$0xff]
        %v4226 = vld [vmem:[%s4 + $0x580] sm:$0xff]
        %v4227 = vld [vmem:[%s4 + $0x588] sm:$0xff]
        %v4228 = vld [vmem:[%s4 + $0x590] sm:$0xff]
        %v4229 = vld [vmem:[%s4 + $0x598] sm:$0xff]
        %v4230 = vld [vmem:[%s4 + $0x5a0] sm:$0xff]
        %v4231 = vld [vmem:[%s4 + $0x5a8] sm:$0xff]
        %v4232 = vld [vmem:[%s4 + $0x5b0] sm:$0xff]
        %v4233 = vld [vmem:[%s4 + $0x5b8] sm:$0xff]
        %v4234 = vld [vmem:[%s4 + $0x5c0] sm:$0xff]
        %v4235 = vld [vmem:[%s4 + $0x5c8] sm:$0xff]
        %v4236 = vld [vmem:[%s4 + $0x5d0] sm:$0xff]
        %v4237 = vld [vmem:[%s4 + $0x5d8] sm:$0xff]
        %v4238 = vld [vmem:[%s4 + $0x5e0] sm:$0xff]
        %v4239 = vld [vmem:[%s4 + $0x5e8] sm:$0xff]
        %v4240 = vld [vmem:[%s4 + $0x5f0] sm:$0xff]
        %v4241 = vld [vmem:[%s4 + $0x5f8] sm:$0xff]
        %v4306 = vunpack.c.l.b16 %v4178
        %v4307 = vunpack.c.h.b16 %v4178
        %v4308 = vunpack.c.l.b16 %v4179
        %v4309 = vunpack.c.h.b16 %v4179
        %v4310 = vunpack.c.l.b16 %v4180
        %v4311 = vunpack.c.h.b16 %v4180
        %v4312 = vunpack.c.l.b16 %v4181
        %v4313 = vunpack.c.h.b16 %v4181
        %v4314 = vunpack.c.l.b16 %v4182
        %v4315 = vunpack.c.h.b16 %v4182
        %v4316 = vunpack.c.l.b16 %v4183
        %v4317 = vunpack.c.h.b16 %v4183
        %v4318 = vunpack.c.l.b16 %v4184
        %v4319 = vunpack.c.h.b16 %v4184
        %v4320 = vunpack.c.l.b16 %v4185
        %v4321 = vunpack.c.h.b16 %v4185
        %v4322 = vunpack.c.l.b16 %v4186
        %v4323 = vunpack.c.h.b16 %v4186
        %v4324 = vunpack.c.l.b16 %v4187
        %v4325 = vunpack.c.h.b16 %v4187
        %v4326 = vunpack.c.l.b16 %v4188
        %v4327 = vunpack.c.h.b16 %v4188
        %v4328 = vunpack.c.l.b16 %v4189
        %v4329 = vunpack.c.h.b16 %v4189
        %v4330 = vunpack.c.l.b16 %v4190
        %v4331 = vunpack.c.h.b16 %v4190
        %v4332 = vunpack.c.l.b16 %v4191
        %v4333 = vunpack.c.h.b16 %v4191
        %v4334 = vunpack.c.l.b16 %v4192
        %v4335 = vunpack.c.h.b16 %v4192
        %v4336 = vunpack.c.l.b16 %v4193
        %v4337 = vunpack.c.h.b16 %v4193
        %v4338 = vunpack.c.l.b16 %v4194
        %v4339 = vunpack.c.h.b16 %v4194
        %v4340 = vunpack.c.l.b16 %v4195
        %v4341 = vunpack.c.h.b16 %v4195
        %v4342 = vunpack.c.l.b16 %v4196
        %v4343 = vunpack.c.h.b16 %v4196
        %v4344 = vunpack.c.l.b16 %v4197
        %v4345 = vunpack.c.h.b16 %v4197
        %v4346 = vunpack.c.l.b16 %v4198
        %v4347 = vunpack.c.h.b16 %v4198
        %v4348 = vunpack.c.l.b16 %v4199
        %v4349 = vunpack.c.h.b16 %v4199
        %v4350 = vunpack.c.l.b16 %v4200
        %v4351 = vunpack.c.h.b16 %v4200
        %v4352 = vunpack.c.l.b16 %v4201
        %v4353 = vunpack.c.h.b16 %v4201
        %v4354 = vunpack.c.l.b16 %v4202
        %v4355 = vunpack.c.h.b16 %v4202
        %v4356 = vunpack.c.l.b16 %v4203
        %v4357 = vunpack.c.h.b16 %v4203
        %v4358 = vunpack.c.l.b16 %v4204
        %v4359 = vunpack.c.h.b16 %v4204
        %v4360 = vunpack.c.l.b16 %v4205
        %v4361 = vunpack.c.h.b16 %v4205
        %v4362 = vunpack.c.l.b16 %v4206
        %v4363 = vunpack.c.h.b16 %v4206
        %v4364 = vunpack.c.l.b16 %v4207
        %v4365 = vunpack.c.h.b16 %v4207
        %v4366 = vunpack.c.l.b16 %v4208
        %v4367 = vunpack.c.h.b16 %v4208
        %v4368 = vunpack.c.l.b16 %v4209
        %v4369 = vunpack.c.h.b16 %v4209
        %v4370 = vunpack.c.l.b16 %v4210
        %v4371 = vunpack.c.h.b16 %v4210
        %v4372 = vunpack.c.l.b16 %v4211
        %v4373 = vunpack.c.h.b16 %v4211
        %v4374 = vunpack.c.l.b16 %v4212
        %v4375 = vunpack.c.h.b16 %v4212
        %v4376 = vunpack.c.l.b16 %v4213
        %v4377 = vunpack.c.h.b16 %v4213
        %v4378 = vunpack.c.l.b16 %v4214
        %v4379 = vunpack.c.h.b16 %v4214
        %v4380 = vunpack.c.l.b16 %v4215
        %v4381 = vunpack.c.h.b16 %v4215
        %v4382 = vunpack.c.l.b16 %v4216
        %v4383 = vunpack.c.h.b16 %v4216
        %v4384 = vunpack.c.l.b16 %v4217
        %v4385 = vunpack.c.h.b16 %v4217
        %v4386 = vunpack.c.l.b16 %v4218
        %v4387 = vunpack.c.h.b16 %v4218
        %v4388 = vunpack.c.l.b16 %v4219
        %v4389 = vunpack.c.h.b16 %v4219
        %v4390 = vunpack.c.l.b16 %v4220
        %v4391 = vunpack.c.h.b16 %v4220
        %v4392 = vunpack.c.l.b16 %v4221
        %v4393 = vunpack.c.h.b16 %v4221
        %v4394 = vunpack.c.l.b16 %v4222
        %v4395 = vunpack.c.h.b16 %v4222
        %v4396 = vunpack.c.l.b16 %v4223
        %v4397 = vunpack.c.h.b16 %v4223
        %v4398 = vunpack.c.l.b16 %v4224
        %v4399 = vunpack.c.h.b16 %v4224
        %v4400 = vunpack.c.l.b16 %v4225
        %v4401 = vunpack.c.h.b16 %v4225
        %v4402 = vunpack.c.l.b16 %v4226
        %v4403 = vunpack.c.h.b16 %v4226
        %v4404 = vunpack.c.l.b16 %v4227
        %v4405 = vunpack.c.h.b16 %v4227
        %v4406 = vunpack.c.l.b16 %v4228
        %v4407 = vunpack.c.h.b16 %v4228
        %v4408 = vunpack.c.l.b16 %v4229
        %v4409 = vunpack.c.h.b16 %v4229
        %v4410 = vunpack.c.l.b16 %v4230
        %v4411 = vunpack.c.h.b16 %v4230
        %v4412 = vunpack.c.l.b16 %v4231
        %v4413 = vunpack.c.h.b16 %v4231
        %v4414 = vunpack.c.l.b16 %v4232
        %v4415 = vunpack.c.h.b16 %v4232
        %v4416 = vunpack.c.l.b16 %v4233
        %v4417 = vunpack.c.h.b16 %v4233
        %v4418 = vunpack.c.l.b16 %v4234
        %v4419 = vunpack.c.h.b16 %v4234
        %v4420 = vunpack.c.l.b16 %v4235
        %v4421 = vunpack.c.h.b16 %v4235
        %v4422 = vunpack.c.l.b16 %v4236
        %v4423 = vunpack.c.h.b16 %v4236
        %v4424 = vunpack.c.l.b16 %v4237
        %v4425 = vunpack.c.h.b16 %v4237
        %v4426 = vunpack.c.l.b16 %v4238
        %v4427 = vunpack.c.h.b16 %v4238
        %v4428 = vunpack.c.l.b16 %v4239
        %v4429 = vunpack.c.h.b16 %v4239
        %v4430 = vunpack.c.l.b16 %v4240
        %v4431 = vunpack.c.h.b16 %v4240
        %v4432 = vunpack.c.l.b16 %v4241
        %v4433 = vunpack.c.h.b16 %v4241
        %v4434 = vpack.c.b16 %v4310, %v4306
        %v4435 = vpack.c.b16 %v4311, %v4307
        %v4436 = vpack.c.b16 %v4312, %v4308
        %v4437 = vpack.c.b16 %v4313, %v4309
        %v4438 = vpack.c.b16 %v4318, %v4314
        %v4439 = vpack.c.b16 %v4319, %v4315
        %v4440 = vpack.c.b16 %v4320, %v4316
        %v4441 = vpack.c.b16 %v4321, %v4317
        %v4442 = vpack.c.b16 %v4326, %v4322
        %v4443 = vpack.c.b16 %v4327, %v4323
        %v4444 = vpack.c.b16 %v4328, %v4324
        %v4445 = vpack.c.b16 %v4329, %v4325
        %v4446 = vpack.c.b16 %v4334, %v4330
        %v4447 = vpack.c.b16 %v4335, %v4331
        %v4448 = vpack.c.b16 %v4336, %v4332
        %v4449 = vpack.c.b16 %v4337, %v4333
        %v4450 = vpack.c.b16 %v4342, %v4338
        %v4451 = vpack.c.b16 %v4343, %v4339
        %v4452 = vpack.c.b16 %v4344, %v4340
        %v4453 = vpack.c.b16 %v4345, %v4341
        %v4454 = vpack.c.b16 %v4350, %v4346
        %v4455 = vpack.c.b16 %v4351, %v4347
        %v4456 = vpack.c.b16 %v4352, %v4348
        %v4457 = vpack.c.b16 %v4353, %v4349
        %v4458 = vpack.c.b16 %v4358, %v4354
        %v4459 = vpack.c.b16 %v4359, %v4355
        %v4460 = vpack.c.b16 %v4360, %v4356
        %v4461 = vpack.c.b16 %v4361, %v4357
        %v4462 = vpack.c.b16 %v4366, %v4362
        %v4463 = vpack.c.b16 %v4367, %v4363
        %v4464 = vpack.c.b16 %v4368, %v4364
        %v4465 = vpack.c.b16 %v4369, %v4365
        %v4466 = vpack.c.b16 %v4374, %v4370
        %v4467 = vpack.c.b16 %v4375, %v4371
        %v4468 = vpack.c.b16 %v4376, %v4372
        %v4469 = vpack.c.b16 %v4377, %v4373
        %v4470 = vpack.c.b16 %v4382, %v4378
        %v4471 = vpack.c.b16 %v4383, %v4379
        %v4472 = vpack.c.b16 %v4384, %v4380
        %v4473 = vpack.c.b16 %v4385, %v4381
        %v4474 = vpack.c.b16 %v4390, %v4386
        %v4475 = vpack.c.b16 %v4391, %v4387
        %v4476 = vpack.c.b16 %v4392, %v4388
        %v4477 = vpack.c.b16 %v4393, %v4389
        %v4478 = vpack.c.b16 %v4398, %v4394
        %v4479 = vpack.c.b16 %v4399, %v4395
        %v4480 = vpack.c.b16 %v4400, %v4396
        %v4481 = vpack.c.b16 %v4401, %v4397
        %v4482 = vpack.c.b16 %v4406, %v4402
        %v4483 = vpack.c.b16 %v4407, %v4403
        %v4484 = vpack.c.b16 %v4408, %v4404
        %v4485 = vpack.c.b16 %v4409, %v4405
        %v4486 = vpack.c.b16 %v4414, %v4410
        %v4487 = vpack.c.b16 %v4415, %v4411
        %v4488 = vpack.c.b16 %v4416, %v4412
        %v4489 = vpack.c.b16 %v4417, %v4413
        %v4490 = vpack.c.b16 %v4422, %v4418
        %v4491 = vpack.c.b16 %v4423, %v4419
        %v4492 = vpack.c.b16 %v4424, %v4420
        %v4493 = vpack.c.b16 %v4425, %v4421
        %v4494 = vpack.c.b16 %v4430, %v4426
        %v4495 = vpack.c.b16 %v4431, %v4427
        %v4496 = vpack.c.b16 %v4432, %v4428
        %v4497 = vpack.c.b16 %v4433, %v4429
        %4562 = vmatprep.subr.bf16.mxu0 %v4463
        %4563 = vmatpush1.bf16.msra.mxu0 %v4462
        %4564 = vmatprep.subr.bf16.mxu0 %v4459
        %4565 = vmatpush1.bf16.msra.mxu0 %v4458
        %4566 = vmatprep.subr.bf16.mxu0 %v4455
        %4567 = vmatpush1.bf16.msra.mxu0 %v4454
        %4568 = vmatprep.subr.bf16.mxu0 %v4451
        %4569 = vmatpush1.bf16.msra.mxu0 %v4450
        %4570 = vmatprep.subr.bf16.mxu0 %v4447
        %4571 = vmatpush1.bf16.msra.mxu0 %v4446
        %4572 = vmatprep.subr.bf16.mxu0 %v4443
        %4573 = vmatpush1.bf16.msra.mxu0 %v4442
        %4574 = vmatprep.subr.bf16.mxu0 %v4439
        %4575 = vmatpush1.bf16.msra.mxu0 %v4438
        %4576 = vmatprep.subr.bf16.mxu0 %v4435
        %4577 = vmatpush1.bf16.msra.mxu0 %v4434
        %4578 = vmatprep.subr.bf16.mxu0 %v4495
        %4579 = vmatpush2.bf16.msra.mxu0 %v4494
        %4580 = vmatprep.subr.bf16.mxu0 %v4491
        %4581 = vmatpush2.bf16.msra.mxu0 %v4490
        %4582 = vmatprep.subr.bf16.mxu0 %v4487
        %4583 = vmatpush2.bf16.msra.mxu0 %v4486
        %4584 = vmatprep.subr.bf16.mxu0 %v4483
        %4585 = vmatpush2.bf16.msra.mxu0 %v4482
        %4586 = vmatprep.subr.bf16.mxu0 %v4479
        %4587 = vmatpush2.bf16.msra.mxu0 %v4478
        %4588 = vmatprep.subr.bf16.mxu0 %v4475
        %4589 = vmatpush2.bf16.msra.mxu0 %v4474
        %4590 = vmatprep.subr.bf16.mxu0 %v4471
        %4591 = vmatpush2.bf16.msra.mxu0 %v4470
        %4592 = vmatprep.subr.bf16.mxu0 %v4467
        %4593 = vmatpush2.bf16.msra.mxu0 %v4466
        %4594 = vmatprep.mubr.bf16.mxu0 %v2698
        %4595 = vmatmul.mubr.bf16.gmra.mxu0 %v2697
        %v4596 = vpop.f32.mrf.mxu0
        %v4597 = vadd.f32 0.0, %v4596
        %v4598 = vpop.f32.mrf.mxu0
        %v4599 = vadd.f32 0.0, %v4598
        %v4600 = vpop.f32.mrf.mxu0
        %v4601 = vadd.f32 0.0, %v4600
        %v4602 = vpop.f32.mrf.mxu0
        %v4603 = vadd.f32 0.0, %v4602
        %4604 = vmatprep.mubr.bf16.mxu0 %v2700
        %4605 = vmatmul.mubr.bf16.gmra.mxu0 %v2699
        %v4606 = vpop.f32.mrf.mxu0
        %v4607 = vadd.f32 0.0, %v4606
        %v4608 = vpop.f32.mrf.mxu0
        %v4609 = vadd.f32 0.0, %v4608
        %v4610 = vpop.f32.mrf.mxu0
        %v4611 = vadd.f32 0.0, %v4610
        %v4612 = vpop.f32.mrf.mxu0
        %v4613 = vadd.f32 0.0, %v4612
        %4614 = vmatprep.mubr.bf16.mxu0 %v2702
        %4615 = vmatmul.mubr.bf16.gmra.mxu0 %v2701
        %v4616 = vpop.f32.mrf.mxu0
        %v4617 = vadd.f32 0.0, %v4616
        %v4618 = vpop.f32.mrf.mxu0
        %v4619 = vadd.f32 0.0, %v4618
        %v4620 = vpop.f32.mrf.mxu0
        %v4621 = vadd.f32 0.0, %v4620
        %v4622 = vpop.f32.mrf.mxu0
        %v4623 = vadd.f32 0.0, %v4622
        %4624 = vmatprep.mubr.bf16.mxu0 %v2704
        %4625 = vmatmul.mubr.bf16.gmra.mxu0 %v2703
        %v4626 = vpop.f32.mrf.mxu0
        %v4627 = vadd.f32 0.0, %v4626
        %v4628 = vpop.f32.mrf.mxu0
        %v4629 = vadd.f32 0.0, %v4628
        %v4630 = vpop.f32.mrf.mxu0
        %v4631 = vadd.f32 0.0, %v4630
        %v4632 = vpop.f32.mrf.mxu0
        %v4633 = vadd.f32 0.0, %v4632
        %4634 = vdwg.mxu0
        %4635 = vmatprep.subr.bf16.mxu0 %v4465
        %4636 = vmatpush1.bf16.msra.mxu0 %v4464
        %4637 = vmatprep.subr.bf16.mxu0 %v4461
        %4638 = vmatpush1.bf16.msra.mxu0 %v4460
        %4639 = vmatprep.subr.bf16.mxu0 %v4457
        %4640 = vmatpush1.bf16.msra.mxu0 %v4456
        %4641 = vmatprep.subr.bf16.mxu0 %v4453
        %4642 = vmatpush1.bf16.msra.mxu0 %v4452
        %4643 = vmatprep.subr.bf16.mxu0 %v4449
        %4644 = vmatpush1.bf16.msra.mxu0 %v4448
        %4645 = vmatprep.subr.bf16.mxu0 %v4445
        %4646 = vmatpush1.bf16.msra.mxu0 %v4444
        %4647 = vmatprep.subr.bf16.mxu0 %v4441
        %4648 = vmatpush1.bf16.msra.mxu0 %v4440
        %4649 = vmatprep.subr.bf16.mxu0 %v4437
        %4650 = vmatpush1.bf16.msra.mxu0 %v4436
        %4651 = vmatprep.subr.bf16.mxu0 %v4497
        %4652 = vmatpush2.bf16.msra.mxu0 %v4496
        %4653 = vmatprep.subr.bf16.mxu0 %v4493
        %4654 = vmatpush2.bf16.msra.mxu0 %v4492
        %4655 = vmatprep.subr.bf16.mxu0 %v4489
        %4656 = vmatpush2.bf16.msra.mxu0 %v4488
        %4657 = vmatprep.subr.bf16.mxu0 %v4485
        %4658 = vmatpush2.bf16.msra.mxu0 %v4484
        %4659 = vmatprep.subr.bf16.mxu0 %v4481
        %4660 = vmatpush2.bf16.msra.mxu0 %v4480
        %4661 = vmatprep.subr.bf16.mxu0 %v4477
        %4662 = vmatpush2.bf16.msra.mxu0 %v4476
        %4663 = vmatprep.subr.bf16.mxu0 %v4473
        %4664 = vmatpush2.bf16.msra.mxu0 %v4472
        %4665 = vmatprep.subr.bf16.mxu0 %v4469
        %4666 = vmatpush2.bf16.msra.mxu0 %v4468
        %4667 = vmatprep.mubr.bf16.mxu0 %v2698
        %4668 = vmatmul.mubr.bf16.gmra.mxu0 %v2697
        %v4669 = vpop.f32.mrf.mxu0
        %v4670 = vadd.f32 0.0, %v4669
        %v4671 = vpop.f32.mrf.mxu0
        %v4672 = vadd.f32 0.0, %v4671
        %v4673 = vpop.f32.mrf.mxu0
        %v4674 = vadd.f32 0.0, %v4673
        %v4675 = vpop.f32.mrf.mxu0
        %v4676 = vadd.f32 0.0, %v4675
        %4677 = vmatprep.mubr.bf16.mxu0 %v2700
        %4678 = vmatmul.mubr.bf16.gmra.mxu0 %v2699
        %v4679 = vpop.f32.mrf.mxu0
        %v4680 = vadd.f32 0.0, %v4679
        %v4681 = vpop.f32.mrf.mxu0
        %v4682 = vadd.f32 0.0, %v4681
        %v4683 = vpop.f32.mrf.mxu0
        %v4684 = vadd.f32 0.0, %v4683
        %v4685 = vpop.f32.mrf.mxu0
        %v4686 = vadd.f32 0.0, %v4685
        %4687 = vmatprep.mubr.bf16.mxu0 %v2702
        %4688 = vmatmul.mubr.bf16.gmra.mxu0 %v2701
        %v4689 = vpop.f32.mrf.mxu0
        %v4690 = vadd.f32 0.0, %v4689
        %v4691 = vpop.f32.mrf.mxu0
        %v4692 = vadd.f32 0.0, %v4691
        %v4693 = vpop.f32.mrf.mxu0
        %v4694 = vadd.f32 0.0, %v4693
        %v4695 = vpop.f32.mrf.mxu0
        %v4696 = vadd.f32 0.0, %v4695
        %4697 = vmatprep.mubr.bf16.mxu0 %v2704
        %4698 = vmatmul.mubr.bf16.gmra.mxu0 %v2703
        %v4699 = vpop.f32.mrf.mxu0
        %v4700 = vadd.f32 0.0, %v4699
        %v4701 = vpop.f32.mrf.mxu0
        %v4702 = vadd.f32 0.0, %v4701
        %v4703 = vpop.f32.mrf.mxu0
        %v4704 = vadd.f32 0.0, %v4703
        %v4705 = vpop.f32.mrf.mxu0
        %v4706 = vadd.f32 0.0, %v4705
        %4707 = vdwg.mxu0
        %4708 = vmatprep.subr.bf16.mxu0 %v4463
        %4709 = vmatpush1.bf16.msra.mxu0 %v4462
        %4710 = vmatprep.subr.bf16.mxu0 %v4459
        %4711 = vmatpush1.bf16.msra.mxu0 %v4458
        %4712 = vmatprep.subr.bf16.mxu0 %v4455
        %4713 = vmatpush1.bf16.msra.mxu0 %v4454
        %4714 = vmatprep.subr.bf16.mxu0 %v4451
        %4715 = vmatpush1.bf16.msra.mxu0 %v4450
        %4716 = vmatprep.subr.bf16.mxu0 %v4447
        %4717 = vmatpush1.bf16.msra.mxu0 %v4446
        %4718 = vmatprep.subr.bf16.mxu0 %v4443
        %4719 = vmatpush1.bf16.msra.mxu0 %v4442
        %4720 = vmatprep.subr.bf16.mxu0 %v4439
        %4721 = vmatpush1.bf16.msra.mxu0 %v4438
        %4722 = vmatprep.subr.bf16.mxu0 %v4435
        %4723 = vmatpush1.bf16.msra.mxu0 %v4434
        %4724 = vmatprep.subr.bf16.mxu0 %v4495
        %4725 = vmatpush2.bf16.msra.mxu0 %v4494
        %4726 = vmatprep.subr.bf16.mxu0 %v4491
        %4727 = vmatpush2.bf16.msra.mxu0 %v4490
        %4728 = vmatprep.subr.bf16.mxu0 %v4487
        %4729 = vmatpush2.bf16.msra.mxu0 %v4486
        %4730 = vmatprep.subr.bf16.mxu0 %v4483
        %4731 = vmatpush2.bf16.msra.mxu0 %v4482
        %4732 = vmatprep.subr.bf16.mxu0 %v4479
        %4733 = vmatpush2.bf16.msra.mxu0 %v4478
        %4734 = vmatprep.subr.bf16.mxu0 %v4475
        %4735 = vmatpush2.bf16.msra.mxu0 %v4474
        %4736 = vmatprep.subr.bf16.mxu0 %v4471
        %4737 = vmatpush2.bf16.msra.mxu0 %v4470
        %4738 = vmatprep.subr.bf16.mxu0 %v4467
        %4739 = vmatpush2.bf16.msra.mxu0 %v4466
        %4740 = vmatprep.mubr.bf16.mxu0 %v2706
        %4741 = vmatmul.mubr.bf16.gmra.mxu0 %v2705
        %v4742 = vpop.f32.mrf.mxu0
        %v4743 = vadd.f32 0.0, %v4742
        %v4744 = vpop.f32.mrf.mxu0
        %v4745 = vadd.f32 0.0, %v4744
        %v4746 = vpop.f32.mrf.mxu0
        %v4747 = vadd.f32 0.0, %v4746
        %v4748 = vpop.f32.mrf.mxu0
        %v4749 = vadd.f32 0.0, %v4748
        %4750 = vmatprep.mubr.bf16.mxu0 %v2708
        %4751 = vmatmul.mubr.bf16.gmra.mxu0 %v2707
        %v4752 = vpop.f32.mrf.mxu0
        %v4753 = vadd.f32 0.0, %v4752
        %v4754 = vpop.f32.mrf.mxu0
        %v4755 = vadd.f32 0.0, %v4754
        %v4756 = vpop.f32.mrf.mxu0
        %v4757 = vadd.f32 0.0, %v4756
        %v4758 = vpop.f32.mrf.mxu0
        %v4759 = vadd.f32 0.0, %v4758
        %4760 = vmatprep.mubr.bf16.mxu0 %v2710
        %4761 = vmatmul.mubr.bf16.gmra.mxu0 %v2709
        %v4762 = vpop.f32.mrf.mxu0
        %v4763 = vadd.f32 0.0, %v4762
        %v4764 = vpop.f32.mrf.mxu0
        %v4765 = vadd.f32 0.0, %v4764
        %v4766 = vpop.f32.mrf.mxu0
        %v4767 = vadd.f32 0.0, %v4766
        %v4768 = vpop.f32.mrf.mxu0
        %v4769 = vadd.f32 0.0, %v4768
        %4770 = vmatprep.mubr.bf16.mxu0 %v2712
        %4771 = vmatmul.mubr.bf16.gmra.mxu0 %v2711
        %v4772 = vpop.f32.mrf.mxu0
        %v4773 = vadd.f32 0.0, %v4772
        %v4774 = vpop.f32.mrf.mxu0
        %v4775 = vadd.f32 0.0, %v4774
        %v4776 = vpop.f32.mrf.mxu0
        %v4777 = vadd.f32 0.0, %v4776
        %v4778 = vpop.f32.mrf.mxu0
        %v4779 = vadd.f32 0.0, %v4778
        %4780 = vdwg.mxu0
        %4781 = vmatprep.subr.bf16.mxu0 %v4465
        %4782 = vmatpush1.bf16.msra.mxu0 %v4464
        %4783 = vmatprep.subr.bf16.mxu0 %v4461
        %4784 = vmatpush1.bf16.msra.mxu0 %v4460
        %4785 = vmatprep.subr.bf16.mxu0 %v4457
        %4786 = vmatpush1.bf16.msra.mxu0 %v4456
        %4787 = vmatprep.subr.bf16.mxu0 %v4453
        %4788 = vmatpush1.bf16.msra.mxu0 %v4452
        %4789 = vmatprep.subr.bf16.mxu0 %v4449
        %4790 = vmatpush1.bf16.msra.mxu0 %v4448
        %4791 = vmatprep.subr.bf16.mxu0 %v4445
        %4792 = vmatpush1.bf16.msra.mxu0 %v4444
        %4793 = vmatprep.subr.bf16.mxu0 %v4441
        %4794 = vmatpush1.bf16.msra.mxu0 %v4440
        %4795 = vmatprep.subr.bf16.mxu0 %v4437
        %4796 = vmatpush1.bf16.msra.mxu0 %v4436
        %4797 = vmatprep.subr.bf16.mxu0 %v4497
        %4798 = vmatpush2.bf16.msra.mxu0 %v4496
        %4799 = vmatprep.subr.bf16.mxu0 %v4493
        %4800 = vmatpush2.bf16.msra.mxu0 %v4492
        %4801 = vmatprep.subr.bf16.mxu0 %v4489
        %4802 = vmatpush2.bf16.msra.mxu0 %v4488
        %4803 = vmatprep.subr.bf16.mxu0 %v4485
        %4804 = vmatpush2.bf16.msra.mxu0 %v4484
        %4805 = vmatprep.subr.bf16.mxu0 %v4481
        %4806 = vmatpush2.bf16.msra.mxu0 %v4480
        %4807 = vmatprep.subr.bf16.mxu0 %v4477
        %4808 = vmatpush2.bf16.msra.mxu0 %v4476
        %4809 = vmatprep.subr.bf16.mxu0 %v4473
        %4810 = vmatpush2.bf16.msra.mxu0 %v4472
        %4811 = vmatprep.subr.bf16.mxu0 %v4469
        %4812 = vmatpush2.bf16.msra.mxu0 %v4468
        %4813 = vmatprep.mubr.bf16.mxu0 %v2706
        %4814 = vmatmul.mubr.bf16.gmra.mxu0 %v2705
        %v4815 = vpop.f32.mrf.mxu0
        %v4816 = vadd.f32 0.0, %v4815
        %v4817 = vpop.f32.mrf.mxu0
        %v4818 = vadd.f32 0.0, %v4817
        %v4819 = vpop.f32.mrf.mxu0
        %v4820 = vadd.f32 0.0, %v4819
        %v4821 = vpop.f32.mrf.mxu0
        %v4822 = vadd.f32 0.0, %v4821
        %4823 = vmatprep.mubr.bf16.mxu0 %v2708
        %4824 = vmatmul.mubr.bf16.gmra.mxu0 %v2707
        %v4825 = vpop.f32.mrf.mxu0
        %v4826 = vadd.f32 0.0, %v4825
        %v4827 = vpop.f32.mrf.mxu0
        %v4828 = vadd.f32 0.0, %v4827
        %v4829 = vpop.f32.mrf.mxu0
        %v4830 = vadd.f32 0.0, %v4829
        %v4831 = vpop.f32.mrf.mxu0
        %v4832 = vadd.f32 0.0, %v4831
        %4833 = vmatprep.mubr.bf16.mxu0 %v2710
        %4834 = vmatmul.mubr.bf16.gmra.mxu0 %v2709
        %v4835 = vpop.f32.mrf.mxu0
        %v4836 = vadd.f32 0.0, %v4835
        %v4837 = vpop.f32.mrf.mxu0
        %v4838 = vadd.f32 0.0, %v4837
        %v4839 = vpop.f32.mrf.mxu0
        %v4840 = vadd.f32 0.0, %v4839
        %v4841 = vpop.f32.mrf.mxu0
        %v4842 = vadd.f32 0.0, %v4841
        %4843 = vmatprep.mubr.bf16.mxu0 %v2712
        %4844 = vmatmul.mubr.bf16.gmra.mxu0 %v2711
        %v4845 = vpop.f32.mrf.mxu0
        %v4846 = vadd.f32 0.0, %v4845
        %v4847 = vpop.f32.mrf.mxu0
        %v4848 = vadd.f32 0.0, %v4847
        %v4849 = vpop.f32.mrf.mxu0
        %v4850 = vadd.f32 0.0, %v4849
        %v4851 = vpop.f32.mrf.mxu0
        %v4852 = vadd.f32 0.0, %v4851
        %4853 = vdwg.mxu0
        %v4854 = vadd.f32 %v3921, %v4597
        %v4855 = vadd.f32 %v3923, %v4599
        %v4856 = vadd.f32 %v3994, %v4670
        %v4857 = vadd.f32 %v3996, %v4672
        %v4858 = vadd.f32 %v3925, %v4601
        %v4859 = vadd.f32 %v3927, %v4603
        %v4860 = vadd.f32 %v3998, %v4674
        %v4861 = vadd.f32 %v4000, %v4676
        %v4862 = vadd.f32 %v3931, %v4607
        %v4863 = vadd.f32 %v3933, %v4609
        %v4864 = vadd.f32 %v4004, %v4680
        %v4865 = vadd.f32 %v4006, %v4682
        %v4866 = vadd.f32 %v3935, %v4611
        %v4867 = vadd.f32 %v3937, %v4613
        %v4868 = vadd.f32 %v4008, %v4684
        %v4869 = vadd.f32 %v4010, %v4686
        %v4870 = vadd.f32 %v3941, %v4617
        %v4871 = vadd.f32 %v3943, %v4619
        %v4872 = vadd.f32 %v4014, %v4690
        %v4873 = vadd.f32 %v4016, %v4692
        %v4874 = vadd.f32 %v3945, %v4621
        %v4875 = vadd.f32 %v3947, %v4623
        %v4876 = vadd.f32 %v4018, %v4694
        %v4877 = vadd.f32 %v4020, %v4696
        %v4878 = vadd.f32 %v3951, %v4627
        %v4879 = vadd.f32 %v3953, %v4629
        %v4880 = vadd.f32 %v4024, %v4700
        %v4881 = vadd.f32 %v4026, %v4702
        %v4882 = vadd.f32 %v3955, %v4631
        %v4883 = vadd.f32 %v3957, %v4633
        %v4884 = vadd.f32 %v4028, %v4704
        %v4885 = vadd.f32 %v4030, %v4706
        %v4886 = vadd.f32 %v4067, %v4743
        %v4887 = vadd.f32 %v4069, %v4745
        %v4888 = vadd.f32 %v4140, %v4816
        %v4889 = vadd.f32 %v4142, %v4818
        %v4890 = vadd.f32 %v4071, %v4747
        %v4891 = vadd.f32 %v4073, %v4749
        %v4892 = vadd.f32 %v4144, %v4820
        %v4893 = vadd.f32 %v4146, %v4822
        %v4894 = vadd.f32 %v4077, %v4753
        %v4895 = vadd.f32 %v4079, %v4755
        %v4896 = vadd.f32 %v4150, %v4826
        %v4897 = vadd.f32 %v4152, %v4828
        %v4898 = vadd.f32 %v4081, %v4757
        %v4899 = vadd.f32 %v4083, %v4759
        %v4900 = vadd.f32 %v4154, %v4830
        %v4901 = vadd.f32 %v4156, %v4832
        %v4902 = vadd.f32 %v4087, %v4763
        %v4903 = vadd.f32 %v4089, %v4765
        %v4904 = vadd.f32 %v4160, %v4836
        %v4905 = vadd.f32 %v4162, %v4838
        %v4906 = vadd.f32 %v4091, %v4767
        %v4907 = vadd.f32 %v4093, %v4769
        %v4908 = vadd.f32 %v4164, %v4840
        %v4909 = vadd.f32 %v4166, %v4842
        %v4910 = vadd.f32 %v4097, %v4773
        %v4911 = vadd.f32 %v4099, %v4775
        %v4912 = vadd.f32 %v4170, %v4846
        %v4913 = vadd.f32 %v4172, %v4848
        %v4914 = vadd.f32 %v4101, %v4777
        %v4915 = vadd.f32 %v4103, %v4779
        %v4916 = vadd.f32 %v4174, %v4850
        %v4917 = vadd.f32 %v4176, %v4852
        %v4918 = vld [vmem:[%s4 + $0x600] sm:$0xff]
        %v4919 = vld [vmem:[%s4 + $0x608] sm:$0xff]
        %v4920 = vld [vmem:[%s4 + $0x610] sm:$0xff]
        %v4921 = vld [vmem:[%s4 + $0x618] sm:$0xff]
        %v4922 = vld [vmem:[%s4 + $0x620] sm:$0xff]
        %v4923 = vld [vmem:[%s4 + $0x628] sm:$0xff]
        %v4924 = vld [vmem:[%s4 + $0x630] sm:$0xff]
        %v4925 = vld [vmem:[%s4 + $0x638] sm:$0xff]
        %v4926 = vld [vmem:[%s4 + $0x640] sm:$0xff]
        %v4927 = vld [vmem:[%s4 + $0x648] sm:$0xff]
        %v4928 = vld [vmem:[%s4 + $0x650] sm:$0xff]
        %v4929 = vld [vmem:[%s4 + $0x658] sm:$0xff]
        %v4930 = vld [vmem:[%s4 + $0x660] sm:$0xff]
        %v4931 = vld [vmem:[%s4 + $0x668] sm:$0xff]
        %v4932 = vld [vmem:[%s4 + $0x670] sm:$0xff]
        %v4933 = vld [vmem:[%s4 + $0x678] sm:$0xff]
        %v4934 = vld [vmem:[%s4 + $0x680] sm:$0xff]
        %v4935 = vld [vmem:[%s4 + $0x688] sm:$0xff]
        %v4936 = vld [vmem:[%s4 + $0x690] sm:$0xff]
        %v4937 = vld [vmem:[%s4 + $0x698] sm:$0xff]
        %v4938 = vld [vmem:[%s4 + $0x6a0] sm:$0xff]
        %v4939 = vld [vmem:[%s4 + $0x6a8] sm:$0xff]
        %v4940 = vld [vmem:[%s4 + $0x6b0] sm:$0xff]
        %v4941 = vld [vmem:[%s4 + $0x6b8] sm:$0xff]
        %v4942 = vld [vmem:[%s4 + $0x6c0] sm:$0xff]
        %v4943 = vld [vmem:[%s4 + $0x6c8] sm:$0xff]
        %v4944 = vld [vmem:[%s4 + $0x6d0] sm:$0xff]
        %v4945 = vld [vmem:[%s4 + $0x6d8] sm:$0xff]
        %v4946 = vld [vmem:[%s4 + $0x6e0] sm:$0xff]
        %v4947 = vld [vmem:[%s4 + $0x6e8] sm:$0xff]
        %v4948 = vld [vmem:[%s4 + $0x6f0] sm:$0xff]
        %v4949 = vld [vmem:[%s4 + $0x6f8] sm:$0xff]
        %v4950 = vld [vmem:[%s4 + $0x700] sm:$0xff]
        %v4951 = vld [vmem:[%s4 + $0x708] sm:$0xff]
        %v4952 = vld [vmem:[%s4 + $0x710] sm:$0xff]
        %v4953 = vld [vmem:[%s4 + $0x718] sm:$0xff]
        %v4954 = vld [vmem:[%s4 + $0x720] sm:$0xff]
        %v4955 = vld [vmem:[%s4 + $0x728] sm:$0xff]
        %v4956 = vld [vmem:[%s4 + $0x730] sm:$0xff]
        %v4957 = vld [vmem:[%s4 + $0x738] sm:$0xff]
        %v4958 = vld [vmem:[%s4 + $0x740] sm:$0xff]
        %v4959 = vld [vmem:[%s4 + $0x748] sm:$0xff]
        %v4960 = vld [vmem:[%s4 + $0x750] sm:$0xff]
        %v4961 = vld [vmem:[%s4 + $0x758] sm:$0xff]
        %v4962 = vld [vmem:[%s4 + $0x760] sm:$0xff]
        %v4963 = vld [vmem:[%s4 + $0x768] sm:$0xff]
        %v4964 = vld [vmem:[%s4 + $0x770] sm:$0xff]
        %v4965 = vld [vmem:[%s4 + $0x778] sm:$0xff]
        %v4966 = vld [vmem:[%s4 + $0x780] sm:$0xff]
        %v4967 = vld [vmem:[%s4 + $0x788] sm:$0xff]
        %v4968 = vld [vmem:[%s4 + $0x790] sm:$0xff]
        %v4969 = vld [vmem:[%s4 + $0x798] sm:$0xff]
        %v4970 = vld [vmem:[%s4 + $0x7a0] sm:$0xff]
        %v4971 = vld [vmem:[%s4 + $0x7a8] sm:$0xff]
        %v4972 = vld [vmem:[%s4 + $0x7b0] sm:$0xff]
        %v4973 = vld [vmem:[%s4 + $0x7b8] sm:$0xff]
        %v4974 = vld [vmem:[%s4 + $0x7c0] sm:$0xff]
        %v4975 = vld [vmem:[%s4 + $0x7c8] sm:$0xff]
        %v4976 = vld [vmem:[%s4 + $0x7d0] sm:$0xff]
        %v4977 = vld [vmem:[%s4 + $0x7d8] sm:$0xff]
        %v4978 = vld [vmem:[%s4 + $0x7e0] sm:$0xff]
        %v4979 = vld [vmem:[%s4 + $0x7e8] sm:$0xff]
        %v4980 = vld [vmem:[%s4 + $0x7f0] sm:$0xff]
        %v4981 = vld [vmem:[%s4 + $0x7f8] sm:$0xff]
        %v5046 = vunpack.c.l.b16 %v4918
        %v5047 = vunpack.c.h.b16 %v4918
        %v5048 = vunpack.c.l.b16 %v4919
        %v5049 = vunpack.c.h.b16 %v4919
        %v5050 = vunpack.c.l.b16 %v4920
        %v5051 = vunpack.c.h.b16 %v4920
        %v5052 = vunpack.c.l.b16 %v4921
        %v5053 = vunpack.c.h.b16 %v4921
        %v5054 = vunpack.c.l.b16 %v4922
        %v5055 = vunpack.c.h.b16 %v4922
        %v5056 = vunpack.c.l.b16 %v4923
        %v5057 = vunpack.c.h.b16 %v4923
        %v5058 = vunpack.c.l.b16 %v4924
        %v5059 = vunpack.c.h.b16 %v4924
        %v5060 = vunpack.c.l.b16 %v4925
        %v5061 = vunpack.c.h.b16 %v4925
        %v5062 = vunpack.c.l.b16 %v4926
        %v5063 = vunpack.c.h.b16 %v4926
        %v5064 = vunpack.c.l.b16 %v4927
        %v5065 = vunpack.c.h.b16 %v4927
        %v5066 = vunpack.c.l.b16 %v4928
        %v5067 = vunpack.c.h.b16 %v4928
        %v5068 = vunpack.c.l.b16 %v4929
        %v5069 = vunpack.c.h.b16 %v4929
        %v5070 = vunpack.c.l.b16 %v4930
        %v5071 = vunpack.c.h.b16 %v4930
        %v5072 = vunpack.c.l.b16 %v4931
        %v5073 = vunpack.c.h.b16 %v4931
        %v5074 = vunpack.c.l.b16 %v4932
        %v5075 = vunpack.c.h.b16 %v4932
        %v5076 = vunpack.c.l.b16 %v4933
        %v5077 = vunpack.c.h.b16 %v4933
        %v5078 = vunpack.c.l.b16 %v4934
        %v5079 = vunpack.c.h.b16 %v4934
        %v5080 = vunpack.c.l.b16 %v4935
        %v5081 = vunpack.c.h.b16 %v4935
        %v5082 = vunpack.c.l.b16 %v4936
        %v5083 = vunpack.c.h.b16 %v4936
        %v5084 = vunpack.c.l.b16 %v4937
        %v5085 = vunpack.c.h.b16 %v4937
        %v5086 = vunpack.c.l.b16 %v4938
        %v5087 = vunpack.c.h.b16 %v4938
        %v5088 = vunpack.c.l.b16 %v4939
        %v5089 = vunpack.c.h.b16 %v4939
        %v5090 = vunpack.c.l.b16 %v4940
        %v5091 = vunpack.c.h.b16 %v4940
        %v5092 = vunpack.c.l.b16 %v4941
        %v5093 = vunpack.c.h.b16 %v4941
        %v5094 = vunpack.c.l.b16 %v4942
        %v5095 = vunpack.c.h.b16 %v4942
        %v5096 = vunpack.c.l.b16 %v4943
        %v5097 = vunpack.c.h.b16 %v4943
        %v5098 = vunpack.c.l.b16 %v4944
        %v5099 = vunpack.c.h.b16 %v4944
        %v5100 = vunpack.c.l.b16 %v4945
        %v5101 = vunpack.c.h.b16 %v4945
        %v5102 = vunpack.c.l.b16 %v4946
        %v5103 = vunpack.c.h.b16 %v4946
        %v5104 = vunpack.c.l.b16 %v4947
        %v5105 = vunpack.c.h.b16 %v4947
        %v5106 = vunpack.c.l.b16 %v4948
        %v5107 = vunpack.c.h.b16 %v4948
        %v5108 = vunpack.c.l.b16 %v4949
        %v5109 = vunpack.c.h.b16 %v4949
        %v5110 = vunpack.c.l.b16 %v4950
        %v5111 = vunpack.c.h.b16 %v4950
        %v5112 = vunpack.c.l.b16 %v4951
        %v5113 = vunpack.c.h.b16 %v4951
        %v5114 = vunpack.c.l.b16 %v4952
        %v5115 = vunpack.c.h.b16 %v4952
        %v5116 = vunpack.c.l.b16 %v4953
        %v5117 = vunpack.c.h.b16 %v4953
        %v5118 = vunpack.c.l.b16 %v4954
        %v5119 = vunpack.c.h.b16 %v4954
        %v5120 = vunpack.c.l.b16 %v4955
        %v5121 = vunpack.c.h.b16 %v4955
        %v5122 = vunpack.c.l.b16 %v4956
        %v5123 = vunpack.c.h.b16 %v4956
        %v5124 = vunpack.c.l.b16 %v4957
        %v5125 = vunpack.c.h.b16 %v4957
        %v5126 = vunpack.c.l.b16 %v4958
        %v5127 = vunpack.c.h.b16 %v4958
        %v5128 = vunpack.c.l.b16 %v4959
        %v5129 = vunpack.c.h.b16 %v4959
        %v5130 = vunpack.c.l.b16 %v4960
        %v5131 = vunpack.c.h.b16 %v4960
        %v5132 = vunpack.c.l.b16 %v4961
        %v5133 = vunpack.c.h.b16 %v4961
        %v5134 = vunpack.c.l.b16 %v4962
        %v5135 = vunpack.c.h.b16 %v4962
        %v5136 = vunpack.c.l.b16 %v4963
        %v5137 = vunpack.c.h.b16 %v4963
        %v5138 = vunpack.c.l.b16 %v4964
        %v5139 = vunpack.c.h.b16 %v4964
        %v5140 = vunpack.c.l.b16 %v4965
        %v5141 = vunpack.c.h.b16 %v4965
        %v5142 = vunpack.c.l.b16 %v4966
        %v5143 = vunpack.c.h.b16 %v4966
        %v5144 = vunpack.c.l.b16 %v4967
        %v5145 = vunpack.c.h.b16 %v4967
        %v5146 = vunpack.c.l.b16 %v4968
        %v5147 = vunpack.c.h.b16 %v4968
        %v5148 = vunpack.c.l.b16 %v4969
        %v5149 = vunpack.c.h.b16 %v4969
        %v5150 = vunpack.c.l.b16 %v4970
        %v5151 = vunpack.c.h.b16 %v4970
        %v5152 = vunpack.c.l.b16 %v4971
        %v5153 = vunpack.c.h.b16 %v4971
        %v5154 = vunpack.c.l.b16 %v4972
        %v5155 = vunpack.c.h.b16 %v4972
        %v5156 = vunpack.c.l.b16 %v4973
        %v5157 = vunpack.c.h.b16 %v4973
        %v5158 = vunpack.c.l.b16 %v4974
        %v5159 = vunpack.c.h.b16 %v4974
        %v5160 = vunpack.c.l.b16 %v4975
        %v5161 = vunpack.c.h.b16 %v4975
        %v5162 = vunpack.c.l.b16 %v4976
        %v5163 = vunpack.c.h.b16 %v4976
        %v5164 = vunpack.c.l.b16 %v4977
        %v5165 = vunpack.c.h.b16 %v4977
        %v5166 = vunpack.c.l.b16 %v4978
        %v5167 = vunpack.c.h.b16 %v4978
        %v5168 = vunpack.c.l.b16 %v4979
        %v5169 = vunpack.c.h.b16 %v4979
        %v5170 = vunpack.c.l.b16 %v4980
        %v5171 = vunpack.c.h.b16 %v4980
        %v5172 = vunpack.c.l.b16 %v4981
        %v5173 = vunpack.c.h.b16 %v4981
        %v5174 = vpack.c.b16 %v5050, %v5046
        %v5175 = vpack.c.b16 %v5051, %v5047
        %v5176 = vpack.c.b16 %v5052, %v5048
        %v5177 = vpack.c.b16 %v5053, %v5049
        %v5178 = vpack.c.b16 %v5058, %v5054
        %v5179 = vpack.c.b16 %v5059, %v5055
        %v5180 = vpack.c.b16 %v5060, %v5056
        %v5181 = vpack.c.b16 %v5061, %v5057
        %v5182 = vpack.c.b16 %v5066, %v5062
        %v5183 = vpack.c.b16 %v5067, %v5063
        %v5184 = vpack.c.b16 %v5068, %v5064
        %v5185 = vpack.c.b16 %v5069, %v5065
        %v5186 = vpack.c.b16 %v5074, %v5070
        %v5187 = vpack.c.b16 %v5075, %v5071
        %v5188 = vpack.c.b16 %v5076, %v5072
        %v5189 = vpack.c.b16 %v5077, %v5073
        %v5190 = vpack.c.b16 %v5082, %v5078
        %v5191 = vpack.c.b16 %v5083, %v5079
        %v5192 = vpack.c.b16 %v5084, %v5080
        %v5193 = vpack.c.b16 %v5085, %v5081
        %v5194 = vpack.c.b16 %v5090, %v5086
        %v5195 = vpack.c.b16 %v5091, %v5087
        %v5196 = vpack.c.b16 %v5092, %v5088
        %v5197 = vpack.c.b16 %v5093, %v5089
        %v5198 = vpack.c.b16 %v5098, %v5094
        %v5199 = vpack.c.b16 %v5099, %v5095
        %v5200 = vpack.c.b16 %v5100, %v5096
        %v5201 = vpack.c.b16 %v5101, %v5097
        %v5202 = vpack.c.b16 %v5106, %v5102
        %v5203 = vpack.c.b16 %v5107, %v5103
        %v5204 = vpack.c.b16 %v5108, %v5104
        %v5205 = vpack.c.b16 %v5109, %v5105
        %v5206 = vpack.c.b16 %v5114, %v5110
        %v5207 = vpack.c.b16 %v5115, %v5111
        %v5208 = vpack.c.b16 %v5116, %v5112
        %v5209 = vpack.c.b16 %v5117, %v5113
        %v5210 = vpack.c.b16 %v5122, %v5118
        %v5211 = vpack.c.b16 %v5123, %v5119
        %v5212 = vpack.c.b16 %v5124, %v5120
        %v5213 = vpack.c.b16 %v5125, %v5121
        %v5214 = vpack.c.b16 %v5130, %v5126
        %v5215 = vpack.c.b16 %v5131, %v5127
        %v5216 = vpack.c.b16 %v5132, %v5128
        %v5217 = vpack.c.b16 %v5133, %v5129
        %v5218 = vpack.c.b16 %v5138, %v5134
        %v5219 = vpack.c.b16 %v5139, %v5135
        %v5220 = vpack.c.b16 %v5140, %v5136
        %v5221 = vpack.c.b16 %v5141, %v5137
        %v5222 = vpack.c.b16 %v5146, %v5142
        %v5223 = vpack.c.b16 %v5147, %v5143
        %v5224 = vpack.c.b16 %v5148, %v5144
        %v5225 = vpack.c.b16 %v5149, %v5145
        %v5226 = vpack.c.b16 %v5154, %v5150
        %v5227 = vpack.c.b16 %v5155, %v5151
        %v5228 = vpack.c.b16 %v5156, %v5152
        %v5229 = vpack.c.b16 %v5157, %v5153
        %v5230 = vpack.c.b16 %v5162, %v5158
        %v5231 = vpack.c.b16 %v5163, %v5159
        %v5232 = vpack.c.b16 %v5164, %v5160
        %v5233 = vpack.c.b16 %v5165, %v5161
        %v5234 = vpack.c.b16 %v5170, %v5166
        %v5235 = vpack.c.b16 %v5171, %v5167
        %v5236 = vpack.c.b16 %v5172, %v5168
        %v5237 = vpack.c.b16 %v5173, %v5169
        %5302 = vmatprep.subr.bf16.mxu0 %v5203
        %5303 = vmatpush1.bf16.msra.mxu0 %v5202
        %5304 = vmatprep.subr.bf16.mxu0 %v5199
        %5305 = vmatpush1.bf16.msra.mxu0 %v5198
        %5306 = vmatprep.subr.bf16.mxu0 %v5195
        %5307 = vmatpush1.bf16.msra.mxu0 %v5194
        %5308 = vmatprep.subr.bf16.mxu0 %v5191
        %5309 = vmatpush1.bf16.msra.mxu0 %v5190
        %5310 = vmatprep.subr.bf16.mxu0 %v5187
        %5311 = vmatpush1.bf16.msra.mxu0 %v5186
        %5312 = vmatprep.subr.bf16.mxu0 %v5183
        %5313 = vmatpush1.bf16.msra.mxu0 %v5182
        %5314 = vmatprep.subr.bf16.mxu0 %v5179
        %5315 = vmatpush1.bf16.msra.mxu0 %v5178
        %5316 = vmatprep.subr.bf16.mxu0 %v5175
        %5317 = vmatpush1.bf16.msra.mxu0 %v5174
        %5318 = vmatprep.subr.bf16.mxu0 %v5235
        %5319 = vmatpush2.bf16.msra.mxu0 %v5234
        %5320 = vmatprep.subr.bf16.mxu0 %v5231
        %5321 = vmatpush2.bf16.msra.mxu0 %v5230
        %5322 = vmatprep.subr.bf16.mxu0 %v5227
        %5323 = vmatpush2.bf16.msra.mxu0 %v5226
        %5324 = vmatprep.subr.bf16.mxu0 %v5223
        %5325 = vmatpush2.bf16.msra.mxu0 %v5222
        %5326 = vmatprep.subr.bf16.mxu0 %v5219
        %5327 = vmatpush2.bf16.msra.mxu0 %v5218
        %5328 = vmatprep.subr.bf16.mxu0 %v5215
        %5329 = vmatpush2.bf16.msra.mxu0 %v5214
        %5330 = vmatprep.subr.bf16.mxu0 %v5211
        %5331 = vmatpush2.bf16.msra.mxu0 %v5210
        %5332 = vmatprep.subr.bf16.mxu0 %v5207
        %5333 = vmatpush2.bf16.msra.mxu0 %v5206
        %5334 = vmatprep.mubr.bf16.mxu0 %v2706
        %5335 = vmatmul.mubr.bf16.gmra.mxu0 %v2705
        %v5336 = vpop.f32.mrf.mxu0
        %v5337 = vadd.f32 0.0, %v5336
        %v5338 = vpop.f32.mrf.mxu0
        %v5339 = vadd.f32 0.0, %v5338
        %v5340 = vpop.f32.mrf.mxu0
        %v5341 = vadd.f32 0.0, %v5340
        %v5342 = vpop.f32.mrf.mxu0
        %v5343 = vadd.f32 0.0, %v5342
        %5344 = vmatprep.mubr.bf16.mxu0 %v2708
        %5345 = vmatmul.mubr.bf16.gmra.mxu0 %v2707
        %v5346 = vpop.f32.mrf.mxu0
        %v5347 = vadd.f32 0.0, %v5346
        %v5348 = vpop.f32.mrf.mxu0
        %v5349 = vadd.f32 0.0, %v5348
        %v5350 = vpop.f32.mrf.mxu0
        %v5351 = vadd.f32 0.0, %v5350
        %v5352 = vpop.f32.mrf.mxu0
        %v5353 = vadd.f32 0.0, %v5352
        %5354 = vmatprep.mubr.bf16.mxu0 %v2710
        %5355 = vmatmul.mubr.bf16.gmra.mxu0 %v2709
        %v5356 = vpop.f32.mrf.mxu0
        %v5357 = vadd.f32 0.0, %v5356
        %v5358 = vpop.f32.mrf.mxu0
        %v5359 = vadd.f32 0.0, %v5358
        %v5360 = vpop.f32.mrf.mxu0
        %v5361 = vadd.f32 0.0, %v5360
        %v5362 = vpop.f32.mrf.mxu0
        %v5363 = vadd.f32 0.0, %v5362
        %5364 = vmatprep.mubr.bf16.mxu0 %v2712
        %5365 = vmatmul.mubr.bf16.gmra.mxu0 %v2711
        %v5366 = vpop.f32.mrf.mxu0
        %v5367 = vadd.f32 0.0, %v5366
        %v5368 = vpop.f32.mrf.mxu0
        %v5369 = vadd.f32 0.0, %v5368
        %v5370 = vpop.f32.mrf.mxu0
        %v5371 = vadd.f32 0.0, %v5370
        %v5372 = vpop.f32.mrf.mxu0
        %v5373 = vadd.f32 0.0, %v5372
        %5374 = vdwg.mxu0
        %5375 = vmatprep.subr.bf16.mxu0 %v5205
        %5376 = vmatpush1.bf16.msra.mxu0 %v5204
        %5377 = vmatprep.subr.bf16.mxu0 %v5201
        %5378 = vmatpush1.bf16.msra.mxu0 %v5200
        %5379 = vmatprep.subr.bf16.mxu0 %v5197
        %5380 = vmatpush1.bf16.msra.mxu0 %v5196
        %5381 = vmatprep.subr.bf16.mxu0 %v5193
        %5382 = vmatpush1.bf16.msra.mxu0 %v5192
        %5383 = vmatprep.subr.bf16.mxu0 %v5189
        %5384 = vmatpush1.bf16.msra.mxu0 %v5188
        %5385 = vmatprep.subr.bf16.mxu0 %v5185
        %5386 = vmatpush1.bf16.msra.mxu0 %v5184
        %5387 = vmatprep.subr.bf16.mxu0 %v5181
        %5388 = vmatpush1.bf16.msra.mxu0 %v5180
        %5389 = vmatprep.subr.bf16.mxu0 %v5177
        %5390 = vmatpush1.bf16.msra.mxu0 %v5176
        %5391 = vmatprep.subr.bf16.mxu0 %v5237
        %5392 = vmatpush2.bf16.msra.mxu0 %v5236
        %5393 = vmatprep.subr.bf16.mxu0 %v5233
        %5394 = vmatpush2.bf16.msra.mxu0 %v5232
        %5395 = vmatprep.subr.bf16.mxu0 %v5229
        %5396 = vmatpush2.bf16.msra.mxu0 %v5228
        %5397 = vmatprep.subr.bf16.mxu0 %v5225
        %5398 = vmatpush2.bf16.msra.mxu0 %v5224
        %5399 = vmatprep.subr.bf16.mxu0 %v5221
        %5400 = vmatpush2.bf16.msra.mxu0 %v5220
        %5401 = vmatprep.subr.bf16.mxu0 %v5217
        %5402 = vmatpush2.bf16.msra.mxu0 %v5216
        %5403 = vmatprep.subr.bf16.mxu0 %v5213
        %5404 = vmatpush2.bf16.msra.mxu0 %v5212
        %5405 = vmatprep.subr.bf16.mxu0 %v5209
        %5406 = vmatpush2.bf16.msra.mxu0 %v5208
        %5407 = vmatprep.mubr.bf16.mxu0 %v2706
        %5408 = vmatmul.mubr.bf16.gmra.mxu0 %v2705
        %v5409 = vpop.f32.mrf.mxu0
        %v5410 = vadd.f32 0.0, %v5409
        %v5411 = vpop.f32.mrf.mxu0
        %v5412 = vadd.f32 0.0, %v5411
        %v5413 = vpop.f32.mrf.mxu0
        %v5414 = vadd.f32 0.0, %v5413
        %v5415 = vpop.f32.mrf.mxu0
        %v5416 = vadd.f32 0.0, %v5415
        %5417 = vmatprep.mubr.bf16.mxu0 %v2708
        %5418 = vmatmul.mubr.bf16.gmra.mxu0 %v2707
        %v5419 = vpop.f32.mrf.mxu0
        %v5420 = vadd.f32 0.0, %v5419
        %v5421 = vpop.f32.mrf.mxu0
        %v5422 = vadd.f32 0.0, %v5421
        %v5423 = vpop.f32.mrf.mxu0
        %v5424 = vadd.f32 0.0, %v5423
        %v5425 = vpop.f32.mrf.mxu0
        %v5426 = vadd.f32 0.0, %v5425
        %5427 = vmatprep.mubr.bf16.mxu0 %v2710
        %5428 = vmatmul.mubr.bf16.gmra.mxu0 %v2709
        %v5429 = vpop.f32.mrf.mxu0
        %v5430 = vadd.f32 0.0, %v5429
        %v5431 = vpop.f32.mrf.mxu0
        %v5432 = vadd.f32 0.0, %v5431
        %v5433 = vpop.f32.mrf.mxu0
        %v5434 = vadd.f32 0.0, %v5433
        %v5435 = vpop.f32.mrf.mxu0
        %v5436 = vadd.f32 0.0, %v5435
        %5437 = vmatprep.mubr.bf16.mxu0 %v2712
        %5438 = vmatmul.mubr.bf16.gmra.mxu0 %v2711
        %v5439 = vpop.f32.mrf.mxu0
        %v5440 = vadd.f32 0.0, %v5439
        %v5441 = vpop.f32.mrf.mxu0
        %v5442 = vadd.f32 0.0, %v5441
        %v5443 = vpop.f32.mrf.mxu0
        %v5444 = vadd.f32 0.0, %v5443
        %v5445 = vpop.f32.mrf.mxu0
        %v5446 = vadd.f32 0.0, %v5445
        %5447 = vdwg.mxu0
        %5448 = vmatprep.subr.bf16.mxu0 %v5203
        %5449 = vmatpush1.bf16.msra.mxu0 %v5202
        %5450 = vmatprep.subr.bf16.mxu0 %v5199
        %5451 = vmatpush1.bf16.msra.mxu0 %v5198
        %5452 = vmatprep.subr.bf16.mxu0 %v5195
        %5453 = vmatpush1.bf16.msra.mxu0 %v5194
        %5454 = vmatprep.subr.bf16.mxu0 %v5191
        %5455 = vmatpush1.bf16.msra.mxu0 %v5190
        %5456 = vmatprep.subr.bf16.mxu0 %v5187
        %5457 = vmatpush1.bf16.msra.mxu0 %v5186
        %5458 = vmatprep.subr.bf16.mxu0 %v5183
        %5459 = vmatpush1.bf16.msra.mxu0 %v5182
        %5460 = vmatprep.subr.bf16.mxu0 %v5179
        %5461 = vmatpush1.bf16.msra.mxu0 %v5178
        %5462 = vmatprep.subr.bf16.mxu0 %v5175
        %5463 = vmatpush1.bf16.msra.mxu0 %v5174
        %5464 = vmatprep.subr.bf16.mxu0 %v5235
        %5465 = vmatpush2.bf16.msra.mxu0 %v5234
        %5466 = vmatprep.subr.bf16.mxu0 %v5231
        %5467 = vmatpush2.bf16.msra.mxu0 %v5230
        %5468 = vmatprep.subr.bf16.mxu0 %v5227
        %5469 = vmatpush2.bf16.msra.mxu0 %v5226
        %5470 = vmatprep.subr.bf16.mxu0 %v5223
        %5471 = vmatpush2.bf16.msra.mxu0 %v5222
        %5472 = vmatprep.subr.bf16.mxu0 %v5219
        %5473 = vmatpush2.bf16.msra.mxu0 %v5218
        %5474 = vmatprep.subr.bf16.mxu0 %v5215
        %5475 = vmatpush2.bf16.msra.mxu0 %v5214
        %5476 = vmatprep.subr.bf16.mxu0 %v5211
        %5477 = vmatpush2.bf16.msra.mxu0 %v5210
        %5478 = vmatprep.subr.bf16.mxu0 %v5207
        %5479 = vmatpush2.bf16.msra.mxu0 %v5206
        %5480 = vmatprep.mubr.bf16.mxu0 %v2763
        %5481 = vmatmul.mubr.bf16.gmra.mxu0 %v2762
        %v5482 = vpop.f32.mrf.mxu0
        %v5483 = vadd.f32 0.0, %v5482
        %v5484 = vpop.f32.mrf.mxu0
        %v5485 = vadd.f32 0.0, %v5484
        %v5486 = vpop.f32.mrf.mxu0
        %v5487 = vadd.f32 0.0, %v5486
        %v5488 = vpop.f32.mrf.mxu0
        %v5489 = vadd.f32 0.0, %v5488
        %5490 = vmatprep.mubr.bf16.mxu0 %v2765
        %5491 = vmatmul.mubr.bf16.gmra.mxu0 %v2764
        %v5492 = vpop.f32.mrf.mxu0
        %v5493 = vadd.f32 0.0, %v5492
        %v5494 = vpop.f32.mrf.mxu0
        %v5495 = vadd.f32 0.0, %v5494
        %v5496 = vpop.f32.mrf.mxu0
        %v5497 = vadd.f32 0.0, %v5496
        %v5498 = vpop.f32.mrf.mxu0
        %v5499 = vadd.f32 0.0, %v5498
        %5500 = vmatprep.mubr.bf16.mxu0 %v2767
        %5501 = vmatmul.mubr.bf16.gmra.mxu0 %v2766
        %v5502 = vpop.f32.mrf.mxu0
        %v5503 = vadd.f32 0.0, %v5502
        %v5504 = vpop.f32.mrf.mxu0
        %v5505 = vadd.f32 0.0, %v5504
        %v5506 = vpop.f32.mrf.mxu0
        %v5507 = vadd.f32 0.0, %v5506
        %v5508 = vpop.f32.mrf.mxu0
        %v5509 = vadd.f32 0.0, %v5508
        %5510 = vmatprep.mubr.bf16.mxu0 %v2769
        %5511 = vmatmul.mubr.bf16.gmra.mxu0 %v2768
        %v5512 = vpop.f32.mrf.mxu0
        %v5513 = vadd.f32 0.0, %v5512
        %v5514 = vpop.f32.mrf.mxu0
        %v5515 = vadd.f32 0.0, %v5514
        %v5516 = vpop.f32.mrf.mxu0
        %v5517 = vadd.f32 0.0, %v5516
        %v5518 = vpop.f32.mrf.mxu0
        %v5519 = vadd.f32 0.0, %v5518
        %5520 = vdwg.mxu0
        %5521 = vmatprep.subr.bf16.mxu0 %v5205
        %5522 = vmatpush1.bf16.msra.mxu0 %v5204
        %5523 = vmatprep.subr.bf16.mxu0 %v5201
        %5524 = vmatpush1.bf16.msra.mxu0 %v5200
        %5525 = vmatprep.subr.bf16.mxu0 %v5197
        %5526 = vmatpush1.bf16.msra.mxu0 %v5196
        %5527 = vmatprep.subr.bf16.mxu0 %v5193
        %5528 = vmatpush1.bf16.msra.mxu0 %v5192
        %5529 = vmatprep.subr.bf16.mxu0 %v5189
        %5530 = vmatpush1.bf16.msra.mxu0 %v5188
        %5531 = vmatprep.subr.bf16.mxu0 %v5185
        %5532 = vmatpush1.bf16.msra.mxu0 %v5184
        %5533 = vmatprep.subr.bf16.mxu0 %v5181
        %5534 = vmatpush1.bf16.msra.mxu0 %v5180
        %5535 = vmatprep.subr.bf16.mxu0 %v5177
        %5536 = vmatpush1.bf16.msra.mxu0 %v5176
        %5537 = vmatprep.subr.bf16.mxu0 %v5237
        %5538 = vmatpush2.bf16.msra.mxu0 %v5236
        %5539 = vmatprep.subr.bf16.mxu0 %v5233
        %5540 = vmatpush2.bf16.msra.mxu0 %v5232
        %5541 = vmatprep.subr.bf16.mxu0 %v5229
        %5542 = vmatpush2.bf16.msra.mxu0 %v5228
        %5543 = vmatprep.subr.bf16.mxu0 %v5225
        %5544 = vmatpush2.bf16.msra.mxu0 %v5224
        %5545 = vmatprep.subr.bf16.mxu0 %v5221
        %5546 = vmatpush2.bf16.msra.mxu0 %v5220
        %5547 = vmatprep.subr.bf16.mxu0 %v5217
        %5548 = vmatpush2.bf16.msra.mxu0 %v5216
        %5549 = vmatprep.subr.bf16.mxu0 %v5213
        %5550 = vmatpush2.bf16.msra.mxu0 %v5212
        %5551 = vmatprep.subr.bf16.mxu0 %v5209
        %5552 = vmatpush2.bf16.msra.mxu0 %v5208
        %5553 = vmatprep.mubr.bf16.mxu0 %v2763
        %5554 = vmatmul.mubr.bf16.gmra.mxu0 %v2762
        %v5555 = vpop.f32.mrf.mxu0
        %v5556 = vadd.f32 0.0, %v5555
        %v5557 = vpop.f32.mrf.mxu0
        %v5558 = vadd.f32 0.0, %v5557
        %v5559 = vpop.f32.mrf.mxu0
        %v5560 = vadd.f32 0.0, %v5559
        %v5561 = vpop.f32.mrf.mxu0
        %v5562 = vadd.f32 0.0, %v5561
        %5563 = vmatprep.mubr.bf16.mxu0 %v2765
        %5564 = vmatmul.mubr.bf16.gmra.mxu0 %v2764
        %v5565 = vpop.f32.mrf.mxu0
        %v5566 = vadd.f32 0.0, %v5565
        %v5567 = vpop.f32.mrf.mxu0
        %v5568 = vadd.f32 0.0, %v5567
        %v5569 = vpop.f32.mrf.mxu0
        %v5570 = vadd.f32 0.0, %v5569
        %v5571 = vpop.f32.mrf.mxu0
        %v5572 = vadd.f32 0.0, %v5571
        %5573 = vmatprep.mubr.bf16.mxu0 %v2767
        %5574 = vmatmul.mubr.bf16.gmra.mxu0 %v2766
        %v5575 = vpop.f32.mrf.mxu0
        %v5576 = vadd.f32 0.0, %v5575
        %v5577 = vpop.f32.mrf.mxu0
        %v5578 = vadd.f32 0.0, %v5577
        %v5579 = vpop.f32.mrf.mxu0
        %v5580 = vadd.f32 0.0, %v5579
        %v5581 = vpop.f32.mrf.mxu0
        %v5582 = vadd.f32 0.0, %v5581
        %5583 = vmatprep.mubr.bf16.mxu0 %v2769
        %5584 = vmatmul.mubr.bf16.gmra.mxu0 %v2768
        %v5585 = vpop.f32.mrf.mxu0
        %v5586 = vadd.f32 0.0, %v5585
        %v5587 = vpop.f32.mrf.mxu0
        %v5588 = vadd.f32 0.0, %v5587
        %v5589 = vpop.f32.mrf.mxu0
        %v5590 = vadd.f32 0.0, %v5589
        %v5591 = vpop.f32.mrf.mxu0
        %v5592 = vadd.f32 0.0, %v5591
        %5593 = vdwg.mxu0
        %v5594 = vadd.f32 %v4854, %v5337
        %v5595 = vadd.f32 %v4855, %v5339
        %v5596 = vadd.f32 %v4856, %v5410
        %v5597 = vadd.f32 %v4857, %v5412
        %v5598 = vadd.f32 %v4858, %v5341
        %v5599 = vadd.f32 %v4859, %v5343
        %v5600 = vadd.f32 %v4860, %v5414
        %v5601 = vadd.f32 %v4861, %v5416
        %v5602 = vadd.f32 %v4862, %v5347
        %v5603 = vadd.f32 %v4863, %v5349
        %v5604 = vadd.f32 %v4864, %v5420
        %v5605 = vadd.f32 %v4865, %v5422
        %v5606 = vadd.f32 %v4866, %v5351
        %v5607 = vadd.f32 %v4867, %v5353
        %v5608 = vadd.f32 %v4868, %v5424
        %v5609 = vadd.f32 %v4869, %v5426
        %v5610 = vadd.f32 %v4870, %v5357
        %v5611 = vadd.f32 %v4871, %v5359
        %v5612 = vadd.f32 %v4872, %v5430
        %v5613 = vadd.f32 %v4873, %v5432
        %v5614 = vadd.f32 %v4874, %v5361
        %v5615 = vadd.f32 %v4875, %v5363
        %v5616 = vadd.f32 %v4876, %v5434
        %v5617 = vadd.f32 %v4877, %v5436
        %v5618 = vadd.f32 %v4878, %v5367
        %v5619 = vadd.f32 %v4879, %v5369
        %v5620 = vadd.f32 %v4880, %v5440
        %v5621 = vadd.f32 %v4881, %v5442
        %v5622 = vadd.f32 %v4882, %v5371
        %v5623 = vadd.f32 %v4883, %v5373
        %v5624 = vadd.f32 %v4884, %v5444
        %v5625 = vadd.f32 %v4885, %v5446
        %v5626 = vadd.f32 %v4886, %v5483
        %v5627 = vadd.f32 %v4887, %v5485
        %v5628 = vadd.f32 %v4888, %v5556
        %v5629 = vadd.f32 %v4889, %v5558
        %v5630 = vadd.f32 %v4890, %v5487
        %v5631 = vadd.f32 %v4891, %v5489
        %v5632 = vadd.f32 %v4892, %v5560
        %v5633 = vadd.f32 %v4893, %v5562
        %v5634 = vadd.f32 %v4894, %v5493
        %v5635 = vadd.f32 %v4895, %v5495
        %v5636 = vadd.f32 %v4896, %v5566
        %v5637 = vadd.f32 %v4897, %v5568
        %v5638 = vadd.f32 %v4898, %v5497
        %v5639 = vadd.f32 %v4899, %v5499
        %v5640 = vadd.f32 %v4900, %v5570
        %v5641 = vadd.f32 %v4901, %v5572
        %v5642 = vadd.f32 %v4902, %v5503
        %v5643 = vadd.f32 %v4903, %v5505
        %v5644 = vadd.f32 %v4904, %v5576
        %v5645 = vadd.f32 %v4905, %v5578
        %v5646 = vadd.f32 %v4906, %v5507
        %v5647 = vadd.f32 %v4907, %v5509
        %v5648 = vadd.f32 %v4908, %v5580
        %v5649 = vadd.f32 %v4909, %v5582
        %v5650 = vadd.f32 %v4910, %v5513
        %v5651 = vadd.f32 %v4911, %v5515
        %v5652 = vadd.f32 %v4912, %v5586
        %v5653 = vadd.f32 %v4913, %v5588
        %v5654 = vadd.f32 %v4914, %v5517
        %v5655 = vadd.f32 %v4915, %v5519
        %v5656 = vadd.f32 %v4916, %v5590
        %v5657 = vadd.f32 %v4917, %v5592
        %v5658 = vld [vmem:[%s4 + $0x800] sm:$0xff]
        %v5659 = vld [vmem:[%s4 + $0x808] sm:$0xff]
        %v5660 = vld [vmem:[%s4 + $0x810] sm:$0xff]
        %v5661 = vld [vmem:[%s4 + $0x818] sm:$0xff]
        %v5662 = vld [vmem:[%s4 + $0x820] sm:$0xff]
        %v5663 = vld [vmem:[%s4 + $0x828] sm:$0xff]
        %v5664 = vld [vmem:[%s4 + $0x830] sm:$0xff]
        %v5665 = vld [vmem:[%s4 + $0x838] sm:$0xff]
        %v5666 = vld [vmem:[%s4 + $0x840] sm:$0xff]
        %v5667 = vld [vmem:[%s4 + $0x848] sm:$0xff]
        %v5668 = vld [vmem:[%s4 + $0x850] sm:$0xff]
        %v5669 = vld [vmem:[%s4 + $0x858] sm:$0xff]
        %v5670 = vld [vmem:[%s4 + $0x860] sm:$0xff]
        %v5671 = vld [vmem:[%s4 + $0x868] sm:$0xff]
        %v5672 = vld [vmem:[%s4 + $0x870] sm:$0xff]
        %v5673 = vld [vmem:[%s4 + $0x878] sm:$0xff]
        %v5674 = vld [vmem:[%s4 + $0x880] sm:$0xff]
        %v5675 = vld [vmem:[%s4 + $0x888] sm:$0xff]
        %v5676 = vld [vmem:[%s4 + $0x890] sm:$0xff]
        %v5677 = vld [vmem:[%s4 + $0x898] sm:$0xff]
        %v5678 = vld [vmem:[%s4 + $0x8a0] sm:$0xff]
        %v5679 = vld [vmem:[%s4 + $0x8a8] sm:$0xff]
        %v5680 = vld [vmem:[%s4 + $0x8b0] sm:$0xff]
        %v5681 = vld [vmem:[%s4 + $0x8b8] sm:$0xff]
        %v5682 = vld [vmem:[%s4 + $0x8c0] sm:$0xff]
        %v5683 = vld [vmem:[%s4 + $0x8c8] sm:$0xff]
        %v5684 = vld [vmem:[%s4 + $0x8d0] sm:$0xff]
        %v5685 = vld [vmem:[%s4 + $0x8d8] sm:$0xff]
        %v5686 = vld [vmem:[%s4 + $0x8e0] sm:$0xff]
        %v5687 = vld [vmem:[%s4 + $0x8e8] sm:$0xff]
        %v5688 = vld [vmem:[%s4 + $0x8f0] sm:$0xff]
        %v5689 = vld [vmem:[%s4 + $0x8f8] sm:$0xff]
        %v5690 = vld [vmem:[%s4 + $0x900] sm:$0xff]
        %v5691 = vld [vmem:[%s4 + $0x908] sm:$0xff]
        %v5692 = vld [vmem:[%s4 + $0x910] sm:$0xff]
        %v5693 = vld [vmem:[%s4 + $0x918] sm:$0xff]
        %v5694 = vld [vmem:[%s4 + $0x920] sm:$0xff]
        %v5695 = vld [vmem:[%s4 + $0x928] sm:$0xff]
        %v5696 = vld [vmem:[%s4 + $0x930] sm:$0xff]
        %v5697 = vld [vmem:[%s4 + $0x938] sm:$0xff]
        %v5698 = vld [vmem:[%s4 + $0x940] sm:$0xff]
        %v5699 = vld [vmem:[%s4 + $0x948] sm:$0xff]
        %v5700 = vld [vmem:[%s4 + $0x950] sm:$0xff]
        %v5701 = vld [vmem:[%s4 + $0x958] sm:$0xff]
        %v5702 = vld [vmem:[%s4 + $0x960] sm:$0xff]
        %v5703 = vld [vmem:[%s4 + $0x968] sm:$0xff]
        %v5704 = vld [vmem:[%s4 + $0x970] sm:$0xff]
        %v5705 = vld [vmem:[%s4 + $0x978] sm:$0xff]
        %v5706 = vld [vmem:[%s4 + $0x980] sm:$0xff]
        %v5707 = vld [vmem:[%s4 + $0x988] sm:$0xff]
        %v5708 = vld [vmem:[%s4 + $0x990] sm:$0xff]
        %v5709 = vld [vmem:[%s4 + $0x998] sm:$0xff]
        %v5710 = vld [vmem:[%s4 + $0x9a0] sm:$0xff]
        %v5711 = vld [vmem:[%s4 + $0x9a8] sm:$0xff]
        %v5712 = vld [vmem:[%s4 + $0x9b0] sm:$0xff]
        %v5713 = vld [vmem:[%s4 + $0x9b8] sm:$0xff]
        %v5714 = vld [vmem:[%s4 + $0x9c0] sm:$0xff]
        %v5715 = vld [vmem:[%s4 + $0x9c8] sm:$0xff]
        %v5716 = vld [vmem:[%s4 + $0x9d0] sm:$0xff]
        %v5717 = vld [vmem:[%s4 + $0x9d8] sm:$0xff]
        %v5718 = vld [vmem:[%s4 + $0x9e0] sm:$0xff]
        %v5719 = vld [vmem:[%s4 + $0x9e8] sm:$0xff]
        %v5720 = vld [vmem:[%s4 + $0x9f0] sm:$0xff]
        %v5721 = vld [vmem:[%s4 + $0x9f8] sm:$0xff]
        %v5786 = vunpack.c.l.b16 %v5658
        %v5787 = vunpack.c.h.b16 %v5658
        %v5788 = vunpack.c.l.b16 %v5659
        %v5789 = vunpack.c.h.b16 %v5659
        %v5790 = vunpack.c.l.b16 %v5660
        %v5791 = vunpack.c.h.b16 %v5660
        %v5792 = vunpack.c.l.b16 %v5661
        %v5793 = vunpack.c.h.b16 %v5661
        %v5794 = vunpack.c.l.b16 %v5662
        %v5795 = vunpack.c.h.b16 %v5662
        %v5796 = vunpack.c.l.b16 %v5663
        %v5797 = vunpack.c.h.b16 %v5663
        %v5798 = vunpack.c.l.b16 %v5664
        %v5799 = vunpack.c.h.b16 %v5664
        %v5800 = vunpack.c.l.b16 %v5665
        %v5801 = vunpack.c.h.b16 %v5665
        %v5802 = vunpack.c.l.b16 %v5666
        %v5803 = vunpack.c.h.b16 %v5666
        %v5804 = vunpack.c.l.b16 %v5667
        %v5805 = vunpack.c.h.b16 %v5667
        %v5806 = vunpack.c.l.b16 %v5668
        %v5807 = vunpack.c.h.b16 %v5668
        %v5808 = vunpack.c.l.b16 %v5669
        %v5809 = vunpack.c.h.b16 %v5669
        %v5810 = vunpack.c.l.b16 %v5670
        %v5811 = vunpack.c.h.b16 %v5670
        %v5812 = vunpack.c.l.b16 %v5671
        %v5813 = vunpack.c.h.b16 %v5671
        %v5814 = vunpack.c.l.b16 %v5672
        %v5815 = vunpack.c.h.b16 %v5672
        %v5816 = vunpack.c.l.b16 %v5673
        %v5817 = vunpack.c.h.b16 %v5673
        %v5818 = vunpack.c.l.b16 %v5674
        %v5819 = vunpack.c.h.b16 %v5674
        %v5820 = vunpack.c.l.b16 %v5675
        %v5821 = vunpack.c.h.b16 %v5675
        %v5822 = vunpack.c.l.b16 %v5676
        %v5823 = vunpack.c.h.b16 %v5676
        %v5824 = vunpack.c.l.b16 %v5677
        %v5825 = vunpack.c.h.b16 %v5677
        %v5826 = vunpack.c.l.b16 %v5678
        %v5827 = vunpack.c.h.b16 %v5678
        %v5828 = vunpack.c.l.b16 %v5679
        %v5829 = vunpack.c.h.b16 %v5679
        %v5830 = vunpack.c.l.b16 %v5680
        %v5831 = vunpack.c.h.b16 %v5680
        %v5832 = vunpack.c.l.b16 %v5681
        %v5833 = vunpack.c.h.b16 %v5681
        %v5834 = vunpack.c.l.b16 %v5682
        %v5835 = vunpack.c.h.b16 %v5682
        %v5836 = vunpack.c.l.b16 %v5683
        %v5837 = vunpack.c.h.b16 %v5683
        %v5838 = vunpack.c.l.b16 %v5684
        %v5839 = vunpack.c.h.b16 %v5684
        %v5840 = vunpack.c.l.b16 %v5685
        %v5841 = vunpack.c.h.b16 %v5685
        %v5842 = vunpack.c.l.b16 %v5686
        %v5843 = vunpack.c.h.b16 %v5686
        %v5844 = vunpack.c.l.b16 %v5687
        %v5845 = vunpack.c.h.b16 %v5687
        %v5846 = vunpack.c.l.b16 %v5688
        %v5847 = vunpack.c.h.b16 %v5688
        %v5848 = vunpack.c.l.b16 %v5689
        %v5849 = vunpack.c.h.b16 %v5689
        %v5850 = vunpack.c.l.b16 %v5690
        %v5851 = vunpack.c.h.b16 %v5690
        %v5852 = vunpack.c.l.b16 %v5691
        %v5853 = vunpack.c.h.b16 %v5691
        %v5854 = vunpack.c.l.b16 %v5692
        %v5855 = vunpack.c.h.b16 %v5692
        %v5856 = vunpack.c.l.b16 %v5693
        %v5857 = vunpack.c.h.b16 %v5693
        %v5858 = vunpack.c.l.b16 %v5694
        %v5859 = vunpack.c.h.b16 %v5694
        %v5860 = vunpack.c.l.b16 %v5695
        %v5861 = vunpack.c.h.b16 %v5695
        %v5862 = vunpack.c.l.b16 %v5696
        %v5863 = vunpack.c.h.b16 %v5696
        %v5864 = vunpack.c.l.b16 %v5697
        %v5865 = vunpack.c.h.b16 %v5697
        %v5866 = vunpack.c.l.b16 %v5698
        %v5867 = vunpack.c.h.b16 %v5698
        %v5868 = vunpack.c.l.b16 %v5699
        %v5869 = vunpack.c.h.b16 %v5699
        %v5870 = vunpack.c.l.b16 %v5700
        %v5871 = vunpack.c.h.b16 %v5700
        %v5872 = vunpack.c.l.b16 %v5701
        %v5873 = vunpack.c.h.b16 %v5701
        %v5874 = vunpack.c.l.b16 %v5702
        %v5875 = vunpack.c.h.b16 %v5702
        %v5876 = vunpack.c.l.b16 %v5703
        %v5877 = vunpack.c.h.b16 %v5703
        %v5878 = vunpack.c.l.b16 %v5704
        %v5879 = vunpack.c.h.b16 %v5704
        %v5880 = vunpack.c.l.b16 %v5705
        %v5881 = vunpack.c.h.b16 %v5705
        %v5882 = vunpack.c.l.b16 %v5706
        %v5883 = vunpack.c.h.b16 %v5706
        %v5884 = vunpack.c.l.b16 %v5707
        %v5885 = vunpack.c.h.b16 %v5707
        %v5886 = vunpack.c.l.b16 %v5708
        %v5887 = vunpack.c.h.b16 %v5708
        %v5888 = vunpack.c.l.b16 %v5709
        %v5889 = vunpack.c.h.b16 %v5709
        %v5890 = vunpack.c.l.b16 %v5710
        %v5891 = vunpack.c.h.b16 %v5710
        %v5892 = vunpack.c.l.b16 %v5711
        %v5893 = vunpack.c.h.b16 %v5711
        %v5894 = vunpack.c.l.b16 %v5712
        %v5895 = vunpack.c.h.b16 %v5712
        %v5896 = vunpack.c.l.b16 %v5713
        %v5897 = vunpack.c.h.b16 %v5713
        %v5898 = vunpack.c.l.b16 %v5714
        %v5899 = vunpack.c.h.b16 %v5714
        %v5900 = vunpack.c.l.b16 %v5715
        %v5901 = vunpack.c.h.b16 %v5715
        %v5902 = vunpack.c.l.b16 %v5716
        %v5903 = vunpack.c.h.b16 %v5716
        %v5904 = vunpack.c.l.b16 %v5717
        %v5905 = vunpack.c.h.b16 %v5717
        %v5906 = vunpack.c.l.b16 %v5718
        %v5907 = vunpack.c.h.b16 %v5718
        %v5908 = vunpack.c.l.b16 %v5719
        %v5909 = vunpack.c.h.b16 %v5719
        %v5910 = vunpack.c.l.b16 %v5720
        %v5911 = vunpack.c.h.b16 %v5720
        %v5912 = vunpack.c.l.b16 %v5721
        %v5913 = vunpack.c.h.b16 %v5721
        %v5914 = vpack.c.b16 %v5790, %v5786
        %v5915 = vpack.c.b16 %v5791, %v5787
        %v5916 = vpack.c.b16 %v5792, %v5788
        %v5917 = vpack.c.b16 %v5793, %v5789
        %v5918 = vpack.c.b16 %v5798, %v5794
        %v5919 = vpack.c.b16 %v5799, %v5795
        %v5920 = vpack.c.b16 %v5800, %v5796
        %v5921 = vpack.c.b16 %v5801, %v5797
        %v5922 = vpack.c.b16 %v5806, %v5802
        %v5923 = vpack.c.b16 %v5807, %v5803
        %v5924 = vpack.c.b16 %v5808, %v5804
        %v5925 = vpack.c.b16 %v5809, %v5805
        %v5926 = vpack.c.b16 %v5814, %v5810
        %v5927 = vpack.c.b16 %v5815, %v5811
        %v5928 = vpack.c.b16 %v5816, %v5812
        %v5929 = vpack.c.b16 %v5817, %v5813
        %v5930 = vpack.c.b16 %v5822, %v5818
        %v5931 = vpack.c.b16 %v5823, %v5819
        %v5932 = vpack.c.b16 %v5824, %v5820
        %v5933 = vpack.c.b16 %v5825, %v5821
        %v5934 = vpack.c.b16 %v5830, %v5826
        %v5935 = vpack.c.b16 %v5831, %v5827
        %v5936 = vpack.c.b16 %v5832, %v5828
        %v5937 = vpack.c.b16 %v5833, %v5829
        %v5938 = vpack.c.b16 %v5838, %v5834
        %v5939 = vpack.c.b16 %v5839, %v5835
        %v5940 = vpack.c.b16 %v5840, %v5836
        %v5941 = vpack.c.b16 %v5841, %v5837
        %v5942 = vpack.c.b16 %v5846, %v5842
        %v5943 = vpack.c.b16 %v5847, %v5843
        %v5944 = vpack.c.b16 %v5848, %v5844
        %v5945 = vpack.c.b16 %v5849, %v5845
        %v5946 = vpack.c.b16 %v5854, %v5850
        %v5947 = vpack.c.b16 %v5855, %v5851
        %v5948 = vpack.c.b16 %v5856, %v5852
        %v5949 = vpack.c.b16 %v5857, %v5853
        %v5950 = vpack.c.b16 %v5862, %v5858
        %v5951 = vpack.c.b16 %v5863, %v5859
        %v5952 = vpack.c.b16 %v5864, %v5860
        %v5953 = vpack.c.b16 %v5865, %v5861
        %v5954 = vpack.c.b16 %v5870, %v5866
        %v5955 = vpack.c.b16 %v5871, %v5867
        %v5956 = vpack.c.b16 %v5872, %v5868
        %v5957 = vpack.c.b16 %v5873, %v5869
        %v5958 = vpack.c.b16 %v5878, %v5874
        %v5959 = vpack.c.b16 %v5879, %v5875
        %v5960 = vpack.c.b16 %v5880, %v5876
        %v5961 = vpack.c.b16 %v5881, %v5877
        %v5962 = vpack.c.b16 %v5886, %v5882
        %v5963 = vpack.c.b16 %v5887, %v5883
        %v5964 = vpack.c.b16 %v5888, %v5884
        %v5965 = vpack.c.b16 %v5889, %v5885
        %v5966 = vpack.c.b16 %v5894, %v5890
        %v5967 = vpack.c.b16 %v5895, %v5891
        %v5968 = vpack.c.b16 %v5896, %v5892
        %v5969 = vpack.c.b16 %v5897, %v5893
        %v5970 = vpack.c.b16 %v5902, %v5898
        %v5971 = vpack.c.b16 %v5903, %v5899
        %v5972 = vpack.c.b16 %v5904, %v5900
        %v5973 = vpack.c.b16 %v5905, %v5901
        %v5974 = vpack.c.b16 %v5910, %v5906
        %v5975 = vpack.c.b16 %v5911, %v5907
        %v5976 = vpack.c.b16 %v5912, %v5908
        %v5977 = vpack.c.b16 %v5913, %v5909
        %6042 = vmatprep.subr.bf16.mxu0 %v5943
        %6043 = vmatpush1.bf16.msra.mxu0 %v5942
        %6044 = vmatprep.subr.bf16.mxu0 %v5939
        %6045 = vmatpush1.bf16.msra.mxu0 %v5938
        %6046 = vmatprep.subr.bf16.mxu0 %v5935
        %6047 = vmatpush1.bf16.msra.mxu0 %v5934
        %6048 = vmatprep.subr.bf16.mxu0 %v5931
        %6049 = vmatpush1.bf16.msra.mxu0 %v5930
        %6050 = vmatprep.subr.bf16.mxu0 %v5927
        %6051 = vmatpush1.bf16.msra.mxu0 %v5926
        %6052 = vmatprep.subr.bf16.mxu0 %v5923
        %6053 = vmatpush1.bf16.msra.mxu0 %v5922
        %6054 = vmatprep.subr.bf16.mxu0 %v5919
        %6055 = vmatpush1.bf16.msra.mxu0 %v5918
        %6056 = vmatprep.subr.bf16.mxu0 %v5915
        %6057 = vmatpush1.bf16.msra.mxu0 %v5914
        %6058 = vmatprep.subr.bf16.mxu0 %v5975
        %6059 = vmatpush2.bf16.msra.mxu0 %v5974
        %6060 = vmatprep.subr.bf16.mxu0 %v5971
        %6061 = vmatpush2.bf16.msra.mxu0 %v5970
        %6062 = vmatprep.subr.bf16.mxu0 %v5967
        %6063 = vmatpush2.bf16.msra.mxu0 %v5966
        %6064 = vmatprep.subr.bf16.mxu0 %v5963
        %6065 = vmatpush2.bf16.msra.mxu0 %v5962
        %6066 = vmatprep.subr.bf16.mxu0 %v5959
        %6067 = vmatpush2.bf16.msra.mxu0 %v5958
        %6068 = vmatprep.subr.bf16.mxu0 %v5955
        %6069 = vmatpush2.bf16.msra.mxu0 %v5954
        %6070 = vmatprep.subr.bf16.mxu0 %v5951
        %6071 = vmatpush2.bf16.msra.mxu0 %v5950
        %6072 = vmatprep.subr.bf16.mxu0 %v5947
        %6073 = vmatpush2.bf16.msra.mxu0 %v5946
        %6074 = vmatprep.mubr.bf16.mxu0 %v2763
        %6075 = vmatmul.mubr.bf16.gmra.mxu0 %v2762
        %v6076 = vpop.f32.mrf.mxu0
        %v6077 = vadd.f32 0.0, %v6076
        %v6078 = vpop.f32.mrf.mxu0
        %v6079 = vadd.f32 0.0, %v6078
        %v6080 = vpop.f32.mrf.mxu0
        %v6081 = vadd.f32 0.0, %v6080
        %v6082 = vpop.f32.mrf.mxu0
        %v6083 = vadd.f32 0.0, %v6082
        %6084 = vmatprep.mubr.bf16.mxu0 %v2765
        %6085 = vmatmul.mubr.bf16.gmra.mxu0 %v2764
        %v6086 = vpop.f32.mrf.mxu0
        %v6087 = vadd.f32 0.0, %v6086
        %v6088 = vpop.f32.mrf.mxu0
        %v6089 = vadd.f32 0.0, %v6088
        %v6090 = vpop.f32.mrf.mxu0
        %v6091 = vadd.f32 0.0, %v6090
        %v6092 = vpop.f32.mrf.mxu0
        %v6093 = vadd.f32 0.0, %v6092
        %6094 = vmatprep.mubr.bf16.mxu0 %v2767
        %6095 = vmatmul.mubr.bf16.gmra.mxu0 %v2766
        %v6096 = vpop.f32.mrf.mxu0
        %v6097 = vadd.f32 0.0, %v6096
        %v6098 = vpop.f32.mrf.mxu0
        %v6099 = vadd.f32 0.0, %v6098
        %v6100 = vpop.f32.mrf.mxu0
        %v6101 = vadd.f32 0.0, %v6100
        %v6102 = vpop.f32.mrf.mxu0
        %v6103 = vadd.f32 0.0, %v6102
        %6104 = vmatprep.mubr.bf16.mxu0 %v2769
        %6105 = vmatmul.mubr.bf16.gmra.mxu0 %v2768
        %v6106 = vpop.f32.mrf.mxu0
        %v6107 = vadd.f32 0.0, %v6106
        %v6108 = vpop.f32.mrf.mxu0
        %v6109 = vadd.f32 0.0, %v6108
        %v6110 = vpop.f32.mrf.mxu0
        %v6111 = vadd.f32 0.0, %v6110
        %v6112 = vpop.f32.mrf.mxu0
        %v6113 = vadd.f32 0.0, %v6112
        %6114 = vdwg.mxu0
        %6115 = vmatprep.subr.bf16.mxu0 %v5945
        %6116 = vmatpush1.bf16.msra.mxu0 %v5944
        %6117 = vmatprep.subr.bf16.mxu0 %v5941
        %6118 = vmatpush1.bf16.msra.mxu0 %v5940
        %6119 = vmatprep.subr.bf16.mxu0 %v5937
        %6120 = vmatpush1.bf16.msra.mxu0 %v5936
        %6121 = vmatprep.subr.bf16.mxu0 %v5933
        %6122 = vmatpush1.bf16.msra.mxu0 %v5932
        %6123 = vmatprep.subr.bf16.mxu0 %v5929
        %6124 = vmatpush1.bf16.msra.mxu0 %v5928
        %6125 = vmatprep.subr.bf16.mxu0 %v5925
        %6126 = vmatpush1.bf16.msra.mxu0 %v5924
        %6127 = vmatprep.subr.bf16.mxu0 %v5921
        %6128 = vmatpush1.bf16.msra.mxu0 %v5920
        %6129 = vmatprep.subr.bf16.mxu0 %v5917
        %6130 = vmatpush1.bf16.msra.mxu0 %v5916
        %6131 = vmatprep.subr.bf16.mxu0 %v5977
        %6132 = vmatpush2.bf16.msra.mxu0 %v5976
        %6133 = vmatprep.subr.bf16.mxu0 %v5973
        %6134 = vmatpush2.bf16.msra.mxu0 %v5972
        %6135 = vmatprep.subr.bf16.mxu0 %v5969
        %6136 = vmatpush2.bf16.msra.mxu0 %v5968
        %6137 = vmatprep.subr.bf16.mxu0 %v5965
        %6138 = vmatpush2.bf16.msra.mxu0 %v5964
        %6139 = vmatprep.subr.bf16.mxu0 %v5961
        %6140 = vmatpush2.bf16.msra.mxu0 %v5960
        %6141 = vmatprep.subr.bf16.mxu0 %v5957
        %6142 = vmatpush2.bf16.msra.mxu0 %v5956
        %6143 = vmatprep.subr.bf16.mxu0 %v5953
        %6144 = vmatpush2.bf16.msra.mxu0 %v5952
        %6145 = vmatprep.subr.bf16.mxu0 %v5949
        %6146 = vmatpush2.bf16.msra.mxu0 %v5948
        %6147 = vmatprep.mubr.bf16.mxu0 %v2763
        %6148 = vmatmul.mubr.bf16.gmra.mxu0 %v2762
        %v6149 = vpop.f32.mrf.mxu0
        %v6150 = vadd.f32 0.0, %v6149
        %v6151 = vpop.f32.mrf.mxu0
        %v6152 = vadd.f32 0.0, %v6151
        %v6153 = vpop.f32.mrf.mxu0
        %v6154 = vadd.f32 0.0, %v6153
        %v6155 = vpop.f32.mrf.mxu0
        %v6156 = vadd.f32 0.0, %v6155
        %6157 = vmatprep.mubr.bf16.mxu0 %v2765
        %6158 = vmatmul.mubr.bf16.gmra.mxu0 %v2764
        %v6159 = vpop.f32.mrf.mxu0
        %v6160 = vadd.f32 0.0, %v6159
        %v6161 = vpop.f32.mrf.mxu0
        %v6162 = vadd.f32 0.0, %v6161
        %v6163 = vpop.f32.mrf.mxu0
        %v6164 = vadd.f32 0.0, %v6163
        %v6165 = vpop.f32.mrf.mxu0
        %v6166 = vadd.f32 0.0, %v6165
        %6167 = vmatprep.mubr.bf16.mxu0 %v2767
        %6168 = vmatmul.mubr.bf16.gmra.mxu0 %v2766
        %v6169 = vpop.f32.mrf.mxu0
        %v6170 = vadd.f32 0.0, %v6169
        %v6171 = vpop.f32.mrf.mxu0
        %v6172 = vadd.f32 0.0, %v6171
        %v6173 = vpop.f32.mrf.mxu0
        %v6174 = vadd.f32 0.0, %v6173
        %v6175 = vpop.f32.mrf.mxu0
        %v6176 = vadd.f32 0.0, %v6175
        %6177 = vmatprep.mubr.bf16.mxu0 %v2769
        %6178 = vmatmul.mubr.bf16.gmra.mxu0 %v2768
        %v6179 = vpop.f32.mrf.mxu0
        %v6180 = vadd.f32 0.0, %v6179
        %v6181 = vpop.f32.mrf.mxu0
        %v6182 = vadd.f32 0.0, %v6181
        %v6183 = vpop.f32.mrf.mxu0
        %v6184 = vadd.f32 0.0, %v6183
        %v6185 = vpop.f32.mrf.mxu0
        %v6186 = vadd.f32 0.0, %v6185
        %6187 = vdwg.mxu0
        %6188 = vmatprep.subr.bf16.mxu0 %v5943
        %6189 = vmatpush1.bf16.msra.mxu0 %v5942
        %6190 = vmatprep.subr.bf16.mxu0 %v5939
        %6191 = vmatpush1.bf16.msra.mxu0 %v5938
        %6192 = vmatprep.subr.bf16.mxu0 %v5935
        %6193 = vmatpush1.bf16.msra.mxu0 %v5934
        %6194 = vmatprep.subr.bf16.mxu0 %v5931
        %6195 = vmatpush1.bf16.msra.mxu0 %v5930
        %6196 = vmatprep.subr.bf16.mxu0 %v5927
        %6197 = vmatpush1.bf16.msra.mxu0 %v5926
        %6198 = vmatprep.subr.bf16.mxu0 %v5923
        %6199 = vmatpush1.bf16.msra.mxu0 %v5922
        %6200 = vmatprep.subr.bf16.mxu0 %v5919
        %6201 = vmatpush1.bf16.msra.mxu0 %v5918
        %6202 = vmatprep.subr.bf16.mxu0 %v5915
        %6203 = vmatpush1.bf16.msra.mxu0 %v5914
        %6204 = vmatprep.subr.bf16.mxu0 %v5975
        %6205 = vmatpush2.bf16.msra.mxu0 %v5974
        %6206 = vmatprep.subr.bf16.mxu0 %v5971
        %6207 = vmatpush2.bf16.msra.mxu0 %v5970
        %6208 = vmatprep.subr.bf16.mxu0 %v5967
        %6209 = vmatpush2.bf16.msra.mxu0 %v5966
        %6210 = vmatprep.subr.bf16.mxu0 %v5963
        %6211 = vmatpush2.bf16.msra.mxu0 %v5962
        %6212 = vmatprep.subr.bf16.mxu0 %v5959
        %6213 = vmatpush2.bf16.msra.mxu0 %v5958
        %6214 = vmatprep.subr.bf16.mxu0 %v5955
        %6215 = vmatpush2.bf16.msra.mxu0 %v5954
        %6216 = vmatprep.subr.bf16.mxu0 %v5951
        %6217 = vmatpush2.bf16.msra.mxu0 %v5950
        %6218 = vmatprep.subr.bf16.mxu0 %v5947
        %6219 = vmatpush2.bf16.msra.mxu0 %v5946
        %6220 = vmatprep.mubr.bf16.mxu0 %v2819
        %6221 = vmatmul.mubr.bf16.gmra.mxu0 %v2818
        %v6222 = vpop.f32.mrf.mxu0
        %v6223 = vadd.f32 0.0, %v6222
        %v6224 = vpop.f32.mrf.mxu0
        %v6225 = vadd.f32 0.0, %v6224
        %v6226 = vpop.f32.mrf.mxu0
        %v6227 = vadd.f32 0.0, %v6226
        %v6228 = vpop.f32.mrf.mxu0
        %v6229 = vadd.f32 0.0, %v6228
        %6230 = vmatprep.mubr.bf16.mxu0 %v2821
        %6231 = vmatmul.mubr.bf16.gmra.mxu0 %v2820
        %v6232 = vpop.f32.mrf.mxu0
        %v6233 = vadd.f32 0.0, %v6232
        %v6234 = vpop.f32.mrf.mxu0
        %v6235 = vadd.f32 0.0, %v6234
        %v6236 = vpop.f32.mrf.mxu0
        %v6237 = vadd.f32 0.0, %v6236
        %v6238 = vpop.f32.mrf.mxu0
        %v6239 = vadd.f32 0.0, %v6238
        %6240 = vmatprep.mubr.bf16.mxu0 %v2823
        %6241 = vmatmul.mubr.bf16.gmra.mxu0 %v2822
        %v6242 = vpop.f32.mrf.mxu0
        %v6243 = vadd.f32 0.0, %v6242
        %v6244 = vpop.f32.mrf.mxu0
        %v6245 = vadd.f32 0.0, %v6244
        %v6246 = vpop.f32.mrf.mxu0
        %v6247 = vadd.f32 0.0, %v6246
        %v6248 = vpop.f32.mrf.mxu0
        %v6249 = vadd.f32 0.0, %v6248
        %6250 = vmatprep.mubr.bf16.mxu0 %v2825
        %6251 = vmatmul.mubr.bf16.gmra.mxu0 %v2824
        %v6252 = vpop.f32.mrf.mxu0
        %v6253 = vadd.f32 0.0, %v6252
        %v6254 = vpop.f32.mrf.mxu0
        %v6255 = vadd.f32 0.0, %v6254
        %v6256 = vpop.f32.mrf.mxu0
        %v6257 = vadd.f32 0.0, %v6256
        %v6258 = vpop.f32.mrf.mxu0
        %v6259 = vadd.f32 0.0, %v6258
        %6260 = vdwg.mxu0
        %6261 = vmatprep.subr.bf16.mxu0 %v5945
        %6262 = vmatpush1.bf16.msra.mxu0 %v5944
        %6263 = vmatprep.subr.bf16.mxu0 %v5941
        %6264 = vmatpush1.bf16.msra.mxu0 %v5940
        %6265 = vmatprep.subr.bf16.mxu0 %v5937
        %6266 = vmatpush1.bf16.msra.mxu0 %v5936
        %6267 = vmatprep.subr.bf16.mxu0 %v5933
        %6268 = vmatpush1.bf16.msra.mxu0 %v5932
        %6269 = vmatprep.subr.bf16.mxu0 %v5929
        %6270 = vmatpush1.bf16.msra.mxu0 %v5928
        %6271 = vmatprep.subr.bf16.mxu0 %v5925
        %6272 = vmatpush1.bf16.msra.mxu0 %v5924
        %6273 = vmatprep.subr.bf16.mxu0 %v5921
        %6274 = vmatpush1.bf16.msra.mxu0 %v5920
        %6275 = vmatprep.subr.bf16.mxu0 %v5917
        %6276 = vmatpush1.bf16.msra.mxu0 %v5916
        %6277 = vmatprep.subr.bf16.mxu0 %v5977
        %6278 = vmatpush2.bf16.msra.mxu0 %v5976
        %6279 = vmatprep.subr.bf16.mxu0 %v5973
        %6280 = vmatpush2.bf16.msra.mxu0 %v5972
        %6281 = vmatprep.subr.bf16.mxu0 %v5969
        %6282 = vmatpush2.bf16.msra.mxu0 %v5968
        %6283 = vmatprep.subr.bf16.mxu0 %v5965
        %6284 = vmatpush2.bf16.msra.mxu0 %v5964
        %6285 = vmatprep.subr.bf16.mxu0 %v5961
        %6286 = vmatpush2.bf16.msra.mxu0 %v5960
        %6287 = vmatprep.subr.bf16.mxu0 %v5957
        %6288 = vmatpush2.bf16.msra.mxu0 %v5956
        %6289 = vmatprep.subr.bf16.mxu0 %v5953
        %6290 = vmatpush2.bf16.msra.mxu0 %v5952
        %6291 = vmatprep.subr.bf16.mxu0 %v5949
        %6292 = vmatpush2.bf16.msra.mxu0 %v5948
        %6293 = vmatprep.mubr.bf16.mxu0 %v2819
        %6294 = vmatmul.mubr.bf16.gmra.mxu0 %v2818
        %v6295 = vpop.f32.mrf.mxu0
        %v6296 = vadd.f32 0.0, %v6295
        %v6297 = vpop.f32.mrf.mxu0
        %v6298 = vadd.f32 0.0, %v6297
        %v6299 = vpop.f32.mrf.mxu0
        %v6300 = vadd.f32 0.0, %v6299
        %v6301 = vpop.f32.mrf.mxu0
        %v6302 = vadd.f32 0.0, %v6301
        %6303 = vmatprep.mubr.bf16.mxu0 %v2821
        %6304 = vmatmul.mubr.bf16.gmra.mxu0 %v2820
        %v6305 = vpop.f32.mrf.mxu0
        %v6306 = vadd.f32 0.0, %v6305
        %v6307 = vpop.f32.mrf.mxu0
        %v6308 = vadd.f32 0.0, %v6307
        %v6309 = vpop.f32.mrf.mxu0
        %v6310 = vadd.f32 0.0, %v6309
        %v6311 = vpop.f32.mrf.mxu0
        %v6312 = vadd.f32 0.0, %v6311
        %6313 = vmatprep.mubr.bf16.mxu0 %v2823
        %6314 = vmatmul.mubr.bf16.gmra.mxu0 %v2822
        %v6315 = vpop.f32.mrf.mxu0
        %v6316 = vadd.f32 0.0, %v6315
        %v6317 = vpop.f32.mrf.mxu0
        %v6318 = vadd.f32 0.0, %v6317
        %v6319 = vpop.f32.mrf.mxu0
        %v6320 = vadd.f32 0.0, %v6319
        %v6321 = vpop.f32.mrf.mxu0
        %v6322 = vadd.f32 0.0, %v6321
        %6323 = vmatprep.mubr.bf16.mxu0 %v2825
        %6324 = vmatmul.mubr.bf16.gmra.mxu0 %v2824
        %v6325 = vpop.f32.mrf.mxu0
        %v6326 = vadd.f32 0.0, %v6325
        %v6327 = vpop.f32.mrf.mxu0
        %v6328 = vadd.f32 0.0, %v6327
        %v6329 = vpop.f32.mrf.mxu0
        %v6330 = vadd.f32 0.0, %v6329
        %v6331 = vpop.f32.mrf.mxu0
        %v6332 = vadd.f32 0.0, %v6331
        %6333 = vdwg.mxu0
        %v6334 = vadd.f32 %v5594, %v6077
        %v6335 = vadd.f32 %v5595, %v6079
        %v6336 = vadd.f32 %v5596, %v6150
        %v6337 = vadd.f32 %v5597, %v6152
        %v6338 = vadd.f32 %v5598, %v6081
        %v6339 = vadd.f32 %v5599, %v6083
        %v6340 = vadd.f32 %v5600, %v6154
        %v6341 = vadd.f32 %v5601, %v6156
        %v6342 = vadd.f32 %v5602, %v6087
        %v6343 = vadd.f32 %v5603, %v6089
        %v6344 = vadd.f32 %v5604, %v6160
        %v6345 = vadd.f32 %v5605, %v6162
        %v6346 = vadd.f32 %v5606, %v6091
        %v6347 = vadd.f32 %v5607, %v6093
        %v6348 = vadd.f32 %v5608, %v6164
        %v6349 = vadd.f32 %v5609, %v6166
        %v6350 = vadd.f32 %v5610, %v6097
        %v6351 = vadd.f32 %v5611, %v6099
        %v6352 = vadd.f32 %v5612, %v6170
        %v6353 = vadd.f32 %v5613, %v6172
        %v6354 = vadd.f32 %v5614, %v6101
        %v6355 = vadd.f32 %v5615, %v6103
        %v6356 = vadd.f32 %v5616, %v6174
        %v6357 = vadd.f32 %v5617, %v6176
        %v6358 = vadd.f32 %v5618, %v6107
        %v6359 = vadd.f32 %v5619, %v6109
        %v6360 = vadd.f32 %v5620, %v6180
        %v6361 = vadd.f32 %v5621, %v6182
        %v6362 = vadd.f32 %v5622, %v6111
        %v6363 = vadd.f32 %v5623, %v6113
        %v6364 = vadd.f32 %v5624, %v6184
        %v6365 = vadd.f32 %v5625, %v6186
        %v6366 = vadd.f32 %v5626, %v6223
        %v6367 = vadd.f32 %v5627, %v6225
        %v6368 = vadd.f32 %v5628, %v6296
        %v6369 = vadd.f32 %v5629, %v6298
        %v6370 = vadd.f32 %v5630, %v6227
        %v6371 = vadd.f32 %v5631, %v6229
        %v6372 = vadd.f32 %v5632, %v6300
        %v6373 = vadd.f32 %v5633, %v6302
        %v6374 = vadd.f32 %v5634, %v6233
        %v6375 = vadd.f32 %v5635, %v6235
        %v6376 = vadd.f32 %v5636, %v6306
        %v6377 = vadd.f32 %v5637, %v6308
        %v6378 = vadd.f32 %v5638, %v6237
        %v6379 = vadd.f32 %v5639, %v6239
        %v6380 = vadd.f32 %v5640, %v6310
        %v6381 = vadd.f32 %v5641, %v6312
        %v6382 = vadd.f32 %v5642, %v6243
        %v6383 = vadd.f32 %v5643, %v6245
        %v6384 = vadd.f32 %v5644, %v6316
        %v6385 = vadd.f32 %v5645, %v6318
        %v6386 = vadd.f32 %v5646, %v6247
        %v6387 = vadd.f32 %v5647, %v6249
        %v6388 = vadd.f32 %v5648, %v6320
        %v6389 = vadd.f32 %v5649, %v6322
        %v6390 = vadd.f32 %v5650, %v6253
        %v6391 = vadd.f32 %v5651, %v6255
        %v6392 = vadd.f32 %v5652, %v6326
        %v6393 = vadd.f32 %v5653, %v6328
        %v6394 = vadd.f32 %v5654, %v6257
        %v6395 = vadd.f32 %v5655, %v6259
        %v6396 = vadd.f32 %v5656, %v6330
        %v6397 = vadd.f32 %v5657, %v6332
        %v6398 = vld [vmem:[%s5] sm:$0xf]
        %v6399 = vld [vmem:[%s6] sm:$0xf]
        %v6401 = vlaneseq
        %v6402 = vshrl.u32 %v6401, 7
        %v6403 = vsub.s32 0, %v6402
        %v6404 = vrot.slane %v6398, %v6403
        %v6405 = vlaneseq
        %v6406 = vshrl.u32 %v6405, 7
        %v6407 = vsub.s32 1, %v6406
        %v6408 = vrot.slane %v6398, %v6407
        %v6409 = vlaneseq
        %v6410 = vshrl.u32 %v6409, 7
        %v6411 = vsub.s32 2, %v6410
        %v6412 = vrot.slane %v6398, %v6411
        %v6413 = vlaneseq
        %v6414 = vshrl.u32 %v6413, 7
        %v6415 = vsub.s32 3, %v6414
        %v6416 = vrot.slane %v6398, %v6415
        %v6421 = vmul.f32 %v6334, %v6404
        %v6422 = vmul.f32 %v6335, %v6408
        %v6423 = vmul.f32 %v6336, %v6412
        %v6424 = vmul.f32 %v6337, %v6416
        %v6425 = vmul.f32 %v6338, %v6404
        %v6426 = vmul.f32 %v6339, %v6408
        %v6427 = vmul.f32 %v6340, %v6412
        %v6428 = vmul.f32 %v6341, %v6416
        %v6429 = vmul.f32 %v6342, %v6404
        %v6430 = vmul.f32 %v6343, %v6408
        %v6431 = vmul.f32 %v6344, %v6412
        %v6432 = vmul.f32 %v6345, %v6416
        %v6433 = vmul.f32 %v6346, %v6404
        %v6434 = vmul.f32 %v6347, %v6408
        %v6435 = vmul.f32 %v6348, %v6412
        %v6436 = vmul.f32 %v6349, %v6416
        %v6437 = vmul.f32 %v6350, %v6404
        %v6438 = vmul.f32 %v6351, %v6408
        %v6439 = vmul.f32 %v6352, %v6412
        %v6440 = vmul.f32 %v6353, %v6416
        %v6441 = vmul.f32 %v6354, %v6404
        %v6442 = vmul.f32 %v6355, %v6408
        %v6443 = vmul.f32 %v6356, %v6412
        %v6444 = vmul.f32 %v6357, %v6416
        %v6445 = vmul.f32 %v6358, %v6404
        %v6446 = vmul.f32 %v6359, %v6408
        %v6447 = vmul.f32 %v6360, %v6412
        %v6448 = vmul.f32 %v6361, %v6416
        %v6449 = vmul.f32 %v6362, %v6404
        %v6450 = vmul.f32 %v6363, %v6408
        %v6451 = vmul.f32 %v6364, %v6412
        %v6452 = vmul.f32 %v6365, %v6416
        %v6454 = vlaneseq
        %v6455 = vshrl.u32 %v6454, 7
        %v6456 = vsub.s32 0, %v6455
        %v6457 = vrot.slane %v6399, %v6456
        %v6458 = vlaneseq
        %v6459 = vshrl.u32 %v6458, 7
        %v6460 = vsub.s32 1, %v6459
        %v6461 = vrot.slane %v6399, %v6460
        %v6462 = vlaneseq
        %v6463 = vshrl.u32 %v6462, 7
        %v6464 = vsub.s32 2, %v6463
        %v6465 = vrot.slane %v6399, %v6464
        %v6466 = vlaneseq
        %v6467 = vshrl.u32 %v6466, 7
        %v6468 = vsub.s32 3, %v6467
        %v6469 = vrot.slane %v6399, %v6468
        %v6474 = vadd.f32 %v6421, %v6457
        %v6475 = vadd.f32 %v6422, %v6461
        %v6476 = vadd.f32 %v6423, %v6465
        %v6477 = vadd.f32 %v6424, %v6469
        %v6478 = vadd.f32 %v6425, %v6457
        %v6479 = vadd.f32 %v6426, %v6461
        %v6480 = vadd.f32 %v6427, %v6465
        %v6481 = vadd.f32 %v6428, %v6469
        %v6482 = vadd.f32 %v6429, %v6457
        %v6483 = vadd.f32 %v6430, %v6461
        %v6484 = vadd.f32 %v6431, %v6465
        %v6485 = vadd.f32 %v6432, %v6469
        %v6486 = vadd.f32 %v6433, %v6457
        %v6487 = vadd.f32 %v6434, %v6461
        %v6488 = vadd.f32 %v6435, %v6465
        %v6489 = vadd.f32 %v6436, %v6469
        %v6490 = vadd.f32 %v6437, %v6457
        %v6491 = vadd.f32 %v6438, %v6461
        %v6492 = vadd.f32 %v6439, %v6465
        %v6493 = vadd.f32 %v6440, %v6469
        %v6494 = vadd.f32 %v6441, %v6457
        %v6495 = vadd.f32 %v6442, %v6461
        %v6496 = vadd.f32 %v6443, %v6465
        %v6497 = vadd.f32 %v6444, %v6469
        %v6498 = vadd.f32 %v6445, %v6457
        %v6499 = vadd.f32 %v6446, %v6461
        %v6500 = vadd.f32 %v6447, %v6465
        %v6501 = vadd.f32 %v6448, %v6469
        %v6502 = vadd.f32 %v6449, %v6457
        %v6503 = vadd.f32 %v6450, %v6461
        %v6504 = vadd.f32 %v6451, %v6465
        %v6505 = vadd.f32 %v6452, %v6469
        %v6506 = vmax.f32 %v6474, 0.0
        %v6507 = vmax.f32 %v6475, 0.0
        %v6508 = vmax.f32 %v6476, 0.0
        %v6509 = vmax.f32 %v6477, 0.0
        %v6510 = vmax.f32 %v6478, 0.0
        %v6511 = vmax.f32 %v6479, 0.0
        %v6512 = vmax.f32 %v6480, 0.0
        %v6513 = vmax.f32 %v6481, 0.0
        %v6514 = vmax.f32 %v6482, 0.0
        %v6515 = vmax.f32 %v6483, 0.0
        %v6516 = vmax.f32 %v6484, 0.0
        %v6517 = vmax.f32 %v6485, 0.0
        %v6518 = vmax.f32 %v6486, 0.0
        %v6519 = vmax.f32 %v6487, 0.0
        %v6520 = vmax.f32 %v6488, 0.0
        %v6521 = vmax.f32 %v6489, 0.0
        %v6522 = vmax.f32 %v6490, 0.0
        %v6523 = vmax.f32 %v6491, 0.0
        %v6524 = vmax.f32 %v6492, 0.0
        %v6525 = vmax.f32 %v6493, 0.0
        %v6526 = vmax.f32 %v6494, 0.0
        %v6527 = vmax.f32 %v6495, 0.0
        %v6528 = vmax.f32 %v6496, 0.0
        %v6529 = vmax.f32 %v6497, 0.0
        %v6530 = vmax.f32 %v6498, 0.0
        %v6531 = vmax.f32 %v6499, 0.0
        %v6532 = vmax.f32 %v6500, 0.0
        %v6533 = vmax.f32 %v6501, 0.0
        %v6534 = vmax.f32 %v6502, 0.0
        %v6535 = vmax.f32 %v6503, 0.0
        %v6536 = vmax.f32 %v6504, 0.0
        %v6537 = vmax.f32 %v6505, 0.0
        %v6538 = vmul.f32 %v6366, %v6404
        %v6539 = vmul.f32 %v6367, %v6408
        %v6540 = vmul.f32 %v6368, %v6412
        %v6541 = vmul.f32 %v6369, %v6416
        %v6542 = vmul.f32 %v6370, %v6404
        %v6543 = vmul.f32 %v6371, %v6408
        %v6544 = vmul.f32 %v6372, %v6412
        %v6545 = vmul.f32 %v6373, %v6416
        %v6546 = vmul.f32 %v6374, %v6404
        %v6547 = vmul.f32 %v6375, %v6408
        %v6548 = vmul.f32 %v6376, %v6412
        %v6549 = vmul.f32 %v6377, %v6416
        %v6550 = vmul.f32 %v6378, %v6404
        %v6551 = vmul.f32 %v6379, %v6408
        %v6552 = vmul.f32 %v6380, %v6412
        %v6553 = vmul.f32 %v6381, %v6416
        %v6554 = vmul.f32 %v6382, %v6404
        %v6555 = vmul.f32 %v6383, %v6408
        %v6556 = vmul.f32 %v6384, %v6412
        %v6557 = vmul.f32 %v6385, %v6416
        %v6558 = vmul.f32 %v6386, %v6404
        %v6559 = vmul.f32 %v6387, %v6408
        %v6560 = vmul.f32 %v6388, %v6412
        %v6561 = vmul.f32 %v6389, %v6416
        %v6562 = vmul.f32 %v6390, %v6404
        %v6563 = vmul.f32 %v6391, %v6408
        %v6564 = vmul.f32 %v6392, %v6412
        %v6565 = vmul.f32 %v6393, %v6416
        %v6566 = vmul.f32 %v6394, %v6404
        %v6567 = vmul.f32 %v6395, %v6408
        %v6568 = vmul.f32 %v6396, %v6412
        %v6569 = vmul.f32 %v6397, %v6416
        %v6570 = vadd.f32 %v6538, %v6457
        %v6571 = vadd.f32 %v6539, %v6461
        %v6572 = vadd.f32 %v6540, %v6465
        %v6573 = vadd.f32 %v6541, %v6469
        %v6574 = vadd.f32 %v6542, %v6457
        %v6575 = vadd.f32 %v6543, %v6461
        %v6576 = vadd.f32 %v6544, %v6465
        %v6577 = vadd.f32 %v6545, %v6469
        %v6578 = vadd.f32 %v6546, %v6457
        %v6579 = vadd.f32 %v6547, %v6461
        %v6580 = vadd.f32 %v6548, %v6465
        %v6581 = vadd.f32 %v6549, %v6469
        %v6582 = vadd.f32 %v6550, %v6457
        %v6583 = vadd.f32 %v6551, %v6461
        %v6584 = vadd.f32 %v6552, %v6465
        %v6585 = vadd.f32 %v6553, %v6469
        %v6586 = vadd.f32 %v6554, %v6457
        %v6587 = vadd.f32 %v6555, %v6461
        %v6588 = vadd.f32 %v6556, %v6465
        %v6589 = vadd.f32 %v6557, %v6469
        %v6590 = vadd.f32 %v6558, %v6457
        %v6591 = vadd.f32 %v6559, %v6461
        %v6592 = vadd.f32 %v6560, %v6465
        %v6593 = vadd.f32 %v6561, %v6469
        %v6594 = vadd.f32 %v6562, %v6457
        %v6595 = vadd.f32 %v6563, %v6461
        %v6596 = vadd.f32 %v6564, %v6465
        %v6597 = vadd.f32 %v6565, %v6469
        %v6598 = vadd.f32 %v6566, %v6457
        %v6599 = vadd.f32 %v6567, %v6461
        %v6600 = vadd.f32 %v6568, %v6465
        %v6601 = vadd.f32 %v6569, %v6469
        %v6602 = vmax.f32 %v6570, 0.0
        %v6603 = vmax.f32 %v6571, 0.0
        %v6604 = vmax.f32 %v6572, 0.0
        %v6605 = vmax.f32 %v6573, 0.0
        %v6606 = vmax.f32 %v6574, 0.0
        %v6607 = vmax.f32 %v6575, 0.0
        %v6608 = vmax.f32 %v6576, 0.0
        %v6609 = vmax.f32 %v6577, 0.0
        %v6610 = vmax.f32 %v6578, 0.0
        %v6611 = vmax.f32 %v6579, 0.0
        %v6612 = vmax.f32 %v6580, 0.0
        %v6613 = vmax.f32 %v6581, 0.0
        %v6614 = vmax.f32 %v6582, 0.0
        %v6615 = vmax.f32 %v6583, 0.0
        %v6616 = vmax.f32 %v6584, 0.0
        %v6617 = vmax.f32 %v6585, 0.0
        %v6618 = vmax.f32 %v6586, 0.0
        %v6619 = vmax.f32 %v6587, 0.0
        %v6620 = vmax.f32 %v6588, 0.0
        %v6621 = vmax.f32 %v6589, 0.0
        %v6622 = vmax.f32 %v6590, 0.0
        %v6623 = vmax.f32 %v6591, 0.0
        %v6624 = vmax.f32 %v6592, 0.0
        %v6625 = vmax.f32 %v6593, 0.0
        %v6626 = vmax.f32 %v6594, 0.0
        %v6627 = vmax.f32 %v6595, 0.0
        %v6628 = vmax.f32 %v6596, 0.0
        %v6629 = vmax.f32 %v6597, 0.0
        %v6630 = vmax.f32 %v6598, 0.0
        %v6631 = vmax.f32 %v6599, 0.0
        %v6632 = vmax.f32 %v6600, 0.0
        %v6633 = vmax.f32 %v6601, 0.0
        %v6634 = vmax.f32 %v6506, %v6508
        %v6635 = vmax.f32 %v6507, %v6509
        %v6636 = vmax.f32 %v6510, %v6512
        %v6637 = vmax.f32 %v6511, %v6513
        %v6638 = vmax.f32 %v6514, %v6516
        %v6639 = vmax.f32 %v6515, %v6517
        %v6640 = vmax.f32 %v6518, %v6520
        %v6641 = vmax.f32 %v6519, %v6521
        %v6642 = vmax.f32 %v6522, %v6524
        %v6643 = vmax.f32 %v6523, %v6525
        %v6644 = vmax.f32 %v6526, %v6528
        %v6645 = vmax.f32 %v6527, %v6529
        %v6646 = vmax.f32 %v6530, %v6532
        %v6647 = vmax.f32 %v6531, %v6533
        %v6648 = vmax.f32 %v6534, %v6536
        %v6649 = vmax.f32 %v6535, %v6537
        %v6650 = vmax.f32 %v6602, %v6604
        %v6651 = vmax.f32 %v6603, %v6605
        %v6652 = vmax.f32 %v6606, %v6608
        %v6653 = vmax.f32 %v6607, %v6609
        %v6654 = vmax.f32 %v6610, %v6612
        %v6655 = vmax.f32 %v6611, %v6613
        %v6656 = vmax.f32 %v6614, %v6616
        %v6657 = vmax.f32 %v6615, %v6617
        %v6658 = vmax.f32 %v6618, %v6620
        %v6659 = vmax.f32 %v6619, %v6621
        %v6660 = vmax.f32 %v6622, %v6624
        %v6661 = vmax.f32 %v6623, %v6625
        %v6662 = vmax.f32 %v6626, %v6628
        %v6663 = vmax.f32 %v6627, %v6629
        %v6664 = vmax.f32 %v6630, %v6632
        %v6665 = vmax.f32 %v6631, %v6633
        %v6666 = vmax.f32 %v6634, %v6650
        %v6667 = vmax.f32 %v6635, %v6651
        %v6668 = vmax.f32 %v6636, %v6652
        %v6669 = vmax.f32 %v6637, %v6653
        %v6670 = vmax.f32 %v6638, %v6654
        %v6671 = vmax.f32 %v6639, %v6655
        %v6672 = vmax.f32 %v6640, %v6656
        %v6673 = vmax.f32 %v6641, %v6657
        %v6674 = vmax.f32 %v6642, %v6658
        %v6675 = vmax.f32 %v6643, %v6659
        %v6676 = vmax.f32 %v6644, %v6660
        %v6677 = vmax.f32 %v6645, %v6661
        %v6678 = vmax.f32 %v6646, %v6662
        %v6679 = vmax.f32 %v6647, %v6663
        %v6680 = vmax.f32 %v6648, %v6664
        %v6681 = vmax.f32 %v6649, %v6665
        %v6698 = vrot.slane %v6668, 7
        %vm6699 = vcmask 1041409
        %v6700 = vsel %vm6699, %v6698, %v6666
        %v6701 = vrot.slane %v6670, 6
        %vm6702 = vcmask 1042434
        %v6703 = vsel %vm6702, %v6701, %v6700
        %v6704 = vrot.slane %v6672, 5
        %vm6705 = vcmask 1043459
        %v6706 = vsel %vm6705, %v6704, %v6703
        %v6707 = vrot.slane %v6674, 4
        %vm6708 = vcmask 1044484
        %v6709 = vsel %vm6708, %v6707, %v6706
        %v6710 = vrot.slane %v6676, 3
        %vm6711 = vcmask 1045509
        %v6712 = vsel %vm6711, %v6710, %v6709
        %v6713 = vrot.slane %v6678, 2
        %vm6714 = vcmask 1046534
        %v6715 = vsel %vm6714, %v6713, %v6712
        %v6716 = vrot.slane %v6680, 1
        %vm6717 = vcmask 1047559
        %v6718 = vsel %vm6717, %v6716, %v6715
        %v6719 = vrot.slane %v6669, 7
        %v6720 = vsel %vm6699, %v6719, %v6667
        %v6721 = vrot.slane %v6671, 6
        %v6722 = vsel %vm6702, %v6721, %v6720
        %v6723 = vrot.slane %v6673, 5
        %v6724 = vsel %vm6705, %v6723, %v6722
        %v6725 = vrot.slane %v6675, 4
        %v6726 = vsel %vm6708, %v6725, %v6724
        %v6727 = vrot.slane %v6677, 3
        %v6728 = vsel %vm6711, %v6727, %v6726
        %v6729 = vrot.slane %v6679, 2
        %v6730 = vsel %vm6714, %v6729, %v6728
        %v6731 = vrot.slane %v6681, 1
        %v6732 = vsel %vm6717, %v6731, %v6730
        %v6735 = vrot.slane %v6666, 1
        %v6736 = vsel %vm6699, %v6668, %v6735
        %v6737 = vrot.slane %v6670, 7
        %v6738 = vsel %vm6702, %v6737, %v6736
        %v6739 = vrot.slane %v6672, 6
        %v6740 = vsel %vm6705, %v6739, %v6738
        %v6741 = vrot.slane %v6674, 5
        %v6742 = vsel %vm6708, %v6741, %v6740
        %v6743 = vrot.slane %v6676, 4
        %v6744 = vsel %vm6711, %v6743, %v6742
        %v6745 = vrot.slane %v6678, 3
        %v6746 = vsel %vm6714, %v6745, %v6744
        %v6747 = vrot.slane %v6680, 2
        %v6748 = vsel %vm6717, %v6747, %v6746
        %v6749 = vrot.slane %v6667, 1
        %v6750 = vsel %vm6699, %v6669, %v6749
        %v6751 = vrot.slane %v6671, 7
        %v6752 = vsel %vm6702, %v6751, %v6750
        %v6753 = vrot.slane %v6673, 6
        %v6754 = vsel %vm6705, %v6753, %v6752
        %v6755 = vrot.slane %v6675, 5
        %v6756 = vsel %vm6708, %v6755, %v6754
        %v6757 = vrot.slane %v6677, 4
        %v6758 = vsel %vm6711, %v6757, %v6756
        %v6759 = vrot.slane %v6679, 3
        %v6760 = vsel %vm6714, %v6759, %v6758
        %v6761 = vrot.slane %v6681, 2
        %v6762 = vsel %vm6717, %v6761, %v6760
        %v6765 = vrot.slane %v6666, 2
        %v6766 = vrot.slane %v6668, 1
        %v6767 = vsel %vm6699, %v6766, %v6765
        %v6768 = vsel %vm6702, %v6670, %v6767
        %v6769 = vrot.slane %v6672, 7
        %v6770 = vsel %vm6705, %v6769, %v6768
        %v6771 = vrot.slane %v6674, 6
        %v6772 = vsel %vm6708, %v6771, %v6770
        %v6773 = vrot.slane %v6676, 5
        %v6774 = vsel %vm6711, %v6773, %v6772
        %v6775 = vrot.slane %v6678, 4
        %v6776 = vsel %vm6714, %v6775, %v6774
        %v6777 = vrot.slane %v6680, 3
        %v6778 = vsel %vm6717, %v6777, %v6776
        %v6779 = vrot.slane %v6667, 2
        %v6780 = vrot.slane %v6669, 1
        %v6781 = vsel %vm6699, %v6780, %v6779
        %v6782 = vsel %vm6702, %v6671, %v6781
        %v6783 = vrot.slane %v6673, 7
        %v6784 = vsel %vm6705, %v6783, %v6782
        %v6785 = vrot.slane %v6675, 6
        %v6786 = vsel %vm6708, %v6785, %v6784
        %v6787 = vrot.slane %v6677, 5
        %v6788 = vsel %vm6711, %v6787, %v6786
        %v6789 = vrot.slane %v6679, 4
        %v6790 = vsel %vm6714, %v6789, %v6788
        %v6791 = vrot.slane %v6681, 3
        %v6792 = vsel %vm6717, %v6791, %v6790
        %v6795 = vrot.slane %v6666, 3
        %v6796 = vrot.slane %v6668, 2
        %v6797 = vsel %vm6699, %v6796, %v6795
        %v6798 = vrot.slane %v6670, 1
        %v6799 = vsel %vm6702, %v6798, %v6797
        %v6800 = vsel %vm6705, %v6672, %v6799
        %v6801 = vrot.slane %v6674, 7
        %v6802 = vsel %vm6708, %v6801, %v6800
        %v6803 = vrot.slane %v6676, 6
        %v6804 = vsel %vm6711, %v6803, %v6802
        %v6805 = vrot.slane %v6678, 5
        %v6806 = vsel %vm6714, %v6805, %v6804
        %v6807 = vrot.slane %v6680, 4
        %v6808 = vsel %vm6717, %v6807, %v6806
        %v6809 = vrot.slane %v6667, 3
        %v6810 = vrot.slane %v6669, 2
        %v6811 = vsel %vm6699, %v6810, %v6809
        %v6812 = vrot.slane %v6671, 1
        %v6813 = vsel %vm6702, %v6812, %v6811
        %v6814 = vsel %vm6705, %v6673, %v6813
        %v6815 = vrot.slane %v6675, 7
        %v6816 = vsel %vm6708, %v6815, %v6814
        %v6817 = vrot.slane %v6677, 6
        %v6818 = vsel %vm6711, %v6817, %v6816
        %v6819 = vrot.slane %v6679, 5
        %v6820 = vsel %vm6714, %v6819, %v6818
        %v6821 = vrot.slane %v6681, 4
        %v6822 = vsel %vm6717, %v6821, %v6820
        %v6825 = vrot.slane %v6666, 4
        %v6826 = vrot.slane %v6668, 3
        %v6827 = vsel %vm6699, %v6826, %v6825
        %v6828 = vrot.slane %v6670, 2
        %v6829 = vsel %vm6702, %v6828, %v6827
        %v6830 = vrot.slane %v6672, 1
        %v6831 = vsel %vm6705, %v6830, %v6829
        %v6832 = vsel %vm6708, %v6674, %v6831
        %v6833 = vrot.slane %v6676, 7
        %v6834 = vsel %vm6711, %v6833, %v6832
        %v6835 = vrot.slane %v6678, 6
        %v6836 = vsel %vm6714, %v6835, %v6834
        %v6837 = vrot.slane %v6680, 5
        %v6838 = vsel %vm6717, %v6837, %v6836
        %v6839 = vrot.slane %v6667, 4
        %v6840 = vrot.slane %v6669, 3
        %v6841 = vsel %vm6699, %v6840, %v6839
        %v6842 = vrot.slane %v6671, 2
        %v6843 = vsel %vm6702, %v6842, %v6841
        %v6844 = vrot.slane %v6673, 1
        %v6845 = vsel %vm6705, %v6844, %v6843
        %v6846 = vsel %vm6708, %v6675, %v6845
        %v6847 = vrot.slane %v6677, 7
        %v6848 = vsel %vm6711, %v6847, %v6846
        %v6849 = vrot.slane %v6679, 6
        %v6850 = vsel %vm6714, %v6849, %v6848
        %v6851 = vrot.slane %v6681, 5
        %v6852 = vsel %vm6717, %v6851, %v6850
        %v6855 = vrot.slane %v6666, 5
        %v6856 = vrot.slane %v6668, 4
        %v6857 = vsel %vm6699, %v6856, %v6855
        %v6858 = vrot.slane %v6670, 3
        %v6859 = vsel %vm6702, %v6858, %v6857
        %v6860 = vrot.slane %v6672, 2
        %v6861 = vsel %vm6705, %v6860, %v6859
        %v6862 = vrot.slane %v6674, 1
        %v6863 = vsel %vm6708, %v6862, %v6861
        %v6864 = vsel %vm6711, %v6676, %v6863
        %v6865 = vrot.slane %v6678, 7
        %v6866 = vsel %vm6714, %v6865, %v6864
        %v6867 = vrot.slane %v6680, 6
        %v6868 = vsel %vm6717, %v6867, %v6866
        %v6869 = vrot.slane %v6667, 5
        %v6870 = vrot.slane %v6669, 4
        %v6871 = vsel %vm6699, %v6870, %v6869
        %v6872 = vrot.slane %v6671, 3
        %v6873 = vsel %vm6702, %v6872, %v6871
        %v6874 = vrot.slane %v6673, 2
        %v6875 = vsel %vm6705, %v6874, %v6873
        %v6876 = vrot.slane %v6675, 1
        %v6877 = vsel %vm6708, %v6876, %v6875
        %v6878 = vsel %vm6711, %v6677, %v6877
        %v6879 = vrot.slane %v6679, 7
        %v6880 = vsel %vm6714, %v6879, %v6878
        %v6881 = vrot.slane %v6681, 6
        %v6882 = vsel %vm6717, %v6881, %v6880
        %v6885 = vrot.slane %v6666, 6
        %v6886 = vrot.slane %v6668, 5
        %v6887 = vsel %vm6699, %v6886, %v6885
        %v6888 = vrot.slane %v6670, 4
        %v6889 = vsel %vm6702, %v6888, %v6887
        %v6890 = vrot.slane %v6672, 3
        %v6891 = vsel %vm6705, %v6890, %v6889
        %v6892 = vrot.slane %v6674, 2
        %v6893 = vsel %vm6708, %v6892, %v6891
        %v6894 = vrot.slane %v6676, 1
        %v6895 = vsel %vm6711, %v6894, %v6893
        %v6896 = vsel %vm6714, %v6678, %v6895
        %v6897 = vrot.slane %v6680, 7
        %v6898 = vsel %vm6717, %v6897, %v6896
        %v6899 = vrot.slane %v6667, 6
        %v6900 = vrot.slane %v6669, 5
        %v6901 = vsel %vm6699, %v6900, %v6899
        %v6902 = vrot.slane %v6671, 4
        %v6903 = vsel %vm6702, %v6902, %v6901
        %v6904 = vrot.slane %v6673, 3
        %v6905 = vsel %vm6705, %v6904, %v6903
        %v6906 = vrot.slane %v6675, 2
        %v6907 = vsel %vm6708, %v6906, %v6905
        %v6908 = vrot.slane %v6677, 1
        %v6909 = vsel %vm6711, %v6908, %v6907
        %v6910 = vsel %vm6714, %v6679, %v6909
        %v6911 = vrot.slane %v6681, 7
        %v6912 = vsel %vm6717, %v6911, %v6910
        %v6915 = vpack.c.bf16 %v6718, %v6718
        %v6916 = vpack.c.bf16 %v6732, %v6732
        %v6917 = vpack.c.bf16 %v6748, %v6748
        %v6918 = vpack.c.bf16 %v6762, %v6762
        %v6919 = vpack.c.bf16 %v6778, %v6778
        %v6920 = vpack.c.bf16 %v6792, %v6792
        %v6921 = vpack.c.bf16 %v6808, %v6808
        %v6922 = vpack.c.bf16 %v6822, %v6822
        %v6923 = vpack.c.bf16 %v6838, %v6838
        %v6924 = vpack.c.bf16 %v6852, %v6852
        %v6925 = vpack.c.bf16 %v6868, %v6868
        %v6926 = vpack.c.bf16 %v6882, %v6882
        %v6927 = vpack.c.bf16 %v6898, %v6898
        %v6928 = vpack.c.bf16 %v6912, %v6912
        %v6929 = vld [vmem:[%s7] sm:$0xf]
        %v6930 = vld [vmem:[%s7 + $0x4] sm:$0xf]
        %v6931 = vld [vmem:[%s7 + $0x8] sm:$0xf]
        %v6932 = vld [vmem:[%s7 + $0xc] sm:$0xf]
        %v6933 = vld [vmem:[%s7 + $0x10] sm:$0xf]
        %v6934 = vld [vmem:[%s7 + $0x14] sm:$0xf]
        %v6935 = vld [vmem:[%s7 + $0x18] sm:$0xf]
        %v6936 = vld [vmem:[%s7 + $0x1c] sm:$0xf]
        %v6937 = vld [vmem:[%s7 + $0x20] sm:$0xf]
        %v6938 = vld [vmem:[%s7 + $0x24] sm:$0xf]
        %v6939 = vld [vmem:[%s7 + $0x28] sm:$0xf]
        %v6940 = vld [vmem:[%s7 + $0x2c] sm:$0xf]
        %v6941 = vld [vmem:[%s7 + $0x30] sm:$0xf]
        %v6942 = vld [vmem:[%s7 + $0x34] sm:$0xf]
        %v6943 = vld [vmem:[%s7 + $0x38] sm:$0xf]
        %v6944 = vld [vmem:[%s7 + $0x3c] sm:$0xf]
        %v6945 = vld [vmem:[%s7 + $0x40] sm:$0xf]
        %v6946 = vld [vmem:[%s7 + $0x44] sm:$0xf]
        %v6947 = vld [vmem:[%s7 + $0x48] sm:$0xf]
        %v6948 = vld [vmem:[%s7 + $0x4c] sm:$0xf]
        %v6949 = vld [vmem:[%s7 + $0x50] sm:$0xf]
        %v6950 = vld [vmem:[%s7 + $0x54] sm:$0xf]
        %v6951 = vld [vmem:[%s7 + $0x58] sm:$0xf]
        %v6952 = vld [vmem:[%s7 + $0x5c] sm:$0xf]
        %v6953 = vld [vmem:[%s7 + $0x60] sm:$0xf]
        %v6954 = vld [vmem:[%s7 + $0x64] sm:$0xf]
        %v6955 = vld [vmem:[%s7 + $0x68] sm:$0xf]
        %v6956 = vld [vmem:[%s7 + $0x6c] sm:$0xf]
        %v6957 = vld [vmem:[%s7 + $0x70] sm:$0xf]
        %v6958 = vld [vmem:[%s7 + $0x74] sm:$0xf]
        %v6959 = vld [vmem:[%s7 + $0x78] sm:$0xf]
        %v6960 = vld [vmem:[%s7 + $0x7c] sm:$0xf]
        %v6961 = vld [vmem:[%s7 + $0x80] sm:$0xf]
        %v6962 = vld [vmem:[%s7 + $0x84] sm:$0xf]
        %v6963 = vld [vmem:[%s7 + $0x88] sm:$0xf]
        %v6964 = vld [vmem:[%s7 + $0x8c] sm:$0xf]
        %v6965 = vld [vmem:[%s7 + $0x90] sm:$0xf]
        %v6966 = vld [vmem:[%s7 + $0x94] sm:$0xf]
        %v6967 = vld [vmem:[%s7 + $0x98] sm:$0xf]
        %v6968 = vld [vmem:[%s7 + $0x9c] sm:$0xf]
        %v6969 = vld [vmem:[%s7 + $0xa0] sm:$0xf]
        %v6970 = vld [vmem:[%s7 + $0xa4] sm:$0xf]
        %v6971 = vld [vmem:[%s7 + $0xa8] sm:$0xf]
        %v6972 = vld [vmem:[%s7 + $0xac] sm:$0xf]
        %v6973 = vld [vmem:[%s7 + $0xb0] sm:$0xf]
        %v6974 = vld [vmem:[%s7 + $0xb4] sm:$0xf]
        %v6975 = vld [vmem:[%s7 + $0xb8] sm:$0xf]
        %v6976 = vld [vmem:[%s7 + $0xbc] sm:$0xf]
        %v6977 = vld [vmem:[%s7 + $0xc0] sm:$0xf]
        %v6978 = vld [vmem:[%s7 + $0xc4] sm:$0xf]
        %v6979 = vld [vmem:[%s7 + $0xc8] sm:$0xf]
        %v6980 = vld [vmem:[%s7 + $0xcc] sm:$0xf]
        %v6981 = vld [vmem:[%s7 + $0xd0] sm:$0xf]
        %v6982 = vld [vmem:[%s7 + $0xd4] sm:$0xf]
        %v6983 = vld [vmem:[%s7 + $0xd8] sm:$0xf]
        %v6984 = vld [vmem:[%s7 + $0xdc] sm:$0xf]
        %v6985 = vld [vmem:[%s7 + $0xe0] sm:$0xf]
        %v6986 = vld [vmem:[%s7 + $0xe4] sm:$0xf]
        %v6987 = vld [vmem:[%s7 + $0xe8] sm:$0xf]
        %v6988 = vld [vmem:[%s7 + $0xec] sm:$0xf]
        %v6989 = vld [vmem:[%s7 + $0xf0] sm:$0xf]
        %v6990 = vld [vmem:[%s7 + $0xf4] sm:$0xf]
        %v6991 = vld [vmem:[%s7 + $0xf8] sm:$0xf]
        %v6992 = vld [vmem:[%s7 + $0xfc] sm:$0xf]
        %v6993 = vld [vmem:[%s7 + $0x100] sm:$0xf]
        %v6994 = vld [vmem:[%s7 + $0x104] sm:$0xf]
        %v6995 = vld [vmem:[%s7 + $0x108] sm:$0xf]
        %v6996 = vld [vmem:[%s7 + $0x10c] sm:$0xf]
        %v6997 = vld [vmem:[%s7 + $0x110] sm:$0xf]
        %v6998 = vld [vmem:[%s7 + $0x114] sm:$0xf]
        %v6999 = vld [vmem:[%s7 + $0x118] sm:$0xf]
        %v7000 = vld [vmem:[%s7 + $0x11c] sm:$0xf]
        %v7001 = vld [vmem:[%s7 + $0x120] sm:$0xf]
        %v7002 = vld [vmem:[%s7 + $0x124] sm:$0xf]
        %v7003 = vld [vmem:[%s7 + $0x128] sm:$0xf]
        %v7004 = vld [vmem:[%s7 + $0x12c] sm:$0xf]
        %v7005 = vld [vmem:[%s7 + $0x130] sm:$0xf]
        %v7006 = vld [vmem:[%s7 + $0x134] sm:$0xf]
        %v7007 = vld [vmem:[%s7 + $0x138] sm:$0xf]
        %v7008 = vld [vmem:[%s7 + $0x13c] sm:$0xf]
        %v7009 = vld [vmem:[%s7 + $0x140] sm:$0xf]
        %v7010 = vld [vmem:[%s7 + $0x144] sm:$0xf]
        %v7011 = vld [vmem:[%s7 + $0x148] sm:$0xf]
        %v7012 = vld [vmem:[%s7 + $0x14c] sm:$0xf]
        %v7013 = vld [vmem:[%s7 + $0x150] sm:$0xf]
        %v7014 = vld [vmem:[%s7 + $0x154] sm:$0xf]
        %v7015 = vld [vmem:[%s7 + $0x158] sm:$0xf]
        %v7016 = vld [vmem:[%s7 + $0x15c] sm:$0xf]
        %v7017 = vld [vmem:[%s7 + $0x160] sm:$0xf]
        %v7018 = vld [vmem:[%s7 + $0x164] sm:$0xf]
        %v7019 = vld [vmem:[%s7 + $0x168] sm:$0xf]
        %v7020 = vld [vmem:[%s7 + $0x16c] sm:$0xf]
        %v7021 = vld [vmem:[%s7 + $0x170] sm:$0xf]
        %v7022 = vld [vmem:[%s7 + $0x174] sm:$0xf]
        %v7023 = vld [vmem:[%s7 + $0x178] sm:$0xf]
        %v7024 = vld [vmem:[%s7 + $0x17c] sm:$0xf]
        %v7025 = vld [vmem:[%s7 + $0x180] sm:$0xf]
        %v7026 = vld [vmem:[%s7 + $0x184] sm:$0xf]
        %v7027 = vld [vmem:[%s7 + $0x188] sm:$0xf]
        %v7028 = vld [vmem:[%s7 + $0x18c] sm:$0xf]
        %v7029 = vld [vmem:[%s7 + $0x190] sm:$0xf]
        %v7030 = vld [vmem:[%s7 + $0x194] sm:$0xf]
        %v7031 = vld [vmem:[%s7 + $0x198] sm:$0xf]
        %v7032 = vld [vmem:[%s7 + $0x19c] sm:$0xf]
        %v7033 = vld [vmem:[%s7 + $0x1a0] sm:$0xf]
        %v7034 = vld [vmem:[%s7 + $0x1a4] sm:$0xf]
        %v7035 = vld [vmem:[%s7 + $0x1a8] sm:$0xf]
        %v7036 = vld [vmem:[%s7 + $0x1ac] sm:$0xf]
        %v7037 = vld [vmem:[%s7 + $0x1b0] sm:$0xf]
        %v7038 = vld [vmem:[%s7 + $0x1b4] sm:$0xf]
        %v7039 = vld [vmem:[%s7 + $0x1b8] sm:$0xf]
        %v7040 = vld [vmem:[%s7 + $0x1bc] sm:$0xf]
        %v7041 = vld [vmem:[%s7 + $0x1c0] sm:$0xf]
        %v7042 = vld [vmem:[%s7 + $0x1c4] sm:$0xf]
        %v7043 = vld [vmem:[%s7 + $0x1c8] sm:$0xf]
        %v7044 = vld [vmem:[%s7 + $0x1cc] sm:$0xf]
        %v7045 = vld [vmem:[%s7 + $0x1d0] sm:$0xf]
        %v7046 = vld [vmem:[%s7 + $0x1d4] sm:$0xf]
        %v7047 = vld [vmem:[%s7 + $0x1d8] sm:$0xf]
        %v7048 = vld [vmem:[%s7 + $0x1dc] sm:$0xf]
        %v7049 = vld [vmem:[%s7 + $0x1e0] sm:$0xf]
        %v7050 = vld [vmem:[%s7 + $0x1e4] sm:$0xf]
        %v7051 = vld [vmem:[%s7 + $0x1e8] sm:$0xf]
        %v7052 = vld [vmem:[%s7 + $0x1ec] sm:$0xf]
        %v7053 = vld [vmem:[%s7 + $0x1f0] sm:$0xf]
        %v7054 = vld [vmem:[%s7 + $0x1f4] sm:$0xf]
        %v7055 = vld [vmem:[%s7 + $0x1f8] sm:$0xf]
        %v7056 = vld [vmem:[%s7 + $0x1fc] sm:$0xf]
        %v7057 = vld [vmem:[%s7 + $0x200] sm:$0xf]
        %v7058 = vld [vmem:[%s7 + $0x204] sm:$0xf]
        %v7059 = vld [vmem:[%s7 + $0x208] sm:$0xf]
        %v7060 = vld [vmem:[%s7 + $0x20c] sm:$0xf]
        %v7061 = vld [vmem:[%s7 + $0x210] sm:$0xf]
        %v7062 = vld [vmem:[%s7 + $0x214] sm:$0xf]
        %v7063 = vld [vmem:[%s7 + $0x218] sm:$0xf]
        %v7064 = vld [vmem:[%s7 + $0x21c] sm:$0xf]
        %v7065 = vld [vmem:[%s7 + $0x220] sm:$0xf]
        %v7066 = vld [vmem:[%s7 + $0x224] sm:$0xf]
        %v7067 = vld [vmem:[%s7 + $0x228] sm:$0xf]
        %v7068 = vld [vmem:[%s7 + $0x22c] sm:$0xf]
        %v7069 = vld [vmem:[%s7 + $0x230] sm:$0xf]
        %v7070 = vld [vmem:[%s7 + $0x234] sm:$0xf]
        %v7071 = vld [vmem:[%s7 + $0x238] sm:$0xf]
        %v7072 = vld [vmem:[%s7 + $0x23c] sm:$0xf]
        %v7073 = vld [vmem:[%s7 + $0x240] sm:$0xf]
        %v7074 = vld [vmem:[%s7 + $0x244] sm:$0xf]
        %v7075 = vld [vmem:[%s7 + $0x248] sm:$0xf]
        %v7076 = vld [vmem:[%s7 + $0x24c] sm:$0xf]
        %v7077 = vld [vmem:[%s7 + $0x250] sm:$0xf]
        %v7078 = vld [vmem:[%s7 + $0x254] sm:$0xf]
        %v7079 = vld [vmem:[%s7 + $0x258] sm:$0xf]
        %v7080 = vld [vmem:[%s7 + $0x25c] sm:$0xf]
        %v7081 = vld [vmem:[%s7 + $0x260] sm:$0xf]
        %v7082 = vld [vmem:[%s7 + $0x264] sm:$0xf]
        %v7083 = vld [vmem:[%s7 + $0x268] sm:$0xf]
        %v7084 = vld [vmem:[%s7 + $0x26c] sm:$0xf]
        %v7085 = vld [vmem:[%s7 + $0x270] sm:$0xf]
        %v7086 = vld [vmem:[%s7 + $0x274] sm:$0xf]
        %v7087 = vld [vmem:[%s7 + $0x278] sm:$0xf]
        %v7088 = vld [vmem:[%s7 + $0x27c] sm:$0xf]
        %v7089 = vld [vmem:[%s7 + $0x280] sm:$0xf]
        %v7090 = vld [vmem:[%s7 + $0x284] sm:$0xf]
        %v7091 = vld [vmem:[%s7 + $0x288] sm:$0xf]
        %v7092 = vld [vmem:[%s7 + $0x28c] sm:$0xf]
        %v7093 = vld [vmem:[%s7 + $0x290] sm:$0xf]
        %v7094 = vld [vmem:[%s7 + $0x294] sm:$0xf]
        %v7095 = vld [vmem:[%s7 + $0x298] sm:$0xf]
        %v7096 = vld [vmem:[%s7 + $0x29c] sm:$0xf]
        %v7097 = vld [vmem:[%s7 + $0x2a0] sm:$0xf]
        %v7098 = vld [vmem:[%s7 + $0x2a4] sm:$0xf]
        %v7099 = vld [vmem:[%s7 + $0x2a8] sm:$0xf]
        %v7100 = vld [vmem:[%s7 + $0x2ac] sm:$0xf]
        %v7101 = vld [vmem:[%s7 + $0x2b0] sm:$0xf]
        %v7102 = vld [vmem:[%s7 + $0x2b4] sm:$0xf]
        %v7103 = vld [vmem:[%s7 + $0x2b8] sm:$0xf]
        %v7104 = vld [vmem:[%s7 + $0x2bc] sm:$0xf]
        %v7105 = vld [vmem:[%s7 + $0x2c0] sm:$0xf]
        %v7106 = vld [vmem:[%s7 + $0x2c4] sm:$0xf]
        %v7107 = vld [vmem:[%s7 + $0x2c8] sm:$0xf]
        %v7108 = vld [vmem:[%s7 + $0x2cc] sm:$0xf]
        %v7109 = vld [vmem:[%s7 + $0x2d0] sm:$0xf]
        %v7110 = vld [vmem:[%s7 + $0x2d4] sm:$0xf]
        %v7111 = vld [vmem:[%s7 + $0x2d8] sm:$0xf]
        %v7112 = vld [vmem:[%s7 + $0x2dc] sm:$0xf]
        %v7113 = vld [vmem:[%s7 + $0x2e0] sm:$0xf]
        %v7114 = vld [vmem:[%s7 + $0x2e4] sm:$0xf]
        %v7115 = vld [vmem:[%s7 + $0x2e8] sm:$0xf]
        %v7116 = vld [vmem:[%s7 + $0x2ec] sm:$0xf]
        %v7117 = vld [vmem:[%s7 + $0x2f0] sm:$0xf]
        %v7118 = vld [vmem:[%s7 + $0x2f4] sm:$0xf]
        %v7119 = vld [vmem:[%s7 + $0x2f8] sm:$0xf]
        %v7120 = vld [vmem:[%s7 + $0x2fc] sm:$0xf]
        %v7121 = vld [vmem:[%s7 + $0x300] sm:$0xf]
        %v7122 = vld [vmem:[%s7 + $0x304] sm:$0xf]
        %v7123 = vld [vmem:[%s7 + $0x308] sm:$0xf]
        %v7124 = vld [vmem:[%s7 + $0x30c] sm:$0xf]
        %v7125 = vld [vmem:[%s7 + $0x310] sm:$0xf]
        %v7126 = vld [vmem:[%s7 + $0x314] sm:$0xf]
        %v7127 = vld [vmem:[%s7 + $0x318] sm:$0xf]
        %v7128 = vld [vmem:[%s7 + $0x31c] sm:$0xf]
        %v7129 = vld [vmem:[%s7 + $0x320] sm:$0xf]
        %v7130 = vld [vmem:[%s7 + $0x324] sm:$0xf]
        %v7131 = vld [vmem:[%s7 + $0x328] sm:$0xf]
        %v7132 = vld [vmem:[%s7 + $0x32c] sm:$0xf]
        %v7133 = vld [vmem:[%s7 + $0x330] sm:$0xf]
        %v7134 = vld [vmem:[%s7 + $0x334] sm:$0xf]
        %v7135 = vld [vmem:[%s7 + $0x338] sm:$0xf]
        %v7136 = vld [vmem:[%s7 + $0x33c] sm:$0xf]
        %v7137 = vld [vmem:[%s7 + $0x340] sm:$0xf]
        %v7138 = vld [vmem:[%s7 + $0x344] sm:$0xf]
        %v7139 = vld [vmem:[%s7 + $0x348] sm:$0xf]
        %v7140 = vld [vmem:[%s7 + $0x34c] sm:$0xf]
        %v7141 = vld [vmem:[%s7 + $0x350] sm:$0xf]
        %v7142 = vld [vmem:[%s7 + $0x354] sm:$0xf]
        %v7143 = vld [vmem:[%s7 + $0x358] sm:$0xf]
        %v7144 = vld [vmem:[%s7 + $0x35c] sm:$0xf]
        %v7145 = vld [vmem:[%s7 + $0x360] sm:$0xf]
        %v7146 = vld [vmem:[%s7 + $0x364] sm:$0xf]
        %v7147 = vld [vmem:[%s7 + $0x368] sm:$0xf]
        %v7148 = vld [vmem:[%s7 + $0x36c] sm:$0xf]
        %v7149 = vld [vmem:[%s7 + $0x370] sm:$0xf]
        %v7150 = vld [vmem:[%s7 + $0x374] sm:$0xf]
        %v7151 = vld [vmem:[%s7 + $0x378] sm:$0xf]
        %v7152 = vld [vmem:[%s7 + $0x37c] sm:$0xf]
        %v7153 = vld [vmem:[%s8] sm:$0x1]
        %v7155 = vlaneseq
        %v7156 = vshrl.u32 %v7155, 7
        %v7157 = vsub.s32 0, %v7156
        %v7158 = vrot.slane %v7153, %v7157
        %v7384 = vunpack.c.l.b16 %v6929
        %v7385 = vunpack.c.l.b16 %v6930
        %v7386 = vunpack.c.l.b16 %v6931
        %v7387 = vunpack.c.l.b16 %v6932
        %v7388 = vunpack.c.l.b16 %v6933
        %v7389 = vunpack.c.l.b16 %v6934
        %v7390 = vunpack.c.l.b16 %v6935
        %v7391 = vunpack.c.l.b16 %v6936
        %v7392 = vunpack.c.l.b16 %v6937
        %v7393 = vunpack.c.l.b16 %v6938
        %v7394 = vunpack.c.l.b16 %v6939
        %v7395 = vunpack.c.l.b16 %v6940
        %v7396 = vunpack.c.l.b16 %v6941
        %v7397 = vunpack.c.l.b16 %v6942
        %v7398 = vunpack.c.l.b16 %v6943
        %v7399 = vunpack.c.l.b16 %v6944
        %v7400 = vunpack.c.l.b16 %v6945
        %v7401 = vunpack.c.l.b16 %v6946
        %v7402 = vunpack.c.l.b16 %v6947
        %v7403 = vunpack.c.l.b16 %v6948
        %v7404 = vunpack.c.l.b16 %v6949
        %v7405 = vunpack.c.l.b16 %v6950
        %v7406 = vunpack.c.l.b16 %v6951
        %v7407 = vunpack.c.l.b16 %v6952
        %v7408 = vunpack.c.l.b16 %v6953
        %v7409 = vunpack.c.l.b16 %v6954
        %v7410 = vunpack.c.l.b16 %v6955
        %v7411 = vunpack.c.l.b16 %v6956
        %v7412 = vunpack.c.l.b16 %v6957
        %v7413 = vunpack.c.l.b16 %v6958
        %v7414 = vunpack.c.l.b16 %v6959
        %v7415 = vunpack.c.l.b16 %v6960
        %v7416 = vunpack.c.l.b16 %v6961
        %v7417 = vunpack.c.l.b16 %v6962
        %v7418 = vunpack.c.l.b16 %v6963
        %v7419 = vunpack.c.l.b16 %v6964
        %v7420 = vunpack.c.l.b16 %v6965
        %v7421 = vunpack.c.l.b16 %v6966
        %v7422 = vunpack.c.l.b16 %v6967
        %v7423 = vunpack.c.l.b16 %v6968
        %v7424 = vunpack.c.l.b16 %v6969
        %v7425 = vunpack.c.l.b16 %v6970
        %v7426 = vunpack.c.l.b16 %v6971
        %v7427 = vunpack.c.l.b16 %v6972
        %v7428 = vunpack.c.l.b16 %v6973
        %v7429 = vunpack.c.l.b16 %v6974
        %v7430 = vunpack.c.l.b16 %v6975
        %v7431 = vunpack.c.l.b16 %v6976
        %v7432 = vunpack.c.l.b16 %v6977
        %v7433 = vunpack.c.l.b16 %v6978
        %v7434 = vunpack.c.l.b16 %v6979
        %v7435 = vunpack.c.l.b16 %v6980
        %v7436 = vunpack.c.l.b16 %v6981
        %v7437 = vunpack.c.l.b16 %v6982
        %v7438 = vunpack.c.l.b16 %v6983
        %v7439 = vunpack.c.l.b16 %v6984
        %v7440 = vunpack.c.l.b16 %v6985
        %v7441 = vunpack.c.l.b16 %v6986
        %v7442 = vunpack.c.l.b16 %v6987
        %v7443 = vunpack.c.l.b16 %v6988
        %v7444 = vunpack.c.l.b16 %v6989
        %v7445 = vunpack.c.l.b16 %v6990
        %v7446 = vunpack.c.l.b16 %v6991
        %v7447 = vunpack.c.l.b16 %v6992
        %v7448 = vunpack.c.l.b16 %v6993
        %v7449 = vunpack.c.l.b16 %v6994
        %v7450 = vunpack.c.l.b16 %v6995
        %v7451 = vunpack.c.l.b16 %v6996
        %v7452 = vunpack.c.l.b16 %v6997
        %v7453 = vunpack.c.l.b16 %v6998
        %v7454 = vunpack.c.l.b16 %v6999
        %v7455 = vunpack.c.l.b16 %v7000
        %v7456 = vunpack.c.l.b16 %v7001
        %v7457 = vunpack.c.l.b16 %v7002
        %v7458 = vunpack.c.l.b16 %v7003
        %v7459 = vunpack.c.l.b16 %v7004
        %v7460 = vunpack.c.l.b16 %v7005
        %v7461 = vunpack.c.l.b16 %v7006
        %v7462 = vunpack.c.l.b16 %v7007
        %v7463 = vunpack.c.l.b16 %v7008
        %v7464 = vunpack.c.l.b16 %v7009
        %v7465 = vunpack.c.l.b16 %v7010
        %v7466 = vunpack.c.l.b16 %v7011
        %v7467 = vunpack.c.l.b16 %v7012
        %v7468 = vunpack.c.l.b16 %v7013
        %v7469 = vunpack.c.l.b16 %v7014
        %v7470 = vunpack.c.l.b16 %v7015
        %v7471 = vunpack.c.l.b16 %v7016
        %v7472 = vunpack.c.l.b16 %v7017
        %v7473 = vunpack.c.l.b16 %v7018
        %v7474 = vunpack.c.l.b16 %v7019
        %v7475 = vunpack.c.l.b16 %v7020
        %v7476 = vunpack.c.l.b16 %v7021
        %v7477 = vunpack.c.l.b16 %v7022
        %v7478 = vunpack.c.l.b16 %v7023
        %v7479 = vunpack.c.l.b16 %v7024
        %v7480 = vunpack.c.l.b16 %v7025
        %v7481 = vunpack.c.l.b16 %v7026
        %v7482 = vunpack.c.l.b16 %v7027
        %v7483 = vunpack.c.l.b16 %v7028
        %v7484 = vunpack.c.l.b16 %v7029
        %v7485 = vunpack.c.l.b16 %v7030
        %v7486 = vunpack.c.l.b16 %v7031
        %v7487 = vunpack.c.l.b16 %v7032
        %v7488 = vunpack.c.l.b16 %v7033
        %v7489 = vunpack.c.l.b16 %v7034
        %v7490 = vunpack.c.l.b16 %v7035
        %v7491 = vunpack.c.l.b16 %v7036
        %v7492 = vunpack.c.l.b16 %v7037
        %v7493 = vunpack.c.l.b16 %v7038
        %v7494 = vunpack.c.l.b16 %v7039
        %v7495 = vunpack.c.l.b16 %v7040
        %v7496 = vunpack.c.l.b16 %v7041
        %v7497 = vunpack.c.l.b16 %v7042
        %v7498 = vunpack.c.l.b16 %v7043
        %v7499 = vunpack.c.l.b16 %v7044
        %v7500 = vunpack.c.l.b16 %v7045
        %v7501 = vunpack.c.l.b16 %v7046
        %v7502 = vunpack.c.l.b16 %v7047
        %v7503 = vunpack.c.l.b16 %v7048
        %v7504 = vunpack.c.l.b16 %v7049
        %v7505 = vunpack.c.l.b16 %v7050
        %v7506 = vunpack.c.l.b16 %v7051
        %v7507 = vunpack.c.l.b16 %v7052
        %v7508 = vunpack.c.l.b16 %v7053
        %v7509 = vunpack.c.l.b16 %v7054
        %v7510 = vunpack.c.l.b16 %v7055
        %v7511 = vunpack.c.l.b16 %v7056
        %v7512 = vunpack.c.l.b16 %v7057
        %v7513 = vunpack.c.l.b16 %v7058
        %v7514 = vunpack.c.l.b16 %v7059
        %v7515 = vunpack.c.l.b16 %v7060
        %v7516 = vunpack.c.l.b16 %v7061
        %v7517 = vunpack.c.l.b16 %v7062
        %v7518 = vunpack.c.l.b16 %v7063
        %v7519 = vunpack.c.l.b16 %v7064
        %v7520 = vunpack.c.l.b16 %v7065
        %v7521 = vunpack.c.l.b16 %v7066
        %v7522 = vunpack.c.l.b16 %v7067
        %v7523 = vunpack.c.l.b16 %v7068
        %v7524 = vunpack.c.l.b16 %v7069
        %v7525 = vunpack.c.l.b16 %v7070
        %v7526 = vunpack.c.l.b16 %v7071
        %v7527 = vunpack.c.l.b16 %v7072
        %v7528 = vunpack.c.l.b16 %v7073
        %v7529 = vunpack.c.l.b16 %v7074
        %v7530 = vunpack.c.l.b16 %v7075
        %v7531 = vunpack.c.l.b16 %v7076
        %v7532 = vunpack.c.l.b16 %v7077
        %v7533 = vunpack.c.l.b16 %v7078
        %v7534 = vunpack.c.l.b16 %v7079
        %v7535 = vunpack.c.l.b16 %v7080
        %v7536 = vunpack.c.l.b16 %v7081
        %v7537 = vunpack.c.l.b16 %v7082
        %v7538 = vunpack.c.l.b16 %v7083
        %v7539 = vunpack.c.l.b16 %v7084
        %v7540 = vunpack.c.l.b16 %v7085
        %v7541 = vunpack.c.l.b16 %v7086
        %v7542 = vunpack.c.l.b16 %v7087
        %v7543 = vunpack.c.l.b16 %v7088
        %v7544 = vunpack.c.l.b16 %v7089
        %v7545 = vunpack.c.l.b16 %v7090
        %v7546 = vunpack.c.l.b16 %v7091
        %v7547 = vunpack.c.l.b16 %v7092
        %v7548 = vunpack.c.l.b16 %v7093
        %v7549 = vunpack.c.l.b16 %v7094
        %v7550 = vunpack.c.l.b16 %v7095
        %v7551 = vunpack.c.l.b16 %v7096
        %v7552 = vunpack.c.l.b16 %v7097
        %v7553 = vunpack.c.l.b16 %v7098
        %v7554 = vunpack.c.l.b16 %v7099
        %v7555 = vunpack.c.l.b16 %v7100
        %v7556 = vunpack.c.l.b16 %v7101
        %v7557 = vunpack.c.l.b16 %v7102
        %v7558 = vunpack.c.l.b16 %v7103
        %v7559 = vunpack.c.l.b16 %v7104
        %v7560 = vunpack.c.l.b16 %v7105
        %v7561 = vunpack.c.l.b16 %v7106
        %v7562 = vunpack.c.l.b16 %v7107
        %v7563 = vunpack.c.l.b16 %v7108
        %v7564 = vunpack.c.l.b16 %v7109
        %v7565 = vunpack.c.l.b16 %v7110
        %v7566 = vunpack.c.l.b16 %v7111
        %v7567 = vunpack.c.l.b16 %v7112
        %v7568 = vunpack.c.l.b16 %v7113
        %v7569 = vunpack.c.l.b16 %v7114
        %v7570 = vunpack.c.l.b16 %v7115
        %v7571 = vunpack.c.l.b16 %v7116
        %v7572 = vunpack.c.l.b16 %v7117
        %v7573 = vunpack.c.l.b16 %v7118
        %v7574 = vunpack.c.l.b16 %v7119
        %v7575 = vunpack.c.l.b16 %v7120
        %v7576 = vunpack.c.l.b16 %v7121
        %v7577 = vunpack.c.l.b16 %v7122
        %v7578 = vunpack.c.l.b16 %v7123
        %v7579 = vunpack.c.l.b16 %v7124
        %v7580 = vunpack.c.l.b16 %v7125
        %v7581 = vunpack.c.l.b16 %v7126
        %v7582 = vunpack.c.l.b16 %v7127
        %v7583 = vunpack.c.l.b16 %v7128
        %v7584 = vunpack.c.l.b16 %v7129
        %v7585 = vunpack.c.l.b16 %v7130
        %v7586 = vunpack.c.l.b16 %v7131
        %v7587 = vunpack.c.l.b16 %v7132
        %v7588 = vunpack.c.l.b16 %v7133
        %v7589 = vunpack.c.l.b16 %v7134
        %v7590 = vunpack.c.l.b16 %v7135
        %v7591 = vunpack.c.l.b16 %v7136
        %v7592 = vunpack.c.l.b16 %v7137
        %v7593 = vunpack.c.l.b16 %v7138
        %v7594 = vunpack.c.l.b16 %v7139
        %v7595 = vunpack.c.l.b16 %v7140
        %v7596 = vunpack.c.l.b16 %v7141
        %v7597 = vunpack.c.l.b16 %v7142
        %v7598 = vunpack.c.l.b16 %v7143
        %v7599 = vunpack.c.l.b16 %v7144
        %v7600 = vunpack.c.l.b16 %v7145
        %v7601 = vunpack.c.l.b16 %v7146
        %v7602 = vunpack.c.l.b16 %v7147
        %v7603 = vunpack.c.l.b16 %v7148
        %v7604 = vunpack.c.l.b16 %v7149
        %v7605 = vunpack.c.l.b16 %v7150
        %v7606 = vunpack.c.l.b16 %v7151
        %v7607 = vunpack.c.l.b16 %v7152
        %v7608 = vpack.c.b16 %v7385, %v7384
        %v7609 = vpack.c.b16 %v7387, %v7386
        %v7610 = vpack.c.b16 %v7389, %v7388
        %v7611 = vpack.c.b16 %v7391, %v7390
        %v7612 = vpack.c.b16 %v7393, %v7392
        %v7613 = vpack.c.b16 %v7395, %v7394
        %v7614 = vpack.c.b16 %v7397, %v7396
        %v7615 = vpack.c.b16 %v7399, %v7398
        %v7616 = vpack.c.b16 %v7401, %v7400
        %v7617 = vpack.c.b16 %v7403, %v7402
        %v7618 = vpack.c.b16 %v7405, %v7404
        %v7619 = vpack.c.b16 %v7407, %v7406
        %v7620 = vpack.c.b16 %v7409, %v7408
        %v7621 = vpack.c.b16 %v7411, %v7410
        %v7622 = vpack.c.b16 %v7413, %v7412
        %v7623 = vpack.c.b16 %v7415, %v7414
        %v7624 = vpack.c.b16 %v7417, %v7416
        %v7625 = vpack.c.b16 %v7419, %v7418
        %v7626 = vpack.c.b16 %v7421, %v7420
        %v7627 = vpack.c.b16 %v7423, %v7422
        %v7628 = vpack.c.b16 %v7425, %v7424
        %v7629 = vpack.c.b16 %v7427, %v7426
        %v7630 = vpack.c.b16 %v7429, %v7428
        %v7631 = vpack.c.b16 %v7431, %v7430
        %v7632 = vpack.c.b16 %v7433, %v7432
        %v7633 = vpack.c.b16 %v7435, %v7434
        %v7634 = vpack.c.b16 %v7437, %v7436
        %v7635 = vpack.c.b16 %v7439, %v7438
        %v7636 = vpack.c.b16 %v7441, %v7440
        %v7637 = vpack.c.b16 %v7443, %v7442
        %v7638 = vpack.c.b16 %v7445, %v7444
        %v7639 = vpack.c.b16 %v7447, %v7446
        %v7640 = vpack.c.b16 %v7449, %v7448
        %v7641 = vpack.c.b16 %v7451, %v7450
        %v7642 = vpack.c.b16 %v7453, %v7452
        %v7643 = vpack.c.b16 %v7455, %v7454
        %v7644 = vpack.c.b16 %v7457, %v7456
        %v7645 = vpack.c.b16 %v7459, %v7458
        %v7646 = vpack.c.b16 %v7461, %v7460
        %v7647 = vpack.c.b16 %v7463, %v7462
        %v7648 = vpack.c.b16 %v7465, %v7464
        %v7649 = vpack.c.b16 %v7467, %v7466
        %v7650 = vpack.c.b16 %v7469, %v7468
        %v7651 = vpack.c.b16 %v7471, %v7470
        %v7652 = vpack.c.b16 %v7473, %v7472
        %v7653 = vpack.c.b16 %v7475, %v7474
        %v7654 = vpack.c.b16 %v7477, %v7476
        %v7655 = vpack.c.b16 %v7479, %v7478
        %v7656 = vpack.c.b16 %v7481, %v7480
        %v7657 = vpack.c.b16 %v7483, %v7482
        %v7658 = vpack.c.b16 %v7485, %v7484
        %v7659 = vpack.c.b16 %v7487, %v7486
        %v7660 = vpack.c.b16 %v7489, %v7488
        %v7661 = vpack.c.b16 %v7491, %v7490
        %v7662 = vpack.c.b16 %v7493, %v7492
        %v7663 = vpack.c.b16 %v7495, %v7494
        %v7664 = vpack.c.b16 %v7497, %v7496
        %v7665 = vpack.c.b16 %v7499, %v7498
        %v7666 = vpack.c.b16 %v7501, %v7500
        %v7667 = vpack.c.b16 %v7503, %v7502
        %v7668 = vpack.c.b16 %v7505, %v7504
        %v7669 = vpack.c.b16 %v7507, %v7506
        %v7670 = vpack.c.b16 %v7509, %v7508
        %v7671 = vpack.c.b16 %v7511, %v7510
        %v7672 = vpack.c.b16 %v7513, %v7512
        %v7673 = vpack.c.b16 %v7515, %v7514
        %v7674 = vpack.c.b16 %v7517, %v7516
        %v7675 = vpack.c.b16 %v7519, %v7518
        %v7676 = vpack.c.b16 %v7521, %v7520
        %v7677 = vpack.c.b16 %v7523, %v7522
        %v7678 = vpack.c.b16 %v7525, %v7524
        %v7679 = vpack.c.b16 %v7527, %v7526
        %v7680 = vpack.c.b16 %v7529, %v7528
        %v7681 = vpack.c.b16 %v7531, %v7530
        %v7682 = vpack.c.b16 %v7533, %v7532
        %v7683 = vpack.c.b16 %v7535, %v7534
        %v7684 = vpack.c.b16 %v7537, %v7536
        %v7685 = vpack.c.b16 %v7539, %v7538
        %v7686 = vpack.c.b16 %v7541, %v7540
        %v7687 = vpack.c.b16 %v7543, %v7542
        %v7688 = vpack.c.b16 %v7545, %v7544
        %v7689 = vpack.c.b16 %v7547, %v7546
        %v7690 = vpack.c.b16 %v7549, %v7548
        %v7691 = vpack.c.b16 %v7551, %v7550
        %v7692 = vpack.c.b16 %v7553, %v7552
        %v7693 = vpack.c.b16 %v7555, %v7554
        %v7694 = vpack.c.b16 %v7557, %v7556
        %v7695 = vpack.c.b16 %v7559, %v7558
        %v7696 = vpack.c.b16 %v7561, %v7560
        %v7697 = vpack.c.b16 %v7563, %v7562
        %v7698 = vpack.c.b16 %v7565, %v7564
        %v7699 = vpack.c.b16 %v7567, %v7566
        %v7700 = vpack.c.b16 %v7569, %v7568
        %v7701 = vpack.c.b16 %v7571, %v7570
        %v7702 = vpack.c.b16 %v7573, %v7572
        %v7703 = vpack.c.b16 %v7575, %v7574
        %v7704 = vpack.c.b16 %v7577, %v7576
        %v7705 = vpack.c.b16 %v7579, %v7578
        %v7706 = vpack.c.b16 %v7581, %v7580
        %v7707 = vpack.c.b16 %v7583, %v7582
        %v7708 = vpack.c.b16 %v7585, %v7584
        %v7709 = vpack.c.b16 %v7587, %v7586
        %v7710 = vpack.c.b16 %v7589, %v7588
        %v7711 = vpack.c.b16 %v7591, %v7590
        %v7712 = vpack.c.b16 %v7593, %v7592
        %v7713 = vpack.c.b16 %v7595, %v7594
        %v7714 = vpack.c.b16 %v7597, %v7596
        %v7715 = vpack.c.b16 %v7599, %v7598
        %v7716 = vpack.c.b16 %v7601, %v7600
        %v7717 = vpack.c.b16 %v7603, %v7602
        %v7718 = vpack.c.b16 %v7605, %v7604
        %v7719 = vpack.c.b16 %v7607, %v7606
        %7832 = vmatprep.subr.bf16.mxu0 0
        %7833 = vmatpush1.bf16.msra.mxu0 %v7615
        %7834 = vmatprep.subr.bf16.mxu0 0
        %7835 = vmatpush1.bf16.msra.mxu0 %v7614
        %7836 = vmatprep.subr.bf16.mxu0 0
        %7837 = vmatpush1.bf16.msra.mxu0 %v7613
        %7838 = vmatprep.subr.bf16.mxu0 0
        %7839 = vmatpush1.bf16.msra.mxu0 %v7612
        %7840 = vmatprep.subr.bf16.mxu0 0
        %7841 = vmatpush1.bf16.msra.mxu0 %v7611
        %7842 = vmatprep.subr.bf16.mxu0 0
        %7843 = vmatpush1.bf16.msra.mxu0 %v7610
        %7844 = vmatprep.subr.bf16.mxu0 0
        %7845 = vmatpush1.bf16.msra.mxu0 %v7609
        %7846 = vmatprep.subr.bf16.mxu0 0
        %7847 = vmatpush1.bf16.msra.mxu0 %v7608
        %7848 = vmatprep.subr.bf16.mxu0 0
        %7849 = vmatpush2.bf16.msra.mxu0 %v7623
        %7850 = vmatprep.subr.bf16.mxu0 0
        %7851 = vmatpush2.bf16.msra.mxu0 %v7622
        %7852 = vmatprep.subr.bf16.mxu0 0
        %7853 = vmatpush2.bf16.msra.mxu0 %v7621
        %7854 = vmatprep.subr.bf16.mxu0 0
        %7855 = vmatpush2.bf16.msra.mxu0 %v7620
        %7856 = vmatprep.subr.bf16.mxu0 0
        %7857 = vmatpush2.bf16.msra.mxu0 %v7619
        %7858 = vmatprep.subr.bf16.mxu0 0
        %7859 = vmatpush2.bf16.msra.mxu0 %v7618
        %7860 = vmatprep.subr.bf16.mxu0 0
        %7861 = vmatpush2.bf16.msra.mxu0 %v7617
        %7862 = vmatprep.subr.bf16.mxu0 0
        %7863 = vmatpush2.bf16.msra.mxu0 %v7616
        %7864 = vmatprep.mubr.bf16.mxu0 %v6916
        %7865 = vmatmul.mubr.bf16.gmra.mxu0 %v6915
        %v7866 = vpop.f32.mrf.mxu0
        %v7867 = vadd.f32 %v7158, %v7866
        %v7868 = vpop.f32.mrf.mxu0
        %v7869 = vpop.f32.mrf.mxu0
        %v7870 = vpop.f32.mrf.mxu0
        %7871 = vdwg.mxu0
        %7872 = vmatprep.subr.bf16.mxu0 0
        %7873 = vmatpush1.bf16.msra.mxu0 %v7631
        %7874 = vmatprep.subr.bf16.mxu0 0
        %7875 = vmatpush1.bf16.msra.mxu0 %v7630
        %7876 = vmatprep.subr.bf16.mxu0 0
        %7877 = vmatpush1.bf16.msra.mxu0 %v7629
        %7878 = vmatprep.subr.bf16.mxu0 0
        %7879 = vmatpush1.bf16.msra.mxu0 %v7628
        %7880 = vmatprep.subr.bf16.mxu0 0
        %7881 = vmatpush1.bf16.msra.mxu0 %v7627
        %7882 = vmatprep.subr.bf16.mxu0 0
        %7883 = vmatpush1.bf16.msra.mxu0 %v7626
        %7884 = vmatprep.subr.bf16.mxu0 0
        %7885 = vmatpush1.bf16.msra.mxu0 %v7625
        %7886 = vmatprep.subr.bf16.mxu0 0
        %7887 = vmatpush1.bf16.msra.mxu0 %v7624
        %7888 = vmatprep.subr.bf16.mxu0 0
        %7889 = vmatpush2.bf16.msra.mxu0 %v7639
        %7890 = vmatprep.subr.bf16.mxu0 0
        %7891 = vmatpush2.bf16.msra.mxu0 %v7638
        %7892 = vmatprep.subr.bf16.mxu0 0
        %7893 = vmatpush2.bf16.msra.mxu0 %v7637
        %7894 = vmatprep.subr.bf16.mxu0 0
        %7895 = vmatpush2.bf16.msra.mxu0 %v7636
        %7896 = vmatprep.subr.bf16.mxu0 0
        %7897 = vmatpush2.bf16.msra.mxu0 %v7635
        %7898 = vmatprep.subr.bf16.mxu0 0
        %7899 = vmatpush2.bf16.msra.mxu0 %v7634
        %7900 = vmatprep.subr.bf16.mxu0 0
        %7901 = vmatpush2.bf16.msra.mxu0 %v7633
        %7902 = vmatprep.subr.bf16.mxu0 0
        %7903 = vmatpush2.bf16.msra.mxu0 %v7632
        %7904 = vmatprep.mubr.bf16.mxu0 %v6918
        %7905 = vmatmul.mubr.bf16.gmra.mxu0 %v6917
        %v7906 = vpop.f32.mrf.mxu0
        %v7907 = vadd.f32 %v7867, %v7906
        %v7908 = vpop.f32.mrf.mxu0
        %v7909 = vpop.f32.mrf.mxu0
        %v7910 = vpop.f32.mrf.mxu0
        %7911 = vdwg.mxu0
        %7912 = vmatprep.subr.bf16.mxu0 0
        %7913 = vmatpush1.bf16.msra.mxu0 %v7647
        %7914 = vmatprep.subr.bf16.mxu0 0
        %7915 = vmatpush1.bf16.msra.mxu0 %v7646
        %7916 = vmatprep.subr.bf16.mxu0 0
        %7917 = vmatpush1.bf16.msra.mxu0 %v7645
        %7918 = vmatprep.subr.bf16.mxu0 0
        %7919 = vmatpush1.bf16.msra.mxu0 %v7644
        %7920 = vmatprep.subr.bf16.mxu0 0
        %7921 = vmatpush1.bf16.msra.mxu0 %v7643
        %7922 = vmatprep.subr.bf16.mxu0 0
        %7923 = vmatpush1.bf16.msra.mxu0 %v7642
        %7924 = vmatprep.subr.bf16.mxu0 0
        %7925 = vmatpush1.bf16.msra.mxu0 %v7641
        %7926 = vmatprep.subr.bf16.mxu0 0
        %7927 = vmatpush1.bf16.msra.mxu0 %v7640
        %7928 = vmatprep.subr.bf16.mxu0 0
        %7929 = vmatpush2.bf16.msra.mxu0 %v7655
        %7930 = vmatprep.subr.bf16.mxu0 0
        %7931 = vmatpush2.bf16.msra.mxu0 %v7654
        %7932 = vmatprep.subr.bf16.mxu0 0
        %7933 = vmatpush2.bf16.msra.mxu0 %v7653
        %7934 = vmatprep.subr.bf16.mxu0 0
        %7935 = vmatpush2.bf16.msra.mxu0 %v7652
        %7936 = vmatprep.subr.bf16.mxu0 0
        %7937 = vmatpush2.bf16.msra.mxu0 %v7651
        %7938 = vmatprep.subr.bf16.mxu0 0
        %7939 = vmatpush2.bf16.msra.mxu0 %v7650
        %7940 = vmatprep.subr.bf16.mxu0 0
        %7941 = vmatpush2.bf16.msra.mxu0 %v7649
        %7942 = vmatprep.subr.bf16.mxu0 0
        %7943 = vmatpush2.bf16.msra.mxu0 %v7648
        %7944 = vmatprep.mubr.bf16.mxu0 %v6920
        %7945 = vmatmul.mubr.bf16.gmra.mxu0 %v6919
        %v7946 = vpop.f32.mrf.mxu0
        %v7947 = vadd.f32 %v7907, %v7946
        %v7948 = vpop.f32.mrf.mxu0
        %v7949 = vpop.f32.mrf.mxu0
        %v7950 = vpop.f32.mrf.mxu0
        %7951 = vdwg.mxu0
        %7952 = vmatprep.subr.bf16.mxu0 0
        %7953 = vmatpush1.bf16.msra.mxu0 %v7663
        %7954 = vmatprep.subr.bf16.mxu0 0
        %7955 = vmatpush1.bf16.msra.mxu0 %v7662
        %7956 = vmatprep.subr.bf16.mxu0 0
        %7957 = vmatpush1.bf16.msra.mxu0 %v7661
        %7958 = vmatprep.subr.bf16.mxu0 0
        %7959 = vmatpush1.bf16.msra.mxu0 %v7660
        %7960 = vmatprep.subr.bf16.mxu0 0
        %7961 = vmatpush1.bf16.msra.mxu0 %v7659
        %7962 = vmatprep.subr.bf16.mxu0 0
        %7963 = vmatpush1.bf16.msra.mxu0 %v7658
        %7964 = vmatprep.subr.bf16.mxu0 0
        %7965 = vmatpush1.bf16.msra.mxu0 %v7657
        %7966 = vmatprep.subr.bf16.mxu0 0
        %7967 = vmatpush1.bf16.msra.mxu0 %v7656
        %7968 = vmatprep.subr.bf16.mxu0 0
        %7969 = vmatpush2.bf16.msra.mxu0 %v7671
        %7970 = vmatprep.subr.bf16.mxu0 0
        %7971 = vmatpush2.bf16.msra.mxu0 %v7670
        %7972 = vmatprep.subr.bf16.mxu0 0
        %7973 = vmatpush2.bf16.msra.mxu0 %v7669
        %7974 = vmatprep.subr.bf16.mxu0 0
        %7975 = vmatpush2.bf16.msra.mxu0 %v7668
        %7976 = vmatprep.subr.bf16.mxu0 0
        %7977 = vmatpush2.bf16.msra.mxu0 %v7667
        %7978 = vmatprep.subr.bf16.mxu0 0
        %7979 = vmatpush2.bf16.msra.mxu0 %v7666
        %7980 = vmatprep.subr.bf16.mxu0 0
        %7981 = vmatpush2.bf16.msra.mxu0 %v7665
        %7982 = vmatprep.subr.bf16.mxu0 0
        %7983 = vmatpush2.bf16.msra.mxu0 %v7664
        %7984 = vmatprep.mubr.bf16.mxu0 %v6922
        %7985 = vmatmul.mubr.bf16.gmra.mxu0 %v6921
        %v7986 = vpop.f32.mrf.mxu0
        %v7987 = vadd.f32 %v7947, %v7986
        %v7988 = vpop.f32.mrf.mxu0
        %v7989 = vpop.f32.mrf.mxu0
        %v7990 = vpop.f32.mrf.mxu0
        %7991 = vdwg.mxu0
        %7992 = vmatprep.subr.bf16.mxu0 0
        %7993 = vmatpush1.bf16.msra.mxu0 %v7679
        %7994 = vmatprep.subr.bf16.mxu0 0
        %7995 = vmatpush1.bf16.msra.mxu0 %v7678
        %7996 = vmatprep.subr.bf16.mxu0 0
        %7997 = vmatpush1.bf16.msra.mxu0 %v7677
        %7998 = vmatprep.subr.bf16.mxu0 0
        %7999 = vmatpush1.bf16.msra.mxu0 %v7676
        %8000 = vmatprep.subr.bf16.mxu0 0
        %8001 = vmatpush1.bf16.msra.mxu0 %v7675
        %8002 = vmatprep.subr.bf16.mxu0 0
        %8003 = vmatpush1.bf16.msra.mxu0 %v7674
        %8004 = vmatprep.subr.bf16.mxu0 0
        %8005 = vmatpush1.bf16.msra.mxu0 %v7673
        %8006 = vmatprep.subr.bf16.mxu0 0
        %8007 = vmatpush1.bf16.msra.mxu0 %v7672
        %8008 = vmatprep.subr.bf16.mxu0 0
        %8009 = vmatpush2.bf16.msra.mxu0 %v7687
        %8010 = vmatprep.subr.bf16.mxu0 0
        %8011 = vmatpush2.bf16.msra.mxu0 %v7686
        %8012 = vmatprep.subr.bf16.mxu0 0
        %8013 = vmatpush2.bf16.msra.mxu0 %v7685
        %8014 = vmatprep.subr.bf16.mxu0 0
        %8015 = vmatpush2.bf16.msra.mxu0 %v7684
        %8016 = vmatprep.subr.bf16.mxu0 0
        %8017 = vmatpush2.bf16.msra.mxu0 %v7683
        %8018 = vmatprep.subr.bf16.mxu0 0
        %8019 = vmatpush2.bf16.msra.mxu0 %v7682
        %8020 = vmatprep.subr.bf16.mxu0 0
        %8021 = vmatpush2.bf16.msra.mxu0 %v7681
        %8022 = vmatprep.subr.bf16.mxu0 0
        %8023 = vmatpush2.bf16.msra.mxu0 %v7680
        %8024 = vmatprep.mubr.bf16.mxu0 %v6924
        %8025 = vmatmul.mubr.bf16.gmra.mxu0 %v6923
        %v8026 = vpop.f32.mrf.mxu0
        %v8027 = vadd.f32 %v7987, %v8026
        %v8028 = vpop.f32.mrf.mxu0
        %v8029 = vpop.f32.mrf.mxu0
        %v8030 = vpop.f32.mrf.mxu0
        %8031 = vdwg.mxu0
        %8032 = vmatprep.subr.bf16.mxu0 0
        %8033 = vmatpush1.bf16.msra.mxu0 %v7695
        %8034 = vmatprep.subr.bf16.mxu0 0
        %8035 = vmatpush1.bf16.msra.mxu0 %v7694
        %8036 = vmatprep.subr.bf16.mxu0 0
        %8037 = vmatpush1.bf16.msra.mxu0 %v7693
        %8038 = vmatprep.subr.bf16.mxu0 0
        %8039 = vmatpush1.bf16.msra.mxu0 %v7692
        %8040 = vmatprep.subr.bf16.mxu0 0
        %8041 = vmatpush1.bf16.msra.mxu0 %v7691
        %8042 = vmatprep.subr.bf16.mxu0 0
        %8043 = vmatpush1.bf16.msra.mxu0 %v7690
        %8044 = vmatprep.subr.bf16.mxu0 0
        %8045 = vmatpush1.bf16.msra.mxu0 %v7689
        %8046 = vmatprep.subr.bf16.mxu0 0
        %8047 = vmatpush1.bf16.msra.mxu0 %v7688
        %8048 = vmatprep.subr.bf16.mxu0 0
        %8049 = vmatpush2.bf16.msra.mxu0 %v7703
        %8050 = vmatprep.subr.bf16.mxu0 0
        %8051 = vmatpush2.bf16.msra.mxu0 %v7702
        %8052 = vmatprep.subr.bf16.mxu0 0
        %8053 = vmatpush2.bf16.msra.mxu0 %v7701
        %8054 = vmatprep.subr.bf16.mxu0 0
        %8055 = vmatpush2.bf16.msra.mxu0 %v7700
        %8056 = vmatprep.subr.bf16.mxu0 0
        %8057 = vmatpush2.bf16.msra.mxu0 %v7699
        %8058 = vmatprep.subr.bf16.mxu0 0
        %8059 = vmatpush2.bf16.msra.mxu0 %v7698
        %8060 = vmatprep.subr.bf16.mxu0 0
        %8061 = vmatpush2.bf16.msra.mxu0 %v7697
        %8062 = vmatprep.subr.bf16.mxu0 0
        %8063 = vmatpush2.bf16.msra.mxu0 %v7696
        %8064 = vmatprep.mubr.bf16.mxu0 %v6926
        %8065 = vmatmul.mubr.bf16.gmra.mxu0 %v6925
        %v8066 = vpop.f32.mrf.mxu0
        %v8067 = vadd.f32 %v8027, %v8066
        %v8068 = vpop.f32.mrf.mxu0
        %v8069 = vpop.f32.mrf.mxu0
        %v8070 = vpop.f32.mrf.mxu0
        %8071 = vdwg.mxu0
        %8072 = vmatprep.subr.bf16.mxu0 0
        %8073 = vmatpush1.bf16.msra.mxu0 %v7711
        %8074 = vmatprep.subr.bf16.mxu0 0
        %8075 = vmatpush1.bf16.msra.mxu0 %v7710
        %8076 = vmatprep.subr.bf16.mxu0 0
        %8077 = vmatpush1.bf16.msra.mxu0 %v7709
        %8078 = vmatprep.subr.bf16.mxu0 0
        %8079 = vmatpush1.bf16.msra.mxu0 %v7708
        %8080 = vmatprep.subr.bf16.mxu0 0
        %8081 = vmatpush1.bf16.msra.mxu0 %v7707
        %8082 = vmatprep.subr.bf16.mxu0 0
        %8083 = vmatpush1.bf16.msra.mxu0 %v7706
        %8084 = vmatprep.subr.bf16.mxu0 0
        %8085 = vmatpush1.bf16.msra.mxu0 %v7705
        %8086 = vmatprep.subr.bf16.mxu0 0
        %8087 = vmatpush1.bf16.msra.mxu0 %v7704
        %8088 = vmatprep.subr.bf16.mxu0 0
        %8089 = vmatpush2.bf16.msra.mxu0 %v7719
        %8090 = vmatprep.subr.bf16.mxu0 0
        %8091 = vmatpush2.bf16.msra.mxu0 %v7718
        %8092 = vmatprep.subr.bf16.mxu0 0
        %8093 = vmatpush2.bf16.msra.mxu0 %v7717
        %8094 = vmatprep.subr.bf16.mxu0 0
        %8095 = vmatpush2.bf16.msra.mxu0 %v7716
        %8096 = vmatprep.subr.bf16.mxu0 0
        %8097 = vmatpush2.bf16.msra.mxu0 %v7715
        %8098 = vmatprep.subr.bf16.mxu0 0
        %8099 = vmatpush2.bf16.msra.mxu0 %v7714
        %8100 = vmatprep.subr.bf16.mxu0 0
        %8101 = vmatpush2.bf16.msra.mxu0 %v7713
        %8102 = vmatprep.subr.bf16.mxu0 0
        %8103 = vmatpush2.bf16.msra.mxu0 %v7712
        %8104 = vmatprep.mubr.bf16.mxu0 %v6928
        %8105 = vmatmul.mubr.bf16.gmra.mxu0 %v6927
        %v8106 = vpop.f32.mrf.mxu0
        %v8107 = vadd.f32 %v8067, %v8106
        %v8108 = vpop.f32.mrf.mxu0
        %v8109 = vpop.f32.mrf.mxu0
        %v8110 = vpop.f32.mrf.mxu0
        %8111 = vdwg.mxu0
        %8112 = vst [vmem:[%s343] sm:$0xff] %v8107
        %s8113 = sand.u32 %s226, 1
        %s8114 = scalar_lea.sflag [#allocation4], %s8113
        %s8115 = sand.u32 %s226, 1
        %s8116 = smul.addr %s8115, 8
        %s8117 = scalar_lea.vmem [#allocation5], %s8116
        // Predicated region
        $region61: #{forward.1} parent=55 // pred_check
          %p8118 = pneg %p236
        $region62: #{forward.1} parent=55 // pred_check_branch
          %8120 = sbr.rel (%p8118) target = $region64
        $region63: #{forward.1} parent=55 // pred_region
          %s8122 = ssub.s32 128, 128
          %8123 = vsyncadd %s8114, %s8122
          %s8124 = smul.addr %s24, 128
          %s8125 = scalar_lea.hbm %s9, %s8124
          %s8127 = sshll.u32 %s8117, 4
          %s8128 = int_to_ptr.vmem [resolvable:$true] %s8127
          %8130 = dma.vmem_to_hbm [thread:$0]  %s8128, 128, %s8125, %s8114
        $region64: #{forward.1} parent=55 // pred_fallthru
          _
      $region56: #{forward.1} parent=5 // pred_fallthru
        _
      %p8131 = scmp.le.s32.totalorder 2, %s19
      // Predicated region
      $region65: #{forward.1} parent=5 // pred_check
        %p8132 = pneg %p8131
      $region66: #{forward.1} parent=5 // pred_check_branch
        %8134 = sbr.rel (%p8132) target = $region68
      $region67: #{forward.1} parent=5 // pred_region
        %s8135 = ssub.s32 %s19, 2
        // Predicated region
        $region69: #{forward.1} parent=67 // pred_check
          %p8136 = pneg %p242
        $region70: #{forward.1} parent=67 // pred_check_branch
          %8138 = sbr.rel (%p8136) target = $region72
        $region71: #{forward.1} parent=67 // pred_region
          %s8139 = sand.u32 %s227, 1
          %s8140 = scalar_lea.sflag [#allocation4], %s8139
          %s8141 = sand.u32 %s227, 1
          %s8142 = smul.addr %s8141, 8
          %s8143 = scalar_lea.vmem [#allocation5], %s8142
          %8144 = dma.done %s8140, 128
        $region72: #{forward.1} parent=67 // pred_fallthru
          _
      $region68: #{forward.1} parent=5 // pred_fallthru
        _
    $region6: #{forward.1} parent=1 // loop_footer
      %s23 = sadd.s32 1, %s19
    $region7: #{forward.1} parent=1 // loop_footer_branch
      %18 = sbr.rel target = $region3
    $region8: #{forward.1} parent=1 // loop_exit
      _
    %8145 = vsyncpa [#allocation3], 1
    %s8146 = scalar_lea.sflag [#allocation3], 1
    %8147 = vsyncpa %s8146, 1
    %8148 = vsyncpa [#allocation4], 1
    %s8149 = scalar_lea.sflag [#allocation4], 1
    %8150 = vsyncpa %s8149, 1

</llo_original>
